<compile_context>
chip_gen: v6e
topology: v6e:2x2x1
jax: 0.10.0
libtpu: 0.0.40
codegen_flags: <defaults>
</compile_context>

<pallas_src>
import functools

import jax
import jax.numpy as jnp
from jax import lax
from jax.experimental import pallas as pl
from jax.experimental.pallas import tpu as pltpu

EPS = 1e-5
_LANE = 128
_SUBLANE = 8


def _ceil_to(v, m):
    return (v + m - 1) // m * m


def _vmem_capacity_bytes():
    """Best-effort per-core VMEM capacity query (trace-time); conservative fallback."""
    try:
        info = pltpu.get_tpu_info()
        for name in ("vmem_capacity_bytes", "vmem_size_bytes", "vmem_bytes"):
            v = getattr(info, name, None)
            if v:
                return int(v)
    except Exception:
        pass
    return 64 << 20   # v7x-safe default


def _pick_row_tile(m, cap):
    """Largest multiple-of-8 divisor of m that is <= cap (0 if none exists)."""
    start = min(cap, m)
    start -= start % _SUBLANE
    for t in range(start, _SUBLANE - 1, -_SUBLANE):
        if m % t == 0:
            return t
    return 0


# ------------------------------ Pallas kernels ------------------------------ #

def conv1x1_stats_kernel(x_ref, w_ref, t_ref, stats_ref):
    """t = x @ w (MXU, f32 accumulate); per-tile [sum; sumsq] BN partials."""
    t = jnp.dot(x_ref[...].astype(w_ref.dtype), w_ref[...],
                preferred_element_type=jnp.float32)
    t_ref[...] = t.astype(t_ref.dtype)
    pp = t.shape[-1]
    stats_ref[0] = jnp.concatenate(
        [jnp.sum(t, axis=0, keepdims=True),
         jnp.sum(t * t, axis=0, keepdims=True),
         jnp.zeros((6, pp), jnp.float32)], axis=0)


def bn1_conv3x3_stats_kernel(t1_ref, scale_ref, shift_ref, w2_ref,
                             t2_ref, stats_ref, yp_ref):
    """y1 = relu(bn1_affine(t1)); t2 = conv3x3(y1) as 9 accumulating MXU matmuls.

    The 1-pixel zero halo is built in the VMEM scratch `yp_ref` (no HBM pad).
    """
    hp2, wp2, pp = yp_ref.shape
    h, w = hp2 - 2, wp2 - 2

    t1 = t1_ref[0].astype(jnp.float32)                              # (h*w, Pp)
    y1 = jnp.maximum(t1 * scale_ref[...] + shift_ref[...], 0.0)

    yp_ref[...] = jnp.zeros_like(yp_ref)                            # zero halo
    yp_ref[1:h + 1, 1:w + 1, :] = y1.reshape(h, w, pp).astype(yp_ref.dtype)

    acc = jnp.zeros((h * w, pp), jnp.float32)
    for k in range(9):                                              # static unroll
        kh, kw = k // 3, k % 3
        tap = yp_ref[kh:kh + h, kw:kw + w, :].reshape(h * w, pp)
        acc += jnp.dot(tap, w2_ref[k], preferred_element_type=jnp.float32)

    t2_ref[0] = acc.astype(t2_ref.dtype)
    stats_ref[0] = jnp.concatenate(
        [jnp.sum(acc, axis=0, keepdims=True),
         jnp.sum(acc * acc, axis=0, keepdims=True),
         jnp.zeros((6, pp), jnp.float32)], axis=0)


def bn2_conv1x1_stats_kernel(t2_ref, scale_ref, shift_ref, w3_ref,
                             t3_ref, stats_ref, *, m_total):
    """y2 = relu(bn2_affine(t2)); t3 = y2 @ w3; BN3 stats partials."""
    y2 = jnp.maximum(t2_ref[...].astype(jnp.float32) * scale_ref[...]
                     + shift_ref[...], 0.0)
    if m_total is not None:   # row-padded fallback only: keep stats exact
        i = pl.program_id(0)
        tm = t2_ref.shape[0]
        rows = lax.broadcasted_iota(jnp.int32, y2.shape, 0) + i * tm
        y2 = jnp.where(rows < m_total, y2, 0.0)
    t3 = jnp.dot(y2.astype(w3_ref.dtype), w3_ref[...],
                 preferred_element_type=jnp.float32)
    t3_ref[...] = t3.astype(t3_ref.dtype)
    cp = t3.shape[-1]
    stats_ref[0] = jnp.concatenate(
        [jnp.sum(t3, axis=0, keepdims=True),
         jnp.sum(t3 * t3, axis=0, keepdims=True),
         jnp.zeros((6, cp), jnp.float32)], axis=0)


def bn3_add_relu_kernel(t3_ref, res_ref, scale_ref, shift_ref, out_ref):
    """out = relu(bn3_affine(t3) + residual) — residual kept in f32."""
    y3 = t3_ref[...].astype(jnp.float32) * scale_ref[...] + shift_ref[...]
    out_ref[...] = jnp.maximum(y3 + res_ref[...].astype(jnp.float32), 0.0)


# ------------------------------- host-side glue ------------------------------ #

def _bn_scale_shift(partials, count, gamma, beta, cpad):
    """Finalize training-mode BN from per-tile [sum; sumsq] partials (tiny XLA op)."""
    s = jnp.sum(partials, axis=0)                       # (8, Cpad); rows 0/1 used
    mean = s[0] / count
    var = jnp.maximum(s[1] / count - mean * mean, 0.0)  # biased variance
    g = jnp.zeros((cpad,), jnp.float32).at[:gamma.shape[0]].set(gamma.astype(jnp.float32))
    b = jnp.zeros((cpad,), jnp.float32).at[:beta.shape[0]].set(beta.astype(jnp.float32))
    scale = g * lax.rsqrt(var + EPS)
    shift = b - mean * scale
    return scale.reshape(1, cpad), shift.reshape(1, cpad)


@functools.partial(jax.jit, static_argnames=("planes", "compute_dtype"))
def bottleneck_forward(x_nchw, params, *, planes, compute_dtype=jnp.bfloat16):
    """Forward of Bottleneck(inplanes=4*planes, planes, stride=1, downsample=None)."""
    n, cin, h, w = x_nchw.shape
    p = planes
    c4 = 4 * p
    assert cin == c4, "identity residual requires inplanes == planes * expansion"

    m = n * h * w
    pp = _ceil_to(p, _LANE)                 # lane-dense padded `planes`
    cp = _ceil_to(c4, _LANE)                # lane-dense padded in/out channels
    store_dtype = compute_dtype             # inter-stage HBM round-trip dtype

    # Generation-dependent row tile / VMEM limit.
    if _vmem_capacity_bytes() >= (100 << 20):   # v5e / v6e (128 MiB VMEM per core)
        row_cap, vmem_limit = 1024, 96 << 20
    else:                                       # v7x-sized VMEM (64 MiB per core)
        row_cap, vmem_limit = 512, 48 << 20

    tm = _pick_row_tile(m, row_cap)
    if tm == 0:                                 # no multiple-of-8 divisor: pad rows
        tm = min(_ceil_to(m, _SUBLANE), row_cap)
    mp = _ceil_to(m, tm)
    nt = mp // tm
    padded_rows = mp != m

    w1, g1, b1, w2, g2, b2, w3, g3, b3 = params
    f32 = jnp.float32

    # ---- layout glue: NCHW -> lane-dense (M, C); weights -> matmul layouts ----
    # TODO(synk): when composing multiple Bottlenecks, keep activations in the
    # (M, Cpad)/NHWC layout between blocks instead of transposing at the boundaries.
    x2d = jnp.transpose(x_nchw, (0, 2, 3, 1)).reshape(m, cin).astype(f32)
    x_res = jnp.pad(x2d, ((0, mp - m), (0, cp - cin)))   # SINGLE padded copy (f32)

    w1m = jnp.zeros((cp, pp), f32).at[:cin, :p].set(w1[:, :, 0, 0].T).astype(compute_dtype)
    taps = jnp.transpose(w2, (2, 3, 1, 0))               # (3, 3, in, out)
    w2m = jnp.pad(taps, ((0, 0), (0, 0), (0, pp - p), (0, pp - p))
                  ).reshape(9, pp, pp).astype(compute_dtype)
    w3m = jnp.zeros((pp, cp), f32).at[:p, :c4].set(w3[:, :, 0, 0].T).astype(compute_dtype)

    cparams = pltpu.CompilerParams(dimension_semantics=("parallel",),
                                   vmem_limit_bytes=vmem_limit)

    # TODO(synk): single-buffer the grid-invariant weight blocks
    # (pipeline_mode=pl.Buffered(1)) once verified on the target jax build.

    # ---- stage 1: conv1 (1x1) + BN1 stats, tiled over M ----
    t1, stats1 = pl.pallas_call(
        conv1x1_stats_kernel,
        grid=(nt,),
        in_specs=[pl.BlockSpec((tm, cp), lambda i: (i, 0)),
                  pl.BlockSpec((cp, pp), lambda i: (0, 0))],
        out_specs=(pl.BlockSpec((tm, pp), lambda i: (i, 0)),
                   pl.BlockSpec((1, 8, pp), lambda i: (i, 0, 0))),
        out_shape=(jax.ShapeDtypeStruct((mp, pp), store_dtype),
                   jax.ShapeDtypeStruct((nt, 8, pp), f32)),
        compiler_params=cparams,
    )(x_res, w1m)
    scale1, shift1 = _bn_scale_shift(stats1, m, g1, b1, pp)

    # ---- stage 2: BN1 apply + ReLU + conv2 (3x3) + BN2 stats, one image per step ----
    # TODO(synk): for layer1-sized images / v7x megacore balance, block the H axis
    # (strip + 1-row halo via manual DMA) instead of one full image per grid step.
    t1_img = (t1[:m] if padded_rows else t1).reshape(n, h * w, pp)   # free reshape when mp==m
    t2_img, stats2 = pl.pallas_call(
        bn1_conv3x3_stats_kernel,
        grid=(n,),
        in_specs=[pl.BlockSpec((1, h * w, pp), lambda i: (i, 0, 0)),
                  pl.BlockSpec((1, pp), lambda i: (0, 0)),
                  pl.BlockSpec((1, pp), lambda i: (0, 0)),
                  pl.BlockSpec((9, pp, pp), lambda i: (0, 0, 0))],
        out_specs=(pl.BlockSpec((1, h * w, pp), lambda i: (i, 0, 0)),
                   pl.BlockSpec((1, 8, pp), lambda i: (i, 0, 0))),
        out_shape=(jax.ShapeDtypeStruct((n, h * w, pp), store_dtype),
                   jax.ShapeDtypeStruct((n, 8, pp), f32)),
        scratch_shapes=[pltpu.VMEM((h + 2, w + 2, pp), compute_dtype)],
        compiler_params=cparams,
    )(t1_img, scale1, shift1, w2m)
    scale2, shift2 = _bn_scale_shift(stats2, m, g2, b2, pp)

    # ---- stage 3: BN2 apply + ReLU + conv3 (1x1) + BN3 stats, tiled over M ----
    t2 = t2_img.reshape(m, pp)
    if padded_rows:
        t2 = jnp.pad(t2, ((0, mp - m), (0, 0)))
    t3, stats3 = pl.pallas_call(
        functools.partial(bn2_conv1x1_stats_kernel,
                          m_total=(m if padded_rows else None)),
        grid=(nt,),
        in_specs=[pl.BlockSpec((tm, pp), lambda i: (i, 0)),
                  pl.BlockSpec((1, pp), lambda i: (0, 0)),
                  pl.BlockSpec((1, pp), lambda i: (0, 0)),
                  pl.BlockSpec((pp, cp), lambda i: (0, 0))],
        out_specs=(pl.BlockSpec((tm, cp), lambda i: (i, 0)),
                   pl.BlockSpec((1, 8, cp), lambda i: (i, 0, 0))),
        out_shape=(jax.ShapeDtypeStruct((mp, cp), store_dtype),
                   jax.ShapeDtypeStruct((nt, 8, cp), f32)),
        compiler_params=cparams,
    )(t2, scale2, shift2, w3m)
    scale3, shift3 = _bn_scale_shift(stats3, m, g3, b3, cp)

    # ---- stage 4: BN3 apply + residual add + ReLU, tiled over M ----
    out2d = pl.pallas_call(
        bn3_add_relu_kernel,
        grid=(nt,),
        in_specs=[pl.BlockSpec((tm, cp), lambda i: (i, 0)),
                  pl.BlockSpec((tm, cp), lambda i: (i, 0)),
                  pl.BlockSpec((1, cp), lambda i: (0, 0)),
                  pl.BlockSpec((1, cp), lambda i: (0, 0))],
        out_specs=pl.BlockSpec((tm, cp), lambda i: (i, 0)),
        out_shape=jax.ShapeDtypeStruct((mp, cp), f32),
        compiler_params=cparams,
    )(t3, x_res, scale3, shift3)

    # (Mp, Cp) -> NCHW (drop row / channel padding)
    out = out2d[:m, :c4].reshape(n, h, w, c4)
    return jnp.transpose(out, (0, 3, 1, 2))


# --------------------------- pure-JAX reference (check) ---------------------- #

def _ref_bn(x_nchw, g, b):
    mean = jnp.mean(x_nchw, axis=(0, 2, 3), keepdims=True)
    var = jnp.mean((x_nchw - mean) ** 2, axis=(0, 2, 3), keepdims=True)
    return (x_nchw - mean) / jnp.sqrt(var + EPS) * g.reshape(1, -1, 1, 1) + b.reshape(
        1, -1, 1, 1)


def _ref_conv(x_nchw, w, padding, dtype):
    return lax.conv_general_dilated(
        x_nchw.astype(dtype), w.astype(dtype),
        window_strides=(1, 1), padding=padding,
        dimension_numbers=("NCHW", "OIHW", "NCHW"),
        preferred_element_type=jnp.float32)


def bottleneck_reference(x, params, conv_dtype=jnp.float32):
    w1, g1, b1, w2, g2, b2, w3, g3, b3 = params
    out = jnp.maximum(_ref_bn(_ref_conv(x, w1, "VALID", conv_dtype), g1, b1), 0.0)
    out = jnp.maximum(_ref_bn(_ref_conv(out, w2, [(1, 1), (1, 1)], conv_dtype), g2, b2), 0.0)
    out = _ref_bn(_ref_conv(out, w3, "VALID", conv_dtype), g3, b3)
    return jnp.maximum(out + x, 0.0)


# ------------------------------------ main ----------------------------------- #

if __name__ == "__main__":
    planes = 4
    inplanes = planes * 4          # expansion = 4, identity residual
    N, H, W = 2, 16, 16

    key = jax.random.PRNGKey(0)
    keys = jax.random.split(key, 8)

    x = jax.random.normal(keys[0], (N, inplanes, H, W), jnp.float32)

    # Deterministic synthetic parameters (shapes match nn.Conv2d / nn.BatchNorm2d).
    w1 = 0.2 * jax.random.normal(keys[1], (planes, inplanes, 1, 1), jnp.float32)
    w2 = 0.2 * jax.random.normal(keys[2], (planes, planes, 3, 3), jnp.float32)
    w3 = 0.2 * jax.random.normal(keys[3], (4 * planes, planes, 1, 1), jnp.float32)
    g1 = 1.0 + 0.1 * jax.random.normal(keys[4], (planes,), jnp.float32)
    b1 = 0.1 * jax.random.normal(keys[5], (planes,), jnp.float32)
    g2 = 1.0 + 0.1 * jax.random.normal(keys[6], (planes,), jnp.float32)
    b2 = 0.1 * jax.random.normal(keys[7], (planes,), jnp.float32)
    g3 = jnp.ones((4 * planes,), jnp.float32)
    b3 = jnp.zeros((4 * planes,), jnp.float32)
    params = (w1, g1, b1, w2, g2, b2, w3, g3, b3)

    # Strict semantics check: f32 matmuls AND f32 intermediates vs f32 reference.
    out32 = jax.block_until_ready(
        bottleneck_forward(x, params, planes=planes, compute_dtype=jnp.float32))
    ref32 = bottleneck_reference(x, params, conv_dtype=jnp.float32)
    assert out32.shape == (N, inplanes, H, W)
    err32 = float(jnp.max(jnp.abs(out32 - ref32)))
    assert jnp.allclose(out32, ref32, rtol=2e-4, atol=2e-4), err32

    # Performance config: bf16 matmul operands AND bf16 inter-stage activations
    # (f32 accumulate / BN / residual), vs a reference with bf16 conv operands.
    out16 = jax.block_until_ready(
        bottleneck_forward(x, params, planes=planes, compute_dtype=jnp.bfloat16))
    ref16 = bottleneck_reference(x, params, conv_dtype=jnp.bfloat16)
    err16 = float(jnp.max(jnp.abs(out16 - ref16)))
    assert jnp.allclose(out16, ref16, rtol=5e-2, atol=5e-2), err16

    print("KERNEL_OK")
</pallas_src>

<mosaic_0001>
module attributes {stable_mosaic.version = 11 : i64} {
  func.func @conv1x1_stats_kernel(%arg0: i32, %arg1: memref<512x128xf32, #tpu.memory_space<vmem>>, %arg2: memref<128x128xf32, #tpu.memory_space<vmem>>, %arg3: memref<512x128xf32, #tpu.memory_space<vmem>>, %arg4: memref<1x8x128xf32, #tpu.memory_space<vmem>>) attributes {dimension_semantics = [#tpu.dimension_semantics<parallel>], iteration_bounds = array<i64: 1>, scalar_prefetch = 0 : i64, scratch_operands = 0 : i64, tpu.core_type = #tpu.core_type<tc>, window_params = [{transform_indices = @transform_0, window_bounds = array<i64: 512, 128>}, {pipeline_mode = #tpu.pipeline_mode<synchronous>, transform_indices = @transform_1, window_bounds = array<i64: 128, 128>}, {transform_indices = @transform_2, window_bounds = array<i64: 512, 128>}, {transform_indices = @transform_3, window_bounds = array<i64: 1, 8, 128>}]} {
    %c0 = arith.constant 0 : index
    %c0_0 = arith.constant 0 : index
    %0 = vector.load %arg1[%c0, %c0_0] : memref<512x128xf32, #tpu.memory_space<vmem>>, vector<512x128xf32>
    %c0_1 = arith.constant 0 : index
    %c0_2 = arith.constant 0 : index
    %1 = vector.load %arg2[%c0_1, %c0_2] : memref<128x128xf32, #tpu.memory_space<vmem>>, vector<128x128xf32>
    %cst = arith.constant dense<0.000000e+00> : vector<512x128xf32>
    %2 = tpu.matmul %0, %1, %cst {dimension_numbers = #tpu.dot_dimension_numbers<[1], [0], [0], [1], [0, 0, 1, 1], [], []>} : vector<512x128xf32>, vector<128x128xf32>, vector<512x128xf32> -> vector<512x128xf32>
    %c0_3 = arith.constant 0 : index
    %c0_4 = arith.constant 0 : index
    %3 = vector.load %arg3[%c0_3, %c0_4] : memref<512x128xf32, #tpu.memory_space<vmem>>, vector<512x128xf32>
    tpu.vector_store %arg3[%c0_3, %c0_4], %2 {strides = array<i32>} : memref<512x128xf32, #tpu.memory_space<vmem>>, vector<512x128xf32>,
    %cst_5 = arith.constant dense<0.000000e+00> : vector<128xf32>
    %4 = vector.multi_reduction <add>, %2, %cst_5 [0] : vector<512x128xf32> to vector<128xf32>
    %5 = vector.shape_cast %4 : vector<128xf32> to vector<1x128xf32>
    %6 = arith.mulf %2, %2 : vector<512x128xf32>
    %cst_6 = arith.constant dense<0.000000e+00> : vector<128xf32>
    %7 = vector.multi_reduction <add>, %6, %cst_6 [0] : vector<512x128xf32> to vector<128xf32>
    %8 = vector.shape_cast %7 : vector<128xf32> to vector<1x128xf32>
    %cst_7 = arith.constant 0.000000e+00 : f32
    %9 = vector.broadcast %cst_7 : f32 to vector<6x128xf32>
    %10 = tpu.concatenate %5, %8, %9 in 0 : vector<1x128xf32>, vector<1x128xf32>, vector<6x128xf32> -> vector<8x128xf32>
    %c0_8 = arith.constant 0 : index
    %c0_9 = arith.constant 0 : index
    %c0_10 = arith.constant 0 : index
    %11 = vector.load %arg4[%c0_8, %c0_9, %c0_10] : memref<1x8x128xf32, #tpu.memory_space<vmem>>, vector<1x8x128xf32>
    %12 = vector.shape_cast %11 : vector<1x8x128xf32> to vector<8x128xf32>
    %13 = vector.shape_cast %10 : vector<8x128xf32> to vector<1x8x128xf32>
    tpu.vector_store %arg4[%c0_8, %c0_9, %c0_10], %13 {strides = array<i32>} : memref<1x8x128xf32, #tpu.memory_space<vmem>>, vector<1x8x128xf32>,
    return
  }
  func.func @transform_0(%arg0: i32) -> (i32, i32) {
    %c0_i32 = arith.constant 0 : i32
    %c0_i32_0 = arith.constant 0 : i32
    return %arg0, %c0_i32 : i32, i32
  }
  func.func @transform_1(%arg0: i32) -> (i32, i32) {
    %c0_i32 = arith.constant 0 : i32
    %c0_i32_0 = arith.constant 0 : i32
    %c0_i32_1 = arith.constant 0 : i32
    return %c0_i32, %c0_i32_0 : i32, i32
  }
  func.func @transform_2(%arg0: i32) -> (i32, i32) {
    %c0_i32 = arith.constant 0 : i32
    %c0_i32_0 = arith.constant 0 : i32
    return %arg0, %c0_i32 : i32, i32
  }
  func.func @transform_3(%arg0: i32) -> (i32, i32, i32) {
    %c0_i32 = arith.constant 0 : i32
    %c0_i32_0 = arith.constant 0 : i32
    %c0_i32_1 = arith.constant 0 : i32
    return %arg0, %c0_i32, %c0_i32_0 : i32, i32, i32
  }
}

module attributes {stable_mosaic.version = 11 : i64} {
  func.func @bn1_conv3x3_stats_kernel(%arg0: i32, %arg1: memref<1x256x128xf32, #tpu.memory_space<vmem>>, %arg2: memref<1x128xf32, #tpu.memory_space<vmem>>, %arg3: memref<1x128xf32, #tpu.memory_space<vmem>>, %arg4: memref<9x128x128xf32, #tpu.memory_space<vmem>>, %arg5: memref<1x256x128xf32, #tpu.memory_space<vmem>>, %arg6: memref<1x8x128xf32, #tpu.memory_space<vmem>>, %arg7: memref<18x18x128xf32, #tpu.memory_space<vmem>>) attributes {dimension_semantics = [#tpu.dimension_semantics<parallel>], iteration_bounds = array<i64: 2>, scalar_prefetch = 0 : i64, scratch_operands = 1 : i64, tpu.core_type = #tpu.core_type<tc>, window_params = [{transform_indices = @transform_0, window_bounds = array<i64: 1, 256, 128>}, {pipeline_mode = #tpu.pipeline_mode<synchronous>, transform_indices = @transform_1, window_bounds = array<i64: 1, 128>}, {pipeline_mode = #tpu.pipeline_mode<synchronous>, transform_indices = @transform_2, window_bounds = array<i64: 1, 128>}, {pipeline_mode = #tpu.pipeline_mode<synchronous>, transform_indices = @transform_3, window_bounds = array<i64: 9, 128, 128>}, {transform_indices = @transform_4, window_bounds = array<i64: 1, 256, 128>}, {transform_indices = @transform_5, window_bounds = array<i64: 1, 8, 128>}]} {
    %c0 = arith.constant 0 : index
    %c0_0 = arith.constant 0 : index
    %c0_1 = arith.constant 0 : index
    %0 = vector.load %arg1[%c0, %c0_0, %c0_1] : memref<1x256x128xf32, #tpu.memory_space<vmem>>, vector<1x256x128xf32>
    %1 = vector.shape_cast %0 : vector<1x256x128xf32> to vector<256x128xf32>
    %c0_2 = arith.constant 0 : index
    %c0_3 = arith.constant 0 : index
    %2 = vector.load %arg2[%c0_2, %c0_3] : memref<1x128xf32, #tpu.memory_space<vmem>>, vector<1x128xf32>
    %3 = vector.broadcast %2 : vector<1x128xf32> to vector<256x128xf32>
    %4 = arith.mulf %1, %3 : vector<256x128xf32>
    %c0_4 = arith.constant 0 : index
    %c0_5 = arith.constant 0 : index
    %5 = vector.load %arg3[%c0_4, %c0_5] : memref<1x128xf32, #tpu.memory_space<vmem>>, vector<1x128xf32>
    %6 = vector.broadcast %5 : vector<1x128xf32> to vector<256x128xf32>
    %7 = arith.addf %4, %6 : vector<256x128xf32>
    %cst = arith.constant 0.000000e+00 : f32
    %8 = vector.broadcast %cst : f32 to vector<256x128xf32>
    %9 = arith.maximumf %7, %8 : vector<256x128xf32>
    %cst_6 = arith.constant 0.000000e+00 : f32
    %10 = vector.broadcast %cst_6 : f32 to vector<18x18x128xf32>
    %c0_7 = arith.constant 0 : index
    %c0_8 = arith.constant 0 : index
    %c0_9 = arith.constant 0 : index
    %11 = vector.load %arg7[%c0_7, %c0_8, %c0_9] : memref<18x18x128xf32, #tpu.memory_space<vmem>>, vector<18x18x128xf32>
    tpu.vector_store %arg7[%c0_7, %c0_8, %c0_9], %10 {strides = array<i32>} : memref<18x18x128xf32, #tpu.memory_space<vmem>>, vector<18x18x128xf32>,
    %12 = vector.shape_cast %9 : vector<256x128xf32> to vector<16x16x128xf32>
    %c1 = arith.constant 1 : index
    %c1_10 = arith.constant 1 : index
    %c0_11 = arith.constant 0 : index
    %13 = vector.load %arg7[%c1, %c1_10, %c0_11] : memref<18x18x128xf32, #tpu.memory_space<vmem>>, vector<16x16x128xf32>
    tpu.vector_store %arg7[%c1, %c1_10, %c0_11], %12 {strides = array<i32>} : memref<18x18x128xf32, #tpu.memory_space<vmem>>, vector<16x16x128xf32>,
    %cst_12 = arith.constant 0.000000e+00 : f32
    %14 = vector.broadcast %cst_12 : f32 to vector<256x128xf32>
    %c0_13 = arith.constant 0 : index
    %c0_14 = arith.constant 0 : index
    %c0_15 = arith.constant 0 : index
    %15 = vector.load %arg7[%c0_13, %c0_14, %c0_15] : memref<18x18x128xf32, #tpu.memory_space<vmem>>, vector<16x16x128xf32>
    %16 = vector.shape_cast %15 : vector<16x16x128xf32> to vector<256x128xf32>
    %c0_16 = arith.constant 0 : index
    %c0_17 = arith.constant 0 : index
    %c0_18 = arith.constant 0 : index
    %17 = vector.load %arg4[%c0_16, %c0_17, %c0_18] : memref<9x128x128xf32, #tpu.memory_space<vmem>>, vector<1x128x128xf32>
    %18 = vector.shape_cast %17 : vector<1x128x128xf32> to vector<128x128xf32>
    %cst_19 = arith.constant dense<0.000000e+00> : vector<256x128xf32>
    %19 = tpu.matmul %16, %18, %cst_19 {dimension_numbers = #tpu.dot_dimension_numbers<[1], [0], [0], [1], [0, 0, 1, 1], [], []>} : vector<256x128xf32>, vector<128x128xf32>, vector<256x128xf32> -> vector<256x128xf32>
    %20 = arith.addf %14, %19 : vector<256x128xf32>
    %c0_20 = arith.constant 0 : index
    %c1_21 = arith.constant 1 : index
    %c0_22 = arith.constant 0 : index
    %21 = vector.load %arg7[%c0_20, %c1_21, %c0_22] : memref<18x18x128xf32, #tpu.memory_space<vmem>>, vector<16x16x128xf32>
    %22 = vector.shape_cast %21 : vector<16x16x128xf32> to vector<256x128xf32>
    %c1_23 = arith.constant 1 : index
    %c0_24 = arith.constant 0 : index
    %c0_25 = arith.constant 0 : index
    %23 = vector.load %arg4[%c1_23, %c0_24, %c0_25] : memref<9x128x128xf32, #tpu.memory_space<vmem>>, vector<1x128x128xf32>
    %24 = vector.shape_cast %23 : vector<1x128x128xf32> to vector<128x128xf32>
    %cst_26 = arith.constant dense<0.000000e+00> : vector<256x128xf32>
    %25 = tpu.matmul %22, %24, %cst_26 {dimension_numbers = #tpu.dot_dimension_numbers<[1], [0], [0], [1], [0, 0, 1, 1], [], []>} : vector<256x128xf32>, vector<128x128xf32>, vector<256x128xf32> -> vector<256x128xf32>
    %26 = arith.addf %20, %25 : vector<256x128xf32>
    %c0_27 = arith.constant 0 : index
    %c2 = arith.constant 2 : index
    %c0_28 = arith.constant 0 : index
    %27 = vector.load %arg7[%c0_27, %c2, %c0_28] : memref<18x18x128xf32, #tpu.memory_space<vmem>>, vector<16x16x128xf32>
    %28 = vector.shape_cast %27 : vector<16x16x128xf32> to vector<256x128xf32>
    %c2_29 = arith.constant 2 : index
    %c0_30 = arith.constant 0 : index
    %c0_31 = arith.constant 0 : index
    %29 = vector.load %arg4[%c2_29, %c0_30, %c0_31] : memref<9x128x128xf32, #tpu.memory_space<vmem>>, vector<1x128x128xf32>
    %30 = vector.shape_cast %29 : vector<1x128x128xf32> to vector<128x128xf32>
    %cst_32 = arith.constant dense<0.000000e+00> : vector<256x128xf32>
    %31 = tpu.matmul %28, %30, %cst_32 {dimension_numbers = #tpu.dot_dimension_numbers<[1], [0], [0], [1], [0, 0, 1, 1], [], []>} : vector<256x128xf32>, vector<128x128xf32>, vector<256x128xf32> -> vector<256x128xf32>
    %32 = arith.addf %26, %31 : vector<256x128xf32>
    %c1_33 = arith.constant 1 : index
    %c0_34 = arith.constant 0 : index
    %c0_35 = arith.constant 0 : index
    %33 = vector.load %arg7[%c1_33, %c0_34, %c0_35] : memref<18x18x128xf32, #tpu.memory_space<vmem>>, vector<16x16x128xf32>
    %34 = vector.shape_cast %33 : vector<16x16x128xf32> to vector<256x128xf32>
    %c3 = arith.constant 3 : index
    %c0_36 = arith.constant 0 : index
    %c0_37 = arith.constant 0 : index
    %35 = vector.load %arg4[%c3, %c0_36, %c0_37] : memref<9x128x128xf32, #tpu.memory_space<vmem>>, vector<1x128x128xf32>
    %36 = vector.shape_cast %35 : vector<1x128x128xf32> to vector<128x128xf32>
    %cst_38 = arith.constant dense<0.000000e+00> : vector<256x128xf32>
    %37 = tpu.matmul %34, %36, %cst_38 {dimension_numbers = #tpu.dot_dimension_numbers<[1], [0], [0], [1], [0, 0, 1, 1], [], []>} : vector<256x128xf32>, vector<128x128xf32>, vector<256x128xf32> -> vector<256x128xf32>
    %38 = arith.addf %32, %37 : vector<256x128xf32>
    %c1_39 = arith.constant 1 : index
    %c1_40 = arith.constant 1 : index
    %c0_41 = arith.constant 0 : index
    %39 = vector.load %arg7[%c1_39, %c1_40, %c0_41] : memref<18x18x128xf32, #tpu.memory_space<vmem>>, vector<16x16x128xf32>
    %40 = vector.shape_cast %39 : vector<16x16x128xf32> to vector<256x128xf32>
    %c4 = arith.constant 4 : index
    %c0_42 = arith.constant 0 : index
    %c0_43 = arith.constant 0 : index
    %41 = vector.load %arg4[%c4, %c0_42, %c0_43] : memref<9x128x128xf32, #tpu.memory_space<vmem>>, vector<1x128x128xf32>
    %42 = vector.shape_cast %41 : vector<1x128x128xf32> to vector<128x128xf32>
    %cst_44 = arith.constant dense<0.000000e+00> : vector<256x128xf32>
    %43 = tpu.matmul %40, %42, %cst_44 {dimension_numbers = #tpu.dot_dimension_numbers<[1], [0], [0], [1], [0, 0, 1, 1], [], []>} : vector<256x128xf32>, vector<128x128xf32>, vector<256x128xf32> -> vector<256x128xf32>
    %44 = arith.addf %38, %43 : vector<256x128xf32>
    %c1_45 = arith.constant 1 : index
    %c2_46 = arith.constant 2 : index
    %c0_47 = arith.constant 0 : index
    %45 = vector.load %arg7[%c1_45, %c2_46, %c0_47] : memref<18x18x128xf32, #tpu.memory_space<vmem>>, vector<16x16x128xf32>
    %46 = vector.shape_cast %45 : vector<16x16x128xf32> to vector<256x128xf32>
    %c5 = arith.constant 5 : index
    %c0_48 = arith.constant 0 : index
    %c0_49 = arith.constant 0 : index
    %47 = vector.load %arg4[%c5, %c0_48, %c0_49] : memref<9x128x128xf32, #tpu.memory_space<vmem>>, vector<1x128x128xf32>
    %48 = vector.shape_cast %47 : vector<1x128x128xf32> to vector<128x128xf32>
    %cst_50 = arith.constant dense<0.000000e+00> : vector<256x128xf32>
    %49 = tpu.matmul %46, %48, %cst_50 {dimension_numbers = #tpu.dot_dimension_numbers<[1], [0], [0], [1], [0, 0, 1, 1], [], []>} : vector<256x128xf32>, vector<128x128xf32>, vector<256x128xf32> -> vector<256x128xf32>
    %50 = arith.addf %44, %49 : vector<256x128xf32>
    %c2_51 = arith.constant 2 : index
    %c0_52 = arith.constant 0 : index
    %c0_53 = arith.constant 0 : index
    %51 = vector.load %arg7[%c2_51, %c0_52, %c0_53] : memref<18x18x128xf32, #tpu.memory_space<vmem>>, vector<16x16x128xf32>
    %52 = vector.shape_cast %51 : vector<16x16x128xf32> to vector<256x128xf32>
    %c6 = arith.constant 6 : index
    %c0_54 = arith.constant 0 : index
    %c0_55 = arith.constant 0 : index
    %53 = vector.load %arg4[%c6, %c0_54, %c0_55] : memref<9x128x128xf32, #tpu.memory_space<vmem>>, vector<1x128x128xf32>
    %54 = vector.shape_cast %53 : vector<1x128x128xf32> to vector<128x128xf32>
    %cst_56 = arith.constant dense<0.000000e+00> : vector<256x128xf32>
    %55 = tpu.matmul %52, %54, %cst_56 {dimension_numbers = #tpu.dot_dimension_numbers<[1], [0], [0], [1], [0, 0, 1, 1], [], []>} : vector<256x128xf32>, vector<128x128xf32>, vector<256x128xf32> -> vector<256x128xf32>
    %56 = arith.addf %50, %55 : vector<256x128xf32>
    %c2_57 = arith.constant 2 : index
    %c1_58 = arith.constant 1 : index
    %c0_59 = arith.constant 0 : index
    %57 = vector.load %arg7[%c2_57, %c1_58, %c0_59] : memref<18x18x128xf32, #tpu.memory_space<vmem>>, vector<16x16x128xf32>
    %58 = vector.shape_cast %57 : vector<16x16x128xf32> to vector<256x128xf32>
    %c7 = arith.constant 7 : index
    %c0_60 = arith.constant 0 : index
    %c0_61 = arith.constant 0 : index
    %59 = vector.load %arg4[%c7, %c0_60, %c0_61] : memref<9x128x128xf32, #tpu.memory_space<vmem>>, vector<1x128x128xf32>
    %60 = vector.shape_cast %59 : vector<1x128x128xf32> to vector<128x128xf32>
    %cst_62 = arith.constant dense<0.000000e+00> : vector<256x128xf32>
    %61 = tpu.matmul %58, %60, %cst_62 {dimension_numbers = #tpu.dot_dimension_numbers<[1], [0], [0], [1], [0, 0, 1, 1], [], []>} : vector<256x128xf32>, vector<128x128xf32>, vector<256x128xf32> -> vector<256x128xf32>
    %62 = arith.addf %56, %61 : vector<256x128xf32>
    %c2_63 = arith.constant 2 : index
    %c2_64 = arith.constant 2 : index
    %c0_65 = arith.constant 0 : index
    %63 = vector.load %arg7[%c2_63, %c2_64, %c0_65] : memref<18x18x128xf32, #tpu.memory_space<vmem>>, vector<16x16x128xf32>
    %64 = vector.shape_cast %63 : vector<16x16x128xf32> to vector<256x128xf32>
    %c8 = arith.constant 8 : index
    %c0_66 = arith.constant 0 : index
    %c0_67 = arith.constant 0 : index
    %65 = vector.load %arg4[%c8, %c0_66, %c0_67] : memref<9x128x128xf32, #tpu.memory_space<vmem>>, vector<1x128x128xf32>
    %66 = vector.shape_cast %65 : vector<1x128x128xf32> to vector<128x128xf32>
    %cst_68 = arith.constant dense<0.000000e+00> : vector<256x128xf32>
    %67 = tpu.matmul %64, %66, %cst_68 {dimension_numbers = #tpu.dot_dimension_numbers<[1], [0], [0], [1], [0, 0, 1, 1], [], []>} : vector<256x128xf32>, vector<128x128xf32>, vector<256x128xf32> -> vector<256x128xf32>
    %68 = arith.addf %62, %67 : vector<256x128xf32>
    %c0_69 = arith.constant 0 : index
    %c0_70 = arith.constant 0 : index
    %c0_71 = arith.constant 0 : index
    %69 = vector.load %arg5[%c0_69, %c0_70, %c0_71] : memref<1x256x128xf32, #tpu.memory_space<vmem>>, vector<1x256x128xf32>
    %70 = vector.shape_cast %69 : vector<1x256x128xf32> to vector<256x128xf32>
    %71 = vector.shape_cast %68 : vector<256x128xf32> to vector<1x256x128xf32>
    tpu.vector_store %arg5[%c0_69, %c0_70, %c0_71], %71 {strides = array<i32>} : memref<1x256x128xf32, #tpu.memory_space<vmem>>, vector<1x256x128xf32>,
    %cst_72 = arith.constant dense<0.000000e+00> : vector<128xf32>
    %72 = vector.multi_reduction <add>, %68, %cst_72 [0] : vector<256x128xf32> to vector<128xf32>
    %73 = vector.shape_cast %72 : vector<128xf32> to vector<1x128xf32>
    %74 = arith.mulf %68, %68 : vector<256x128xf32>
    %cst_73 = arith.constant dense<0.000000e+00> : vector<128xf32>
    %75 = vector.multi_reduction <add>, %74, %cst_73 [0] : vector<256x128xf32> to vector<128xf32>
    %76 = vector.shape_cast %75 : vector<128xf32> to vector<1x128xf32>
    %cst_74 = arith.constant 0.000000e+00 : f32
    %77 = vector.broadcast %cst_74 : f32 to vector<6x128xf32>
    %78 = tpu.concatenate %73, %76, %77 in 0 : vector<1x128xf32>, vector<1x128xf32>, vector<6x128xf32> -> vector<8x128xf32>
    %c0_75 = arith.constant 0 : index
    %c0_76 = arith.constant 0 : index
    %c0_77 = arith.constant 0 : index
    %79 = vector.load %arg6[%c0_75, %c0_76, %c0_77] : memref<1x8x128xf32, #tpu.memory_space<vmem>>, vector<1x8x128xf32>
    %80 = vector.shape_cast %79 : vector<1x8x128xf32> to vector<8x128xf32>
    %81 = vector.shape_cast %78 : vector<8x128xf32> to vector<1x8x128xf32>
    tpu.vector_store %arg6[%c0_75, %c0_76, %c0_77], %81 {strides = array<i32>} : memref<1x8x128xf32, #tpu.memory_space<vmem>>, vector<1x8x128xf32>,
    return
  }
  func.func @transform_0(%arg0: i32) -> (i32, i32, i32) {
    %c0_i32 = arith.constant 0 : i32
    %c0_i32_0 = arith.constant 0 : i32
    %c0_i32_1 = arith.constant 0 : i32
    return %arg0, %c0_i32, %c0_i32_0 : i32, i32, i32
  }
  func.func @transform_1(%arg0: i32) -> (i32, i32) {
    %c0_i32 = arith.constant 0 : i32
    %c0_i32_0 = arith.constant 0 : i32
    %c0_i32_1 = arith.constant 0 : i32
    return %c0_i32, %c0_i32_0 : i32, i32
  }
  func.func @transform_2(%arg0: i32) -> (i32, i32) {
    %c0_i32 = arith.constant 0 : i32
    %c0_i32_0 = arith.constant 0 : i32
    %c0_i32_1 = arith.constant 0 : i32
    return %c0_i32, %c0_i32_0 : i32, i32
  }
  func.func @transform_3(%arg0: i32) -> (i32, i32, i32) {
    %c0_i32 = arith.constant 0 : i32
    %c0_i32_0 = arith.constant 0 : i32
    %c0_i32_1 = arith.constant 0 : i32
    %c0_i32_2 = arith.constant 0 : i32
    return %c0_i32, %c0_i32_0, %c0_i32_1 : i32, i32, i32
  }
  func.func @transform_4(%arg0: i32) -> (i32, i32, i32) {
    %c0_i32 = arith.constant 0 : i32
    %c0_i32_0 = arith.constant 0 : i32
    %c0_i32_1 = arith.constant 0 : i32
    return %arg0, %c0_i32, %c0_i32_0 : i32, i32, i32
  }
  func.func @transform_5(%arg0: i32) -> (i32, i32, i32) {
    %c0_i32 = arith.constant 0 : i32
    %c0_i32_0 = arith.constant 0 : i32
    %c0_i32_1 = arith.constant 0 : i32
    return %arg0, %c0_i32, %c0_i32_0 : i32, i32, i32
  }
}

module attributes {stable_mosaic.version = 11 : i64} {
  func.func @bn3_add_relu_kernel(%arg0: i32, %arg1: memref<512x128xf32, #tpu.memory_space<vmem>>, %arg2: memref<512x128xf32, #tpu.memory_space<vmem>>, %arg3: memref<1x128xf32, #tpu.memory_space<vmem>>, %arg4: memref<1x128xf32, #tpu.memory_space<vmem>>, %arg5: memref<512x128xf32, #tpu.memory_space<vmem>>) attributes {dimension_semantics = [#tpu.dimension_semantics<parallel>], iteration_bounds = array<i64: 1>, scalar_prefetch = 0 : i64, scratch_operands = 0 : i64, tpu.core_type = #tpu.core_type<tc>, window_params = [{transform_indices = @transform_0, window_bounds = array<i64: 512, 128>}, {transform_indices = @transform_1, window_bounds = array<i64: 512, 128>}, {pipeline_mode = #tpu.pipeline_mode<synchronous>, transform_indices = @transform_2, window_bounds = array<i64: 1, 128>}, {pipeline_mode = #tpu.pipeline_mode<synchronous>, transform_indices = @transform_3, window_bounds = array<i64: 1, 128>}, {transform_indices = @transform_4, window_bounds = array<i64: 512, 128>}]} {
    %c0 = arith.constant 0 : index
    %c0_0 = arith.constant 0 : index
    %0 = vector.load %arg1[%c0, %c0_0] : memref<512x128xf32, #tpu.memory_space<vmem>>, vector<512x128xf32>
    %c0_1 = arith.constant 0 : index
    %c0_2 = arith.constant 0 : index
    %1 = vector.load %arg3[%c0_1, %c0_2] : memref<1x128xf32, #tpu.memory_space<vmem>>, vector<1x128xf32>
    %2 = vector.broadcast %1 : vector<1x128xf32> to vector<512x128xf32>
    %3 = arith.mulf %0, %2 : vector<512x128xf32>
    %c0_3 = arith.constant 0 : index
    %c0_4 = arith.constant 0 : index
    %4 = vector.load %arg4[%c0_3, %c0_4] : memref<1x128xf32, #tpu.memory_space<vmem>>, vector<1x128xf32>
    %5 = vector.broadcast %4 : vector<1x128xf32> to vector<512x128xf32>
    %6 = arith.addf %3, %5 : vector<512x128xf32>
    %c0_5 = arith.constant 0 : index
    %c0_6 = arith.constant 0 : index
    %7 = vector.load %arg2[%c0_5, %c0_6] : memref<512x128xf32, #tpu.memory_space<vmem>>, vector<512x128xf32>
    %8 = arith.addf %6, %7 : vector<512x128xf32>
    %cst = arith.constant 0.000000e+00 : f32
    %9 = vector.broadcast %cst : f32 to vector<512x128xf32>
    %10 = arith.maximumf %8, %9 : vector<512x128xf32>
    %c0_7 = arith.constant 0 : index
    %c0_8 = arith.constant 0 : index
    %11 = vector.load %arg5[%c0_7, %c0_8] : memref<512x128xf32, #tpu.memory_space<vmem>>, vector<512x128xf32>
    tpu.vector_store %arg5[%c0_7, %c0_8], %10 {strides = array<i32>} : memref<512x128xf32, #tpu.memory_space<vmem>>, vector<512x128xf32>,
    return
  }
  func.func @transform_0(%arg0: i32) -> (i32, i32) {
    %c0_i32 = arith.constant 0 : i32
    %c0_i32_0 = arith.constant 0 : i32
    return %arg0, %c0_i32 : i32, i32
  }
  func.func @transform_1(%arg0: i32) -> (i32, i32) {
    %c0_i32 = arith.constant 0 : i32
    %c0_i32_0 = arith.constant 0 : i32
    return %arg0, %c0_i32 : i32, i32
  }
  func.func @transform_2(%arg0: i32) -> (i32, i32) {
    %c0_i32 = arith.constant 0 : i32
    %c0_i32_0 = arith.constant 0 : i32
    %c0_i32_1 = arith.constant 0 : i32
    return %c0_i32, %c0_i32_0 : i32, i32
  }
  func.func @transform_3(%arg0: i32) -> (i32, i32) {
    %c0_i32 = arith.constant 0 : i32
    %c0_i32_0 = arith.constant 0 : i32
    %c0_i32_1 = arith.constant 0 : i32
    return %c0_i32, %c0_i32_0 : i32, i32
  }
  func.func @transform_4(%arg0: i32) -> (i32, i32) {
    %c0_i32 = arith.constant 0 : i32
    %c0_i32_0 = arith.constant 0 : i32
    return %arg0, %c0_i32 : i32, i32
  }
}

module attributes {stable_mosaic.version = 11 : i64} {
  func.func @bn2_conv1x1_stats_kernel(%arg0: i32, %arg1: memref<512x128xf32, #tpu.memory_space<vmem>>, %arg2: memref<1x128xf32, #tpu.memory_space<vmem>>, %arg3: memref<1x128xf32, #tpu.memory_space<vmem>>, %arg4: memref<128x128xf32, #tpu.memory_space<vmem>>, %arg5: memref<512x128xf32, #tpu.memory_space<vmem>>, %arg6: memref<1x8x128xf32, #tpu.memory_space<vmem>>) attributes {dimension_semantics = [#tpu.dimension_semantics<parallel>], iteration_bounds = array<i64: 1>, scalar_prefetch = 0 : i64, scratch_operands = 0 : i64, tpu.core_type = #tpu.core_type<tc>, window_params = [{transform_indices = @transform_0, window_bounds = array<i64: 512, 128>}, {pipeline_mode = #tpu.pipeline_mode<synchronous>, transform_indices = @transform_1, window_bounds = array<i64: 1, 128>}, {pipeline_mode = #tpu.pipeline_mode<synchronous>, transform_indices = @transform_2, window_bounds = array<i64: 1, 128>}, {pipeline_mode = #tpu.pipeline_mode<synchronous>, transform_indices = @transform_3, window_bounds = array<i64: 128, 128>}, {transform_indices = @transform_4, window_bounds = array<i64: 512, 128>}, {transform_indices = @transform_5, window_bounds = array<i64: 1, 8, 128>}]} {
    %c0 = arith.constant 0 : index
    %c0_0 = arith.constant 0 : index
    %0 = vector.load %arg1[%c0, %c0_0] : memref<512x128xf32, #tpu.memory_space<vmem>>, vector<512x128xf32>
    %c0_1 = arith.constant 0 : index
    %c0_2 = arith.constant 0 : index
    %1 = vector.load %arg2[%c0_1, %c0_2] : memref<1x128xf32, #tpu.memory_space<vmem>>, vector<1x128xf32>
    %2 = vector.broadcast %1 : vector<1x128xf32> to vector<512x128xf32>
    %3 = arith.mulf %0, %2 : vector<512x128xf32>
    %c0_3 = arith.constant 0 : index
    %c0_4 = arith.constant 0 : index
    %4 = vector.load %arg3[%c0_3, %c0_4] : memref<1x128xf32, #tpu.memory_space<vmem>>, vector<1x128xf32>
    %5 = vector.broadcast %4 : vector<1x128xf32> to vector<512x128xf32>
    %6 = arith.addf %3, %5 : vector<512x128xf32>
    %cst = arith.constant 0.000000e+00 : f32
    %7 = vector.broadcast %cst : f32 to vector<512x128xf32>
    %8 = arith.maximumf %6, %7 : vector<512x128xf32>
    %c0_5 = arith.constant 0 : index
    %c0_6 = arith.constant 0 : index
    %9 = vector.load %arg4[%c0_5, %c0_6] : memref<128x128xf32, #tpu.memory_space<vmem>>, vector<128x128xf32>
    %cst_7 = arith.constant dense<0.000000e+00> : vector<512x128xf32>
    %10 = tpu.matmul %8, %9, %cst_7 {dimension_numbers = #tpu.dot_dimension_numbers<[1], [0], [0], [1], [0, 0, 1, 1], [], []>} : vector<512x128xf32>, vector<128x128xf32>, vector<512x128xf32> -> vector<512x128xf32>
    %c0_8 = arith.constant 0 : index
    %c0_9 = arith.constant 0 : index
    %11 = vector.load %arg5[%c0_8, %c0_9] : memref<512x128xf32, #tpu.memory_space<vmem>>, vector<512x128xf32>
    tpu.vector_store %arg5[%c0_8, %c0_9], %10 {strides = array<i32>} : memref<512x128xf32, #tpu.memory_space<vmem>>, vector<512x128xf32>,
    %cst_10 = arith.constant dense<0.000000e+00> : vector<128xf32>
    %12 = vector.multi_reduction <add>, %10, %cst_10 [0] : vector<512x128xf32> to vector<128xf32>
    %13 = vector.shape_cast %12 : vector<128xf32> to vector<1x128xf32>
    %14 = arith.mulf %10, %10 : vector<512x128xf32>
    %cst_11 = arith.constant dense<0.000000e+00> : vector<128xf32>
    %15 = vector.multi_reduction <add>, %14, %cst_11 [0] : vector<512x128xf32> to vector<128xf32>
    %16 = vector.shape_cast %15 : vector<128xf32> to vector<1x128xf32>
    %cst_12 = arith.constant 0.000000e+00 : f32
    %17 = vector.broadcast %cst_12 : f32 to vector<6x128xf32>
    %18 = tpu.concatenate %13, %16, %17 in 0 : vector<1x128xf32>, vector<1x128xf32>, vector<6x128xf32> -> vector<8x128xf32>
    %c0_13 = arith.constant 0 : index
    %c0_14 = arith.constant 0 : index
    %c0_15 = arith.constant 0 : index
    %19 = vector.load %arg6[%c0_13, %c0_14, %c0_15] : memref<1x8x128xf32, #tpu.memory_space<vmem>>, vector<1x8x128xf32>
    %20 = vector.shape_cast %19 : vector<1x8x128xf32> to vector<8x128xf32>
    %21 = vector.shape_cast %18 : vector<8x128xf32> to vector<1x8x128xf32>
    tpu.vector_store %arg6[%c0_13, %c0_14, %c0_15], %21 {strides = array<i32>} : memref<1x8x128xf32, #tpu.memory_space<vmem>>, vector<1x8x128xf32>,
    return
  }
  func.func @transform_0(%arg0: i32) -> (i32, i32) {
    %c0_i32 = arith.constant 0 : i32
    %c0_i32_0 = arith.constant 0 : i32
    return %arg0, %c0_i32 : i32, i32
  }
  func.func @transform_1(%arg0: i32) -> (i32, i32) {
    %c0_i32 = arith.constant 0 : i32
    %c0_i32_0 = arith.constant 0 : i32
    %c0_i32_1 = arith.constant 0 : i32
    return %c0_i32, %c0_i32_0 : i32, i32
  }
  func.func @transform_2(%arg0: i32) -> (i32, i32) {
    %c0_i32 = arith.constant 0 : i32
    %c0_i32_0 = arith.constant 0 : i32
    %c0_i32_1 = arith.constant 0 : i32
    return %c0_i32, %c0_i32_0 : i32, i32
  }
  func.func @transform_3(%arg0: i32) -> (i32, i32) {
    %c0_i32 = arith.constant 0 : i32
    %c0_i32_0 = arith.constant 0 : i32
    %c0_i32_1 = arith.constant 0 : i32
    return %c0_i32, %c0_i32_0 : i32, i32
  }
  func.func @transform_4(%arg0: i32) -> (i32, i32) {
    %c0_i32 = arith.constant 0 : i32
    %c0_i32_0 = arith.constant 0 : i32
    return %arg0, %c0_i32 : i32, i32
  }
  func.func @transform_5(%arg0: i32) -> (i32, i32, i32) {
    %c0_i32 = arith.constant 0 : i32
    %c0_i32_0 = arith.constant 0 : i32
    %c0_i32_1 = arith.constant 0 : i32
    return %arg0, %c0_i32, %c0_i32_0 : i32, i32, i32
  }
}

</mosaic_0001>

<llo_original>
// kernel: bottleneck_forward.4
$region0: #{bottleneck_forward.4}
  #allocation0 [shape = 'u32[]', space=smem, size = 0x4, offset = 0x4, fixed_abs, tag = 'smem constant byte address 0x4 - core index']
  #allocation1 [shape = 'u32[144,128]{1,0:T(1,128)}', space=vmem, size = 0x12000, scoped, tag = 'internal scratch']
  %s0 = inlined_call_operand.vmem [shape: f32[512,128], index: 0, kind: input, shape index: {}]
  %s1 = inlined_call_operand.vmem [shape: f32[128,128], index: 1, kind: input, shape index: {}]
  %s2 = inlined_call_operand.vmem [shape: f32[512,128], index: 2, kind: output, shape index: {0}]
  %s3 = inlined_call_operand.vmem [shape: f32[1,8,128], index: 3, kind: output, shape index: {1}]
  %4 = xla_tuple %s2, %s3
  %s5 = sld [smem:[#allocation0]]
  $region26: #{bottleneck_forward.4} parent=0
    _
  %s7 = ssub.s32 1, %s5
  %s8 = scalar_select 0, %s7, %s5
  // Predicated region
  $region2: #{bottleneck_forward.4} parent=0 // pred_check
    _
  $region3: #{bottleneck_forward.4} parent=0 // pred_check_branch
    %10 = sbr.rel (0) target = $region5
  $region4: #{bottleneck_forward.4} parent=0 // pred_region
    _
  $region5: #{bottleneck_forward.4} parent=0 // pred_fallthru
    _
  // Predicated region
  $region6: #{bottleneck_forward.4} parent=0 // pred_check
    _
  $region7: #{bottleneck_forward.4} parent=0 // pred_check_branch
    %12 = sbr.rel (0) target = $region9
  $region8: #{bottleneck_forward.4} parent=0 // pred_region
    _
  $region9: #{bottleneck_forward.4} parent=0 // pred_fallthru
    _
  %v13 = vld [vmem:[%s0] sm:$0xff]
  %v14 = vld [vmem:[%s0 + $0x8] sm:$0xff]
  %v15 = vld [vmem:[%s0 + $0x10] sm:$0xff]
  %v16 = vld [vmem:[%s0 + $0x18] sm:$0xff]
  %v17 = vld [vmem:[%s0 + $0x20] sm:$0xff]
  %v18 = vld [vmem:[%s0 + $0x28] sm:$0xff]
  %v19 = vld [vmem:[%s0 + $0x30] sm:$0xff]
  %v20 = vld [vmem:[%s0 + $0x38] sm:$0xff]
  %v21 = vld [vmem:[%s0 + $0x40] sm:$0xff]
  %v22 = vld [vmem:[%s0 + $0x48] sm:$0xff]
  %v23 = vld [vmem:[%s0 + $0x50] sm:$0xff]
  %v24 = vld [vmem:[%s0 + $0x58] sm:$0xff]
  %v25 = vld [vmem:[%s0 + $0x60] sm:$0xff]
  %v26 = vld [vmem:[%s0 + $0x68] sm:$0xff]
  %v27 = vld [vmem:[%s0 + $0x70] sm:$0xff]
  %v28 = vld [vmem:[%s0 + $0x78] sm:$0xff]
  %v29 = vld [vmem:[%s0 + $0x80] sm:$0xff]
  %v30 = vld [vmem:[%s0 + $0x88] sm:$0xff]
  %v31 = vld [vmem:[%s0 + $0x90] sm:$0xff]
  %v32 = vld [vmem:[%s0 + $0x98] sm:$0xff]
  %v33 = vld [vmem:[%s0 + $0xa0] sm:$0xff]
  %v34 = vld [vmem:[%s0 + $0xa8] sm:$0xff]
  %v35 = vld [vmem:[%s0 + $0xb0] sm:$0xff]
  %v36 = vld [vmem:[%s0 + $0xb8] sm:$0xff]
  %v37 = vld [vmem:[%s0 + $0xc0] sm:$0xff]
  %v38 = vld [vmem:[%s0 + $0xc8] sm:$0xff]
  %v39 = vld [vmem:[%s0 + $0xd0] sm:$0xff]
  %v40 = vld [vmem:[%s0 + $0xd8] sm:$0xff]
  %v41 = vld [vmem:[%s0 + $0xe0] sm:$0xff]
  %v42 = vld [vmem:[%s0 + $0xe8] sm:$0xff]
  %v43 = vld [vmem:[%s0 + $0xf0] sm:$0xff]
  %v44 = vld [vmem:[%s0 + $0xf8] sm:$0xff]
  %v45 = vld [vmem:[%s0 + $0x100] sm:$0xff]
  %v46 = vld [vmem:[%s0 + $0x108] sm:$0xff]
  %v47 = vld [vmem:[%s0 + $0x110] sm:$0xff]
  %v48 = vld [vmem:[%s0 + $0x118] sm:$0xff]
  %v49 = vld [vmem:[%s0 + $0x120] sm:$0xff]
  %v50 = vld [vmem:[%s0 + $0x128] sm:$0xff]
  %v51 = vld [vmem:[%s0 + $0x130] sm:$0xff]
  %v52 = vld [vmem:[%s0 + $0x138] sm:$0xff]
  %v53 = vld [vmem:[%s0 + $0x140] sm:$0xff]
  %v54 = vld [vmem:[%s0 + $0x148] sm:$0xff]
  %v55 = vld [vmem:[%s0 + $0x150] sm:$0xff]
  %v56 = vld [vmem:[%s0 + $0x158] sm:$0xff]
  %v57 = vld [vmem:[%s0 + $0x160] sm:$0xff]
  %v58 = vld [vmem:[%s0 + $0x168] sm:$0xff]
  %v59 = vld [vmem:[%s0 + $0x170] sm:$0xff]
  %v60 = vld [vmem:[%s0 + $0x178] sm:$0xff]
  %v61 = vld [vmem:[%s0 + $0x180] sm:$0xff]
  %v62 = vld [vmem:[%s0 + $0x188] sm:$0xff]
  %v63 = vld [vmem:[%s0 + $0x190] sm:$0xff]
  %v64 = vld [vmem:[%s0 + $0x198] sm:$0xff]
  %v65 = vld [vmem:[%s0 + $0x1a0] sm:$0xff]
  %v66 = vld [vmem:[%s0 + $0x1a8] sm:$0xff]
  %v67 = vld [vmem:[%s0 + $0x1b0] sm:$0xff]
  %v68 = vld [vmem:[%s0 + $0x1b8] sm:$0xff]
  %v69 = vld [vmem:[%s0 + $0x1c0] sm:$0xff]
  %v70 = vld [vmem:[%s0 + $0x1c8] sm:$0xff]
  %v71 = vld [vmem:[%s0 + $0x1d0] sm:$0xff]
  %v72 = vld [vmem:[%s0 + $0x1d8] sm:$0xff]
  %v73 = vld [vmem:[%s0 + $0x1e0] sm:$0xff]
  %v74 = vld [vmem:[%s0 + $0x1e8] sm:$0xff]
  %v75 = vld [vmem:[%s0 + $0x1f0] sm:$0xff]
  %v76 = vld [vmem:[%s0 + $0x1f8] sm:$0xff]
  %v77 = vld [vmem:[%s1] sm:$0xff]
  %v78 = vld [vmem:[%s1 + $0x8] sm:$0xff]
  %v79 = vld [vmem:[%s1 + $0x10] sm:$0xff]
  %v80 = vld [vmem:[%s1 + $0x18] sm:$0xff]
  %v81 = vld [vmem:[%s1 + $0x20] sm:$0xff]
  %v82 = vld [vmem:[%s1 + $0x28] sm:$0xff]
  %v83 = vld [vmem:[%s1 + $0x30] sm:$0xff]
  %v84 = vld [vmem:[%s1 + $0x38] sm:$0xff]
  %v85 = vld [vmem:[%s1 + $0x40] sm:$0xff]
  %v86 = vld [vmem:[%s1 + $0x48] sm:$0xff]
  %v87 = vld [vmem:[%s1 + $0x50] sm:$0xff]
  %v88 = vld [vmem:[%s1 + $0x58] sm:$0xff]
  %v89 = vld [vmem:[%s1 + $0x60] sm:$0xff]
  %v90 = vld [vmem:[%s1 + $0x68] sm:$0xff]
  %v91 = vld [vmem:[%s1 + $0x70] sm:$0xff]
  %v92 = vld [vmem:[%s1 + $0x78] sm:$0xff]
  %93 = vmatprep.subr.mxu0 0.0
  %94 = vmatpush1.msra.mxu0 %v92
  %95 = vmatprep.subr.mxu0 0.0
  %96 = vmatpush1.msra.mxu0 %v91
  %97 = vmatprep.subr.mxu0 0.0
  %98 = vmatpush1.msra.mxu0 %v90
  %99 = vmatprep.subr.mxu0 0.0
  %100 = vmatpush1.msra.mxu0 %v89
  %101 = vmatprep.subr.mxu0 0.0
  %102 = vmatpush1.msra.mxu0 %v88
  %103 = vmatprep.subr.mxu0 0.0
  %104 = vmatpush1.msra.mxu0 %v87
  %105 = vmatprep.subr.mxu0 0.0
  %106 = vmatpush1.msra.mxu0 %v86
  %107 = vmatprep.subr.mxu0 0.0
  %108 = vmatpush1.msra.mxu0 %v85
  %109 = vmatprep.subr.mxu0 0.0
  %110 = vmatpush1.msra.mxu0 %v84
  %111 = vmatprep.subr.mxu0 0.0
  %112 = vmatpush1.msra.mxu0 %v83
  %113 = vmatprep.subr.mxu0 0.0
  %114 = vmatpush1.msra.mxu0 %v82
  %115 = vmatprep.subr.mxu0 0.0
  %116 = vmatpush1.msra.mxu0 %v81
  %117 = vmatprep.subr.mxu0 0.0
  %118 = vmatpush1.msra.mxu0 %v80
  %119 = vmatprep.subr.mxu0 0.0
  %120 = vmatpush1.msra.mxu0 %v79
  %121 = vmatprep.subr.mxu0 0.0
  %122 = vmatpush1.msra.mxu0 %v78
  %123 = vmatprep.subr.mxu0 0.0
  %124 = vmatpush1.msra.mxu0 %v77
  %125 = vmatprep.subr.mxu0 0.0
  %126 = vmatpush2.msra.mxu0 0.0
  %127 = vmatprep.subr.mxu0 0.0
  %128 = vmatpush2.msra.mxu0 0.0
  %129 = vmatprep.subr.mxu0 0.0
  %130 = vmatpush2.msra.mxu0 0.0
  %131 = vmatprep.subr.mxu0 0.0
  %132 = vmatpush2.msra.mxu0 0.0
  %133 = vmatprep.subr.mxu0 0.0
  %134 = vmatpush2.msra.mxu0 0.0
  %135 = vmatprep.subr.mxu0 0.0
  %136 = vmatpush2.msra.mxu0 0.0
  %137 = vmatprep.subr.mxu0 0.0
  %138 = vmatpush2.msra.mxu0 0.0
  %139 = vmatprep.subr.mxu0 0.0
  %140 = vmatpush2.msra.mxu0 0.0
  %141 = vmatprep.subr.mxu0 0.0
  %142 = vmatpush2.msra.mxu0 0.0
  %143 = vmatprep.subr.mxu0 0.0
  %144 = vmatpush2.msra.mxu0 0.0
  %145 = vmatprep.subr.mxu0 0.0
  %146 = vmatpush2.msra.mxu0 0.0
  %147 = vmatprep.subr.mxu0 0.0
  %148 = vmatpush2.msra.mxu0 0.0
  %149 = vmatprep.subr.mxu0 0.0
  %150 = vmatpush2.msra.mxu0 0.0
  %151 = vmatprep.subr.mxu0 0.0
  %152 = vmatpush2.msra.mxu0 0.0
  %153 = vmatprep.subr.mxu0 0.0
  %154 = vmatpush2.msra.mxu0 0.0
  %155 = vmatprep.subr.mxu0 0.0
  %156 = vmatpush2.msra.mxu0 0.0
  %157 = vmatprep.mubr.f32.mxu0 0.0
  %158 = vmatmul.mubr.f32.gmra.mxu0 %v13
  %v159 = vpop.f32.mrf.mxu0
  %v160 = vadd.f32 0.0, %v159
  %v161 = vpop.f32.mrf.mxu0
  %162 = vmatprep.mubr.f32.mxu0 0.0
  %163 = vmatmul.mubr.f32.gmra.mxu0 %v14
  %v164 = vpop.f32.mrf.mxu0
  %v165 = vadd.f32 0.0, %v164
  %v166 = vpop.f32.mrf.mxu0
  %167 = vmatprep.mubr.f32.mxu0 0.0
  %168 = vmatmul.mubr.f32.gmra.mxu0 %v15
  %v169 = vpop.f32.mrf.mxu0
  %v170 = vadd.f32 0.0, %v169
  %v171 = vpop.f32.mrf.mxu0
  %172 = vmatprep.mubr.f32.mxu0 0.0
  %173 = vmatmul.mubr.f32.gmra.mxu0 %v16
  %v174 = vpop.f32.mrf.mxu0
  %v175 = vadd.f32 0.0, %v174
  %v176 = vpop.f32.mrf.mxu0
  %177 = vmatprep.mubr.f32.mxu0 0.0
  %178 = vmatmul.mubr.f32.gmra.mxu0 %v17
  %v179 = vpop.f32.mrf.mxu0
  %v180 = vadd.f32 0.0, %v179
  %v181 = vpop.f32.mrf.mxu0
  %182 = vmatprep.mubr.f32.mxu0 0.0
  %183 = vmatmul.mubr.f32.gmra.mxu0 %v18
  %v184 = vpop.f32.mrf.mxu0
  %v185 = vadd.f32 0.0, %v184
  %v186 = vpop.f32.mrf.mxu0
  %187 = vmatprep.mubr.f32.mxu0 0.0
  %188 = vmatmul.mubr.f32.gmra.mxu0 %v19
  %v189 = vpop.f32.mrf.mxu0
  %v190 = vadd.f32 0.0, %v189
  %v191 = vpop.f32.mrf.mxu0
  %192 = vmatprep.mubr.f32.mxu0 0.0
  %193 = vmatmul.mubr.f32.gmra.mxu0 %v20
  %v194 = vpop.f32.mrf.mxu0
  %v195 = vadd.f32 0.0, %v194
  %v196 = vpop.f32.mrf.mxu0
  %197 = vmatprep.mubr.f32.mxu0 0.0
  %198 = vmatmul.mubr.f32.gmra.mxu0 %v21
  %v199 = vpop.f32.mrf.mxu0
  %v200 = vadd.f32 0.0, %v199
  %v201 = vpop.f32.mrf.mxu0
  %202 = vmatprep.mubr.f32.mxu0 0.0
  %203 = vmatmul.mubr.f32.gmra.mxu0 %v22
  %v204 = vpop.f32.mrf.mxu0
  %v205 = vadd.f32 0.0, %v204
  %v206 = vpop.f32.mrf.mxu0
  %207 = vmatprep.mubr.f32.mxu0 0.0
  %208 = vmatmul.mubr.f32.gmra.mxu0 %v23
  %v209 = vpop.f32.mrf.mxu0
  %v210 = vadd.f32 0.0, %v209
  %v211 = vpop.f32.mrf.mxu0
  %212 = vmatprep.mubr.f32.mxu0 0.0
  %213 = vmatmul.mubr.f32.gmra.mxu0 %v24
  %v214 = vpop.f32.mrf.mxu0
  %v215 = vadd.f32 0.0, %v214
  %v216 = vpop.f32.mrf.mxu0
  %217 = vmatprep.mubr.f32.mxu0 0.0
  %218 = vmatmul.mubr.f32.gmra.mxu0 %v25
  %v219 = vpop.f32.mrf.mxu0
  %v220 = vadd.f32 0.0, %v219
  %v221 = vpop.f32.mrf.mxu0
  %222 = vmatprep.mubr.f32.mxu0 0.0
  %223 = vmatmul.mubr.f32.gmra.mxu0 %v26
  %v224 = vpop.f32.mrf.mxu0
  %v225 = vadd.f32 0.0, %v224
  %v226 = vpop.f32.mrf.mxu0
  %227 = vmatprep.mubr.f32.mxu0 0.0
  %228 = vmatmul.mubr.f32.gmra.mxu0 %v27
  %v229 = vpop.f32.mrf.mxu0
  %v230 = vadd.f32 0.0, %v229
  %v231 = vpop.f32.mrf.mxu0
  %232 = vmatprep.mubr.f32.mxu0 0.0
  %233 = vmatmul.mubr.f32.gmra.mxu0 %v28
  %v234 = vpop.f32.mrf.mxu0
  %v235 = vadd.f32 0.0, %v234
  %v236 = vpop.f32.mrf.mxu0
  %237 = vmatprep.mubr.f32.mxu0 0.0
  %238 = vmatmul.mubr.f32.gmra.mxu0 %v29
  %v239 = vpop.f32.mrf.mxu0
  %v240 = vadd.f32 0.0, %v239
  %v241 = vpop.f32.mrf.mxu0
  %242 = vmatprep.mubr.f32.mxu0 0.0
  %243 = vmatmul.mubr.f32.gmra.mxu0 %v30
  %v244 = vpop.f32.mrf.mxu0
  %v245 = vadd.f32 0.0, %v244
  %v246 = vpop.f32.mrf.mxu0
  %247 = vmatprep.mubr.f32.mxu0 0.0
  %248 = vmatmul.mubr.f32.gmra.mxu0 %v31
  %v249 = vpop.f32.mrf.mxu0
  %v250 = vadd.f32 0.0, %v249
  %v251 = vpop.f32.mrf.mxu0
  %252 = vmatprep.mubr.f32.mxu0 0.0
  %253 = vmatmul.mubr.f32.gmra.mxu0 %v32
  %v254 = vpop.f32.mrf.mxu0
  %v255 = vadd.f32 0.0, %v254
  %v256 = vpop.f32.mrf.mxu0
  %257 = vmatprep.mubr.f32.mxu0 0.0
  %258 = vmatmul.mubr.f32.gmra.mxu0 %v33
  %v259 = vpop.f32.mrf.mxu0
  %v260 = vadd.f32 0.0, %v259
  %v261 = vpop.f32.mrf.mxu0
  %262 = vmatprep.mubr.f32.mxu0 0.0
  %263 = vmatmul.mubr.f32.gmra.mxu0 %v34
  %v264 = vpop.f32.mrf.mxu0
  %v265 = vadd.f32 0.0, %v264
  %v266 = vpop.f32.mrf.mxu0
  %267 = vmatprep.mubr.f32.mxu0 0.0
  %268 = vmatmul.mubr.f32.gmra.mxu0 %v35
  %v269 = vpop.f32.mrf.mxu0
  %v270 = vadd.f32 0.0, %v269
  %v271 = vpop.f32.mrf.mxu0
  %272 = vmatprep.mubr.f32.mxu0 0.0
  %273 = vmatmul.mubr.f32.gmra.mxu0 %v36
  %v274 = vpop.f32.mrf.mxu0
  %v275 = vadd.f32 0.0, %v274
  %v276 = vpop.f32.mrf.mxu0
  %277 = vmatprep.mubr.f32.mxu0 0.0
  %278 = vmatmul.mubr.f32.gmra.mxu0 %v37
  %v279 = vpop.f32.mrf.mxu0
  %v280 = vadd.f32 0.0, %v279
  %v281 = vpop.f32.mrf.mxu0
  %282 = vmatprep.mubr.f32.mxu0 0.0
  %283 = vmatmul.mubr.f32.gmra.mxu0 %v38
  %v284 = vpop.f32.mrf.mxu0
  %v285 = vadd.f32 0.0, %v284
  %v286 = vpop.f32.mrf.mxu0
  %287 = vmatprep.mubr.f32.mxu0 0.0
  %288 = vmatmul.mubr.f32.gmra.mxu0 %v39
  %v289 = vpop.f32.mrf.mxu0
  %v290 = vadd.f32 0.0, %v289
  %v291 = vpop.f32.mrf.mxu0
  %292 = vmatprep.mubr.f32.mxu0 0.0
  %293 = vmatmul.mubr.f32.gmra.mxu0 %v40
  %v294 = vpop.f32.mrf.mxu0
  %v295 = vadd.f32 0.0, %v294
  %v296 = vpop.f32.mrf.mxu0
  %297 = vmatprep.mubr.f32.mxu0 0.0
  %298 = vmatmul.mubr.f32.gmra.mxu0 %v41
  %v299 = vpop.f32.mrf.mxu0
  %v300 = vadd.f32 0.0, %v299
  %v301 = vpop.f32.mrf.mxu0
  %302 = vmatprep.mubr.f32.mxu0 0.0
  %303 = vmatmul.mubr.f32.gmra.mxu0 %v42
  %v304 = vpop.f32.mrf.mxu0
  %v305 = vadd.f32 0.0, %v304
  %v306 = vpop.f32.mrf.mxu0
  %307 = vmatprep.mubr.f32.mxu0 0.0
  %308 = vmatmul.mubr.f32.gmra.mxu0 %v43
  %v309 = vpop.f32.mrf.mxu0
  %v310 = vadd.f32 0.0, %v309
  %v311 = vpop.f32.mrf.mxu0
  %312 = vmatprep.mubr.f32.mxu0 0.0
  %313 = vmatmul.mubr.f32.gmra.mxu0 %v44
  %v314 = vpop.f32.mrf.mxu0
  %v315 = vadd.f32 0.0, %v314
  %v316 = vpop.f32.mrf.mxu0
  %317 = vmatprep.mubr.f32.mxu0 0.0
  %318 = vmatmul.mubr.f32.gmra.mxu0 %v45
  %v319 = vpop.f32.mrf.mxu0
  %v320 = vadd.f32 0.0, %v319
  %v321 = vpop.f32.mrf.mxu0
  %322 = vmatprep.mubr.f32.mxu0 0.0
  %323 = vmatmul.mubr.f32.gmra.mxu0 %v46
  %v324 = vpop.f32.mrf.mxu0
  %v325 = vadd.f32 0.0, %v324
  %v326 = vpop.f32.mrf.mxu0
  %327 = vmatprep.mubr.f32.mxu0 0.0
  %328 = vmatmul.mubr.f32.gmra.mxu0 %v47
  %v329 = vpop.f32.mrf.mxu0
  %v330 = vadd.f32 0.0, %v329
  %v331 = vpop.f32.mrf.mxu0
  %332 = vmatprep.mubr.f32.mxu0 0.0
  %333 = vmatmul.mubr.f32.gmra.mxu0 %v48
  %v334 = vpop.f32.mrf.mxu0
  %v335 = vadd.f32 0.0, %v334
  %v336 = vpop.f32.mrf.mxu0
  %337 = vmatprep.mubr.f32.mxu0 0.0
  %338 = vmatmul.mubr.f32.gmra.mxu0 %v49
  %v339 = vpop.f32.mrf.mxu0
  %v340 = vadd.f32 0.0, %v339
  %v341 = vpop.f32.mrf.mxu0
  %342 = vmatprep.mubr.f32.mxu0 0.0
  %343 = vmatmul.mubr.f32.gmra.mxu0 %v50
  %v344 = vpop.f32.mrf.mxu0
  %v345 = vadd.f32 0.0, %v344
  %v346 = vpop.f32.mrf.mxu0
  %347 = vmatprep.mubr.f32.mxu0 0.0
  %348 = vmatmul.mubr.f32.gmra.mxu0 %v51
  %v349 = vpop.f32.mrf.mxu0
  %v350 = vadd.f32 0.0, %v349
  %v351 = vpop.f32.mrf.mxu0
  %352 = vmatprep.mubr.f32.mxu0 0.0
  %353 = vmatmul.mubr.f32.gmra.mxu0 %v52
  %v354 = vpop.f32.mrf.mxu0
  %v355 = vadd.f32 0.0, %v354
  %v356 = vpop.f32.mrf.mxu0
  %357 = vmatprep.mubr.f32.mxu0 0.0
  %358 = vmatmul.mubr.f32.gmra.mxu0 %v53
  %v359 = vpop.f32.mrf.mxu0
  %v360 = vadd.f32 0.0, %v359
  %v361 = vpop.f32.mrf.mxu0
  %362 = vmatprep.mubr.f32.mxu0 0.0
  %363 = vmatmul.mubr.f32.gmra.mxu0 %v54
  %v364 = vpop.f32.mrf.mxu0
  %v365 = vadd.f32 0.0, %v364
  %v366 = vpop.f32.mrf.mxu0
  %367 = vmatprep.mubr.f32.mxu0 0.0
  %368 = vmatmul.mubr.f32.gmra.mxu0 %v55
  %v369 = vpop.f32.mrf.mxu0
  %v370 = vadd.f32 0.0, %v369
  %v371 = vpop.f32.mrf.mxu0
  %372 = vmatprep.mubr.f32.mxu0 0.0
  %373 = vmatmul.mubr.f32.gmra.mxu0 %v56
  %v374 = vpop.f32.mrf.mxu0
  %v375 = vadd.f32 0.0, %v374
  %v376 = vpop.f32.mrf.mxu0
  %377 = vmatprep.mubr.f32.mxu0 0.0
  %378 = vmatmul.mubr.f32.gmra.mxu0 %v57
  %v379 = vpop.f32.mrf.mxu0
  %v380 = vadd.f32 0.0, %v379
  %v381 = vpop.f32.mrf.mxu0
  %382 = vmatprep.mubr.f32.mxu0 0.0
  %383 = vmatmul.mubr.f32.gmra.mxu0 %v58
  %v384 = vpop.f32.mrf.mxu0
  %v385 = vadd.f32 0.0, %v384
  %v386 = vpop.f32.mrf.mxu0
  %387 = vmatprep.mubr.f32.mxu0 0.0
  %388 = vmatmul.mubr.f32.gmra.mxu0 %v59
  %v389 = vpop.f32.mrf.mxu0
  %v390 = vadd.f32 0.0, %v389
  %v391 = vpop.f32.mrf.mxu0
  %392 = vmatprep.mubr.f32.mxu0 0.0
  %393 = vmatmul.mubr.f32.gmra.mxu0 %v60
  %v394 = vpop.f32.mrf.mxu0
  %v395 = vadd.f32 0.0, %v394
  %v396 = vpop.f32.mrf.mxu0
  %397 = vmatprep.mubr.f32.mxu0 0.0
  %398 = vmatmul.mubr.f32.gmra.mxu0 %v61
  %v399 = vpop.f32.mrf.mxu0
  %v400 = vadd.f32 0.0, %v399
  %v401 = vpop.f32.mrf.mxu0
  %402 = vmatprep.mubr.f32.mxu0 0.0
  %403 = vmatmul.mubr.f32.gmra.mxu0 %v62
  %v404 = vpop.f32.mrf.mxu0
  %v405 = vadd.f32 0.0, %v404
  %v406 = vpop.f32.mrf.mxu0
  %407 = vmatprep.mubr.f32.mxu0 0.0
  %408 = vmatmul.mubr.f32.gmra.mxu0 %v63
  %v409 = vpop.f32.mrf.mxu0
  %v410 = vadd.f32 0.0, %v409
  %v411 = vpop.f32.mrf.mxu0
  %412 = vmatprep.mubr.f32.mxu0 0.0
  %413 = vmatmul.mubr.f32.gmra.mxu0 %v64
  %v414 = vpop.f32.mrf.mxu0
  %v415 = vadd.f32 0.0, %v414
  %v416 = vpop.f32.mrf.mxu0
  %417 = vmatprep.mubr.f32.mxu0 0.0
  %418 = vmatmul.mubr.f32.gmra.mxu0 %v65
  %v419 = vpop.f32.mrf.mxu0
  %v420 = vadd.f32 0.0, %v419
  %v421 = vpop.f32.mrf.mxu0
  %422 = vmatprep.mubr.f32.mxu0 0.0
  %423 = vmatmul.mubr.f32.gmra.mxu0 %v66
  %v424 = vpop.f32.mrf.mxu0
  %v425 = vadd.f32 0.0, %v424
  %v426 = vpop.f32.mrf.mxu0
  %427 = vmatprep.mubr.f32.mxu0 0.0
  %428 = vmatmul.mubr.f32.gmra.mxu0 %v67
  %v429 = vpop.f32.mrf.mxu0
  %v430 = vadd.f32 0.0, %v429
  %v431 = vpop.f32.mrf.mxu0
  %432 = vmatprep.mubr.f32.mxu0 0.0
  %433 = vmatmul.mubr.f32.gmra.mxu0 %v68
  %v434 = vpop.f32.mrf.mxu0
  %v435 = vadd.f32 0.0, %v434
  %v436 = vpop.f32.mrf.mxu0
  %437 = vmatprep.mubr.f32.mxu0 0.0
  %438 = vmatmul.mubr.f32.gmra.mxu0 %v69
  %v439 = vpop.f32.mrf.mxu0
  %v440 = vadd.f32 0.0, %v439
  %v441 = vpop.f32.mrf.mxu0
  %442 = vmatprep.mubr.f32.mxu0 0.0
  %443 = vmatmul.mubr.f32.gmra.mxu0 %v70
  %v444 = vpop.f32.mrf.mxu0
  %v445 = vadd.f32 0.0, %v444
  %v446 = vpop.f32.mrf.mxu0
  %447 = vmatprep.mubr.f32.mxu0 0.0
  %448 = vmatmul.mubr.f32.gmra.mxu0 %v71
  %v449 = vpop.f32.mrf.mxu0
  %v450 = vadd.f32 0.0, %v449
  %v451 = vpop.f32.mrf.mxu0
  %452 = vmatprep.mubr.f32.mxu0 0.0
  %453 = vmatmul.mubr.f32.gmra.mxu0 %v72
  %v454 = vpop.f32.mrf.mxu0
  %v455 = vadd.f32 0.0, %v454
  %v456 = vpop.f32.mrf.mxu0
  %457 = vmatprep.mubr.f32.mxu0 0.0
  %458 = vmatmul.mubr.f32.gmra.mxu0 %v73
  %v459 = vpop.f32.mrf.mxu0
  %v460 = vadd.f32 0.0, %v459
  %v461 = vpop.f32.mrf.mxu0
  %462 = vmatprep.mubr.f32.mxu0 0.0
  %463 = vmatmul.mubr.f32.gmra.mxu0 %v74
  %v464 = vpop.f32.mrf.mxu0
  %v465 = vadd.f32 0.0, %v464
  %v466 = vpop.f32.mrf.mxu0
  %467 = vmatprep.mubr.f32.mxu0 0.0
  %468 = vmatmul.mubr.f32.gmra.mxu0 %v75
  %v469 = vpop.f32.mrf.mxu0
  %v470 = vadd.f32 0.0, %v469
  %v471 = vpop.f32.mrf.mxu0
  %472 = vmatprep.mubr.f32.mxu0 0.0
  %473 = vmatmul.mubr.f32.gmra.mxu0 %v76
  %v474 = vpop.f32.mrf.mxu0
  %v475 = vadd.f32 0.0, %v474
  %v476 = vpop.f32.mrf.mxu0
  %477 = vdwg.mxu0
  %478 = vst [vmem:[%s2] sm:$0xff] %v160
  %479 = vst [vmem:[%s2 + $0x8] sm:$0xff] %v165
  %480 = vst [vmem:[%s2 + $0x10] sm:$0xff] %v170
  %481 = vst [vmem:[%s2 + $0x18] sm:$0xff] %v175
  %482 = vst [vmem:[%s2 + $0x20] sm:$0xff] %v180
  %483 = vst [vmem:[%s2 + $0x28] sm:$0xff] %v185
  %484 = vst [vmem:[%s2 + $0x30] sm:$0xff] %v190
  %485 = vst [vmem:[%s2 + $0x38] sm:$0xff] %v195
  %486 = vst [vmem:[%s2 + $0x40] sm:$0xff] %v200
  %487 = vst [vmem:[%s2 + $0x48] sm:$0xff] %v205
  %488 = vst [vmem:[%s2 + $0x50] sm:$0xff] %v210
  %489 = vst [vmem:[%s2 + $0x58] sm:$0xff] %v215
  %490 = vst [vmem:[%s2 + $0x60] sm:$0xff] %v220
  %491 = vst [vmem:[%s2 + $0x68] sm:$0xff] %v225
  %492 = vst [vmem:[%s2 + $0x70] sm:$0xff] %v230
  %493 = vst [vmem:[%s2 + $0x78] sm:$0xff] %v235
  %494 = vst [vmem:[%s2 + $0x80] sm:$0xff] %v240
  %495 = vst [vmem:[%s2 + $0x88] sm:$0xff] %v245
  %496 = vst [vmem:[%s2 + $0x90] sm:$0xff] %v250
  %497 = vst [vmem:[%s2 + $0x98] sm:$0xff] %v255
  %498 = vst [vmem:[%s2 + $0xa0] sm:$0xff] %v260
  %499 = vst [vmem:[%s2 + $0xa8] sm:$0xff] %v265
  %500 = vst [vmem:[%s2 + $0xb0] sm:$0xff] %v270
  %501 = vst [vmem:[%s2 + $0xb8] sm:$0xff] %v275
  %502 = vst [vmem:[%s2 + $0xc0] sm:$0xff] %v280
  %503 = vst [vmem:[%s2 + $0xc8] sm:$0xff] %v285
  %504 = vst [vmem:[%s2 + $0xd0] sm:$0xff] %v290
  %505 = vst [vmem:[%s2 + $0xd8] sm:$0xff] %v295
  %506 = vst [vmem:[%s2 + $0xe0] sm:$0xff] %v300
  %507 = vst [vmem:[%s2 + $0xe8] sm:$0xff] %v305
  %508 = vst [vmem:[%s2 + $0xf0] sm:$0xff] %v310
  %509 = vst [vmem:[%s2 + $0xf8] sm:$0xff] %v315
  %510 = vst [vmem:[%s2 + $0x100] sm:$0xff] %v320
  %511 = vst [vmem:[%s2 + $0x108] sm:$0xff] %v325
  %512 = vst [vmem:[%s2 + $0x110] sm:$0xff] %v330
  %513 = vst [vmem:[%s2 + $0x118] sm:$0xff] %v335
  %514 = vst [vmem:[%s2 + $0x120] sm:$0xff] %v340
  %515 = vst [vmem:[%s2 + $0x128] sm:$0xff] %v345
  %516 = vst [vmem:[%s2 + $0x130] sm:$0xff] %v350
  %517 = vst [vmem:[%s2 + $0x138] sm:$0xff] %v355
  %518 = vst [vmem:[%s2 + $0x140] sm:$0xff] %v360
  %519 = vst [vmem:[%s2 + $0x148] sm:$0xff] %v365
  %520 = vst [vmem:[%s2 + $0x150] sm:$0xff] %v370
  %521 = vst [vmem:[%s2 + $0x158] sm:$0xff] %v375
  %522 = vst [vmem:[%s2 + $0x160] sm:$0xff] %v380
  %523 = vst [vmem:[%s2 + $0x168] sm:$0xff] %v385
  %524 = vst [vmem:[%s2 + $0x170] sm:$0xff] %v390
  %525 = vst [vmem:[%s2 + $0x178] sm:$0xff] %v395
  %526 = vst [vmem:[%s2 + $0x180] sm:$0xff] %v400
  %527 = vst [vmem:[%s2 + $0x188] sm:$0xff] %v405
  %528 = vst [vmem:[%s2 + $0x190] sm:$0xff] %v410
  %529 = vst [vmem:[%s2 + $0x198] sm:$0xff] %v415
  %530 = vst [vmem:[%s2 + $0x1a0] sm:$0xff] %v420
  %531 = vst [vmem:[%s2 + $0x1a8] sm:$0xff] %v425
  %532 = vst [vmem:[%s2 + $0x1b0] sm:$0xff] %v430
  %533 = vst [vmem:[%s2 + $0x1b8] sm:$0xff] %v435
  %534 = vst [vmem:[%s2 + $0x1c0] sm:$0xff] %v440
  %535 = vst [vmem:[%s2 + $0x1c8] sm:$0xff] %v445
  %536 = vst [vmem:[%s2 + $0x1d0] sm:$0xff] %v450
  %537 = vst [vmem:[%s2 + $0x1d8] sm:$0xff] %v455
  %538 = vst [vmem:[%s2 + $0x1e0] sm:$0xff] %v460
  %539 = vst [vmem:[%s2 + $0x1e8] sm:$0xff] %v465
  %540 = vst [vmem:[%s2 + $0x1f0] sm:$0xff] %v470
  %541 = vst [vmem:[%s2 + $0x1f8] sm:$0xff] %v475
  %v542 = vadd.f32 %v160, %v165
  %v543 = vadd.f32 %v542, %v170
  %v544 = vadd.f32 %v543, %v175
  %v545 = vadd.f32 %v544, %v180
  %v546 = vadd.f32 %v545, %v185
  %v547 = vadd.f32 %v546, %v190
  %v548 = vadd.f32 %v547, %v195
  %v549 = vadd.f32 %v548, %v200
  %v550 = vadd.f32 %v549, %v205
  %v551 = vadd.f32 %v550, %v210
  %v552 = vadd.f32 %v551, %v215
  %v553 = vadd.f32 %v552, %v220
  %v554 = vadd.f32 %v553, %v225
  %v555 = vadd.f32 %v554, %v230
  %v556 = vadd.f32 %v555, %v235
  %v557 = vadd.f32 %v556, %v240
  %v558 = vadd.f32 %v557, %v245
  %v559 = vadd.f32 %v558, %v250
  %v560 = vadd.f32 %v559, %v255
  %v561 = vadd.f32 %v560, %v260
  %v562 = vadd.f32 %v561, %v265
  %v563 = vadd.f32 %v562, %v270
  %v564 = vadd.f32 %v563, %v275
  %v565 = vadd.f32 %v564, %v280
  %v566 = vadd.f32 %v565, %v285
  %v567 = vadd.f32 %v566, %v290
  %v568 = vadd.f32 %v567, %v295
  %v569 = vadd.f32 %v568, %v300
  %v570 = vadd.f32 %v569, %v305
  %v571 = vadd.f32 %v570, %v310
  %v572 = vadd.f32 %v571, %v315
  %v573 = vadd.f32 %v572, %v320
  %v574 = vadd.f32 %v573, %v325
  %v575 = vadd.f32 %v574, %v330
  %v576 = vadd.f32 %v575, %v335
  %v577 = vadd.f32 %v576, %v340
  %v578 = vadd.f32 %v577, %v345
  %v579 = vadd.f32 %v578, %v350
  %v580 = vadd.f32 %v579, %v355
  %v581 = vadd.f32 %v580, %v360
  %v582 = vadd.f32 %v581, %v365
  %v583 = vadd.f32 %v582, %v370
  %v584 = vadd.f32 %v583, %v375
  %v585 = vadd.f32 %v584, %v380
  %v586 = vadd.f32 %v585, %v385
  %v587 = vadd.f32 %v586, %v390
  %v588 = vadd.f32 %v587, %v395
  %v589 = vadd.f32 %v588, %v400
  %v590 = vadd.f32 %v589, %v405
  %v591 = vadd.f32 %v590, %v410
  %v592 = vadd.f32 %v591, %v415
  %v593 = vadd.f32 %v592, %v420
  %v594 = vadd.f32 %v593, %v425
  %v595 = vadd.f32 %v594, %v430
  %v596 = vadd.f32 %v595, %v435
  %v597 = vadd.f32 %v596, %v440
  %v598 = vadd.f32 %v597, %v445
  %v599 = vadd.f32 %v598, %v450
  %v600 = vadd.f32 %v599, %v455
  %v601 = vadd.f32 %v600, %v460
  %v602 = vadd.f32 %v601, %v465
  %v603 = vadd.f32 %v602, %v470
  %v604 = vadd.f32 %v603, %v475
  %v605 = vrot.slane %v604, 4
  %v606 = vadd.f32 %v604, %v605
  %v607 = vrot.slane %v606, 2
  %v608 = vadd.f32 %v606, %v607
  %v609 = vrot.slane %v608, 1
  %v610 = vadd.f32 %v608, %v609
  %v611 = vmul.f32 %v160, %v160
  %v612 = vmul.f32 %v165, %v165
  %v613 = vmul.f32 %v170, %v170
  %v614 = vmul.f32 %v175, %v175
  %v615 = vmul.f32 %v180, %v180
  %v616 = vmul.f32 %v185, %v185
  %v617 = vmul.f32 %v190, %v190
  %v618 = vmul.f32 %v195, %v195
  %v619 = vmul.f32 %v200, %v200
  %v620 = vmul.f32 %v205, %v205
  %v621 = vmul.f32 %v210, %v210
  %v622 = vmul.f32 %v215, %v215
  %v623 = vmul.f32 %v220, %v220
  %v624 = vmul.f32 %v225, %v225
  %v625 = vmul.f32 %v230, %v230
  %v626 = vmul.f32 %v235, %v235
  %v627 = vmul.f32 %v240, %v240
  %v628 = vmul.f32 %v245, %v245
  %v629 = vmul.f32 %v250, %v250
  %v630 = vmul.f32 %v255, %v255
  %v631 = vmul.f32 %v260, %v260
  %v632 = vmul.f32 %v265, %v265
  %v633 = vmul.f32 %v270, %v270
  %v634 = vmul.f32 %v275, %v275
  %v635 = vmul.f32 %v280, %v280
  %v636 = vmul.f32 %v285, %v285
  %v637 = vmul.f32 %v290, %v290
  %v638 = vmul.f32 %v295, %v295
  %v639 = vmul.f32 %v300, %v300
  %v640 = vmul.f32 %v305, %v305
  %v641 = vmul.f32 %v310, %v310
  %v642 = vmul.f32 %v315, %v315
  %v643 = vmul.f32 %v320, %v320
  %v644 = vmul.f32 %v325, %v325
  %v645 = vmul.f32 %v330, %v330
  %v646 = vmul.f32 %v335, %v335
  %v647 = vmul.f32 %v340, %v340
  %v648 = vmul.f32 %v345, %v345
  %v649 = vmul.f32 %v350, %v350
  %v650 = vmul.f32 %v355, %v355
  %v651 = vmul.f32 %v360, %v360
  %v652 = vmul.f32 %v365, %v365
  %v653 = vmul.f32 %v370, %v370
  %v654 = vmul.f32 %v375, %v375
  %v655 = vmul.f32 %v380, %v380
  %v656 = vmul.f32 %v385, %v385
  %v657 = vmul.f32 %v390, %v390
  %v658 = vmul.f32 %v395, %v395
  %v659 = vmul.f32 %v400, %v400
  %v660 = vmul.f32 %v405, %v405
  %v661 = vmul.f32 %v410, %v410
  %v662 = vmul.f32 %v415, %v415
  %v663 = vmul.f32 %v420, %v420
  %v664 = vmul.f32 %v425, %v425
  %v665 = vmul.f32 %v430, %v430
  %v666 = vmul.f32 %v435, %v435
  %v667 = vmul.f32 %v440, %v440
  %v668 = vmul.f32 %v445, %v445
  %v669 = vmul.f32 %v450, %v450
  %v670 = vmul.f32 %v455, %v455
  %v671 = vmul.f32 %v460, %v460
  %v672 = vmul.f32 %v465, %v465
  %v673 = vmul.f32 %v470, %v470
  %v674 = vmul.f32 %v475, %v475
  %v675 = vadd.f32 %v611, %v612
  %v676 = vadd.f32 %v675, %v613
  %v677 = vadd.f32 %v676, %v614
  %v678 = vadd.f32 %v677, %v615
  %v679 = vadd.f32 %v678, %v616
  %v680 = vadd.f32 %v679, %v617
  %v681 = vadd.f32 %v680, %v618
  %v682 = vadd.f32 %v681, %v619
  %v683 = vadd.f32 %v682, %v620
  %v684 = vadd.f32 %v683, %v621
  %v685 = vadd.f32 %v684, %v622
  %v686 = vadd.f32 %v685, %v623
  %v687 = vadd.f32 %v686, %v624
  %v688 = vadd.f32 %v687, %v625
  %v689 = vadd.f32 %v688, %v626
  %v690 = vadd.f32 %v689, %v627
  %v691 = vadd.f32 %v690, %v628
  %v692 = vadd.f32 %v691, %v629
  %v693 = vadd.f32 %v692, %v630
  %v694 = vadd.f32 %v693, %v631
  %v695 = vadd.f32 %v694, %v632
  %v696 = vadd.f32 %v695, %v633
  %v697 = vadd.f32 %v696, %v634
  %v698 = vadd.f32 %v697, %v635
  %v699 = vadd.f32 %v698, %v636
  %v700 = vadd.f32 %v699, %v637
  %v701 = vadd.f32 %v700, %v638
  %v702 = vadd.f32 %v701, %v639
  %v703 = vadd.f32 %v702, %v640
  %v704 = vadd.f32 %v703, %v641
  %v705 = vadd.f32 %v704, %v642
  %v706 = vadd.f32 %v705, %v643
  %v707 = vadd.f32 %v706, %v644
  %v708 = vadd.f32 %v707, %v645
  %v709 = vadd.f32 %v708, %v646
  %v710 = vadd.f32 %v709, %v647
  %v711 = vadd.f32 %v710, %v648
  %v712 = vadd.f32 %v711, %v649
  %v713 = vadd.f32 %v712, %v650
  %v714 = vadd.f32 %v713, %v651
  %v715 = vadd.f32 %v714, %v652
  %v716 = vadd.f32 %v715, %v653
  %v717 = vadd.f32 %v716, %v654
  %v718 = vadd.f32 %v717, %v655
  %v719 = vadd.f32 %v718, %v656
  %v720 = vadd.f32 %v719, %v657
  %v721 = vadd.f32 %v720, %v658
  %v722 = vadd.f32 %v721, %v659
  %v723 = vadd.f32 %v722, %v660
  %v724 = vadd.f32 %v723, %v661
  %v725 = vadd.f32 %v724, %v662
  %v726 = vadd.f32 %v725, %v663
  %v727 = vadd.f32 %v726, %v664
  %v728 = vadd.f32 %v727, %v665
  %v729 = vadd.f32 %v728, %v666
  %v730 = vadd.f32 %v729, %v667
  %v731 = vadd.f32 %v730, %v668
  %v732 = vadd.f32 %v731, %v669
  %v733 = vadd.f32 %v732, %v670
  %v734 = vadd.f32 %v733, %v671
  %v735 = vadd.f32 %v734, %v672
  %v736 = vadd.f32 %v735, %v673
  %v737 = vadd.f32 %v736, %v674
  %v738 = vrot.slane %v737, 4
  %v739 = vadd.f32 %v737, %v738
  %v740 = vrot.slane %v739, 2
  %v741 = vadd.f32 %v739, %v740
  %v742 = vrot.slane %v741, 1
  %v743 = vadd.f32 %v741, %v742
  %vm744 = vcmask 1040384
  %v745 = vsel %vm744, %v610, %v743
  %vm746 = vcmask 1041408
  %v747 = vsel %vm746, %v745, 0.0
  %748 = vst [vmem:[%s3] sm:$0xff] %v747
  // Predicated region
  $region10: #{bottleneck_forward.4} parent=0 // pred_check
    _
  $region11: #{bottleneck_forward.4} parent=0 // pred_check_branch
    %750 = sbr.rel (0) target = $region13
  $region12: #{bottleneck_forward.4} parent=0 // pred_region
    _
  $region13: #{bottleneck_forward.4} parent=0 // pred_fallthru
    _
  // Predicated region
  $region14: #{bottleneck_forward.4} parent=0 // pred_check
    _
  $region15: #{bottleneck_forward.4} parent=0 // pred_check_branch
    %752 = sbr.rel (0) target = $region17
  $region16: #{bottleneck_forward.4} parent=0 // pred_region
    _
  $region17: #{bottleneck_forward.4} parent=0 // pred_fallthru
    _
  // Predicated region
  $region18: #{bottleneck_forward.4} parent=0 // pred_check
    _
  $region19: #{bottleneck_forward.4} parent=0 // pred_check_branch
    %754 = sbr.rel (0) target = $region21
  $region20: #{bottleneck_forward.4} parent=0 // pred_region
    _
  $region21: #{bottleneck_forward.4} parent=0 // pred_fallthru
    _
  // Predicated region
  $region22: #{bottleneck_forward.4} parent=0 // pred_check
    _
  $region23: #{bottleneck_forward.4} parent=0 // pred_check_branch
    %756 = sbr.rel (0) target = $region25
  $region24: #{bottleneck_forward.4} parent=0 // pred_region
    _
  $region25: #{bottleneck_forward.4} parent=0 // pred_fallthru
    _

// kernel: bottleneck_forward.7
$region0: #{bottleneck_forward.7}
  #allocation0 [shape = 'u32[]', space=smem, size = 0x4, offset = 0x4, fixed_abs, tag = 'smem constant byte address 0x4 - core index']
  #allocation1 [shape = 'u32[144,128]{1,0:T(1,128)}', space=vmem, size = 0x12000, scoped, tag = 'internal scratch']
  %s0 = inlined_call_operand.vmem [shape: f32[512,128], index: 0, kind: input, shape index: {}]
  %s1 = inlined_call_operand.vmem [shape: f32[512,128], index: 1, kind: input, shape index: {}]
  %s2 = inlined_call_operand.vmem [shape: f32[1,128], index: 2, kind: input, shape index: {}]
  %s3 = inlined_call_operand.vmem [shape: f32[1,128], index: 3, kind: input, shape index: {}]
  %s4 = inlined_call_operand.vmem [shape: f32[512,128], index: 4, kind: output, shape index: {}]
  %s5 = sld [smem:[#allocation0]]
  $region26: #{bottleneck_forward.7} parent=0
    _
  %s7 = ssub.s32 1, %s5
  %s8 = scalar_select 0, %s7, %s5
  // Predicated region
  $region2: #{bottleneck_forward.7} parent=0 // pred_check
    _
  $region3: #{bottleneck_forward.7} parent=0 // pred_check_branch
    %10 = sbr.rel (0) target = $region5
  $region4: #{bottleneck_forward.7} parent=0 // pred_region
    _
  $region5: #{bottleneck_forward.7} parent=0 // pred_fallthru
    _
  // Predicated region
  $region6: #{bottleneck_forward.7} parent=0 // pred_check
    _
  $region7: #{bottleneck_forward.7} parent=0 // pred_check_branch
    %12 = sbr.rel (0) target = $region9
  $region8: #{bottleneck_forward.7} parent=0 // pred_region
    _
  $region9: #{bottleneck_forward.7} parent=0 // pred_fallthru
    _
  // Predicated region
  $region10: #{bottleneck_forward.7} parent=0 // pred_check
    _
  $region11: #{bottleneck_forward.7} parent=0 // pred_check_branch
    %14 = sbr.rel (0) target = $region13
  $region12: #{bottleneck_forward.7} parent=0 // pred_region
    _
  $region13: #{bottleneck_forward.7} parent=0 // pred_fallthru
    _
  // Predicated region
  $region14: #{bottleneck_forward.7} parent=0 // pred_check
    _
  $region15: #{bottleneck_forward.7} parent=0 // pred_check_branch
    %16 = sbr.rel (0) target = $region17
  $region16: #{bottleneck_forward.7} parent=0 // pred_region
    _
  $region17: #{bottleneck_forward.7} parent=0 // pred_fallthru
    _
  %v17 = vld [vmem:[%s0] sm:$0xff]
  %v18 = vld [vmem:[%s0 + $0x8] sm:$0xff]
  %v19 = vld [vmem:[%s0 + $0x10] sm:$0xff]
  %v20 = vld [vmem:[%s0 + $0x18] sm:$0xff]
  %v21 = vld [vmem:[%s0 + $0x20] sm:$0xff]
  %v22 = vld [vmem:[%s0 + $0x28] sm:$0xff]
  %v23 = vld [vmem:[%s0 + $0x30] sm:$0xff]
  %v24 = vld [vmem:[%s0 + $0x38] sm:$0xff]
  %v25 = vld [vmem:[%s0 + $0x40] sm:$0xff]
  %v26 = vld [vmem:[%s0 + $0x48] sm:$0xff]
  %v27 = vld [vmem:[%s0 + $0x50] sm:$0xff]
  %v28 = vld [vmem:[%s0 + $0x58] sm:$0xff]
  %v29 = vld [vmem:[%s0 + $0x60] sm:$0xff]
  %v30 = vld [vmem:[%s0 + $0x68] sm:$0xff]
  %v31 = vld [vmem:[%s0 + $0x70] sm:$0xff]
  %v32 = vld [vmem:[%s0 + $0x78] sm:$0xff]
  %v33 = vld [vmem:[%s0 + $0x80] sm:$0xff]
  %v34 = vld [vmem:[%s0 + $0x88] sm:$0xff]
  %v35 = vld [vmem:[%s0 + $0x90] sm:$0xff]
  %v36 = vld [vmem:[%s0 + $0x98] sm:$0xff]
  %v37 = vld [vmem:[%s0 + $0xa0] sm:$0xff]
  %v38 = vld [vmem:[%s0 + $0xa8] sm:$0xff]
  %v39 = vld [vmem:[%s0 + $0xb0] sm:$0xff]
  %v40 = vld [vmem:[%s0 + $0xb8] sm:$0xff]
  %v41 = vld [vmem:[%s0 + $0xc0] sm:$0xff]
  %v42 = vld [vmem:[%s0 + $0xc8] sm:$0xff]
  %v43 = vld [vmem:[%s0 + $0xd0] sm:$0xff]
  %v44 = vld [vmem:[%s0 + $0xd8] sm:$0xff]
  %v45 = vld [vmem:[%s0 + $0xe0] sm:$0xff]
  %v46 = vld [vmem:[%s0 + $0xe8] sm:$0xff]
  %v47 = vld [vmem:[%s0 + $0xf0] sm:$0xff]
  %v48 = vld [vmem:[%s0 + $0xf8] sm:$0xff]
  %v49 = vld [vmem:[%s0 + $0x100] sm:$0xff]
  %v50 = vld [vmem:[%s0 + $0x108] sm:$0xff]
  %v51 = vld [vmem:[%s0 + $0x110] sm:$0xff]
  %v52 = vld [vmem:[%s0 + $0x118] sm:$0xff]
  %v53 = vld [vmem:[%s0 + $0x120] sm:$0xff]
  %v54 = vld [vmem:[%s0 + $0x128] sm:$0xff]
  %v55 = vld [vmem:[%s0 + $0x130] sm:$0xff]
  %v56 = vld [vmem:[%s0 + $0x138] sm:$0xff]
  %v57 = vld [vmem:[%s0 + $0x140] sm:$0xff]
  %v58 = vld [vmem:[%s0 + $0x148] sm:$0xff]
  %v59 = vld [vmem:[%s0 + $0x150] sm:$0xff]
  %v60 = vld [vmem:[%s0 + $0x158] sm:$0xff]
  %v61 = vld [vmem:[%s0 + $0x160] sm:$0xff]
  %v62 = vld [vmem:[%s0 + $0x168] sm:$0xff]
  %v63 = vld [vmem:[%s0 + $0x170] sm:$0xff]
  %v64 = vld [vmem:[%s0 + $0x178] sm:$0xff]
  %v65 = vld [vmem:[%s0 + $0x180] sm:$0xff]
  %v66 = vld [vmem:[%s0 + $0x188] sm:$0xff]
  %v67 = vld [vmem:[%s0 + $0x190] sm:$0xff]
  %v68 = vld [vmem:[%s0 + $0x198] sm:$0xff]
  %v69 = vld [vmem:[%s0 + $0x1a0] sm:$0xff]
  %v70 = vld [vmem:[%s0 + $0x1a8] sm:$0xff]
  %v71 = vld [vmem:[%s0 + $0x1b0] sm:$0xff]
  %v72 = vld [vmem:[%s0 + $0x1b8] sm:$0xff]
  %v73 = vld [vmem:[%s0 + $0x1c0] sm:$0xff]
  %v74 = vld [vmem:[%s0 + $0x1c8] sm:$0xff]
  %v75 = vld [vmem:[%s0 + $0x1d0] sm:$0xff]
  %v76 = vld [vmem:[%s0 + $0x1d8] sm:$0xff]
  %v77 = vld [vmem:[%s0 + $0x1e0] sm:$0xff]
  %v78 = vld [vmem:[%s0 + $0x1e8] sm:$0xff]
  %v79 = vld [vmem:[%s0 + $0x1f0] sm:$0xff]
  %v80 = vld [vmem:[%s0 + $0x1f8] sm:$0xff]
  %v81 = vld [vmem:[%s2] sm:$0x1]
  %v83 = vlaneseq
  %v84 = vshrl.u32 %v83, 7
  %v85 = vsub.s32 0, %v84
  %v86 = vrot.slane %v81, %v85
  %v88 = vmul.f32 %v17, %v86
  %v89 = vmul.f32 %v18, %v86
  %v90 = vmul.f32 %v19, %v86
  %v91 = vmul.f32 %v20, %v86
  %v92 = vmul.f32 %v21, %v86
  %v93 = vmul.f32 %v22, %v86
  %v94 = vmul.f32 %v23, %v86
  %v95 = vmul.f32 %v24, %v86
  %v96 = vmul.f32 %v25, %v86
  %v97 = vmul.f32 %v26, %v86
  %v98 = vmul.f32 %v27, %v86
  %v99 = vmul.f32 %v28, %v86
  %v100 = vmul.f32 %v29, %v86
  %v101 = vmul.f32 %v30, %v86
  %v102 = vmul.f32 %v31, %v86
  %v103 = vmul.f32 %v32, %v86
  %v104 = vmul.f32 %v33, %v86
  %v105 = vmul.f32 %v34, %v86
  %v106 = vmul.f32 %v35, %v86
  %v107 = vmul.f32 %v36, %v86
  %v108 = vmul.f32 %v37, %v86
  %v109 = vmul.f32 %v38, %v86
  %v110 = vmul.f32 %v39, %v86
  %v111 = vmul.f32 %v40, %v86
  %v112 = vmul.f32 %v41, %v86
  %v113 = vmul.f32 %v42, %v86
  %v114 = vmul.f32 %v43, %v86
  %v115 = vmul.f32 %v44, %v86
  %v116 = vmul.f32 %v45, %v86
  %v117 = vmul.f32 %v46, %v86
  %v118 = vmul.f32 %v47, %v86
  %v119 = vmul.f32 %v48, %v86
  %v120 = vmul.f32 %v49, %v86
  %v121 = vmul.f32 %v50, %v86
  %v122 = vmul.f32 %v51, %v86
  %v123 = vmul.f32 %v52, %v86
  %v124 = vmul.f32 %v53, %v86
  %v125 = vmul.f32 %v54, %v86
  %v126 = vmul.f32 %v55, %v86
  %v127 = vmul.f32 %v56, %v86
  %v128 = vmul.f32 %v57, %v86
  %v129 = vmul.f32 %v58, %v86
  %v130 = vmul.f32 %v59, %v86
  %v131 = vmul.f32 %v60, %v86
  %v132 = vmul.f32 %v61, %v86
  %v133 = vmul.f32 %v62, %v86
  %v134 = vmul.f32 %v63, %v86
  %v135 = vmul.f32 %v64, %v86
  %v136 = vmul.f32 %v65, %v86
  %v137 = vmul.f32 %v66, %v86
  %v138 = vmul.f32 %v67, %v86
  %v139 = vmul.f32 %v68, %v86
  %v140 = vmul.f32 %v69, %v86
  %v141 = vmul.f32 %v70, %v86
  %v142 = vmul.f32 %v71, %v86
  %v143 = vmul.f32 %v72, %v86
  %v144 = vmul.f32 %v73, %v86
  %v145 = vmul.f32 %v74, %v86
  %v146 = vmul.f32 %v75, %v86
  %v147 = vmul.f32 %v76, %v86
  %v148 = vmul.f32 %v77, %v86
  %v149 = vmul.f32 %v78, %v86
  %v150 = vmul.f32 %v79, %v86
  %v151 = vmul.f32 %v80, %v86
  %v152 = vld [vmem:[%s3] sm:$0x1]
  %v154 = vlaneseq
  %v155 = vshrl.u32 %v154, 7
  %v156 = vsub.s32 0, %v155
  %v157 = vrot.slane %v152, %v156
  %v159 = vadd.f32 %v88, %v157
  %v160 = vadd.f32 %v89, %v157
  %v161 = vadd.f32 %v90, %v157
  %v162 = vadd.f32 %v91, %v157
  %v163 = vadd.f32 %v92, %v157
  %v164 = vadd.f32 %v93, %v157
  %v165 = vadd.f32 %v94, %v157
  %v166 = vadd.f32 %v95, %v157
  %v167 = vadd.f32 %v96, %v157
  %v168 = vadd.f32 %v97, %v157
  %v169 = vadd.f32 %v98, %v157
  %v170 = vadd.f32 %v99, %v157
  %v171 = vadd.f32 %v100, %v157
  %v172 = vadd.f32 %v101, %v157
  %v173 = vadd.f32 %v102, %v157
  %v174 = vadd.f32 %v103, %v157
  %v175 = vadd.f32 %v104, %v157
  %v176 = vadd.f32 %v105, %v157
  %v177 = vadd.f32 %v106, %v157
  %v178 = vadd.f32 %v107, %v157
  %v179 = vadd.f32 %v108, %v157
  %v180 = vadd.f32 %v109, %v157
  %v181 = vadd.f32 %v110, %v157
  %v182 = vadd.f32 %v111, %v157
  %v183 = vadd.f32 %v112, %v157
  %v184 = vadd.f32 %v113, %v157
  %v185 = vadd.f32 %v114, %v157
  %v186 = vadd.f32 %v115, %v157
  %v187 = vadd.f32 %v116, %v157
  %v188 = vadd.f32 %v117, %v157
  %v189 = vadd.f32 %v118, %v157
  %v190 = vadd.f32 %v119, %v157
  %v191 = vadd.f32 %v120, %v157
  %v192 = vadd.f32 %v121, %v157
  %v193 = vadd.f32 %v122, %v157
  %v194 = vadd.f32 %v123, %v157
  %v195 = vadd.f32 %v124, %v157
  %v196 = vadd.f32 %v125, %v157
  %v197 = vadd.f32 %v126, %v157
  %v198 = vadd.f32 %v127, %v157
  %v199 = vadd.f32 %v128, %v157
  %v200 = vadd.f32 %v129, %v157
  %v201 = vadd.f32 %v130, %v157
  %v202 = vadd.f32 %v131, %v157
  %v203 = vadd.f32 %v132, %v157
  %v204 = vadd.f32 %v133, %v157
  %v205 = vadd.f32 %v134, %v157
  %v206 = vadd.f32 %v135, %v157
  %v207 = vadd.f32 %v136, %v157
  %v208 = vadd.f32 %v137, %v157
  %v209 = vadd.f32 %v138, %v157
  %v210 = vadd.f32 %v139, %v157
  %v211 = vadd.f32 %v140, %v157
  %v212 = vadd.f32 %v141, %v157
  %v213 = vadd.f32 %v142, %v157
  %v214 = vadd.f32 %v143, %v157
  %v215 = vadd.f32 %v144, %v157
  %v216 = vadd.f32 %v145, %v157
  %v217 = vadd.f32 %v146, %v157
  %v218 = vadd.f32 %v147, %v157
  %v219 = vadd.f32 %v148, %v157
  %v220 = vadd.f32 %v149, %v157
  %v221 = vadd.f32 %v150, %v157
  %v222 = vadd.f32 %v151, %v157
  %v223 = vld [vmem:[%s1] sm:$0xff]
  %v224 = vld [vmem:[%s1 + $0x8] sm:$0xff]
  %v225 = vld [vmem:[%s1 + $0x10] sm:$0xff]
  %v226 = vld [vmem:[%s1 + $0x18] sm:$0xff]
  %v227 = vld [vmem:[%s1 + $0x20] sm:$0xff]
  %v228 = vld [vmem:[%s1 + $0x28] sm:$0xff]
  %v229 = vld [vmem:[%s1 + $0x30] sm:$0xff]
  %v230 = vld [vmem:[%s1 + $0x38] sm:$0xff]
  %v231 = vld [vmem:[%s1 + $0x40] sm:$0xff]
  %v232 = vld [vmem:[%s1 + $0x48] sm:$0xff]
  %v233 = vld [vmem:[%s1 + $0x50] sm:$0xff]
  %v234 = vld [vmem:[%s1 + $0x58] sm:$0xff]
  %v235 = vld [vmem:[%s1 + $0x60] sm:$0xff]
  %v236 = vld [vmem:[%s1 + $0x68] sm:$0xff]
  %v237 = vld [vmem:[%s1 + $0x70] sm:$0xff]
  %v238 = vld [vmem:[%s1 + $0x78] sm:$0xff]
  %v239 = vld [vmem:[%s1 + $0x80] sm:$0xff]
  %v240 = vld [vmem:[%s1 + $0x88] sm:$0xff]
  %v241 = vld [vmem:[%s1 + $0x90] sm:$0xff]
  %v242 = vld [vmem:[%s1 + $0x98] sm:$0xff]
  %v243 = vld [vmem:[%s1 + $0xa0] sm:$0xff]
  %v244 = vld [vmem:[%s1 + $0xa8] sm:$0xff]
  %v245 = vld [vmem:[%s1 + $0xb0] sm:$0xff]
  %v246 = vld [vmem:[%s1 + $0xb8] sm:$0xff]
  %v247 = vld [vmem:[%s1 + $0xc0] sm:$0xff]
  %v248 = vld [vmem:[%s1 + $0xc8] sm:$0xff]
  %v249 = vld [vmem:[%s1 + $0xd0] sm:$0xff]
  %v250 = vld [vmem:[%s1 + $0xd8] sm:$0xff]
  %v251 = vld [vmem:[%s1 + $0xe0] sm:$0xff]
  %v252 = vld [vmem:[%s1 + $0xe8] sm:$0xff]
  %v253 = vld [vmem:[%s1 + $0xf0] sm:$0xff]
  %v254 = vld [vmem:[%s1 + $0xf8] sm:$0xff]
  %v255 = vld [vmem:[%s1 + $0x100] sm:$0xff]
  %v256 = vld [vmem:[%s1 + $0x108] sm:$0xff]
  %v257 = vld [vmem:[%s1 + $0x110] sm:$0xff]
  %v258 = vld [vmem:[%s1 + $0x118] sm:$0xff]
  %v259 = vld [vmem:[%s1 + $0x120] sm:$0xff]
  %v260 = vld [vmem:[%s1 + $0x128] sm:$0xff]
  %v261 = vld [vmem:[%s1 + $0x130] sm:$0xff]
  %v262 = vld [vmem:[%s1 + $0x138] sm:$0xff]
  %v263 = vld [vmem:[%s1 + $0x140] sm:$0xff]
  %v264 = vld [vmem:[%s1 + $0x148] sm:$0xff]
  %v265 = vld [vmem:[%s1 + $0x150] sm:$0xff]
  %v266 = vld [vmem:[%s1 + $0x158] sm:$0xff]
  %v267 = vld [vmem:[%s1 + $0x160] sm:$0xff]
  %v268 = vld [vmem:[%s1 + $0x168] sm:$0xff]
  %v269 = vld [vmem:[%s1 + $0x170] sm:$0xff]
  %v270 = vld [vmem:[%s1 + $0x178] sm:$0xff]
  %v271 = vld [vmem:[%s1 + $0x180] sm:$0xff]
  %v272 = vld [vmem:[%s1 + $0x188] sm:$0xff]
  %v273 = vld [vmem:[%s1 + $0x190] sm:$0xff]
  %v274 = vld [vmem:[%s1 + $0x198] sm:$0xff]
  %v275 = vld [vmem:[%s1 + $0x1a0] sm:$0xff]
  %v276 = vld [vmem:[%s1 + $0x1a8] sm:$0xff]
  %v277 = vld [vmem:[%s1 + $0x1b0] sm:$0xff]
  %v278 = vld [vmem:[%s1 + $0x1b8] sm:$0xff]
  %v279 = vld [vmem:[%s1 + $0x1c0] sm:$0xff]
  %v280 = vld [vmem:[%s1 + $0x1c8] sm:$0xff]
  %v281 = vld [vmem:[%s1 + $0x1d0] sm:$0xff]
  %v282 = vld [vmem:[%s1 + $0x1d8] sm:$0xff]
  %v283 = vld [vmem:[%s1 + $0x1e0] sm:$0xff]
  %v284 = vld [vmem:[%s1 + $0x1e8] sm:$0xff]
  %v285 = vld [vmem:[%s1 + $0x1f0] sm:$0xff]
  %v286 = vld [vmem:[%s1 + $0x1f8] sm:$0xff]
  %v287 = vadd.f32 %v159, %v223
  %v288 = vadd.f32 %v160, %v224
  %v289 = vadd.f32 %v161, %v225
  %v290 = vadd.f32 %v162, %v226
  %v291 = vadd.f32 %v163, %v227
  %v292 = vadd.f32 %v164, %v228
  %v293 = vadd.f32 %v165, %v229
  %v294 = vadd.f32 %v166, %v230
  %v295 = vadd.f32 %v167, %v231
  %v296 = vadd.f32 %v168, %v232
  %v297 = vadd.f32 %v169, %v233
  %v298 = vadd.f32 %v170, %v234
  %v299 = vadd.f32 %v171, %v235
  %v300 = vadd.f32 %v172, %v236
  %v301 = vadd.f32 %v173, %v237
  %v302 = vadd.f32 %v174, %v238
  %v303 = vadd.f32 %v175, %v239
  %v304 = vadd.f32 %v176, %v240
  %v305 = vadd.f32 %v177, %v241
  %v306 = vadd.f32 %v178, %v242
  %v307 = vadd.f32 %v179, %v243
  %v308 = vadd.f32 %v180, %v244
  %v309 = vadd.f32 %v181, %v245
  %v310 = vadd.f32 %v182, %v246
  %v311 = vadd.f32 %v183, %v247
  %v312 = vadd.f32 %v184, %v248
  %v313 = vadd.f32 %v185, %v249
  %v314 = vadd.f32 %v186, %v250
  %v315 = vadd.f32 %v187, %v251
  %v316 = vadd.f32 %v188, %v252
  %v317 = vadd.f32 %v189, %v253
  %v318 = vadd.f32 %v190, %v254
  %v319 = vadd.f32 %v191, %v255
  %v320 = vadd.f32 %v192, %v256
  %v321 = vadd.f32 %v193, %v257
  %v322 = vadd.f32 %v194, %v258
  %v323 = vadd.f32 %v195, %v259
  %v324 = vadd.f32 %v196, %v260
  %v325 = vadd.f32 %v197, %v261
  %v326 = vadd.f32 %v198, %v262
  %v327 = vadd.f32 %v199, %v263
  %v328 = vadd.f32 %v200, %v264
  %v329 = vadd.f32 %v201, %v265
  %v330 = vadd.f32 %v202, %v266
  %v331 = vadd.f32 %v203, %v267
  %v332 = vadd.f32 %v204, %v268
  %v333 = vadd.f32 %v205, %v269
  %v334 = vadd.f32 %v206, %v270
  %v335 = vadd.f32 %v207, %v271
  %v336 = vadd.f32 %v208, %v272
  %v337 = vadd.f32 %v209, %v273
  %v338 = vadd.f32 %v210, %v274
  %v339 = vadd.f32 %v211, %v275
  %v340 = vadd.f32 %v212, %v276
  %v341 = vadd.f32 %v213, %v277
  %v342 = vadd.f32 %v214, %v278
  %v343 = vadd.f32 %v215, %v279
  %v344 = vadd.f32 %v216, %v280
  %v345 = vadd.f32 %v217, %v281
  %v346 = vadd.f32 %v218, %v282
  %v347 = vadd.f32 %v219, %v283
  %v348 = vadd.f32 %v220, %v284
  %v349 = vadd.f32 %v221, %v285
  %v350 = vadd.f32 %v222, %v286
  %v351 = vmax.f32 %v287, 0.0
  %v352 = vmax.f32 %v288, 0.0
  %v353 = vmax.f32 %v289, 0.0
  %v354 = vmax.f32 %v290, 0.0
  %v355 = vmax.f32 %v291, 0.0
  %v356 = vmax.f32 %v292, 0.0
  %v357 = vmax.f32 %v293, 0.0
  %v358 = vmax.f32 %v294, 0.0
  %v359 = vmax.f32 %v295, 0.0
  %v360 = vmax.f32 %v296, 0.0
  %v361 = vmax.f32 %v297, 0.0
  %v362 = vmax.f32 %v298, 0.0
  %v363 = vmax.f32 %v299, 0.0
  %v364 = vmax.f32 %v300, 0.0
  %v365 = vmax.f32 %v301, 0.0
  %v366 = vmax.f32 %v302, 0.0
  %v367 = vmax.f32 %v303, 0.0
  %v368 = vmax.f32 %v304, 0.0
  %v369 = vmax.f32 %v305, 0.0
  %v370 = vmax.f32 %v306, 0.0
  %v371 = vmax.f32 %v307, 0.0
  %v372 = vmax.f32 %v308, 0.0
  %v373 = vmax.f32 %v309, 0.0
  %v374 = vmax.f32 %v310, 0.0
  %v375 = vmax.f32 %v311, 0.0
  %v376 = vmax.f32 %v312, 0.0
  %v377 = vmax.f32 %v313, 0.0
  %v378 = vmax.f32 %v314, 0.0
  %v379 = vmax.f32 %v315, 0.0
  %v380 = vmax.f32 %v316, 0.0
  %v381 = vmax.f32 %v317, 0.0
  %v382 = vmax.f32 %v318, 0.0
  %v383 = vmax.f32 %v319, 0.0
  %v384 = vmax.f32 %v320, 0.0
  %v385 = vmax.f32 %v321, 0.0
  %v386 = vmax.f32 %v322, 0.0
  %v387 = vmax.f32 %v323, 0.0
  %v388 = vmax.f32 %v324, 0.0
  %v389 = vmax.f32 %v325, 0.0
  %v390 = vmax.f32 %v326, 0.0
  %v391 = vmax.f32 %v327, 0.0
  %v392 = vmax.f32 %v328, 0.0
  %v393 = vmax.f32 %v329, 0.0
  %v394 = vmax.f32 %v330, 0.0
  %v395 = vmax.f32 %v331, 0.0
  %v396 = vmax.f32 %v332, 0.0
  %v397 = vmax.f32 %v333, 0.0
  %v398 = vmax.f32 %v334, 0.0
  %v399 = vmax.f32 %v335, 0.0
  %v400 = vmax.f32 %v336, 0.0
  %v401 = vmax.f32 %v337, 0.0
  %v402 = vmax.f32 %v338, 0.0
  %v403 = vmax.f32 %v339, 0.0
  %v404 = vmax.f32 %v340, 0.0
  %v405 = vmax.f32 %v341, 0.0
  %v406 = vmax.f32 %v342, 0.0
  %v407 = vmax.f32 %v343, 0.0
  %v408 = vmax.f32 %v344, 0.0
  %v409 = vmax.f32 %v345, 0.0
  %v410 = vmax.f32 %v346, 0.0
  %v411 = vmax.f32 %v347, 0.0
  %v412 = vmax.f32 %v348, 0.0
  %v413 = vmax.f32 %v349, 0.0
  %v414 = vmax.f32 %v350, 0.0
  %415 = vst [vmem:[%s4] sm:$0xff] %v351
  %416 = vst [vmem:[%s4 + $0x8] sm:$0xff] %v352
  %417 = vst [vmem:[%s4 + $0x10] sm:$0xff] %v353
  %418 = vst [vmem:[%s4 + $0x18] sm:$0xff] %v354
  %419 = vst [vmem:[%s4 + $0x20] sm:$0xff] %v355
  %420 = vst [vmem:[%s4 + $0x28] sm:$0xff] %v356
  %421 = vst [vmem:[%s4 + $0x30] sm:$0xff] %v357
  %422 = vst [vmem:[%s4 + $0x38] sm:$0xff] %v358
  %423 = vst [vmem:[%s4 + $0x40] sm:$0xff] %v359
  %424 = vst [vmem:[%s4 + $0x48] sm:$0xff] %v360
  %425 = vst [vmem:[%s4 + $0x50] sm:$0xff] %v361
  %426 = vst [vmem:[%s4 + $0x58] sm:$0xff] %v362
  %427 = vst [vmem:[%s4 + $0x60] sm:$0xff] %v363
  %428 = vst [vmem:[%s4 + $0x68] sm:$0xff] %v364
  %429 = vst [vmem:[%s4 + $0x70] sm:$0xff] %v365
  %430 = vst [vmem:[%s4 + $0x78] sm:$0xff] %v366
  %431 = vst [vmem:[%s4 + $0x80] sm:$0xff] %v367
  %432 = vst [vmem:[%s4 + $0x88] sm:$0xff] %v368
  %433 = vst [vmem:[%s4 + $0x90] sm:$0xff] %v369
  %434 = vst [vmem:[%s4 + $0x98] sm:$0xff] %v370
  %435 = vst [vmem:[%s4 + $0xa0] sm:$0xff] %v371
  %436 = vst [vmem:[%s4 + $0xa8] sm:$0xff] %v372
  %437 = vst [vmem:[%s4 + $0xb0] sm:$0xff] %v373
  %438 = vst [vmem:[%s4 + $0xb8] sm:$0xff] %v374
  %439 = vst [vmem:[%s4 + $0xc0] sm:$0xff] %v375
  %440 = vst [vmem:[%s4 + $0xc8] sm:$0xff] %v376
  %441 = vst [vmem:[%s4 + $0xd0] sm:$0xff] %v377
  %442 = vst [vmem:[%s4 + $0xd8] sm:$0xff] %v378
  %443 = vst [vmem:[%s4 + $0xe0] sm:$0xff] %v379
  %444 = vst [vmem:[%s4 + $0xe8] sm:$0xff] %v380
  %445 = vst [vmem:[%s4 + $0xf0] sm:$0xff] %v381
  %446 = vst [vmem:[%s4 + $0xf8] sm:$0xff] %v382
  %447 = vst [vmem:[%s4 + $0x100] sm:$0xff] %v383
  %448 = vst [vmem:[%s4 + $0x108] sm:$0xff] %v384
  %449 = vst [vmem:[%s4 + $0x110] sm:$0xff] %v385
  %450 = vst [vmem:[%s4 + $0x118] sm:$0xff] %v386
  %451 = vst [vmem:[%s4 + $0x120] sm:$0xff] %v387
  %452 = vst [vmem:[%s4 + $0x128] sm:$0xff] %v388
  %453 = vst [vmem:[%s4 + $0x130] sm:$0xff] %v389
  %454 = vst [vmem:[%s4 + $0x138] sm:$0xff] %v390
  %455 = vst [vmem:[%s4 + $0x140] sm:$0xff] %v391
  %456 = vst [vmem:[%s4 + $0x148] sm:$0xff] %v392
  %457 = vst [vmem:[%s4 + $0x150] sm:$0xff] %v393
  %458 = vst [vmem:[%s4 + $0x158] sm:$0xff] %v394
  %459 = vst [vmem:[%s4 + $0x160] sm:$0xff] %v395
  %460 = vst [vmem:[%s4 + $0x168] sm:$0xff] %v396
  %461 = vst [vmem:[%s4 + $0x170] sm:$0xff] %v397
  %462 = vst [vmem:[%s4 + $0x178] sm:$0xff] %v398
  %463 = vst [vmem:[%s4 + $0x180] sm:$0xff] %v399
  %464 = vst [vmem:[%s4 + $0x188] sm:$0xff] %v400
  %465 = vst [vmem:[%s4 + $0x190] sm:$0xff] %v401
  %466 = vst [vmem:[%s4 + $0x198] sm:$0xff] %v402
  %467 = vst [vmem:[%s4 + $0x1a0] sm:$0xff] %v403
  %468 = vst [vmem:[%s4 + $0x1a8] sm:$0xff] %v404
  %469 = vst [vmem:[%s4 + $0x1b0] sm:$0xff] %v405
  %470 = vst [vmem:[%s4 + $0x1b8] sm:$0xff] %v406
  %471 = vst [vmem:[%s4 + $0x1c0] sm:$0xff] %v407
  %472 = vst [vmem:[%s4 + $0x1c8] sm:$0xff] %v408
  %473 = vst [vmem:[%s4 + $0x1d0] sm:$0xff] %v409
  %474 = vst [vmem:[%s4 + $0x1d8] sm:$0xff] %v410
  %475 = vst [vmem:[%s4 + $0x1e0] sm:$0xff] %v411
  %476 = vst [vmem:[%s4 + $0x1e8] sm:$0xff] %v412
  %477 = vst [vmem:[%s4 + $0x1f0] sm:$0xff] %v413
  %478 = vst [vmem:[%s4 + $0x1f8] sm:$0xff] %v414
  // Predicated region
  $region18: #{bottleneck_forward.7} parent=0 // pred_check
    _
  $region19: #{bottleneck_forward.7} parent=0 // pred_check_branch
    %480 = sbr.rel (0) target = $region21
  $region20: #{bottleneck_forward.7} parent=0 // pred_region
    _
  $region21: #{bottleneck_forward.7} parent=0 // pred_fallthru
    _
  // Predicated region
  $region22: #{bottleneck_forward.7} parent=0 // pred_check
    _
  $region23: #{bottleneck_forward.7} parent=0 // pred_check_branch
    %482 = sbr.rel (0) target = $region25
  $region24: #{bottleneck_forward.7} parent=0 // pred_region
    _
  $region25: #{bottleneck_forward.7} parent=0 // pred_fallthru
    _

// kernel: bottleneck_forward.6
$region0: #{bottleneck_forward.6}
  #allocation0 [shape = 'u32[]', space=smem, size = 0x4, offset = 0x4, fixed_abs, tag = 'smem constant byte address 0x4 - core index']
  #allocation1 [shape = 'u32[144,128]{1,0:T(1,128)}', space=vmem, size = 0x12000, scoped, tag = 'internal scratch']
  %s0 = inlined_call_operand.vmem [shape: f32[512,128], index: 0, kind: input, shape index: {}]
  %s1 = inlined_call_operand.vmem [shape: f32[1,128], index: 1, kind: input, shape index: {}]
  %s2 = inlined_call_operand.vmem [shape: f32[1,128], index: 2, kind: input, shape index: {}]
  %s3 = inlined_call_operand.vmem [shape: f32[128,128], index: 3, kind: input, shape index: {}]
  %s4 = inlined_call_operand.vmem [shape: f32[512,128], index: 4, kind: output, shape index: {0}]
  %s5 = inlined_call_operand.vmem [shape: f32[1,8,128], index: 5, kind: output, shape index: {1}]
  %6 = xla_tuple %s4, %s5
  %s7 = sld [smem:[#allocation0]]
  $region34: #{bottleneck_forward.6} parent=0
    _
  %s9 = ssub.s32 1, %s7
  %s10 = scalar_select 0, %s9, %s7
  // Predicated region
  $region2: #{bottleneck_forward.6} parent=0 // pred_check
    _
  $region3: #{bottleneck_forward.6} parent=0 // pred_check_branch
    %12 = sbr.rel (0) target = $region5
  $region4: #{bottleneck_forward.6} parent=0 // pred_region
    _
  $region5: #{bottleneck_forward.6} parent=0 // pred_fallthru
    _
  // Predicated region
  $region6: #{bottleneck_forward.6} parent=0 // pred_check
    _
  $region7: #{bottleneck_forward.6} parent=0 // pred_check_branch
    %14 = sbr.rel (0) target = $region9
  $region8: #{bottleneck_forward.6} parent=0 // pred_region
    _
  $region9: #{bottleneck_forward.6} parent=0 // pred_fallthru
    _
  // Predicated region
  $region10: #{bottleneck_forward.6} parent=0 // pred_check
    _
  $region11: #{bottleneck_forward.6} parent=0 // pred_check_branch
    %16 = sbr.rel (0) target = $region13
  $region12: #{bottleneck_forward.6} parent=0 // pred_region
    _
  $region13: #{bottleneck_forward.6} parent=0 // pred_fallthru
    _
  // Predicated region
  $region14: #{bottleneck_forward.6} parent=0 // pred_check
    _
  $region15: #{bottleneck_forward.6} parent=0 // pred_check_branch
    %18 = sbr.rel (0) target = $region17
  $region16: #{bottleneck_forward.6} parent=0 // pred_region
    _
  $region17: #{bottleneck_forward.6} parent=0 // pred_fallthru
    _
  %v19 = vld [vmem:[%s0] sm:$0xff]
  %v20 = vld [vmem:[%s0 + $0x8] sm:$0xff]
  %v21 = vld [vmem:[%s0 + $0x10] sm:$0xff]
  %v22 = vld [vmem:[%s0 + $0x18] sm:$0xff]
  %v23 = vld [vmem:[%s0 + $0x20] sm:$0xff]
  %v24 = vld [vmem:[%s0 + $0x28] sm:$0xff]
  %v25 = vld [vmem:[%s0 + $0x30] sm:$0xff]
  %v26 = vld [vmem:[%s0 + $0x38] sm:$0xff]
  %v27 = vld [vmem:[%s0 + $0x40] sm:$0xff]
  %v28 = vld [vmem:[%s0 + $0x48] sm:$0xff]
  %v29 = vld [vmem:[%s0 + $0x50] sm:$0xff]
  %v30 = vld [vmem:[%s0 + $0x58] sm:$0xff]
  %v31 = vld [vmem:[%s0 + $0x60] sm:$0xff]
  %v32 = vld [vmem:[%s0 + $0x68] sm:$0xff]
  %v33 = vld [vmem:[%s0 + $0x70] sm:$0xff]
  %v34 = vld [vmem:[%s0 + $0x78] sm:$0xff]
  %v35 = vld [vmem:[%s0 + $0x80] sm:$0xff]
  %v36 = vld [vmem:[%s0 + $0x88] sm:$0xff]
  %v37 = vld [vmem:[%s0 + $0x90] sm:$0xff]
  %v38 = vld [vmem:[%s0 + $0x98] sm:$0xff]
  %v39 = vld [vmem:[%s0 + $0xa0] sm:$0xff]
  %v40 = vld [vmem:[%s0 + $0xa8] sm:$0xff]
  %v41 = vld [vmem:[%s0 + $0xb0] sm:$0xff]
  %v42 = vld [vmem:[%s0 + $0xb8] sm:$0xff]
  %v43 = vld [vmem:[%s0 + $0xc0] sm:$0xff]
  %v44 = vld [vmem:[%s0 + $0xc8] sm:$0xff]
  %v45 = vld [vmem:[%s0 + $0xd0] sm:$0xff]
  %v46 = vld [vmem:[%s0 + $0xd8] sm:$0xff]
  %v47 = vld [vmem:[%s0 + $0xe0] sm:$0xff]
  %v48 = vld [vmem:[%s0 + $0xe8] sm:$0xff]
  %v49 = vld [vmem:[%s0 + $0xf0] sm:$0xff]
  %v50 = vld [vmem:[%s0 + $0xf8] sm:$0xff]
  %v51 = vld [vmem:[%s0 + $0x100] sm:$0xff]
  %v52 = vld [vmem:[%s0 + $0x108] sm:$0xff]
  %v53 = vld [vmem:[%s0 + $0x110] sm:$0xff]
  %v54 = vld [vmem:[%s0 + $0x118] sm:$0xff]
  %v55 = vld [vmem:[%s0 + $0x120] sm:$0xff]
  %v56 = vld [vmem:[%s0 + $0x128] sm:$0xff]
  %v57 = vld [vmem:[%s0 + $0x130] sm:$0xff]
  %v58 = vld [vmem:[%s0 + $0x138] sm:$0xff]
  %v59 = vld [vmem:[%s0 + $0x140] sm:$0xff]
  %v60 = vld [vmem:[%s0 + $0x148] sm:$0xff]
  %v61 = vld [vmem:[%s0 + $0x150] sm:$0xff]
  %v62 = vld [vmem:[%s0 + $0x158] sm:$0xff]
  %v63 = vld [vmem:[%s0 + $0x160] sm:$0xff]
  %v64 = vld [vmem:[%s0 + $0x168] sm:$0xff]
  %v65 = vld [vmem:[%s0 + $0x170] sm:$0xff]
  %v66 = vld [vmem:[%s0 + $0x178] sm:$0xff]
  %v67 = vld [vmem:[%s0 + $0x180] sm:$0xff]
  %v68 = vld [vmem:[%s0 + $0x188] sm:$0xff]
  %v69 = vld [vmem:[%s0 + $0x190] sm:$0xff]
  %v70 = vld [vmem:[%s0 + $0x198] sm:$0xff]
  %v71 = vld [vmem:[%s0 + $0x1a0] sm:$0xff]
  %v72 = vld [vmem:[%s0 + $0x1a8] sm:$0xff]
  %v73 = vld [vmem:[%s0 + $0x1b0] sm:$0xff]
  %v74 = vld [vmem:[%s0 + $0x1b8] sm:$0xff]
  %v75 = vld [vmem:[%s0 + $0x1c0] sm:$0xff]
  %v76 = vld [vmem:[%s0 + $0x1c8] sm:$0xff]
  %v77 = vld [vmem:[%s0 + $0x1d0] sm:$0xff]
  %v78 = vld [vmem:[%s0 + $0x1d8] sm:$0xff]
  %v79 = vld [vmem:[%s0 + $0x1e0] sm:$0xff]
  %v80 = vld [vmem:[%s0 + $0x1e8] sm:$0xff]
  %v81 = vld [vmem:[%s0 + $0x1f0] sm:$0xff]
  %v82 = vld [vmem:[%s0 + $0x1f8] sm:$0xff]
  %v83 = vld [vmem:[%s1] sm:$0x1]
  %v85 = vlaneseq
  %v86 = vshrl.u32 %v85, 7
  %v87 = vsub.s32 0, %v86
  %v88 = vrot.slane %v83, %v87
  %v90 = vmul.f32 %v19, %v88
  %v91 = vmul.f32 %v20, %v88
  %v92 = vmul.f32 %v21, %v88
  %v93 = vmul.f32 %v22, %v88
  %v94 = vmul.f32 %v23, %v88
  %v95 = vmul.f32 %v24, %v88
  %v96 = vmul.f32 %v25, %v88
  %v97 = vmul.f32 %v26, %v88
  %v98 = vmul.f32 %v27, %v88
  %v99 = vmul.f32 %v28, %v88
  %v100 = vmul.f32 %v29, %v88
  %v101 = vmul.f32 %v30, %v88
  %v102 = vmul.f32 %v31, %v88
  %v103 = vmul.f32 %v32, %v88
  %v104 = vmul.f32 %v33, %v88
  %v105 = vmul.f32 %v34, %v88
  %v106 = vmul.f32 %v35, %v88
  %v107 = vmul.f32 %v36, %v88
  %v108 = vmul.f32 %v37, %v88
  %v109 = vmul.f32 %v38, %v88
  %v110 = vmul.f32 %v39, %v88
  %v111 = vmul.f32 %v40, %v88
  %v112 = vmul.f32 %v41, %v88
  %v113 = vmul.f32 %v42, %v88
  %v114 = vmul.f32 %v43, %v88
  %v115 = vmul.f32 %v44, %v88
  %v116 = vmul.f32 %v45, %v88
  %v117 = vmul.f32 %v46, %v88
  %v118 = vmul.f32 %v47, %v88
  %v119 = vmul.f32 %v48, %v88
  %v120 = vmul.f32 %v49, %v88
  %v121 = vmul.f32 %v50, %v88
  %v122 = vmul.f32 %v51, %v88
  %v123 = vmul.f32 %v52, %v88
  %v124 = vmul.f32 %v53, %v88
  %v125 = vmul.f32 %v54, %v88
  %v126 = vmul.f32 %v55, %v88
  %v127 = vmul.f32 %v56, %v88
  %v128 = vmul.f32 %v57, %v88
  %v129 = vmul.f32 %v58, %v88
  %v130 = vmul.f32 %v59, %v88
  %v131 = vmul.f32 %v60, %v88
  %v132 = vmul.f32 %v61, %v88
  %v133 = vmul.f32 %v62, %v88
  %v134 = vmul.f32 %v63, %v88
  %v135 = vmul.f32 %v64, %v88
  %v136 = vmul.f32 %v65, %v88
  %v137 = vmul.f32 %v66, %v88
  %v138 = vmul.f32 %v67, %v88
  %v139 = vmul.f32 %v68, %v88
  %v140 = vmul.f32 %v69, %v88
  %v141 = vmul.f32 %v70, %v88
  %v142 = vmul.f32 %v71, %v88
  %v143 = vmul.f32 %v72, %v88
  %v144 = vmul.f32 %v73, %v88
  %v145 = vmul.f32 %v74, %v88
  %v146 = vmul.f32 %v75, %v88
  %v147 = vmul.f32 %v76, %v88
  %v148 = vmul.f32 %v77, %v88
  %v149 = vmul.f32 %v78, %v88
  %v150 = vmul.f32 %v79, %v88
  %v151 = vmul.f32 %v80, %v88
  %v152 = vmul.f32 %v81, %v88
  %v153 = vmul.f32 %v82, %v88
  %v154 = vld [vmem:[%s2] sm:$0x1]
  %v156 = vlaneseq
  %v157 = vshrl.u32 %v156, 7
  %v158 = vsub.s32 0, %v157
  %v159 = vrot.slane %v154, %v158
  %v161 = vadd.f32 %v90, %v159
  %v162 = vadd.f32 %v91, %v159
  %v163 = vadd.f32 %v92, %v159
  %v164 = vadd.f32 %v93, %v159
  %v165 = vadd.f32 %v94, %v159
  %v166 = vadd.f32 %v95, %v159
  %v167 = vadd.f32 %v96, %v159
  %v168 = vadd.f32 %v97, %v159
  %v169 = vadd.f32 %v98, %v159
  %v170 = vadd.f32 %v99, %v159
  %v171 = vadd.f32 %v100, %v159
  %v172 = vadd.f32 %v101, %v159
  %v173 = vadd.f32 %v102, %v159
  %v174 = vadd.f32 %v103, %v159
  %v175 = vadd.f32 %v104, %v159
  %v176 = vadd.f32 %v105, %v159
  %v177 = vadd.f32 %v106, %v159
  %v178 = vadd.f32 %v107, %v159
  %v179 = vadd.f32 %v108, %v159
  %v180 = vadd.f32 %v109, %v159
  %v181 = vadd.f32 %v110, %v159
  %v182 = vadd.f32 %v111, %v159
  %v183 = vadd.f32 %v112, %v159
  %v184 = vadd.f32 %v113, %v159
  %v185 = vadd.f32 %v114, %v159
  %v186 = vadd.f32 %v115, %v159
  %v187 = vadd.f32 %v116, %v159
  %v188 = vadd.f32 %v117, %v159
  %v189 = vadd.f32 %v118, %v159
  %v190 = vadd.f32 %v119, %v159
  %v191 = vadd.f32 %v120, %v159
  %v192 = vadd.f32 %v121, %v159
  %v193 = vadd.f32 %v122, %v159
  %v194 = vadd.f32 %v123, %v159
  %v195 = vadd.f32 %v124, %v159
  %v196 = vadd.f32 %v125, %v159
  %v197 = vadd.f32 %v126, %v159
  %v198 = vadd.f32 %v127, %v159
  %v199 = vadd.f32 %v128, %v159
  %v200 = vadd.f32 %v129, %v159
  %v201 = vadd.f32 %v130, %v159
  %v202 = vadd.f32 %v131, %v159
  %v203 = vadd.f32 %v132, %v159
  %v204 = vadd.f32 %v133, %v159
  %v205 = vadd.f32 %v134, %v159
  %v206 = vadd.f32 %v135, %v159
  %v207 = vadd.f32 %v136, %v159
  %v208 = vadd.f32 %v137, %v159
  %v209 = vadd.f32 %v138, %v159
  %v210 = vadd.f32 %v139, %v159
  %v211 = vadd.f32 %v140, %v159
  %v212 = vadd.f32 %v141, %v159
  %v213 = vadd.f32 %v142, %v159
  %v214 = vadd.f32 %v143, %v159
  %v215 = vadd.f32 %v144, %v159
  %v216 = vadd.f32 %v145, %v159
  %v217 = vadd.f32 %v146, %v159
  %v218 = vadd.f32 %v147, %v159
  %v219 = vadd.f32 %v148, %v159
  %v220 = vadd.f32 %v149, %v159
  %v221 = vadd.f32 %v150, %v159
  %v222 = vadd.f32 %v151, %v159
  %v223 = vadd.f32 %v152, %v159
  %v224 = vadd.f32 %v153, %v159
  %v225 = vmax.f32 %v161, 0.0
  %v226 = vmax.f32 %v162, 0.0
  %v227 = vmax.f32 %v163, 0.0
  %v228 = vmax.f32 %v164, 0.0
  %v229 = vmax.f32 %v165, 0.0
  %v230 = vmax.f32 %v166, 0.0
  %v231 = vmax.f32 %v167, 0.0
  %v232 = vmax.f32 %v168, 0.0
  %v233 = vmax.f32 %v169, 0.0
  %v234 = vmax.f32 %v170, 0.0
  %v235 = vmax.f32 %v171, 0.0
  %v236 = vmax.f32 %v172, 0.0
  %v237 = vmax.f32 %v173, 0.0
  %v238 = vmax.f32 %v174, 0.0
  %v239 = vmax.f32 %v175, 0.0
  %v240 = vmax.f32 %v176, 0.0
  %v241 = vmax.f32 %v177, 0.0
  %v242 = vmax.f32 %v178, 0.0
  %v243 = vmax.f32 %v179, 0.0
  %v244 = vmax.f32 %v180, 0.0
  %v245 = vmax.f32 %v181, 0.0
  %v246 = vmax.f32 %v182, 0.0
  %v247 = vmax.f32 %v183, 0.0
  %v248 = vmax.f32 %v184, 0.0
  %v249 = vmax.f32 %v185, 0.0
  %v250 = vmax.f32 %v186, 0.0
  %v251 = vmax.f32 %v187, 0.0
  %v252 = vmax.f32 %v188, 0.0
  %v253 = vmax.f32 %v189, 0.0
  %v254 = vmax.f32 %v190, 0.0
  %v255 = vmax.f32 %v191, 0.0
  %v256 = vmax.f32 %v192, 0.0
  %v257 = vmax.f32 %v193, 0.0
  %v258 = vmax.f32 %v194, 0.0
  %v259 = vmax.f32 %v195, 0.0
  %v260 = vmax.f32 %v196, 0.0
  %v261 = vmax.f32 %v197, 0.0
  %v262 = vmax.f32 %v198, 0.0
  %v263 = vmax.f32 %v199, 0.0
  %v264 = vmax.f32 %v200, 0.0
  %v265 = vmax.f32 %v201, 0.0
  %v266 = vmax.f32 %v202, 0.0
  %v267 = vmax.f32 %v203, 0.0
  %v268 = vmax.f32 %v204, 0.0
  %v269 = vmax.f32 %v205, 0.0
  %v270 = vmax.f32 %v206, 0.0
  %v271 = vmax.f32 %v207, 0.0
  %v272 = vmax.f32 %v208, 0.0
  %v273 = vmax.f32 %v209, 0.0
  %v274 = vmax.f32 %v210, 0.0
  %v275 = vmax.f32 %v211, 0.0
  %v276 = vmax.f32 %v212, 0.0
  %v277 = vmax.f32 %v213, 0.0
  %v278 = vmax.f32 %v214, 0.0
  %v279 = vmax.f32 %v215, 0.0
  %v280 = vmax.f32 %v216, 0.0
  %v281 = vmax.f32 %v217, 0.0
  %v282 = vmax.f32 %v218, 0.0
  %v283 = vmax.f32 %v219, 0.0
  %v284 = vmax.f32 %v220, 0.0
  %v285 = vmax.f32 %v221, 0.0
  %v286 = vmax.f32 %v222, 0.0
  %v287 = vmax.f32 %v223, 0.0
  %v288 = vmax.f32 %v224, 0.0
  %v289 = vld [vmem:[%s3] sm:$0xff]
  %v290 = vld [vmem:[%s3 + $0x8] sm:$0xff]
  %v291 = vld [vmem:[%s3 + $0x10] sm:$0xff]
  %v292 = vld [vmem:[%s3 + $0x18] sm:$0xff]
  %v293 = vld [vmem:[%s3 + $0x20] sm:$0xff]
  %v294 = vld [vmem:[%s3 + $0x28] sm:$0xff]
  %v295 = vld [vmem:[%s3 + $0x30] sm:$0xff]
  %v296 = vld [vmem:[%s3 + $0x38] sm:$0xff]
  %v297 = vld [vmem:[%s3 + $0x40] sm:$0xff]
  %v298 = vld [vmem:[%s3 + $0x48] sm:$0xff]
  %v299 = vld [vmem:[%s3 + $0x50] sm:$0xff]
  %v300 = vld [vmem:[%s3 + $0x58] sm:$0xff]
  %v301 = vld [vmem:[%s3 + $0x60] sm:$0xff]
  %v302 = vld [vmem:[%s3 + $0x68] sm:$0xff]
  %v303 = vld [vmem:[%s3 + $0x70] sm:$0xff]
  %v304 = vld [vmem:[%s3 + $0x78] sm:$0xff]
  %305 = vmatprep.subr.mxu0 0.0
  %306 = vmatpush1.msra.mxu0 %v304
  %307 = vmatprep.subr.mxu0 0.0
  %308 = vmatpush1.msra.mxu0 %v303
  %309 = vmatprep.subr.mxu0 0.0
  %310 = vmatpush1.msra.mxu0 %v302
  %311 = vmatprep.subr.mxu0 0.0
  %312 = vmatpush1.msra.mxu0 %v301
  %313 = vmatprep.subr.mxu0 0.0
  %314 = vmatpush1.msra.mxu0 %v300
  %315 = vmatprep.subr.mxu0 0.0
  %316 = vmatpush1.msra.mxu0 %v299
  %317 = vmatprep.subr.mxu0 0.0
  %318 = vmatpush1.msra.mxu0 %v298
  %319 = vmatprep.subr.mxu0 0.0
  %320 = vmatpush1.msra.mxu0 %v297
  %321 = vmatprep.subr.mxu0 0.0
  %322 = vmatpush1.msra.mxu0 %v296
  %323 = vmatprep.subr.mxu0 0.0
  %324 = vmatpush1.msra.mxu0 %v295
  %325 = vmatprep.subr.mxu0 0.0
  %326 = vmatpush1.msra.mxu0 %v294
  %327 = vmatprep.subr.mxu0 0.0
  %328 = vmatpush1.msra.mxu0 %v293
  %329 = vmatprep.subr.mxu0 0.0
  %330 = vmatpush1.msra.mxu0 %v292
  %331 = vmatprep.subr.mxu0 0.0
  %332 = vmatpush1.msra.mxu0 %v291
  %333 = vmatprep.subr.mxu0 0.0
  %334 = vmatpush1.msra.mxu0 %v290
  %335 = vmatprep.subr.mxu0 0.0
  %336 = vmatpush1.msra.mxu0 %v289
  %337 = vmatprep.subr.mxu0 0.0
  %338 = vmatpush2.msra.mxu0 0.0
  %339 = vmatprep.subr.mxu0 0.0
  %340 = vmatpush2.msra.mxu0 0.0
  %341 = vmatprep.subr.mxu0 0.0
  %342 = vmatpush2.msra.mxu0 0.0
  %343 = vmatprep.subr.mxu0 0.0
  %344 = vmatpush2.msra.mxu0 0.0
  %345 = vmatprep.subr.mxu0 0.0
  %346 = vmatpush2.msra.mxu0 0.0
  %347 = vmatprep.subr.mxu0 0.0
  %348 = vmatpush2.msra.mxu0 0.0
  %349 = vmatprep.subr.mxu0 0.0
  %350 = vmatpush2.msra.mxu0 0.0
  %351 = vmatprep.subr.mxu0 0.0
  %352 = vmatpush2.msra.mxu0 0.0
  %353 = vmatprep.subr.mxu0 0.0
  %354 = vmatpush2.msra.mxu0 0.0
  %355 = vmatprep.subr.mxu0 0.0
  %356 = vmatpush2.msra.mxu0 0.0
  %357 = vmatprep.subr.mxu0 0.0
  %358 = vmatpush2.msra.mxu0 0.0
  %359 = vmatprep.subr.mxu0 0.0
  %360 = vmatpush2.msra.mxu0 0.0
  %361 = vmatprep.subr.mxu0 0.0
  %362 = vmatpush2.msra.mxu0 0.0
  %363 = vmatprep.subr.mxu0 0.0
  %364 = vmatpush2.msra.mxu0 0.0
  %365 = vmatprep.subr.mxu0 0.0
  %366 = vmatpush2.msra.mxu0 0.0
  %367 = vmatprep.subr.mxu0 0.0
  %368 = vmatpush2.msra.mxu0 0.0
  %369 = vmatprep.mubr.f32.mxu0 0.0
  %370 = vmatmul.mubr.f32.gmra.mxu0 %v225
  %v371 = vpop.f32.mrf.mxu0
  %v372 = vadd.f32 0.0, %v371
  %v373 = vpop.f32.mrf.mxu0
  %374 = vmatprep.mubr.f32.mxu0 0.0
  %375 = vmatmul.mubr.f32.gmra.mxu0 %v226
  %v376 = vpop.f32.mrf.mxu0
  %v377 = vadd.f32 0.0, %v376
  %v378 = vpop.f32.mrf.mxu0
  %379 = vmatprep.mubr.f32.mxu0 0.0
  %380 = vmatmul.mubr.f32.gmra.mxu0 %v227
  %v381 = vpop.f32.mrf.mxu0
  %v382 = vadd.f32 0.0, %v381
  %v383 = vpop.f32.mrf.mxu0
  %384 = vmatprep.mubr.f32.mxu0 0.0
  %385 = vmatmul.mubr.f32.gmra.mxu0 %v228
  %v386 = vpop.f32.mrf.mxu0
  %v387 = vadd.f32 0.0, %v386
  %v388 = vpop.f32.mrf.mxu0
  %389 = vmatprep.mubr.f32.mxu0 0.0
  %390 = vmatmul.mubr.f32.gmra.mxu0 %v229
  %v391 = vpop.f32.mrf.mxu0
  %v392 = vadd.f32 0.0, %v391
  %v393 = vpop.f32.mrf.mxu0
  %394 = vmatprep.mubr.f32.mxu0 0.0
  %395 = vmatmul.mubr.f32.gmra.mxu0 %v230
  %v396 = vpop.f32.mrf.mxu0
  %v397 = vadd.f32 0.0, %v396
  %v398 = vpop.f32.mrf.mxu0
  %399 = vmatprep.mubr.f32.mxu0 0.0
  %400 = vmatmul.mubr.f32.gmra.mxu0 %v231
  %v401 = vpop.f32.mrf.mxu0
  %v402 = vadd.f32 0.0, %v401
  %v403 = vpop.f32.mrf.mxu0
  %404 = vmatprep.mubr.f32.mxu0 0.0
  %405 = vmatmul.mubr.f32.gmra.mxu0 %v232
  %v406 = vpop.f32.mrf.mxu0
  %v407 = vadd.f32 0.0, %v406
  %v408 = vpop.f32.mrf.mxu0
  %409 = vmatprep.mubr.f32.mxu0 0.0
  %410 = vmatmul.mubr.f32.gmra.mxu0 %v233
  %v411 = vpop.f32.mrf.mxu0
  %v412 = vadd.f32 0.0, %v411
  %v413 = vpop.f32.mrf.mxu0
  %414 = vmatprep.mubr.f32.mxu0 0.0
  %415 = vmatmul.mubr.f32.gmra.mxu0 %v234
  %v416 = vpop.f32.mrf.mxu0
  %v417 = vadd.f32 0.0, %v416
  %v418 = vpop.f32.mrf.mxu0
  %419 = vmatprep.mubr.f32.mxu0 0.0
  %420 = vmatmul.mubr.f32.gmra.mxu0 %v235
  %v421 = vpop.f32.mrf.mxu0
  %v422 = vadd.f32 0.0, %v421
  %v423 = vpop.f32.mrf.mxu0
  %424 = vmatprep.mubr.f32.mxu0 0.0
  %425 = vmatmul.mubr.f32.gmra.mxu0 %v236
  %v426 = vpop.f32.mrf.mxu0
  %v427 = vadd.f32 0.0, %v426
  %v428 = vpop.f32.mrf.mxu0
  %429 = vmatprep.mubr.f32.mxu0 0.0
  %430 = vmatmul.mubr.f32.gmra.mxu0 %v237
  %v431 = vpop.f32.mrf.mxu0
  %v432 = vadd.f32 0.0, %v431
  %v433 = vpop.f32.mrf.mxu0
  %434 = vmatprep.mubr.f32.mxu0 0.0
  %435 = vmatmul.mubr.f32.gmra.mxu0 %v238
  %v436 = vpop.f32.mrf.mxu0
  %v437 = vadd.f32 0.0, %v436
  %v438 = vpop.f32.mrf.mxu0
  %439 = vmatprep.mubr.f32.mxu0 0.0
  %440 = vmatmul.mubr.f32.gmra.mxu0 %v239
  %v441 = vpop.f32.mrf.mxu0
  %v442 = vadd.f32 0.0, %v441
  %v443 = vpop.f32.mrf.mxu0
  %444 = vmatprep.mubr.f32.mxu0 0.0
  %445 = vmatmul.mubr.f32.gmra.mxu0 %v240
  %v446 = vpop.f32.mrf.mxu0
  %v447 = vadd.f32 0.0, %v446
  %v448 = vpop.f32.mrf.mxu0
  %449 = vmatprep.mubr.f32.mxu0 0.0
  %450 = vmatmul.mubr.f32.gmra.mxu0 %v241
  %v451 = vpop.f32.mrf.mxu0
  %v452 = vadd.f32 0.0, %v451
  %v453 = vpop.f32.mrf.mxu0
  %454 = vmatprep.mubr.f32.mxu0 0.0
  %455 = vmatmul.mubr.f32.gmra.mxu0 %v242
  %v456 = vpop.f32.mrf.mxu0
  %v457 = vadd.f32 0.0, %v456
  %v458 = vpop.f32.mrf.mxu0
  %459 = vmatprep.mubr.f32.mxu0 0.0
  %460 = vmatmul.mubr.f32.gmra.mxu0 %v243
  %v461 = vpop.f32.mrf.mxu0
  %v462 = vadd.f32 0.0, %v461
  %v463 = vpop.f32.mrf.mxu0
  %464 = vmatprep.mubr.f32.mxu0 0.0
  %465 = vmatmul.mubr.f32.gmra.mxu0 %v244
  %v466 = vpop.f32.mrf.mxu0
  %v467 = vadd.f32 0.0, %v466
  %v468 = vpop.f32.mrf.mxu0
  %469 = vmatprep.mubr.f32.mxu0 0.0
  %470 = vmatmul.mubr.f32.gmra.mxu0 %v245
  %v471 = vpop.f32.mrf.mxu0
  %v472 = vadd.f32 0.0, %v471
  %v473 = vpop.f32.mrf.mxu0
  %474 = vmatprep.mubr.f32.mxu0 0.0
  %475 = vmatmul.mubr.f32.gmra.mxu0 %v246
  %v476 = vpop.f32.mrf.mxu0
  %v477 = vadd.f32 0.0, %v476
  %v478 = vpop.f32.mrf.mxu0
  %479 = vmatprep.mubr.f32.mxu0 0.0
  %480 = vmatmul.mubr.f32.gmra.mxu0 %v247
  %v481 = vpop.f32.mrf.mxu0
  %v482 = vadd.f32 0.0, %v481
  %v483 = vpop.f32.mrf.mxu0
  %484 = vmatprep.mubr.f32.mxu0 0.0
  %485 = vmatmul.mubr.f32.gmra.mxu0 %v248
  %v486 = vpop.f32.mrf.mxu0
  %v487 = vadd.f32 0.0, %v486
  %v488 = vpop.f32.mrf.mxu0
  %489 = vmatprep.mubr.f32.mxu0 0.0
  %490 = vmatmul.mubr.f32.gmra.mxu0 %v249
  %v491 = vpop.f32.mrf.mxu0
  %v492 = vadd.f32 0.0, %v491
  %v493 = vpop.f32.mrf.mxu0
  %494 = vmatprep.mubr.f32.mxu0 0.0
  %495 = vmatmul.mubr.f32.gmra.mxu0 %v250
  %v496 = vpop.f32.mrf.mxu0
  %v497 = vadd.f32 0.0, %v496
  %v498 = vpop.f32.mrf.mxu0
  %499 = vmatprep.mubr.f32.mxu0 0.0
  %500 = vmatmul.mubr.f32.gmra.mxu0 %v251
  %v501 = vpop.f32.mrf.mxu0
  %v502 = vadd.f32 0.0, %v501
  %v503 = vpop.f32.mrf.mxu0
  %504 = vmatprep.mubr.f32.mxu0 0.0
  %505 = vmatmul.mubr.f32.gmra.mxu0 %v252
  %v506 = vpop.f32.mrf.mxu0
  %v507 = vadd.f32 0.0, %v506
  %v508 = vpop.f32.mrf.mxu0
  %509 = vmatprep.mubr.f32.mxu0 0.0
  %510 = vmatmul.mubr.f32.gmra.mxu0 %v253
  %v511 = vpop.f32.mrf.mxu0
  %v512 = vadd.f32 0.0, %v511
  %v513 = vpop.f32.mrf.mxu0
  %514 = vmatprep.mubr.f32.mxu0 0.0
  %515 = vmatmul.mubr.f32.gmra.mxu0 %v254
  %v516 = vpop.f32.mrf.mxu0
  %v517 = vadd.f32 0.0, %v516
  %v518 = vpop.f32.mrf.mxu0
  %519 = vmatprep.mubr.f32.mxu0 0.0
  %520 = vmatmul.mubr.f32.gmra.mxu0 %v255
  %v521 = vpop.f32.mrf.mxu0
  %v522 = vadd.f32 0.0, %v521
  %v523 = vpop.f32.mrf.mxu0
  %524 = vmatprep.mubr.f32.mxu0 0.0
  %525 = vmatmul.mubr.f32.gmra.mxu0 %v256
  %v526 = vpop.f32.mrf.mxu0
  %v527 = vadd.f32 0.0, %v526
  %v528 = vpop.f32.mrf.mxu0
  %529 = vmatprep.mubr.f32.mxu0 0.0
  %530 = vmatmul.mubr.f32.gmra.mxu0 %v257
  %v531 = vpop.f32.mrf.mxu0
  %v532 = vadd.f32 0.0, %v531
  %v533 = vpop.f32.mrf.mxu0
  %534 = vmatprep.mubr.f32.mxu0 0.0
  %535 = vmatmul.mubr.f32.gmra.mxu0 %v258
  %v536 = vpop.f32.mrf.mxu0
  %v537 = vadd.f32 0.0, %v536
  %v538 = vpop.f32.mrf.mxu0
  %539 = vmatprep.mubr.f32.mxu0 0.0
  %540 = vmatmul.mubr.f32.gmra.mxu0 %v259
  %v541 = vpop.f32.mrf.mxu0
  %v542 = vadd.f32 0.0, %v541
  %v543 = vpop.f32.mrf.mxu0
  %544 = vmatprep.mubr.f32.mxu0 0.0
  %545 = vmatmul.mubr.f32.gmra.mxu0 %v260
  %v546 = vpop.f32.mrf.mxu0
  %v547 = vadd.f32 0.0, %v546
  %v548 = vpop.f32.mrf.mxu0
  %549 = vmatprep.mubr.f32.mxu0 0.0
  %550 = vmatmul.mubr.f32.gmra.mxu0 %v261
  %v551 = vpop.f32.mrf.mxu0
  %v552 = vadd.f32 0.0, %v551
  %v553 = vpop.f32.mrf.mxu0
  %554 = vmatprep.mubr.f32.mxu0 0.0
  %555 = vmatmul.mubr.f32.gmra.mxu0 %v262
  %v556 = vpop.f32.mrf.mxu0
  %v557 = vadd.f32 0.0, %v556
  %v558 = vpop.f32.mrf.mxu0
  %559 = vmatprep.mubr.f32.mxu0 0.0
  %560 = vmatmul.mubr.f32.gmra.mxu0 %v263
  %v561 = vpop.f32.mrf.mxu0
  %v562 = vadd.f32 0.0, %v561
  %v563 = vpop.f32.mrf.mxu0
  %564 = vmatprep.mubr.f32.mxu0 0.0
  %565 = vmatmul.mubr.f32.gmra.mxu0 %v264
  %v566 = vpop.f32.mrf.mxu0
  %v567 = vadd.f32 0.0, %v566
  %v568 = vpop.f32.mrf.mxu0
  %569 = vmatprep.mubr.f32.mxu0 0.0
  %570 = vmatmul.mubr.f32.gmra.mxu0 %v265
  %v571 = vpop.f32.mrf.mxu0
  %v572 = vadd.f32 0.0, %v571
  %v573 = vpop.f32.mrf.mxu0
  %574 = vmatprep.mubr.f32.mxu0 0.0
  %575 = vmatmul.mubr.f32.gmra.mxu0 %v266
  %v576 = vpop.f32.mrf.mxu0
  %v577 = vadd.f32 0.0, %v576
  %v578 = vpop.f32.mrf.mxu0
  %579 = vmatprep.mubr.f32.mxu0 0.0
  %580 = vmatmul.mubr.f32.gmra.mxu0 %v267
  %v581 = vpop.f32.mrf.mxu0
  %v582 = vadd.f32 0.0, %v581
  %v583 = vpop.f32.mrf.mxu0
  %584 = vmatprep.mubr.f32.mxu0 0.0
  %585 = vmatmul.mubr.f32.gmra.mxu0 %v268
  %v586 = vpop.f32.mrf.mxu0
  %v587 = vadd.f32 0.0, %v586
  %v588 = vpop.f32.mrf.mxu0
  %589 = vmatprep.mubr.f32.mxu0 0.0
  %590 = vmatmul.mubr.f32.gmra.mxu0 %v269
  %v591 = vpop.f32.mrf.mxu0
  %v592 = vadd.f32 0.0, %v591
  %v593 = vpop.f32.mrf.mxu0
  %594 = vmatprep.mubr.f32.mxu0 0.0
  %595 = vmatmul.mubr.f32.gmra.mxu0 %v270
  %v596 = vpop.f32.mrf.mxu0
  %v597 = vadd.f32 0.0, %v596
  %v598 = vpop.f32.mrf.mxu0
  %599 = vmatprep.mubr.f32.mxu0 0.0
  %600 = vmatmul.mubr.f32.gmra.mxu0 %v271
  %v601 = vpop.f32.mrf.mxu0
  %v602 = vadd.f32 0.0, %v601
  %v603 = vpop.f32.mrf.mxu0
  %604 = vmatprep.mubr.f32.mxu0 0.0
  %605 = vmatmul.mubr.f32.gmra.mxu0 %v272
  %v606 = vpop.f32.mrf.mxu0
  %v607 = vadd.f32 0.0, %v606
  %v608 = vpop.f32.mrf.mxu0
  %609 = vmatprep.mubr.f32.mxu0 0.0
  %610 = vmatmul.mubr.f32.gmra.mxu0 %v273
  %v611 = vpop.f32.mrf.mxu0
  %v612 = vadd.f32 0.0, %v611
  %v613 = vpop.f32.mrf.mxu0
  %614 = vmatprep.mubr.f32.mxu0 0.0
  %615 = vmatmul.mubr.f32.gmra.mxu0 %v274
  %v616 = vpop.f32.mrf.mxu0
  %v617 = vadd.f32 0.0, %v616
  %v618 = vpop.f32.mrf.mxu0
  %619 = vmatprep.mubr.f32.mxu0 0.0
  %620 = vmatmul.mubr.f32.gmra.mxu0 %v275
  %v621 = vpop.f32.mrf.mxu0
  %v622 = vadd.f32 0.0, %v621
  %v623 = vpop.f32.mrf.mxu0
  %624 = vmatprep.mubr.f32.mxu0 0.0
  %625 = vmatmul.mubr.f32.gmra.mxu0 %v276
  %v626 = vpop.f32.mrf.mxu0
  %v627 = vadd.f32 0.0, %v626
  %v628 = vpop.f32.mrf.mxu0
  %629 = vmatprep.mubr.f32.mxu0 0.0
  %630 = vmatmul.mubr.f32.gmra.mxu0 %v277
  %v631 = vpop.f32.mrf.mxu0
  %v632 = vadd.f32 0.0, %v631
  %v633 = vpop.f32.mrf.mxu0
  %634 = vmatprep.mubr.f32.mxu0 0.0
  %635 = vmatmul.mubr.f32.gmra.mxu0 %v278
  %v636 = vpop.f32.mrf.mxu0
  %v637 = vadd.f32 0.0, %v636
  %v638 = vpop.f32.mrf.mxu0
  %639 = vmatprep.mubr.f32.mxu0 0.0
  %640 = vmatmul.mubr.f32.gmra.mxu0 %v279
  %v641 = vpop.f32.mrf.mxu0
  %v642 = vadd.f32 0.0, %v641
  %v643 = vpop.f32.mrf.mxu0
  %644 = vmatprep.mubr.f32.mxu0 0.0
  %645 = vmatmul.mubr.f32.gmra.mxu0 %v280
  %v646 = vpop.f32.mrf.mxu0
  %v647 = vadd.f32 0.0, %v646
  %v648 = vpop.f32.mrf.mxu0
  %649 = vmatprep.mubr.f32.mxu0 0.0
  %650 = vmatmul.mubr.f32.gmra.mxu0 %v281
  %v651 = vpop.f32.mrf.mxu0
  %v652 = vadd.f32 0.0, %v651
  %v653 = vpop.f32.mrf.mxu0
  %654 = vmatprep.mubr.f32.mxu0 0.0
  %655 = vmatmul.mubr.f32.gmra.mxu0 %v282
  %v656 = vpop.f32.mrf.mxu0
  %v657 = vadd.f32 0.0, %v656
  %v658 = vpop.f32.mrf.mxu0
  %659 = vmatprep.mubr.f32.mxu0 0.0
  %660 = vmatmul.mubr.f32.gmra.mxu0 %v283
  %v661 = vpop.f32.mrf.mxu0
  %v662 = vadd.f32 0.0, %v661
  %v663 = vpop.f32.mrf.mxu0
  %664 = vmatprep.mubr.f32.mxu0 0.0
  %665 = vmatmul.mubr.f32.gmra.mxu0 %v284
  %v666 = vpop.f32.mrf.mxu0
  %v667 = vadd.f32 0.0, %v666
  %v668 = vpop.f32.mrf.mxu0
  %669 = vmatprep.mubr.f32.mxu0 0.0
  %670 = vmatmul.mubr.f32.gmra.mxu0 %v285
  %v671 = vpop.f32.mrf.mxu0
  %v672 = vadd.f32 0.0, %v671
  %v673 = vpop.f32.mrf.mxu0
  %674 = vmatprep.mubr.f32.mxu0 0.0
  %675 = vmatmul.mubr.f32.gmra.mxu0 %v286
  %v676 = vpop.f32.mrf.mxu0
  %v677 = vadd.f32 0.0, %v676
  %v678 = vpop.f32.mrf.mxu0
  %679 = vmatprep.mubr.f32.mxu0 0.0
  %680 = vmatmul.mubr.f32.gmra.mxu0 %v287
  %v681 = vpop.f32.mrf.mxu0
  %v682 = vadd.f32 0.0, %v681
  %v683 = vpop.f32.mrf.mxu0
  %684 = vmatprep.mubr.f32.mxu0 0.0
  %685 = vmatmul.mubr.f32.gmra.mxu0 %v288
  %v686 = vpop.f32.mrf.mxu0
  %v687 = vadd.f32 0.0, %v686
  %v688 = vpop.f32.mrf.mxu0
  %689 = vdwg.mxu0
  %690 = vst [vmem:[%s4] sm:$0xff] %v372
  %691 = vst [vmem:[%s4 + $0x8] sm:$0xff] %v377
  %692 = vst [vmem:[%s4 + $0x10] sm:$0xff] %v382
  %693 = vst [vmem:[%s4 + $0x18] sm:$0xff] %v387
  %694 = vst [vmem:[%s4 + $0x20] sm:$0xff] %v392
  %695 = vst [vmem:[%s4 + $0x28] sm:$0xff] %v397
  %696 = vst [vmem:[%s4 + $0x30] sm:$0xff] %v402
  %697 = vst [vmem:[%s4 + $0x38] sm:$0xff] %v407
  %698 = vst [vmem:[%s4 + $0x40] sm:$0xff] %v412
  %699 = vst [vmem:[%s4 + $0x48] sm:$0xff] %v417
  %700 = vst [vmem:[%s4 + $0x50] sm:$0xff] %v422
  %701 = vst [vmem:[%s4 + $0x58] sm:$0xff] %v427
  %702 = vst [vmem:[%s4 + $0x60] sm:$0xff] %v432
  %703 = vst [vmem:[%s4 + $0x68] sm:$0xff] %v437
  %704 = vst [vmem:[%s4 + $0x70] sm:$0xff] %v442
  %705 = vst [vmem:[%s4 + $0x78] sm:$0xff] %v447
  %706 = vst [vmem:[%s4 + $0x80] sm:$0xff] %v452
  %707 = vst [vmem:[%s4 + $0x88] sm:$0xff] %v457
  %708 = vst [vmem:[%s4 + $0x90] sm:$0xff] %v462
  %709 = vst [vmem:[%s4 + $0x98] sm:$0xff] %v467
  %710 = vst [vmem:[%s4 + $0xa0] sm:$0xff] %v472
  %711 = vst [vmem:[%s4 + $0xa8] sm:$0xff] %v477
  %712 = vst [vmem:[%s4 + $0xb0] sm:$0xff] %v482
  %713 = vst [vmem:[%s4 + $0xb8] sm:$0xff] %v487
  %714 = vst [vmem:[%s4 + $0xc0] sm:$0xff] %v492
  %715 = vst [vmem:[%s4 + $0xc8] sm:$0xff] %v497
  %716 = vst [vmem:[%s4 + $0xd0] sm:$0xff] %v502
  %717 = vst [vmem:[%s4 + $0xd8] sm:$0xff] %v507
  %718 = vst [vmem:[%s4 + $0xe0] sm:$0xff] %v512
  %719 = vst [vmem:[%s4 + $0xe8] sm:$0xff] %v517
  %720 = vst [vmem:[%s4 + $0xf0] sm:$0xff] %v522
  %721 = vst [vmem:[%s4 + $0xf8] sm:$0xff] %v527
  %722 = vst [vmem:[%s4 + $0x100] sm:$0xff] %v532
  %723 = vst [vmem:[%s4 + $0x108] sm:$0xff] %v537
  %724 = vst [vmem:[%s4 + $0x110] sm:$0xff] %v542
  %725 = vst [vmem:[%s4 + $0x118] sm:$0xff] %v547
  %726 = vst [vmem:[%s4 + $0x120] sm:$0xff] %v552
  %727 = vst [vmem:[%s4 + $0x128] sm:$0xff] %v557
  %728 = vst [vmem:[%s4 + $0x130] sm:$0xff] %v562
  %729 = vst [vmem:[%s4 + $0x138] sm:$0xff] %v567
  %730 = vst [vmem:[%s4 + $0x140] sm:$0xff] %v572
  %731 = vst [vmem:[%s4 + $0x148] sm:$0xff] %v577
  %732 = vst [vmem:[%s4 + $0x150] sm:$0xff] %v582
  %733 = vst [vmem:[%s4 + $0x158] sm:$0xff] %v587
  %734 = vst [vmem:[%s4 + $0x160] sm:$0xff] %v592
  %735 = vst [vmem:[%s4 + $0x168] sm:$0xff] %v597
  %736 = vst [vmem:[%s4 + $0x170] sm:$0xff] %v602
  %737 = vst [vmem:[%s4 + $0x178] sm:$0xff] %v607
  %738 = vst [vmem:[%s4 + $0x180] sm:$0xff] %v612
  %739 = vst [vmem:[%s4 + $0x188] sm:$0xff] %v617
  %740 = vst [vmem:[%s4 + $0x190] sm:$0xff] %v622
  %741 = vst [vmem:[%s4 + $0x198] sm:$0xff] %v627
  %742 = vst [vmem:[%s4 + $0x1a0] sm:$0xff] %v632
  %743 = vst [vmem:[%s4 + $0x1a8] sm:$0xff] %v637
  %744 = vst [vmem:[%s4 + $0x1b0] sm:$0xff] %v642
  %745 = vst [vmem:[%s4 + $0x1b8] sm:$0xff] %v647
  %746 = vst [vmem:[%s4 + $0x1c0] sm:$0xff] %v652
  %747 = vst [vmem:[%s4 + $0x1c8] sm:$0xff] %v657
  %748 = vst [vmem:[%s4 + $0x1d0] sm:$0xff] %v662
  %749 = vst [vmem:[%s4 + $0x1d8] sm:$0xff] %v667
  %750 = vst [vmem:[%s4 + $0x1e0] sm:$0xff] %v672
  %751 = vst [vmem:[%s4 + $0x1e8] sm:$0xff] %v677
  %752 = vst [vmem:[%s4 + $0x1f0] sm:$0xff] %v682
  %753 = vst [vmem:[%s4 + $0x1f8] sm:$0xff] %v687
  %v754 = vadd.f32 %v372, %v377
  %v755 = vadd.f32 %v754, %v382
  %v756 = vadd.f32 %v755, %v387
  %v757 = vadd.f32 %v756, %v392
  %v758 = vadd.f32 %v757, %v397
  %v759 = vadd.f32 %v758, %v402
  %v760 = vadd.f32 %v759, %v407
  %v761 = vadd.f32 %v760, %v412
  %v762 = vadd.f32 %v761, %v417
  %v763 = vadd.f32 %v762, %v422
  %v764 = vadd.f32 %v763, %v427
  %v765 = vadd.f32 %v764, %v432
  %v766 = vadd.f32 %v765, %v437
  %v767 = vadd.f32 %v766, %v442
  %v768 = vadd.f32 %v767, %v447
  %v769 = vadd.f32 %v768, %v452
  %v770 = vadd.f32 %v769, %v457
  %v771 = vadd.f32 %v770, %v462
  %v772 = vadd.f32 %v771, %v467
  %v773 = vadd.f32 %v772, %v472
  %v774 = vadd.f32 %v773, %v477
  %v775 = vadd.f32 %v774, %v482
  %v776 = vadd.f32 %v775, %v487
  %v777 = vadd.f32 %v776, %v492
  %v778 = vadd.f32 %v777, %v497
  %v779 = vadd.f32 %v778, %v502
  %v780 = vadd.f32 %v779, %v507
  %v781 = vadd.f32 %v780, %v512
  %v782 = vadd.f32 %v781, %v517
  %v783 = vadd.f32 %v782, %v522
  %v784 = vadd.f32 %v783, %v527
  %v785 = vadd.f32 %v784, %v532
  %v786 = vadd.f32 %v785, %v537
  %v787 = vadd.f32 %v786, %v542
  %v788 = vadd.f32 %v787, %v547
  %v789 = vadd.f32 %v788, %v552
  %v790 = vadd.f32 %v789, %v557
  %v791 = vadd.f32 %v790, %v562
  %v792 = vadd.f32 %v791, %v567
  %v793 = vadd.f32 %v792, %v572
  %v794 = vadd.f32 %v793, %v577
  %v795 = vadd.f32 %v794, %v582
  %v796 = vadd.f32 %v795, %v587
  %v797 = vadd.f32 %v796, %v592
  %v798 = vadd.f32 %v797, %v597
  %v799 = vadd.f32 %v798, %v602
  %v800 = vadd.f32 %v799, %v607
  %v801 = vadd.f32 %v800, %v612
  %v802 = vadd.f32 %v801, %v617
  %v803 = vadd.f32 %v802, %v622
  %v804 = vadd.f32 %v803, %v627
  %v805 = vadd.f32 %v804, %v632
  %v806 = vadd.f32 %v805, %v637
  %v807 = vadd.f32 %v806, %v642
  %v808 = vadd.f32 %v807, %v647
  %v809 = vadd.f32 %v808, %v652
  %v810 = vadd.f32 %v809, %v657
  %v811 = vadd.f32 %v810, %v662
  %v812 = vadd.f32 %v811, %v667
  %v813 = vadd.f32 %v812, %v672
  %v814 = vadd.f32 %v813, %v677
  %v815 = vadd.f32 %v814, %v682
  %v816 = vadd.f32 %v815, %v687
  %v817 = vrot.slane %v816, 4
  %v818 = vadd.f32 %v816, %v817
  %v819 = vrot.slane %v818, 2
  %v820 = vadd.f32 %v818, %v819
  %v821 = vrot.slane %v820, 1
  %v822 = vadd.f32 %v820, %v821
  %v823 = vmul.f32 %v372, %v372
  %v824 = vmul.f32 %v377, %v377
  %v825 = vmul.f32 %v382, %v382
  %v826 = vmul.f32 %v387, %v387
  %v827 = vmul.f32 %v392, %v392
  %v828 = vmul.f32 %v397, %v397
  %v829 = vmul.f32 %v402, %v402
  %v830 = vmul.f32 %v407, %v407
  %v831 = vmul.f32 %v412, %v412
  %v832 = vmul.f32 %v417, %v417
  %v833 = vmul.f32 %v422, %v422
  %v834 = vmul.f32 %v427, %v427
  %v835 = vmul.f32 %v432, %v432
  %v836 = vmul.f32 %v437, %v437
  %v837 = vmul.f32 %v442, %v442
  %v838 = vmul.f32 %v447, %v447
  %v839 = vmul.f32 %v452, %v452
  %v840 = vmul.f32 %v457, %v457
  %v841 = vmul.f32 %v462, %v462
  %v842 = vmul.f32 %v467, %v467
  %v843 = vmul.f32 %v472, %v472
  %v844 = vmul.f32 %v477, %v477
  %v845 = vmul.f32 %v482, %v482
  %v846 = vmul.f32 %v487, %v487
  %v847 = vmul.f32 %v492, %v492
  %v848 = vmul.f32 %v497, %v497
  %v849 = vmul.f32 %v502, %v502
  %v850 = vmul.f32 %v507, %v507
  %v851 = vmul.f32 %v512, %v512
  %v852 = vmul.f32 %v517, %v517
  %v853 = vmul.f32 %v522, %v522
  %v854 = vmul.f32 %v527, %v527
  %v855 = vmul.f32 %v532, %v532
  %v856 = vmul.f32 %v537, %v537
  %v857 = vmul.f32 %v542, %v542
  %v858 = vmul.f32 %v547, %v547
  %v859 = vmul.f32 %v552, %v552
  %v860 = vmul.f32 %v557, %v557
  %v861 = vmul.f32 %v562, %v562
  %v862 = vmul.f32 %v567, %v567
  %v863 = vmul.f32 %v572, %v572
  %v864 = vmul.f32 %v577, %v577
  %v865 = vmul.f32 %v582, %v582
  %v866 = vmul.f32 %v587, %v587
  %v867 = vmul.f32 %v592, %v592
  %v868 = vmul.f32 %v597, %v597
  %v869 = vmul.f32 %v602, %v602
  %v870 = vmul.f32 %v607, %v607
  %v871 = vmul.f32 %v612, %v612
  %v872 = vmul.f32 %v617, %v617
  %v873 = vmul.f32 %v622, %v622
  %v874 = vmul.f32 %v627, %v627
  %v875 = vmul.f32 %v632, %v632
  %v876 = vmul.f32 %v637, %v637
  %v877 = vmul.f32 %v642, %v642
  %v878 = vmul.f32 %v647, %v647
  %v879 = vmul.f32 %v652, %v652
  %v880 = vmul.f32 %v657, %v657
  %v881 = vmul.f32 %v662, %v662
  %v882 = vmul.f32 %v667, %v667
  %v883 = vmul.f32 %v672, %v672
  %v884 = vmul.f32 %v677, %v677
  %v885 = vmul.f32 %v682, %v682
  %v886 = vmul.f32 %v687, %v687
  %v887 = vadd.f32 %v823, %v824
  %v888 = vadd.f32 %v887, %v825
  %v889 = vadd.f32 %v888, %v826
  %v890 = vadd.f32 %v889, %v827
  %v891 = vadd.f32 %v890, %v828
  %v892 = vadd.f32 %v891, %v829
  %v893 = vadd.f32 %v892, %v830
  %v894 = vadd.f32 %v893, %v831
  %v895 = vadd.f32 %v894, %v832
  %v896 = vadd.f32 %v895, %v833
  %v897 = vadd.f32 %v896, %v834
  %v898 = vadd.f32 %v897, %v835
  %v899 = vadd.f32 %v898, %v836
  %v900 = vadd.f32 %v899, %v837
  %v901 = vadd.f32 %v900, %v838
  %v902 = vadd.f32 %v901, %v839
  %v903 = vadd.f32 %v902, %v840
  %v904 = vadd.f32 %v903, %v841
  %v905 = vadd.f32 %v904, %v842
  %v906 = vadd.f32 %v905, %v843
  %v907 = vadd.f32 %v906, %v844
  %v908 = vadd.f32 %v907, %v845
  %v909 = vadd.f32 %v908, %v846
  %v910 = vadd.f32 %v909, %v847
  %v911 = vadd.f32 %v910, %v848
  %v912 = vadd.f32 %v911, %v849
  %v913 = vadd.f32 %v912, %v850
  %v914 = vadd.f32 %v913, %v851
  %v915 = vadd.f32 %v914, %v852
  %v916 = vadd.f32 %v915, %v853
  %v917 = vadd.f32 %v916, %v854
  %v918 = vadd.f32 %v917, %v855
  %v919 = vadd.f32 %v918, %v856
  %v920 = vadd.f32 %v919, %v857
  %v921 = vadd.f32 %v920, %v858
  %v922 = vadd.f32 %v921, %v859
  %v923 = vadd.f32 %v922, %v860
  %v924 = vadd.f32 %v923, %v861
  %v925 = vadd.f32 %v924, %v862
  %v926 = vadd.f32 %v925, %v863
  %v927 = vadd.f32 %v926, %v864
  %v928 = vadd.f32 %v927, %v865
  %v929 = vadd.f32 %v928, %v866
  %v930 = vadd.f32 %v929, %v867
  %v931 = vadd.f32 %v930, %v868
  %v932 = vadd.f32 %v931, %v869
  %v933 = vadd.f32 %v932, %v870
  %v934 = vadd.f32 %v933, %v871
  %v935 = vadd.f32 %v934, %v872
  %v936 = vadd.f32 %v935, %v873
  %v937 = vadd.f32 %v936, %v874
  %v938 = vadd.f32 %v937, %v875
  %v939 = vadd.f32 %v938, %v876
  %v940 = vadd.f32 %v939, %v877
  %v941 = vadd.f32 %v940, %v878
  %v942 = vadd.f32 %v941, %v879
  %v943 = vadd.f32 %v942, %v880
  %v944 = vadd.f32 %v943, %v881
  %v945 = vadd.f32 %v944, %v882
  %v946 = vadd.f32 %v945, %v883
  %v947 = vadd.f32 %v946, %v884
  %v948 = vadd.f32 %v947, %v885
  %v949 = vadd.f32 %v948, %v886
  %v950 = vrot.slane %v949, 4
  %v951 = vadd.f32 %v949, %v950
  %v952 = vrot.slane %v951, 2
  %v953 = vadd.f32 %v951, %v952
  %v954 = vrot.slane %v953, 1
  %v955 = vadd.f32 %v953, %v954
  %vm956 = vcmask 1040384
  %v957 = vsel %vm956, %v822, %v955
  %vm958 = vcmask 1041408
  %v959 = vsel %vm958, %v957, 0.0
  %960 = vst [vmem:[%s5] sm:$0xff] %v959
  // Predicated region
  $region18: #{bottleneck_forward.6} parent=0 // pred_check
    _
  $region19: #{bottleneck_forward.6} parent=0 // pred_check_branch
    %962 = sbr.rel (0) target = $region21
  $region20: #{bottleneck_forward.6} parent=0 // pred_region
    _
  $region21: #{bottleneck_forward.6} parent=0 // pred_fallthru
    _
  // Predicated region
  $region22: #{bottleneck_forward.6} parent=0 // pred_check
    _
  $region23: #{bottleneck_forward.6} parent=0 // pred_check_branch
    %964 = sbr.rel (0) target = $region25
  $region24: #{bottleneck_forward.6} parent=0 // pred_region
    _
  $region25: #{bottleneck_forward.6} parent=0 // pred_fallthru
    _
  // Predicated region
  $region26: #{bottleneck_forward.6} parent=0 // pred_check
    _
  $region27: #{bottleneck_forward.6} parent=0 // pred_check_branch
    %966 = sbr.rel (0) target = $region29
  $region28: #{bottleneck_forward.6} parent=0 // pred_region
    _
  $region29: #{bottleneck_forward.6} parent=0 // pred_fallthru
    _
  // Predicated region
  $region30: #{bottleneck_forward.6} parent=0 // pred_check
    _
  $region31: #{bottleneck_forward.6} parent=0 // pred_check_branch
    %968 = sbr.rel (0) target = $region33
  $region32: #{bottleneck_forward.6} parent=0 // pred_region
    _
  $region33: #{bottleneck_forward.6} parent=0 // pred_fallthru
    _

// kernel: bottleneck_forward.5
$region0: #{bottleneck_forward.5}
  #allocation0 [shape = 'u32[]', space=smem, size = 0x4, offset = 0x4, fixed_abs, tag = 'smem constant byte address 0x4 - core index']
  #allocation1 [shape = 'u32[144,128]{1,0:T(1,128)}', space=vmem, size = 0x12000, scoped, tag = 'internal scratch']
  #allocation2 [shape = 'f32[18,18,128]{2,1,0:T(8,128)}', space=vmem, size = 0x36000, scoped, tag = 'scratch operand']
  %s0 = inlined_call_operand.vmem [shape: f32[2,256,128], index: 0, kind: input, shape index: {}]
  %s1 = inlined_call_operand.vmem [shape: f32[1,128], index: 1, kind: input, shape index: {}]
  %s2 = inlined_call_operand.vmem [shape: f32[1,128], index: 2, kind: input, shape index: {}]
  %s3 = inlined_call_operand.vmem [shape: f32[9,128,128], index: 3, kind: input, shape index: {}]
  %s4 = inlined_call_operand.vmem [shape: f32[2,256,128], index: 4, kind: output, shape index: {0}]
  %s5 = inlined_call_operand.vmem [shape: f32[2,8,128], index: 5, kind: output, shape index: {1}]
  %6 = xla_tuple %s4, %s5
  %s7 = sld [smem:[#allocation0]]
  $region57: #{bottleneck_forward.5} parent=0
    _
  %s9 = ssub.s32 1, %s7
  %s10 = scalar_select 0, %s9, %s7
  loop: start=0, step=1, limit=4
  $region2: #{bottleneck_forward.5} parent=0 // loop_pre_header
    _
  $region3: #{bottleneck_forward.5} parent=0 // loop_header
    %s12 = sphi 0, %s16
    %p13 = scmp.ge.s32.totalorder %s12, 4
    %s22 = sphi 0, %s24
    %s25 = sphi 0, %s22
    %s26 = sphi 0, %s25
    %s42 = sphi 0, %s26
    %s46 = sphi 0, %s46
    %s48 = sphi 0, %s46
    %s49 = sphi 0, %s48
    %s63 = sphi 0, %s49
    %s67 = sphi 0, %s67
    %s69 = sphi 0, %s67
    %s70 = sphi 0, %s69
    %s84 = sphi 0, %s70
    %s88 = sphi 0, %s88
    %s90 = sphi 0, %s88
    %s91 = sphi 0, %s90
    %s105 = sphi 0, %s91
    %s111 = sphi 0, %s113
    %s114 = sphi 0, %s111
    %s115 = sphi 0, %s114
    %s131 = sphi 0, %s115
    %s137 = sphi 0, %s139
    %s140 = sphi 0, %s137
    %s141 = sphi 0, %s140
    %s157 = sphi 0, %s141
  $region4: #{bottleneck_forward.5} parent=0 // loop_header_branch
    %15 = sbr.rel (%p13) target = $region8
  $region5: #{bottleneck_forward.5} parent=0 // loop_body
    %s17 = ssub.s32 %s12, 1
    %s18 = ssub.s32 %s12, 2
    %s19 = sadd.s32 %s12, 1
    %s20 = ssub.s32 %s12, %s19
    %p21 = scmp.eq.s32.totalorder %s20, 0
    %s23 = sadd.s32 %s22, 1
    %s24 = scalar_select %p21, %s22, %s23
    %p27 = pneg %p21
    %p28 = scmp.eq.s32.totalorder %s12, 1
    %p29 = por %p27, %p28
    %p30 = scmp.ne.s32.totalorder %s22, %s25
    %p31 = scmp.eq.s32.totalorder %s12, 0
    %p32 = por %p30, %p31
    %p33 = scmp.ne.s32.totalorder %s22, %s25
    %p34 = scmp.eq.s32.totalorder %s17, 1
    %p35 = por %p33, %p34
    %p36 = scmp.ne.s32.totalorder %s25, %s26
    %p37 = scmp.eq.s32.totalorder %s17, 0
    %p38 = por %p36, %p37
    %p39 = scmp.ne.s32.totalorder %s25, %s26
    %p40 = scmp.eq.s32.totalorder %s18, 1
    %p41 = por %p39, %p40
    %p43 = scmp.ne.s32.totalorder %s26, %s42
    %p44 = scmp.eq.s32.totalorder %s18, 0
    %p45 = por %p43, %p44
    %s47 = sadd.s32 %s46, 1
    %p50 = scmp.eq.s32.totalorder %s12, 1
    %p51 = scmp.ne.s32.totalorder %s46, %s48
    %p52 = scmp.eq.s32.totalorder %s12, 0
    %p53 = por %p51, %p52
    %p54 = scmp.ne.s32.totalorder %s46, %s48
    %p55 = scmp.eq.s32.totalorder %s17, 1
    %p56 = por %p54, %p55
    %p57 = scmp.ne.s32.totalorder %s48, %s49
    %p58 = scmp.eq.s32.totalorder %s17, 0
    %p59 = por %p57, %p58
    %p60 = scmp.ne.s32.totalorder %s48, %s49
    %p61 = scmp.eq.s32.totalorder %s18, 1
    %p62 = por %p60, %p61
    %p64 = scmp.ne.s32.totalorder %s49, %s63
    %p65 = scmp.eq.s32.totalorder %s18, 0
    %p66 = por %p64, %p65
    %s68 = sadd.s32 %s67, 1
    %p71 = scmp.eq.s32.totalorder %s12, 1
    %p72 = scmp.ne.s32.totalorder %s67, %s69
    %p73 = scmp.eq.s32.totalorder %s12, 0
    %p74 = por %p72, %p73
    %p75 = scmp.ne.s32.totalorder %s67, %s69
    %p76 = scmp.eq.s32.totalorder %s17, 1
    %p77 = por %p75, %p76
    %p78 = scmp.ne.s32.totalorder %s69, %s70
    %p79 = scmp.eq.s32.totalorder %s17, 0
    %p80 = por %p78, %p79
    %p81 = scmp.ne.s32.totalorder %s69, %s70
    %p82 = scmp.eq.s32.totalorder %s18, 1
    %p83 = por %p81, %p82
    %p85 = scmp.ne.s32.totalorder %s70, %s84
    %p86 = scmp.eq.s32.totalorder %s18, 0
    %p87 = por %p85, %p86
    %s89 = sadd.s32 %s88, 1
    %p92 = scmp.eq.s32.totalorder %s12, 1
    %p93 = scmp.ne.s32.totalorder %s88, %s90
    %p94 = scmp.eq.s32.totalorder %s12, 0
    %p95 = por %p93, %p94
    %p96 = scmp.ne.s32.totalorder %s88, %s90
    %p97 = scmp.eq.s32.totalorder %s17, 1
    %p98 = por %p96, %p97
    %p99 = scmp.ne.s32.totalorder %s90, %s91
    %p100 = scmp.eq.s32.totalorder %s17, 0
    %p101 = por %p99, %p100
    %p102 = scmp.ne.s32.totalorder %s90, %s91
    %p103 = scmp.eq.s32.totalorder %s18, 1
    %p104 = por %p102, %p103
    %p106 = scmp.ne.s32.totalorder %s91, %s105
    %p107 = scmp.eq.s32.totalorder %s18, 0
    %p108 = por %p106, %p107
    %s109 = ssub.s32 %s12, %s19
    %p110 = scmp.eq.s32.totalorder %s109, 0
    %s112 = sadd.s32 %s111, 1
    %s113 = scalar_select %p110, %s111, %s112
    %p116 = pneg %p110
    %p117 = scmp.eq.s32.totalorder %s12, 1
    %p118 = por %p116, %p117
    %p119 = scmp.ne.s32.totalorder %s111, %s114
    %p120 = scmp.eq.s32.totalorder %s12, 0
    %p121 = por %p119, %p120
    %p122 = scmp.ne.s32.totalorder %s111, %s114
    %p123 = scmp.eq.s32.totalorder %s17, 1
    %p124 = por %p122, %p123
    %p125 = scmp.ne.s32.totalorder %s114, %s115
    %p126 = scmp.eq.s32.totalorder %s17, 0
    %p127 = por %p125, %p126
    %p128 = scmp.ne.s32.totalorder %s114, %s115
    %p129 = scmp.eq.s32.totalorder %s18, 1
    %p130 = por %p128, %p129
    %p132 = scmp.ne.s32.totalorder %s115, %s131
    %p133 = scmp.eq.s32.totalorder %s18, 0
    %p134 = por %p132, %p133
    %s135 = ssub.s32 %s12, %s19
    %p136 = scmp.eq.s32.totalorder %s135, 0
    %s138 = sadd.s32 %s137, 1
    %s139 = scalar_select %p136, %s137, %s138
    %p142 = pneg %p136
    %p143 = scmp.eq.s32.totalorder %s12, 1
    %p144 = por %p142, %p143
    %p145 = scmp.ne.s32.totalorder %s137, %s140
    %p146 = scmp.eq.s32.totalorder %s12, 0
    %p147 = por %p145, %p146
    %p148 = scmp.ne.s32.totalorder %s137, %s140
    %p149 = scmp.eq.s32.totalorder %s17, 1
    %p150 = por %p148, %p149
    %p151 = scmp.ne.s32.totalorder %s140, %s141
    %p152 = scmp.eq.s32.totalorder %s17, 0
    %p153 = por %p151, %p152
    %p154 = scmp.ne.s32.totalorder %s140, %s141
    %p155 = scmp.eq.s32.totalorder %s18, 1
    %p156 = por %p154, %p155
    %p158 = scmp.ne.s32.totalorder %s141, %s157
    %p159 = scmp.eq.s32.totalorder %s18, 0
    %p160 = por %p158, %p159
    %p161 = scmp.le.s32.totalorder 1, %s12
    %p162 = scmp.lt.s32.totalorder %s12, 3
    %p163 = pnand %p161, %p162
    %p164 = pneg %p163
    // Predicated region
    $region9: #{bottleneck_forward.5} parent=5 // pred_check
      _
    $region10: #{bottleneck_forward.5} parent=5 // pred_check_branch
      %166 = sbr.rel (%p163) target = $region12
    $region11: #{bottleneck_forward.5} parent=5 // pred_region
      %s167 = ssub.s32 %s12, 1
      // Predicated region
      $region13: #{bottleneck_forward.5} parent=11 // pred_check
        %p168 = pneg %p59
      $region14: #{bottleneck_forward.5} parent=11 // pred_check_branch
        %170 = sbr.rel (%p168) target = $region16
      $region15: #{bottleneck_forward.5} parent=11 // pred_region
        _
      $region16: #{bottleneck_forward.5} parent=11 // pred_fallthru
        _
      // Predicated region
      $region17: #{bottleneck_forward.5} parent=11 // pred_check
        %p171 = pneg %p80
      $region18: #{bottleneck_forward.5} parent=11 // pred_check_branch
        %173 = sbr.rel (%p171) target = $region20
      $region19: #{bottleneck_forward.5} parent=11 // pred_region
        _
      $region20: #{bottleneck_forward.5} parent=11 // pred_fallthru
        _
      // Predicated region
      $region21: #{bottleneck_forward.5} parent=11 // pred_check
        %p174 = pneg %p101
      $region22: #{bottleneck_forward.5} parent=11 // pred_check_branch
        %176 = sbr.rel (%p174) target = $region24
      $region23: #{bottleneck_forward.5} parent=11 // pred_region
        _
      $region24: #{bottleneck_forward.5} parent=11 // pred_fallthru
        _
    $region12: #{bottleneck_forward.5} parent=5 // pred_fallthru
      _
    %p177 = scmp.lt.s32.totalorder %s12, 2
    // Predicated region
    $region25: #{bottleneck_forward.5} parent=5 // pred_check
      %p178 = pneg %p177
    $region26: #{bottleneck_forward.5} parent=5 // pred_check_branch
      %180 = sbr.rel (%p178) target = $region28
    $region27: #{bottleneck_forward.5} parent=5 // pred_region
      // Predicated region
      $region29: #{bottleneck_forward.5} parent=27 // pred_check
        %p181 = pneg %p32
      $region30: #{bottleneck_forward.5} parent=27 // pred_check_branch
        %183 = sbr.rel (%p181) target = $region32
      $region31: #{bottleneck_forward.5} parent=27 // pred_region
        %p184 = scmp.lt.s32.totalorder %s12, 1
        %s185 = scalar_select %p184, %s12, 1
        %s186 = smul.addr %s185, 32
        %s187 = smul.addr %s186, 8
        %s188 = scalar_lea.vmem %s0, %s187
      $region32: #{bottleneck_forward.5} parent=27 // pred_fallthru
        _
    $region28: #{bottleneck_forward.5} parent=5 // pred_fallthru
      _
    %p189 = scmp.le.s32.totalorder 1, %s12
    %p190 = scmp.lt.s32.totalorder %s12, 3
    %p191 = pnand %p189, %p190
    %p192 = pneg %p191
    // Predicated region
    $region33: #{bottleneck_forward.5} parent=5 // pred_check
      _
    $region34: #{bottleneck_forward.5} parent=5 // pred_check_branch
      %194 = sbr.rel (%p191) target = $region36
    $region35: #{bottleneck_forward.5} parent=5 // pred_region
      %s195 = ssub.s32 %s12, 1
      %p196 = scmp.lt.s32.totalorder %s17, 1
      %s197 = scalar_select %p196, %s17, 1
      %s198 = smul.addr %s197, 32
      %s199 = smul.addr %s198, 8
      %s200 = scalar_lea.vmem %s0, %s199
      %p201 = pneg %p38
      %p202 = pneg %p35
      %p203 = pneg %p59
      %p204 = pneg %p56
      %p205 = pneg %p80
      %p206 = pneg %p77
      %p207 = pneg %p101
      %p208 = pneg %p98
      %p209 = pneg %p127
      %p210 = pneg %p124
      %p211 = scmp.lt.s32.totalorder %s17, 1
      %s212 = scalar_select %p211, %s17, 1
      %s213 = smul.addr %s212, 32
      %s214 = smul.addr %s213, 8
      %s215 = scalar_lea.vmem %s4, %s214
      %p216 = pneg %p153
      %p217 = pneg %p150
      %p218 = scmp.lt.s32.totalorder %s17, 1
      %s219 = scalar_select %p218, %s17, 1
      %s220 = smul.addr %s219, 8
      %s221 = scalar_lea.vmem %s5, %s220
      %p222 = scmp.lt.s32.totalorder %s17, 1
      %s223 = scalar_select %p222, %s17, 1
      %s224 = smul.addr %s223, 32
      %s225 = smul.addr %s224, 8
      %s226 = scalar_lea.vmem %s0, %s225
      %p227 = scmp.lt.s32.totalorder %s17, 1
      %s228 = scalar_select %p227, %s17, 1
      %s229 = smul.addr %s228, 32
      %s230 = smul.addr %s229, 8
      %s231 = scalar_lea.vmem %s4, %s230
      %p232 = scmp.lt.s32.totalorder %s17, 1
      %s233 = scalar_select %p232, %s17, 1
      %s234 = smul.addr %s233, 8
      %s235 = scalar_lea.vmem %s5, %s234
      %v236 = vld [vmem:[%s226] sm:$0xff]
      %v237 = vld [vmem:[%s226 + $0x8] sm:$0xff]
      %v238 = vld [vmem:[%s226 + $0x10] sm:$0xff]
      %v239 = vld [vmem:[%s226 + $0x18] sm:$0xff]
      %v240 = vld [vmem:[%s226 + $0x20] sm:$0xff]
      %v241 = vld [vmem:[%s226 + $0x28] sm:$0xff]
      %v242 = vld [vmem:[%s226 + $0x30] sm:$0xff]
      %v243 = vld [vmem:[%s226 + $0x38] sm:$0xff]
      %v244 = vld [vmem:[%s226 + $0x40] sm:$0xff]
      %v245 = vld [vmem:[%s226 + $0x48] sm:$0xff]
      %v246 = vld [vmem:[%s226 + $0x50] sm:$0xff]
      %v247 = vld [vmem:[%s226 + $0x58] sm:$0xff]
      %v248 = vld [vmem:[%s226 + $0x60] sm:$0xff]
      %v249 = vld [vmem:[%s226 + $0x68] sm:$0xff]
      %v250 = vld [vmem:[%s226 + $0x70] sm:$0xff]
      %v251 = vld [vmem:[%s226 + $0x78] sm:$0xff]
      %v252 = vld [vmem:[%s226 + $0x80] sm:$0xff]
      %v253 = vld [vmem:[%s226 + $0x88] sm:$0xff]
      %v254 = vld [vmem:[%s226 + $0x90] sm:$0xff]
      %v255 = vld [vmem:[%s226 + $0x98] sm:$0xff]
      %v256 = vld [vmem:[%s226 + $0xa0] sm:$0xff]
      %v257 = vld [vmem:[%s226 + $0xa8] sm:$0xff]
      %v258 = vld [vmem:[%s226 + $0xb0] sm:$0xff]
      %v259 = vld [vmem:[%s226 + $0xb8] sm:$0xff]
      %v260 = vld [vmem:[%s226 + $0xc0] sm:$0xff]
      %v261 = vld [vmem:[%s226 + $0xc8] sm:$0xff]
      %v262 = vld [vmem:[%s226 + $0xd0] sm:$0xff]
      %v263 = vld [vmem:[%s226 + $0xd8] sm:$0xff]
      %v264 = vld [vmem:[%s226 + $0xe0] sm:$0xff]
      %v265 = vld [vmem:[%s226 + $0xe8] sm:$0xff]
      %v266 = vld [vmem:[%s226 + $0xf0] sm:$0xff]
      %v267 = vld [vmem:[%s226 + $0xf8] sm:$0xff]
      %v268 = vld [vmem:[%s1] sm:$0x1]
      %v270 = vlaneseq
      %v271 = vshrl.u32 %v270, 7
      %v272 = vsub.s32 0, %v271
      %v273 = vrot.slane %v268, %v272
      %v275 = vmul.f32 %v236, %v273
      %v276 = vmul.f32 %v237, %v273
      %v277 = vmul.f32 %v238, %v273
      %v278 = vmul.f32 %v239, %v273
      %v279 = vmul.f32 %v240, %v273
      %v280 = vmul.f32 %v241, %v273
      %v281 = vmul.f32 %v242, %v273
      %v282 = vmul.f32 %v243, %v273
      %v283 = vmul.f32 %v244, %v273
      %v284 = vmul.f32 %v245, %v273
      %v285 = vmul.f32 %v246, %v273
      %v286 = vmul.f32 %v247, %v273
      %v287 = vmul.f32 %v248, %v273
      %v288 = vmul.f32 %v249, %v273
      %v289 = vmul.f32 %v250, %v273
      %v290 = vmul.f32 %v251, %v273
      %v291 = vmul.f32 %v252, %v273
      %v292 = vmul.f32 %v253, %v273
      %v293 = vmul.f32 %v254, %v273
      %v294 = vmul.f32 %v255, %v273
      %v295 = vmul.f32 %v256, %v273
      %v296 = vmul.f32 %v257, %v273
      %v297 = vmul.f32 %v258, %v273
      %v298 = vmul.f32 %v259, %v273
      %v299 = vmul.f32 %v260, %v273
      %v300 = vmul.f32 %v261, %v273
      %v301 = vmul.f32 %v262, %v273
      %v302 = vmul.f32 %v263, %v273
      %v303 = vmul.f32 %v264, %v273
      %v304 = vmul.f32 %v265, %v273
      %v305 = vmul.f32 %v266, %v273
      %v306 = vmul.f32 %v267, %v273
      %v307 = vld [vmem:[%s2] sm:$0x1]
      %v309 = vlaneseq
      %v310 = vshrl.u32 %v309, 7
      %v311 = vsub.s32 0, %v310
      %v312 = vrot.slane %v307, %v311
      %v314 = vadd.f32 %v275, %v312
      %v315 = vadd.f32 %v276, %v312
      %v316 = vadd.f32 %v277, %v312
      %v317 = vadd.f32 %v278, %v312
      %v318 = vadd.f32 %v279, %v312
      %v319 = vadd.f32 %v280, %v312
      %v320 = vadd.f32 %v281, %v312
      %v321 = vadd.f32 %v282, %v312
      %v322 = vadd.f32 %v283, %v312
      %v323 = vadd.f32 %v284, %v312
      %v324 = vadd.f32 %v285, %v312
      %v325 = vadd.f32 %v286, %v312
      %v326 = vadd.f32 %v287, %v312
      %v327 = vadd.f32 %v288, %v312
      %v328 = vadd.f32 %v289, %v312
      %v329 = vadd.f32 %v290, %v312
      %v330 = vadd.f32 %v291, %v312
      %v331 = vadd.f32 %v292, %v312
      %v332 = vadd.f32 %v293, %v312
      %v333 = vadd.f32 %v294, %v312
      %v334 = vadd.f32 %v295, %v312
      %v335 = vadd.f32 %v296, %v312
      %v336 = vadd.f32 %v297, %v312
      %v337 = vadd.f32 %v298, %v312
      %v338 = vadd.f32 %v299, %v312
      %v339 = vadd.f32 %v300, %v312
      %v340 = vadd.f32 %v301, %v312
      %v341 = vadd.f32 %v302, %v312
      %v342 = vadd.f32 %v303, %v312
      %v343 = vadd.f32 %v304, %v312
      %v344 = vadd.f32 %v305, %v312
      %v345 = vadd.f32 %v306, %v312
      %v346 = vmax.f32 %v314, 0.0
      %v347 = vmax.f32 %v315, 0.0
      %v348 = vmax.f32 %v316, 0.0
      %v349 = vmax.f32 %v317, 0.0
      %v350 = vmax.f32 %v318, 0.0
      %v351 = vmax.f32 %v319, 0.0
      %v352 = vmax.f32 %v320, 0.0
      %v353 = vmax.f32 %v321, 0.0
      %v354 = vmax.f32 %v322, 0.0
      %v355 = vmax.f32 %v323, 0.0
      %v356 = vmax.f32 %v324, 0.0
      %v357 = vmax.f32 %v325, 0.0
      %v358 = vmax.f32 %v326, 0.0
      %v359 = vmax.f32 %v327, 0.0
      %v360 = vmax.f32 %v328, 0.0
      %v361 = vmax.f32 %v329, 0.0
      %v362 = vmax.f32 %v330, 0.0
      %v363 = vmax.f32 %v331, 0.0
      %v364 = vmax.f32 %v332, 0.0
      %v365 = vmax.f32 %v333, 0.0
      %v366 = vmax.f32 %v334, 0.0
      %v367 = vmax.f32 %v335, 0.0
      %v368 = vmax.f32 %v336, 0.0
      %v369 = vmax.f32 %v337, 0.0
      %v370 = vmax.f32 %v338, 0.0
      %v371 = vmax.f32 %v339, 0.0
      %v372 = vmax.f32 %v340, 0.0
      %v373 = vmax.f32 %v341, 0.0
      %v374 = vmax.f32 %v342, 0.0
      %v375 = vmax.f32 %v343, 0.0
      %v376 = vmax.f32 %v344, 0.0
      %v377 = vmax.f32 %v345, 0.0
      %378 = vst [vmem:[#allocation2] sm:$0xff] 0.0
      %379 = vst [vmem:[#allocation2 + $0x8] sm:$0xff] 0.0
      %380 = vst [vmem:[#allocation2 + $0x10] sm:$0x3] 0.0
      %381 = vst [vmem:[#allocation2 + $0x18] sm:$0xff] 0.0
      %382 = vst [vmem:[#allocation2 + $0x20] sm:$0xff] 0.0
      %383 = vst [vmem:[#allocation2 + $0x28] sm:$0x3] 0.0
      %384 = vst [vmem:[#allocation2 + $0x30] sm:$0xff] 0.0
      %385 = vst [vmem:[#allocation2 + $0x38] sm:$0xff] 0.0
      %386 = vst [vmem:[#allocation2 + $0x40] sm:$0x3] 0.0
      %387 = vst [vmem:[#allocation2 + $0x48] sm:$0xff] 0.0
      %388 = vst [vmem:[#allocation2 + $0x50] sm:$0xff] 0.0
      %389 = vst [vmem:[#allocation2 + $0x58] sm:$0x3] 0.0
      %390 = vst [vmem:[#allocation2 + $0x60] sm:$0xff] 0.0
      %391 = vst [vmem:[#allocation2 + $0x68] sm:$0xff] 0.0
      %392 = vst [vmem:[#allocation2 + $0x70] sm:$0x3] 0.0
      %393 = vst [vmem:[#allocation2 + $0x78] sm:$0xff] 0.0
      %394 = vst [vmem:[#allocation2 + $0x80] sm:$0xff] 0.0
      %395 = vst [vmem:[#allocation2 + $0x88] sm:$0x3] 0.0
      %396 = vst [vmem:[#allocation2 + $0x90] sm:$0xff] 0.0
      %397 = vst [vmem:[#allocation2 + $0x98] sm:$0xff] 0.0
      %398 = vst [vmem:[#allocation2 + $0xa0] sm:$0x3] 0.0
      %399 = vst [vmem:[#allocation2 + $0xa8] sm:$0xff] 0.0
      %400 = vst [vmem:[#allocation2 + $0xb0] sm:$0xff] 0.0
      %401 = vst [vmem:[#allocation2 + $0xb8] sm:$0x3] 0.0
      %402 = vst [vmem:[#allocation2 + $0xc0] sm:$0xff] 0.0
      %403 = vst [vmem:[#allocation2 + $0xc8] sm:$0xff] 0.0
      %404 = vst [vmem:[#allocation2 + $0xd0] sm:$0x3] 0.0
      %405 = vst [vmem:[#allocation2 + $0xd8] sm:$0xff] 0.0
      %406 = vst [vmem:[#allocation2 + $0xe0] sm:$0xff] 0.0
      %407 = vst [vmem:[#allocation2 + $0xe8] sm:$0x3] 0.0
      %408 = vst [vmem:[#allocation2 + $0xf0] sm:$0xff] 0.0
      %409 = vst [vmem:[#allocation2 + $0xf8] sm:$0xff] 0.0
      %410 = vst [vmem:[#allocation2 + $0x100] sm:$0x3] 0.0
      %411 = vst [vmem:[#allocation2 + $0x108] sm:$0xff] 0.0
      %412 = vst [vmem:[#allocation2 + $0x110] sm:$0xff] 0.0
      %413 = vst [vmem:[#allocation2 + $0x118] sm:$0x3] 0.0
      %414 = vst [vmem:[#allocation2 + $0x120] sm:$0xff] 0.0
      %415 = vst [vmem:[#allocation2 + $0x128] sm:$0xff] 0.0
      %416 = vst [vmem:[#allocation2 + $0x130] sm:$0x3] 0.0
      %417 = vst [vmem:[#allocation2 + $0x138] sm:$0xff] 0.0
      %418 = vst [vmem:[#allocation2 + $0x140] sm:$0xff] 0.0
      %419 = vst [vmem:[#allocation2 + $0x148] sm:$0x3] 0.0
      %420 = vst [vmem:[#allocation2 + $0x150] sm:$0xff] 0.0
      %421 = vst [vmem:[#allocation2 + $0x158] sm:$0xff] 0.0
      %422 = vst [vmem:[#allocation2 + $0x160] sm:$0x3] 0.0
      %423 = vst [vmem:[#allocation2 + $0x168] sm:$0xff] 0.0
      %424 = vst [vmem:[#allocation2 + $0x170] sm:$0xff] 0.0
      %425 = vst [vmem:[#allocation2 + $0x178] sm:$0x3] 0.0
      %426 = vst [vmem:[#allocation2 + $0x180] sm:$0xff] 0.0
      %427 = vst [vmem:[#allocation2 + $0x188] sm:$0xff] 0.0
      %428 = vst [vmem:[#allocation2 + $0x190] sm:$0x3] 0.0
      %429 = vst [vmem:[#allocation2 + $0x198] sm:$0xff] 0.0
      %430 = vst [vmem:[#allocation2 + $0x1a0] sm:$0xff] 0.0
      %431 = vst [vmem:[#allocation2 + $0x1a8] sm:$0x3] 0.0
      %s432 = scalar_lea.vmem [#allocation2], 24
      %433 = vst [vmem:[%s432 + $0x1] sm:$0xff] %v346
      %434 = vst [vmem:[%s432 + $0x9] sm:$0xff] %v347
      %435 = vst [vmem:[%s432 + $0x19] sm:$0xff] %v348
      %436 = vst [vmem:[%s432 + $0x21] sm:$0xff] %v349
      %437 = vst [vmem:[%s432 + $0x31] sm:$0xff] %v350
      %438 = vst [vmem:[%s432 + $0x39] sm:$0xff] %v351
      %439 = vst [vmem:[%s432 + $0x49] sm:$0xff] %v352
      %440 = vst [vmem:[%s432 + $0x51] sm:$0xff] %v353
      %441 = vst [vmem:[%s432 + $0x61] sm:$0xff] %v354
      %442 = vst [vmem:[%s432 + $0x69] sm:$0xff] %v355
      %443 = vst [vmem:[%s432 + $0x79] sm:$0xff] %v356
      %444 = vst [vmem:[%s432 + $0x81] sm:$0xff] %v357
      %445 = vst [vmem:[%s432 + $0x91] sm:$0xff] %v358
      %446 = vst [vmem:[%s432 + $0x99] sm:$0xff] %v359
      %447 = vst [vmem:[%s432 + $0xa9] sm:$0xff] %v360
      %448 = vst [vmem:[%s432 + $0xb1] sm:$0xff] %v361
      %449 = vst [vmem:[%s432 + $0xc1] sm:$0xff] %v362
      %450 = vst [vmem:[%s432 + $0xc9] sm:$0xff] %v363
      %451 = vst [vmem:[%s432 + $0xd9] sm:$0xff] %v364
      %452 = vst [vmem:[%s432 + $0xe1] sm:$0xff] %v365
      %453 = vst [vmem:[%s432 + $0xf1] sm:$0xff] %v366
      %454 = vst [vmem:[%s432 + $0xf9] sm:$0xff] %v367
      %455 = vst [vmem:[%s432 + $0x109] sm:$0xff] %v368
      %456 = vst [vmem:[%s432 + $0x111] sm:$0xff] %v369
      %457 = vst [vmem:[%s432 + $0x121] sm:$0xff] %v370
      %458 = vst [vmem:[%s432 + $0x129] sm:$0xff] %v371
      %459 = vst [vmem:[%s432 + $0x139] sm:$0xff] %v372
      %460 = vst [vmem:[%s432 + $0x141] sm:$0xff] %v373
      %461 = vst [vmem:[%s432 + $0x151] sm:$0xff] %v374
      %462 = vst [vmem:[%s432 + $0x159] sm:$0xff] %v375
      %463 = vst [vmem:[%s432 + $0x169] sm:$0xff] %v376
      %464 = vst [vmem:[%s432 + $0x171] sm:$0xff] %v377
      %v465 = vld [vmem:[#allocation2] sm:$0xff]
      %v466 = vld [vmem:[#allocation2 + $0x8] sm:$0xff]
      %v467 = vld [vmem:[#allocation2 + $0x18] sm:$0xff]
      %v468 = vld [vmem:[#allocation2 + $0x20] sm:$0xff]
      %v469 = vld [vmem:[#allocation2 + $0x30] sm:$0xff]
      %v470 = vld [vmem:[#allocation2 + $0x38] sm:$0xff]
      %v471 = vld [vmem:[#allocation2 + $0x48] sm:$0xff]
      %v472 = vld [vmem:[#allocation2 + $0x50] sm:$0xff]
      %v473 = vld [vmem:[#allocation2 + $0x60] sm:$0xff]
      %v474 = vld [vmem:[#allocation2 + $0x68] sm:$0xff]
      %v475 = vld [vmem:[#allocation2 + $0x78] sm:$0xff]
      %v476 = vld [vmem:[#allocation2 + $0x80] sm:$0xff]
      %v477 = vld [vmem:[#allocation2 + $0x90] sm:$0xff]
      %v478 = vld [vmem:[#allocation2 + $0x98] sm:$0xff]
      %v479 = vld [vmem:[#allocation2 + $0xa8] sm:$0xff]
      %v480 = vld [vmem:[#allocation2 + $0xb0] sm:$0xff]
      %v481 = vld [vmem:[#allocation2 + $0xc0] sm:$0xff]
      %v482 = vld [vmem:[#allocation2 + $0xc8] sm:$0xff]
      %v483 = vld [vmem:[#allocation2 + $0xd8] sm:$0xff]
      %v484 = vld [vmem:[#allocation2 + $0xe0] sm:$0xff]
      %v485 = vld [vmem:[#allocation2 + $0xf0] sm:$0xff]
      %v486 = vld [vmem:[#allocation2 + $0xf8] sm:$0xff]
      %v487 = vld [vmem:[#allocation2 + $0x108] sm:$0xff]
      %v488 = vld [vmem:[#allocation2 + $0x110] sm:$0xff]
      %v489 = vld [vmem:[#allocation2 + $0x120] sm:$0xff]
      %v490 = vld [vmem:[#allocation2 + $0x128] sm:$0xff]
      %v491 = vld [vmem:[#allocation2 + $0x138] sm:$0xff]
      %v492 = vld [vmem:[#allocation2 + $0x140] sm:$0xff]
      %v493 = vld [vmem:[#allocation2 + $0x150] sm:$0xff]
      %v494 = vld [vmem:[#allocation2 + $0x158] sm:$0xff]
      %v495 = vld [vmem:[#allocation2 + $0x168] sm:$0xff]
      %v496 = vld [vmem:[#allocation2 + $0x170] sm:$0xff]
      %v497 = vld [vmem:[%s3] sm:$0xff]
      %v498 = vld [vmem:[%s3 + $0x8] sm:$0xff]
      %v499 = vld [vmem:[%s3 + $0x10] sm:$0xff]
      %v500 = vld [vmem:[%s3 + $0x18] sm:$0xff]
      %v501 = vld [vmem:[%s3 + $0x20] sm:$0xff]
      %v502 = vld [vmem:[%s3 + $0x28] sm:$0xff]
      %v503 = vld [vmem:[%s3 + $0x30] sm:$0xff]
      %v504 = vld [vmem:[%s3 + $0x38] sm:$0xff]
      %v505 = vld [vmem:[%s3 + $0x40] sm:$0xff]
      %v506 = vld [vmem:[%s3 + $0x48] sm:$0xff]
      %v507 = vld [vmem:[%s3 + $0x50] sm:$0xff]
      %v508 = vld [vmem:[%s3 + $0x58] sm:$0xff]
      %v509 = vld [vmem:[%s3 + $0x60] sm:$0xff]
      %v510 = vld [vmem:[%s3 + $0x68] sm:$0xff]
      %v511 = vld [vmem:[%s3 + $0x70] sm:$0xff]
      %v512 = vld [vmem:[%s3 + $0x78] sm:$0xff]
      %v513 = vld [vmem:[#allocation2 + $0x1] sm:$0xff]
      %v514 = vld [vmem:[#allocation2 + $0x9] sm:$0xff]
      %v515 = vld [vmem:[#allocation2 + $0x19] sm:$0xff]
      %v516 = vld [vmem:[#allocation2 + $0x21] sm:$0xff]
      %v517 = vld [vmem:[#allocation2 + $0x31] sm:$0xff]
      %v518 = vld [vmem:[#allocation2 + $0x39] sm:$0xff]
      %v519 = vld [vmem:[#allocation2 + $0x49] sm:$0xff]
      %v520 = vld [vmem:[#allocation2 + $0x51] sm:$0xff]
      %v521 = vld [vmem:[#allocation2 + $0x61] sm:$0xff]
      %v522 = vld [vmem:[#allocation2 + $0x69] sm:$0xff]
      %v523 = vld [vmem:[#allocation2 + $0x79] sm:$0xff]
      %v524 = vld [vmem:[#allocation2 + $0x81] sm:$0xff]
      %v525 = vld [vmem:[#allocation2 + $0x91] sm:$0xff]
      %v526 = vld [vmem:[#allocation2 + $0x99] sm:$0xff]
      %v527 = vld [vmem:[#allocation2 + $0xa9] sm:$0xff]
      %v528 = vld [vmem:[#allocation2 + $0xb1] sm:$0xff]
      %v529 = vld [vmem:[#allocation2 + $0xc1] sm:$0xff]
      %v530 = vld [vmem:[#allocation2 + $0xc9] sm:$0xff]
      %v531 = vld [vmem:[#allocation2 + $0xd9] sm:$0xff]
      %v532 = vld [vmem:[#allocation2 + $0xe1] sm:$0xff]
      %v533 = vld [vmem:[#allocation2 + $0xf1] sm:$0xff]
      %v534 = vld [vmem:[#allocation2 + $0xf9] sm:$0xff]
      %v535 = vld [vmem:[#allocation2 + $0x109] sm:$0xff]
      %v536 = vld [vmem:[#allocation2 + $0x111] sm:$0xff]
      %v537 = vld [vmem:[#allocation2 + $0x121] sm:$0xff]
      %v538 = vld [vmem:[#allocation2 + $0x129] sm:$0xff]
      %v539 = vld [vmem:[#allocation2 + $0x139] sm:$0xff]
      %v540 = vld [vmem:[#allocation2 + $0x141] sm:$0xff]
      %v541 = vld [vmem:[#allocation2 + $0x151] sm:$0xff]
      %v542 = vld [vmem:[#allocation2 + $0x159] sm:$0xff]
      %v543 = vld [vmem:[#allocation2 + $0x169] sm:$0xff]
      %v544 = vld [vmem:[#allocation2 + $0x171] sm:$0xff]
      %s545 = scalar_lea.vmem %s3, 128
      %v546 = vld [vmem:[%s545] sm:$0xff]
      %v547 = vld [vmem:[%s545 + $0x8] sm:$0xff]
      %v548 = vld [vmem:[%s545 + $0x10] sm:$0xff]
      %v549 = vld [vmem:[%s545 + $0x18] sm:$0xff]
      %v550 = vld [vmem:[%s545 + $0x20] sm:$0xff]
      %v551 = vld [vmem:[%s545 + $0x28] sm:$0xff]
      %v552 = vld [vmem:[%s545 + $0x30] sm:$0xff]
      %v553 = vld [vmem:[%s545 + $0x38] sm:$0xff]
      %v554 = vld [vmem:[%s545 + $0x40] sm:$0xff]
      %v555 = vld [vmem:[%s545 + $0x48] sm:$0xff]
      %v556 = vld [vmem:[%s545 + $0x50] sm:$0xff]
      %v557 = vld [vmem:[%s545 + $0x58] sm:$0xff]
      %v558 = vld [vmem:[%s545 + $0x60] sm:$0xff]
      %v559 = vld [vmem:[%s545 + $0x68] sm:$0xff]
      %v560 = vld [vmem:[%s545 + $0x70] sm:$0xff]
      %v561 = vld [vmem:[%s545 + $0x78] sm:$0xff]
      %562 = vmatprep.subr.mxu0 0.0
      %563 = vmatpush1.msra.mxu0 %v561
      %564 = vmatprep.subr.mxu0 0.0
      %565 = vmatpush1.msra.mxu0 %v560
      %566 = vmatprep.subr.mxu0 0.0
      %567 = vmatpush1.msra.mxu0 %v559
      %568 = vmatprep.subr.mxu0 0.0
      %569 = vmatpush1.msra.mxu0 %v558
      %570 = vmatprep.subr.mxu0 0.0
      %571 = vmatpush1.msra.mxu0 %v557
      %572 = vmatprep.subr.mxu0 0.0
      %573 = vmatpush1.msra.mxu0 %v556
      %574 = vmatprep.subr.mxu0 0.0
      %575 = vmatpush1.msra.mxu0 %v555
      %576 = vmatprep.subr.mxu0 0.0
      %577 = vmatpush1.msra.mxu0 %v554
      %578 = vmatprep.subr.mxu0 0.0
      %579 = vmatpush1.msra.mxu0 %v553
      %580 = vmatprep.subr.mxu0 0.0
      %581 = vmatpush1.msra.mxu0 %v552
      %582 = vmatprep.subr.mxu0 0.0
      %583 = vmatpush1.msra.mxu0 %v551
      %584 = vmatprep.subr.mxu0 0.0
      %585 = vmatpush1.msra.mxu0 %v550
      %586 = vmatprep.subr.mxu0 0.0
      %587 = vmatpush1.msra.mxu0 %v549
      %588 = vmatprep.subr.mxu0 0.0
      %589 = vmatpush1.msra.mxu0 %v548
      %590 = vmatprep.subr.mxu0 0.0
      %591 = vmatpush1.msra.mxu0 %v547
      %592 = vmatprep.subr.mxu0 0.0
      %593 = vmatpush1.msra.mxu0 %v546
      %594 = vmatprep.subr.mxu0 0.0
      %595 = vmatpush2.msra.mxu0 0.0
      %596 = vmatprep.subr.mxu0 0.0
      %597 = vmatpush2.msra.mxu0 0.0
      %598 = vmatprep.subr.mxu0 0.0
      %599 = vmatpush2.msra.mxu0 0.0
      %600 = vmatprep.subr.mxu0 0.0
      %601 = vmatpush2.msra.mxu0 0.0
      %602 = vmatprep.subr.mxu0 0.0
      %603 = vmatpush2.msra.mxu0 0.0
      %604 = vmatprep.subr.mxu0 0.0
      %605 = vmatpush2.msra.mxu0 0.0
      %606 = vmatprep.subr.mxu0 0.0
      %607 = vmatpush2.msra.mxu0 0.0
      %608 = vmatprep.subr.mxu0 0.0
      %609 = vmatpush2.msra.mxu0 0.0
      %610 = vmatprep.subr.mxu0 0.0
      %611 = vmatpush2.msra.mxu0 0.0
      %612 = vmatprep.subr.mxu0 0.0
      %613 = vmatpush2.msra.mxu0 0.0
      %614 = vmatprep.subr.mxu0 0.0
      %615 = vmatpush2.msra.mxu0 0.0
      %616 = vmatprep.subr.mxu0 0.0
      %617 = vmatpush2.msra.mxu0 0.0
      %618 = vmatprep.subr.mxu0 0.0
      %619 = vmatpush2.msra.mxu0 0.0
      %620 = vmatprep.subr.mxu0 0.0
      %621 = vmatpush2.msra.mxu0 0.0
      %622 = vmatprep.subr.mxu0 0.0
      %623 = vmatpush2.msra.mxu0 0.0
      %624 = vmatprep.subr.mxu0 0.0
      %625 = vmatpush2.msra.mxu0 0.0
      %626 = vmatprep.mubr.f32.mxu0 0.0
      %627 = vmatmul.mubr.f32.gmra.mxu0 %v513
      %v628 = vpop.f32.mrf.mxu0
      %v629 = vadd.f32 0.0, %v628
      %v630 = vpop.f32.mrf.mxu0
      %631 = vmatprep.mubr.f32.mxu0 0.0
      %632 = vmatmul.mubr.f32.gmra.mxu0 %v514
      %v633 = vpop.f32.mrf.mxu0
      %v634 = vadd.f32 0.0, %v633
      %v635 = vpop.f32.mrf.mxu0
      %636 = vmatprep.mubr.f32.mxu0 0.0
      %637 = vmatmul.mubr.f32.gmra.mxu0 %v515
      %v638 = vpop.f32.mrf.mxu0
      %v639 = vadd.f32 0.0, %v638
      %v640 = vpop.f32.mrf.mxu0
      %641 = vmatprep.mubr.f32.mxu0 0.0
      %642 = vmatmul.mubr.f32.gmra.mxu0 %v516
      %v643 = vpop.f32.mrf.mxu0
      %v644 = vadd.f32 0.0, %v643
      %v645 = vpop.f32.mrf.mxu0
      %646 = vmatprep.mubr.f32.mxu0 0.0
      %647 = vmatmul.mubr.f32.gmra.mxu0 %v517
      %v648 = vpop.f32.mrf.mxu0
      %v649 = vadd.f32 0.0, %v648
      %v650 = vpop.f32.mrf.mxu0
      %651 = vmatprep.mubr.f32.mxu0 0.0
      %652 = vmatmul.mubr.f32.gmra.mxu0 %v518
      %v653 = vpop.f32.mrf.mxu0
      %v654 = vadd.f32 0.0, %v653
      %v655 = vpop.f32.mrf.mxu0
      %656 = vmatprep.mubr.f32.mxu0 0.0
      %657 = vmatmul.mubr.f32.gmra.mxu0 %v519
      %v658 = vpop.f32.mrf.mxu0
      %v659 = vadd.f32 0.0, %v658
      %v660 = vpop.f32.mrf.mxu0
      %661 = vmatprep.mubr.f32.mxu0 0.0
      %662 = vmatmul.mubr.f32.gmra.mxu0 %v520
      %v663 = vpop.f32.mrf.mxu0
      %v664 = vadd.f32 0.0, %v663
      %v665 = vpop.f32.mrf.mxu0
      %666 = vmatprep.mubr.f32.mxu0 0.0
      %667 = vmatmul.mubr.f32.gmra.mxu0 %v521
      %v668 = vpop.f32.mrf.mxu0
      %v669 = vadd.f32 0.0, %v668
      %v670 = vpop.f32.mrf.mxu0
      %671 = vmatprep.mubr.f32.mxu0 0.0
      %672 = vmatmul.mubr.f32.gmra.mxu0 %v522
      %v673 = vpop.f32.mrf.mxu0
      %v674 = vadd.f32 0.0, %v673
      %v675 = vpop.f32.mrf.mxu0
      %676 = vmatprep.mubr.f32.mxu0 0.0
      %677 = vmatmul.mubr.f32.gmra.mxu0 %v523
      %v678 = vpop.f32.mrf.mxu0
      %v679 = vadd.f32 0.0, %v678
      %v680 = vpop.f32.mrf.mxu0
      %681 = vmatprep.mubr.f32.mxu0 0.0
      %682 = vmatmul.mubr.f32.gmra.mxu0 %v524
      %v683 = vpop.f32.mrf.mxu0
      %v684 = vadd.f32 0.0, %v683
      %v685 = vpop.f32.mrf.mxu0
      %686 = vmatprep.mubr.f32.mxu0 0.0
      %687 = vmatmul.mubr.f32.gmra.mxu0 %v525
      %v688 = vpop.f32.mrf.mxu0
      %v689 = vadd.f32 0.0, %v688
      %v690 = vpop.f32.mrf.mxu0
      %691 = vmatprep.mubr.f32.mxu0 0.0
      %692 = vmatmul.mubr.f32.gmra.mxu0 %v526
      %v693 = vpop.f32.mrf.mxu0
      %v694 = vadd.f32 0.0, %v693
      %v695 = vpop.f32.mrf.mxu0
      %696 = vmatprep.mubr.f32.mxu0 0.0
      %697 = vmatmul.mubr.f32.gmra.mxu0 %v527
      %v698 = vpop.f32.mrf.mxu0
      %v699 = vadd.f32 0.0, %v698
      %v700 = vpop.f32.mrf.mxu0
      %701 = vmatprep.mubr.f32.mxu0 0.0
      %702 = vmatmul.mubr.f32.gmra.mxu0 %v528
      %v703 = vpop.f32.mrf.mxu0
      %v704 = vadd.f32 0.0, %v703
      %v705 = vpop.f32.mrf.mxu0
      %706 = vmatprep.mubr.f32.mxu0 0.0
      %707 = vmatmul.mubr.f32.gmra.mxu0 %v529
      %v708 = vpop.f32.mrf.mxu0
      %v709 = vadd.f32 0.0, %v708
      %v710 = vpop.f32.mrf.mxu0
      %711 = vmatprep.mubr.f32.mxu0 0.0
      %712 = vmatmul.mubr.f32.gmra.mxu0 %v530
      %v713 = vpop.f32.mrf.mxu0
      %v714 = vadd.f32 0.0, %v713
      %v715 = vpop.f32.mrf.mxu0
      %716 = vmatprep.mubr.f32.mxu0 0.0
      %717 = vmatmul.mubr.f32.gmra.mxu0 %v531
      %v718 = vpop.f32.mrf.mxu0
      %v719 = vadd.f32 0.0, %v718
      %v720 = vpop.f32.mrf.mxu0
      %721 = vmatprep.mubr.f32.mxu0 0.0
      %722 = vmatmul.mubr.f32.gmra.mxu0 %v532
      %v723 = vpop.f32.mrf.mxu0
      %v724 = vadd.f32 0.0, %v723
      %v725 = vpop.f32.mrf.mxu0
      %726 = vmatprep.mubr.f32.mxu0 0.0
      %727 = vmatmul.mubr.f32.gmra.mxu0 %v533
      %v728 = vpop.f32.mrf.mxu0
      %v729 = vadd.f32 0.0, %v728
      %v730 = vpop.f32.mrf.mxu0
      %731 = vmatprep.mubr.f32.mxu0 0.0
      %732 = vmatmul.mubr.f32.gmra.mxu0 %v534
      %v733 = vpop.f32.mrf.mxu0
      %v734 = vadd.f32 0.0, %v733
      %v735 = vpop.f32.mrf.mxu0
      %736 = vmatprep.mubr.f32.mxu0 0.0
      %737 = vmatmul.mubr.f32.gmra.mxu0 %v535
      %v738 = vpop.f32.mrf.mxu0
      %v739 = vadd.f32 0.0, %v738
      %v740 = vpop.f32.mrf.mxu0
      %741 = vmatprep.mubr.f32.mxu0 0.0
      %742 = vmatmul.mubr.f32.gmra.mxu0 %v536
      %v743 = vpop.f32.mrf.mxu0
      %v744 = vadd.f32 0.0, %v743
      %v745 = vpop.f32.mrf.mxu0
      %746 = vmatprep.mubr.f32.mxu0 0.0
      %747 = vmatmul.mubr.f32.gmra.mxu0 %v537
      %v748 = vpop.f32.mrf.mxu0
      %v749 = vadd.f32 0.0, %v748
      %v750 = vpop.f32.mrf.mxu0
      %751 = vmatprep.mubr.f32.mxu0 0.0
      %752 = vmatmul.mubr.f32.gmra.mxu0 %v538
      %v753 = vpop.f32.mrf.mxu0
      %v754 = vadd.f32 0.0, %v753
      %v755 = vpop.f32.mrf.mxu0
      %756 = vmatprep.mubr.f32.mxu0 0.0
      %757 = vmatmul.mubr.f32.gmra.mxu0 %v539
      %v758 = vpop.f32.mrf.mxu0
      %v759 = vadd.f32 0.0, %v758
      %v760 = vpop.f32.mrf.mxu0
      %761 = vmatprep.mubr.f32.mxu0 0.0
      %762 = vmatmul.mubr.f32.gmra.mxu0 %v540
      %v763 = vpop.f32.mrf.mxu0
      %v764 = vadd.f32 0.0, %v763
      %v765 = vpop.f32.mrf.mxu0
      %766 = vmatprep.mubr.f32.mxu0 0.0
      %767 = vmatmul.mubr.f32.gmra.mxu0 %v541
      %v768 = vpop.f32.mrf.mxu0
      %v769 = vadd.f32 0.0, %v768
      %v770 = vpop.f32.mrf.mxu0
      %771 = vmatprep.mubr.f32.mxu0 0.0
      %772 = vmatmul.mubr.f32.gmra.mxu0 %v542
      %v773 = vpop.f32.mrf.mxu0
      %v774 = vadd.f32 0.0, %v773
      %v775 = vpop.f32.mrf.mxu0
      %776 = vmatprep.mubr.f32.mxu0 0.0
      %777 = vmatmul.mubr.f32.gmra.mxu0 %v543
      %v778 = vpop.f32.mrf.mxu0
      %v779 = vadd.f32 0.0, %v778
      %v780 = vpop.f32.mrf.mxu0
      %781 = vmatprep.mubr.f32.mxu0 0.0
      %782 = vmatmul.mubr.f32.gmra.mxu0 %v544
      %v783 = vpop.f32.mrf.mxu0
      %v784 = vadd.f32 0.0, %v783
      %v785 = vpop.f32.mrf.mxu0
      %786 = vdwg.mxu0
      %787 = vmatprep.subr.mxu0 0.0
      %788 = vmatpush1.msra.mxu0 %v512
      %789 = vmatprep.subr.mxu0 0.0
      %790 = vmatpush1.msra.mxu0 %v511
      %791 = vmatprep.subr.mxu0 0.0
      %792 = vmatpush1.msra.mxu0 %v510
      %793 = vmatprep.subr.mxu0 0.0
      %794 = vmatpush1.msra.mxu0 %v509
      %795 = vmatprep.subr.mxu0 0.0
      %796 = vmatpush1.msra.mxu0 %v508
      %797 = vmatprep.subr.mxu0 0.0
      %798 = vmatpush1.msra.mxu0 %v507
      %799 = vmatprep.subr.mxu0 0.0
      %800 = vmatpush1.msra.mxu0 %v506
      %801 = vmatprep.subr.mxu0 0.0
      %802 = vmatpush1.msra.mxu0 %v505
      %803 = vmatprep.subr.mxu0 0.0
      %804 = vmatpush1.msra.mxu0 %v504
      %805 = vmatprep.subr.mxu0 0.0
      %806 = vmatpush1.msra.mxu0 %v503
      %807 = vmatprep.subr.mxu0 0.0
      %808 = vmatpush1.msra.mxu0 %v502
      %809 = vmatprep.subr.mxu0 0.0
      %810 = vmatpush1.msra.mxu0 %v501
      %811 = vmatprep.subr.mxu0 0.0
      %812 = vmatpush1.msra.mxu0 %v500
      %813 = vmatprep.subr.mxu0 0.0
      %814 = vmatpush1.msra.mxu0 %v499
      %815 = vmatprep.subr.mxu0 0.0
      %816 = vmatpush1.msra.mxu0 %v498
      %817 = vmatprep.subr.mxu0 0.0
      %818 = vmatpush1.msra.mxu0 %v497
      %819 = vmatprep.subr.mxu0 0.0
      %820 = vmatpush2.msra.mxu0 0.0
      %821 = vmatprep.subr.mxu0 0.0
      %822 = vmatpush2.msra.mxu0 0.0
      %823 = vmatprep.subr.mxu0 0.0
      %824 = vmatpush2.msra.mxu0 0.0
      %825 = vmatprep.subr.mxu0 0.0
      %826 = vmatpush2.msra.mxu0 0.0
      %827 = vmatprep.subr.mxu0 0.0
      %828 = vmatpush2.msra.mxu0 0.0
      %829 = vmatprep.subr.mxu0 0.0
      %830 = vmatpush2.msra.mxu0 0.0
      %831 = vmatprep.subr.mxu0 0.0
      %832 = vmatpush2.msra.mxu0 0.0
      %833 = vmatprep.subr.mxu0 0.0
      %834 = vmatpush2.msra.mxu0 0.0
      %835 = vmatprep.subr.mxu0 0.0
      %836 = vmatpush2.msra.mxu0 0.0
      %837 = vmatprep.subr.mxu0 0.0
      %838 = vmatpush2.msra.mxu0 0.0
      %839 = vmatprep.subr.mxu0 0.0
      %840 = vmatpush2.msra.mxu0 0.0
      %841 = vmatprep.subr.mxu0 0.0
      %842 = vmatpush2.msra.mxu0 0.0
      %843 = vmatprep.subr.mxu0 0.0
      %844 = vmatpush2.msra.mxu0 0.0
      %845 = vmatprep.subr.mxu0 0.0
      %846 = vmatpush2.msra.mxu0 0.0
      %847 = vmatprep.subr.mxu0 0.0
      %848 = vmatpush2.msra.mxu0 0.0
      %849 = vmatprep.subr.mxu0 0.0
      %850 = vmatpush2.msra.mxu0 0.0
      %851 = vmatprep.mubr.f32.mxu0 0.0
      %852 = vmatmul.mubr.f32.gmra.mxu0 %v465
      %v853 = vpop.f32.mrf.mxu0
      %v854 = vadd.f32 %v629, %v853
      %v855 = vpop.f32.mrf.mxu0
      %856 = vmatprep.mubr.f32.mxu0 0.0
      %857 = vmatmul.mubr.f32.gmra.mxu0 %v466
      %v858 = vpop.f32.mrf.mxu0
      %v859 = vadd.f32 %v634, %v858
      %v860 = vpop.f32.mrf.mxu0
      %861 = vmatprep.mubr.f32.mxu0 0.0
      %862 = vmatmul.mubr.f32.gmra.mxu0 %v467
      %v863 = vpop.f32.mrf.mxu0
      %v864 = vadd.f32 %v639, %v863
      %v865 = vpop.f32.mrf.mxu0
      %866 = vmatprep.mubr.f32.mxu0 0.0
      %867 = vmatmul.mubr.f32.gmra.mxu0 %v468
      %v868 = vpop.f32.mrf.mxu0
      %v869 = vadd.f32 %v644, %v868
      %v870 = vpop.f32.mrf.mxu0
      %871 = vmatprep.mubr.f32.mxu0 0.0
      %872 = vmatmul.mubr.f32.gmra.mxu0 %v469
      %v873 = vpop.f32.mrf.mxu0
      %v874 = vadd.f32 %v649, %v873
      %v875 = vpop.f32.mrf.mxu0
      %876 = vmatprep.mubr.f32.mxu0 0.0
      %877 = vmatmul.mubr.f32.gmra.mxu0 %v470
      %v878 = vpop.f32.mrf.mxu0
      %v879 = vadd.f32 %v654, %v878
      %v880 = vpop.f32.mrf.mxu0
      %881 = vmatprep.mubr.f32.mxu0 0.0
      %882 = vmatmul.mubr.f32.gmra.mxu0 %v471
      %v883 = vpop.f32.mrf.mxu0
      %v884 = vadd.f32 %v659, %v883
      %v885 = vpop.f32.mrf.mxu0
      %886 = vmatprep.mubr.f32.mxu0 0.0
      %887 = vmatmul.mubr.f32.gmra.mxu0 %v472
      %v888 = vpop.f32.mrf.mxu0
      %v889 = vadd.f32 %v664, %v888
      %v890 = vpop.f32.mrf.mxu0
      %891 = vmatprep.mubr.f32.mxu0 0.0
      %892 = vmatmul.mubr.f32.gmra.mxu0 %v473
      %v893 = vpop.f32.mrf.mxu0
      %v894 = vadd.f32 %v669, %v893
      %v895 = vpop.f32.mrf.mxu0
      %896 = vmatprep.mubr.f32.mxu0 0.0
      %897 = vmatmul.mubr.f32.gmra.mxu0 %v474
      %v898 = vpop.f32.mrf.mxu0
      %v899 = vadd.f32 %v674, %v898
      %v900 = vpop.f32.mrf.mxu0
      %901 = vmatprep.mubr.f32.mxu0 0.0
      %902 = vmatmul.mubr.f32.gmra.mxu0 %v475
      %v903 = vpop.f32.mrf.mxu0
      %v904 = vadd.f32 %v679, %v903
      %v905 = vpop.f32.mrf.mxu0
      %906 = vmatprep.mubr.f32.mxu0 0.0
      %907 = vmatmul.mubr.f32.gmra.mxu0 %v476
      %v908 = vpop.f32.mrf.mxu0
      %v909 = vadd.f32 %v684, %v908
      %v910 = vpop.f32.mrf.mxu0
      %911 = vmatprep.mubr.f32.mxu0 0.0
      %912 = vmatmul.mubr.f32.gmra.mxu0 %v477
      %v913 = vpop.f32.mrf.mxu0
      %v914 = vadd.f32 %v689, %v913
      %v915 = vpop.f32.mrf.mxu0
      %916 = vmatprep.mubr.f32.mxu0 0.0
      %917 = vmatmul.mubr.f32.gmra.mxu0 %v478
      %v918 = vpop.f32.mrf.mxu0
      %v919 = vadd.f32 %v694, %v918
      %v920 = vpop.f32.mrf.mxu0
      %921 = vmatprep.mubr.f32.mxu0 0.0
      %922 = vmatmul.mubr.f32.gmra.mxu0 %v479
      %v923 = vpop.f32.mrf.mxu0
      %v924 = vadd.f32 %v699, %v923
      %v925 = vpop.f32.mrf.mxu0
      %926 = vmatprep.mubr.f32.mxu0 0.0
      %927 = vmatmul.mubr.f32.gmra.mxu0 %v480
      %v928 = vpop.f32.mrf.mxu0
      %v929 = vadd.f32 %v704, %v928
      %v930 = vpop.f32.mrf.mxu0
      %931 = vmatprep.mubr.f32.mxu0 0.0
      %932 = vmatmul.mubr.f32.gmra.mxu0 %v481
      %v933 = vpop.f32.mrf.mxu0
      %v934 = vadd.f32 %v709, %v933
      %v935 = vpop.f32.mrf.mxu0
      %936 = vmatprep.mubr.f32.mxu0 0.0
      %937 = vmatmul.mubr.f32.gmra.mxu0 %v482
      %v938 = vpop.f32.mrf.mxu0
      %v939 = vadd.f32 %v714, %v938
      %v940 = vpop.f32.mrf.mxu0
      %941 = vmatprep.mubr.f32.mxu0 0.0
      %942 = vmatmul.mubr.f32.gmra.mxu0 %v483
      %v943 = vpop.f32.mrf.mxu0
      %v944 = vadd.f32 %v719, %v943
      %v945 = vpop.f32.mrf.mxu0
      %946 = vmatprep.mubr.f32.mxu0 0.0
      %947 = vmatmul.mubr.f32.gmra.mxu0 %v484
      %v948 = vpop.f32.mrf.mxu0
      %v949 = vadd.f32 %v724, %v948
      %v950 = vpop.f32.mrf.mxu0
      %951 = vmatprep.mubr.f32.mxu0 0.0
      %952 = vmatmul.mubr.f32.gmra.mxu0 %v485
      %v953 = vpop.f32.mrf.mxu0
      %v954 = vadd.f32 %v729, %v953
      %v955 = vpop.f32.mrf.mxu0
      %956 = vmatprep.mubr.f32.mxu0 0.0
      %957 = vmatmul.mubr.f32.gmra.mxu0 %v486
      %v958 = vpop.f32.mrf.mxu0
      %v959 = vadd.f32 %v734, %v958
      %v960 = vpop.f32.mrf.mxu0
      %961 = vmatprep.mubr.f32.mxu0 0.0
      %962 = vmatmul.mubr.f32.gmra.mxu0 %v487
      %v963 = vpop.f32.mrf.mxu0
      %v964 = vadd.f32 %v739, %v963
      %v965 = vpop.f32.mrf.mxu0
      %966 = vmatprep.mubr.f32.mxu0 0.0
      %967 = vmatmul.mubr.f32.gmra.mxu0 %v488
      %v968 = vpop.f32.mrf.mxu0
      %v969 = vadd.f32 %v744, %v968
      %v970 = vpop.f32.mrf.mxu0
      %971 = vmatprep.mubr.f32.mxu0 0.0
      %972 = vmatmul.mubr.f32.gmra.mxu0 %v489
      %v973 = vpop.f32.mrf.mxu0
      %v974 = vadd.f32 %v749, %v973
      %v975 = vpop.f32.mrf.mxu0
      %976 = vmatprep.mubr.f32.mxu0 0.0
      %977 = vmatmul.mubr.f32.gmra.mxu0 %v490
      %v978 = vpop.f32.mrf.mxu0
      %v979 = vadd.f32 %v754, %v978
      %v980 = vpop.f32.mrf.mxu0
      %981 = vmatprep.mubr.f32.mxu0 0.0
      %982 = vmatmul.mubr.f32.gmra.mxu0 %v491
      %v983 = vpop.f32.mrf.mxu0
      %v984 = vadd.f32 %v759, %v983
      %v985 = vpop.f32.mrf.mxu0
      %986 = vmatprep.mubr.f32.mxu0 0.0
      %987 = vmatmul.mubr.f32.gmra.mxu0 %v492
      %v988 = vpop.f32.mrf.mxu0
      %v989 = vadd.f32 %v764, %v988
      %v990 = vpop.f32.mrf.mxu0
      %991 = vmatprep.mubr.f32.mxu0 0.0
      %992 = vmatmul.mubr.f32.gmra.mxu0 %v493
      %v993 = vpop.f32.mrf.mxu0
      %v994 = vadd.f32 %v769, %v993
      %v995 = vpop.f32.mrf.mxu0
      %996 = vmatprep.mubr.f32.mxu0 0.0
      %997 = vmatmul.mubr.f32.gmra.mxu0 %v494
      %v998 = vpop.f32.mrf.mxu0
      %v999 = vadd.f32 %v774, %v998
      %v1000 = vpop.f32.mrf.mxu0
      %1001 = vmatprep.mubr.f32.mxu0 0.0
      %1002 = vmatmul.mubr.f32.gmra.mxu0 %v495
      %v1003 = vpop.f32.mrf.mxu0
      %v1004 = vadd.f32 %v779, %v1003
      %v1005 = vpop.f32.mrf.mxu0
      %1006 = vmatprep.mubr.f32.mxu0 0.0
      %1007 = vmatmul.mubr.f32.gmra.mxu0 %v496
      %v1008 = vpop.f32.mrf.mxu0
      %v1009 = vadd.f32 %v784, %v1008
      %v1010 = vpop.f32.mrf.mxu0
      %1011 = vdwg.mxu0
      %v1012 = vld [vmem:[#allocation2 + $0x2] sm:$0xff]
      %v1013 = vld [vmem:[#allocation2 + $0xa] sm:$0xff]
      %v1014 = vld [vmem:[#allocation2 + $0x1a] sm:$0xff]
      %v1015 = vld [vmem:[#allocation2 + $0x22] sm:$0xff]
      %v1016 = vld [vmem:[#allocation2 + $0x32] sm:$0xff]
      %v1017 = vld [vmem:[#allocation2 + $0x3a] sm:$0xff]
      %v1018 = vld [vmem:[#allocation2 + $0x4a] sm:$0xff]
      %v1019 = vld [vmem:[#allocation2 + $0x52] sm:$0xff]
      %v1020 = vld [vmem:[#allocation2 + $0x62] sm:$0xff]
      %v1021 = vld [vmem:[#allocation2 + $0x6a] sm:$0xff]
      %v1022 = vld [vmem:[#allocation2 + $0x7a] sm:$0xff]
      %v1023 = vld [vmem:[#allocation2 + $0x82] sm:$0xff]
      %v1024 = vld [vmem:[#allocation2 + $0x92] sm:$0xff]
      %v1025 = vld [vmem:[#allocation2 + $0x9a] sm:$0xff]
      %v1026 = vld [vmem:[#allocation2 + $0xaa] sm:$0xff]
      %v1027 = vld [vmem:[#allocation2 + $0xb2] sm:$0xff]
      %v1028 = vld [vmem:[#allocation2 + $0xc2] sm:$0xff]
      %v1029 = vld [vmem:[#allocation2 + $0xca] sm:$0xff]
      %v1030 = vld [vmem:[#allocation2 + $0xda] sm:$0xff]
      %v1031 = vld [vmem:[#allocation2 + $0xe2] sm:$0xff]
      %v1032 = vld [vmem:[#allocation2 + $0xf2] sm:$0xff]
      %v1033 = vld [vmem:[#allocation2 + $0xfa] sm:$0xff]
      %v1034 = vld [vmem:[#allocation2 + $0x10a] sm:$0xff]
      %v1035 = vld [vmem:[#allocation2 + $0x112] sm:$0xff]
      %v1036 = vld [vmem:[#allocation2 + $0x122] sm:$0xff]
      %v1037 = vld [vmem:[#allocation2 + $0x12a] sm:$0xff]
      %v1038 = vld [vmem:[#allocation2 + $0x13a] sm:$0xff]
      %v1039 = vld [vmem:[#allocation2 + $0x142] sm:$0xff]
      %v1040 = vld [vmem:[#allocation2 + $0x152] sm:$0xff]
      %v1041 = vld [vmem:[#allocation2 + $0x15a] sm:$0xff]
      %v1042 = vld [vmem:[#allocation2 + $0x16a] sm:$0xff]
      %v1043 = vld [vmem:[#allocation2 + $0x172] sm:$0xff]
      %s1044 = scalar_lea.vmem %s3, 256
      %v1045 = vld [vmem:[%s1044] sm:$0xff]
      %v1046 = vld [vmem:[%s1044 + $0x8] sm:$0xff]
      %v1047 = vld [vmem:[%s1044 + $0x10] sm:$0xff]
      %v1048 = vld [vmem:[%s1044 + $0x18] sm:$0xff]
      %v1049 = vld [vmem:[%s1044 + $0x20] sm:$0xff]
      %v1050 = vld [vmem:[%s1044 + $0x28] sm:$0xff]
      %v1051 = vld [vmem:[%s1044 + $0x30] sm:$0xff]
      %v1052 = vld [vmem:[%s1044 + $0x38] sm:$0xff]
      %v1053 = vld [vmem:[%s1044 + $0x40] sm:$0xff]
      %v1054 = vld [vmem:[%s1044 + $0x48] sm:$0xff]
      %v1055 = vld [vmem:[%s1044 + $0x50] sm:$0xff]
      %v1056 = vld [vmem:[%s1044 + $0x58] sm:$0xff]
      %v1057 = vld [vmem:[%s1044 + $0x60] sm:$0xff]
      %v1058 = vld [vmem:[%s1044 + $0x68] sm:$0xff]
      %v1059 = vld [vmem:[%s1044 + $0x70] sm:$0xff]
      %v1060 = vld [vmem:[%s1044 + $0x78] sm:$0xff]
      %1061 = vmatprep.subr.mxu0 0.0
      %1062 = vmatpush1.msra.mxu0 %v1060
      %1063 = vmatprep.subr.mxu0 0.0
      %1064 = vmatpush1.msra.mxu0 %v1059
      %1065 = vmatprep.subr.mxu0 0.0
      %1066 = vmatpush1.msra.mxu0 %v1058
      %1067 = vmatprep.subr.mxu0 0.0
      %1068 = vmatpush1.msra.mxu0 %v1057
      %1069 = vmatprep.subr.mxu0 0.0
      %1070 = vmatpush1.msra.mxu0 %v1056
      %1071 = vmatprep.subr.mxu0 0.0
      %1072 = vmatpush1.msra.mxu0 %v1055
      %1073 = vmatprep.subr.mxu0 0.0
      %1074 = vmatpush1.msra.mxu0 %v1054
      %1075 = vmatprep.subr.mxu0 0.0
      %1076 = vmatpush1.msra.mxu0 %v1053
      %1077 = vmatprep.subr.mxu0 0.0
      %1078 = vmatpush1.msra.mxu0 %v1052
      %1079 = vmatprep.subr.mxu0 0.0
      %1080 = vmatpush1.msra.mxu0 %v1051
      %1081 = vmatprep.subr.mxu0 0.0
      %1082 = vmatpush1.msra.mxu0 %v1050
      %1083 = vmatprep.subr.mxu0 0.0
      %1084 = vmatpush1.msra.mxu0 %v1049
      %1085 = vmatprep.subr.mxu0 0.0
      %1086 = vmatpush1.msra.mxu0 %v1048
      %1087 = vmatprep.subr.mxu0 0.0
      %1088 = vmatpush1.msra.mxu0 %v1047
      %1089 = vmatprep.subr.mxu0 0.0
      %1090 = vmatpush1.msra.mxu0 %v1046
      %1091 = vmatprep.subr.mxu0 0.0
      %1092 = vmatpush1.msra.mxu0 %v1045
      %1093 = vmatprep.subr.mxu0 0.0
      %1094 = vmatpush2.msra.mxu0 0.0
      %1095 = vmatprep.subr.mxu0 0.0
      %1096 = vmatpush2.msra.mxu0 0.0
      %1097 = vmatprep.subr.mxu0 0.0
      %1098 = vmatpush2.msra.mxu0 0.0
      %1099 = vmatprep.subr.mxu0 0.0
      %1100 = vmatpush2.msra.mxu0 0.0
      %1101 = vmatprep.subr.mxu0 0.0
      %1102 = vmatpush2.msra.mxu0 0.0
      %1103 = vmatprep.subr.mxu0 0.0
      %1104 = vmatpush2.msra.mxu0 0.0
      %1105 = vmatprep.subr.mxu0 0.0
      %1106 = vmatpush2.msra.mxu0 0.0
      %1107 = vmatprep.subr.mxu0 0.0
      %1108 = vmatpush2.msra.mxu0 0.0
      %1109 = vmatprep.subr.mxu0 0.0
      %1110 = vmatpush2.msra.mxu0 0.0
      %1111 = vmatprep.subr.mxu0 0.0
      %1112 = vmatpush2.msra.mxu0 0.0
      %1113 = vmatprep.subr.mxu0 0.0
      %1114 = vmatpush2.msra.mxu0 0.0
      %1115 = vmatprep.subr.mxu0 0.0
      %1116 = vmatpush2.msra.mxu0 0.0
      %1117 = vmatprep.subr.mxu0 0.0
      %1118 = vmatpush2.msra.mxu0 0.0
      %1119 = vmatprep.subr.mxu0 0.0
      %1120 = vmatpush2.msra.mxu0 0.0
      %1121 = vmatprep.subr.mxu0 0.0
      %1122 = vmatpush2.msra.mxu0 0.0
      %1123 = vmatprep.subr.mxu0 0.0
      %1124 = vmatpush2.msra.mxu0 0.0
      %1125 = vmatprep.mubr.f32.mxu0 0.0
      %1126 = vmatmul.mubr.f32.gmra.mxu0 %v1012
      %v1127 = vpop.f32.mrf.mxu0
      %v1128 = vadd.f32 0.0, %v1127
      %v1129 = vpop.f32.mrf.mxu0
      %1130 = vmatprep.mubr.f32.mxu0 0.0
      %1131 = vmatmul.mubr.f32.gmra.mxu0 %v1013
      %v1132 = vpop.f32.mrf.mxu0
      %v1133 = vadd.f32 0.0, %v1132
      %v1134 = vpop.f32.mrf.mxu0
      %1135 = vmatprep.mubr.f32.mxu0 0.0
      %1136 = vmatmul.mubr.f32.gmra.mxu0 %v1014
      %v1137 = vpop.f32.mrf.mxu0
      %v1138 = vadd.f32 0.0, %v1137
      %v1139 = vpop.f32.mrf.mxu0
      %1140 = vmatprep.mubr.f32.mxu0 0.0
      %1141 = vmatmul.mubr.f32.gmra.mxu0 %v1015
      %v1142 = vpop.f32.mrf.mxu0
      %v1143 = vadd.f32 0.0, %v1142
      %v1144 = vpop.f32.mrf.mxu0
      %1145 = vmatprep.mubr.f32.mxu0 0.0
      %1146 = vmatmul.mubr.f32.gmra.mxu0 %v1016
      %v1147 = vpop.f32.mrf.mxu0
      %v1148 = vadd.f32 0.0, %v1147
      %v1149 = vpop.f32.mrf.mxu0
      %1150 = vmatprep.mubr.f32.mxu0 0.0
      %1151 = vmatmul.mubr.f32.gmra.mxu0 %v1017
      %v1152 = vpop.f32.mrf.mxu0
      %v1153 = vadd.f32 0.0, %v1152
      %v1154 = vpop.f32.mrf.mxu0
      %1155 = vmatprep.mubr.f32.mxu0 0.0
      %1156 = vmatmul.mubr.f32.gmra.mxu0 %v1018
      %v1157 = vpop.f32.mrf.mxu0
      %v1158 = vadd.f32 0.0, %v1157
      %v1159 = vpop.f32.mrf.mxu0
      %1160 = vmatprep.mubr.f32.mxu0 0.0
      %1161 = vmatmul.mubr.f32.gmra.mxu0 %v1019
      %v1162 = vpop.f32.mrf.mxu0
      %v1163 = vadd.f32 0.0, %v1162
      %v1164 = vpop.f32.mrf.mxu0
      %1165 = vmatprep.mubr.f32.mxu0 0.0
      %1166 = vmatmul.mubr.f32.gmra.mxu0 %v1020
      %v1167 = vpop.f32.mrf.mxu0
      %v1168 = vadd.f32 0.0, %v1167
      %v1169 = vpop.f32.mrf.mxu0
      %1170 = vmatprep.mubr.f32.mxu0 0.0
      %1171 = vmatmul.mubr.f32.gmra.mxu0 %v1021
      %v1172 = vpop.f32.mrf.mxu0
      %v1173 = vadd.f32 0.0, %v1172
      %v1174 = vpop.f32.mrf.mxu0
      %1175 = vmatprep.mubr.f32.mxu0 0.0
      %1176 = vmatmul.mubr.f32.gmra.mxu0 %v1022
      %v1177 = vpop.f32.mrf.mxu0
      %v1178 = vadd.f32 0.0, %v1177
      %v1179 = vpop.f32.mrf.mxu0
      %1180 = vmatprep.mubr.f32.mxu0 0.0
      %1181 = vmatmul.mubr.f32.gmra.mxu0 %v1023
      %v1182 = vpop.f32.mrf.mxu0
      %v1183 = vadd.f32 0.0, %v1182
      %v1184 = vpop.f32.mrf.mxu0
      %1185 = vmatprep.mubr.f32.mxu0 0.0
      %1186 = vmatmul.mubr.f32.gmra.mxu0 %v1024
      %v1187 = vpop.f32.mrf.mxu0
      %v1188 = vadd.f32 0.0, %v1187
      %v1189 = vpop.f32.mrf.mxu0
      %1190 = vmatprep.mubr.f32.mxu0 0.0
      %1191 = vmatmul.mubr.f32.gmra.mxu0 %v1025
      %v1192 = vpop.f32.mrf.mxu0
      %v1193 = vadd.f32 0.0, %v1192
      %v1194 = vpop.f32.mrf.mxu0
      %1195 = vmatprep.mubr.f32.mxu0 0.0
      %1196 = vmatmul.mubr.f32.gmra.mxu0 %v1026
      %v1197 = vpop.f32.mrf.mxu0
      %v1198 = vadd.f32 0.0, %v1197
      %v1199 = vpop.f32.mrf.mxu0
      %1200 = vmatprep.mubr.f32.mxu0 0.0
      %1201 = vmatmul.mubr.f32.gmra.mxu0 %v1027
      %v1202 = vpop.f32.mrf.mxu0
      %v1203 = vadd.f32 0.0, %v1202
      %v1204 = vpop.f32.mrf.mxu0
      %1205 = vmatprep.mubr.f32.mxu0 0.0
      %1206 = vmatmul.mubr.f32.gmra.mxu0 %v1028
      %v1207 = vpop.f32.mrf.mxu0
      %v1208 = vadd.f32 0.0, %v1207
      %v1209 = vpop.f32.mrf.mxu0
      %1210 = vmatprep.mubr.f32.mxu0 0.0
      %1211 = vmatmul.mubr.f32.gmra.mxu0 %v1029
      %v1212 = vpop.f32.mrf.mxu0
      %v1213 = vadd.f32 0.0, %v1212
      %v1214 = vpop.f32.mrf.mxu0
      %1215 = vmatprep.mubr.f32.mxu0 0.0
      %1216 = vmatmul.mubr.f32.gmra.mxu0 %v1030
      %v1217 = vpop.f32.mrf.mxu0
      %v1218 = vadd.f32 0.0, %v1217
      %v1219 = vpop.f32.mrf.mxu0
      %1220 = vmatprep.mubr.f32.mxu0 0.0
      %1221 = vmatmul.mubr.f32.gmra.mxu0 %v1031
      %v1222 = vpop.f32.mrf.mxu0
      %v1223 = vadd.f32 0.0, %v1222
      %v1224 = vpop.f32.mrf.mxu0
      %1225 = vmatprep.mubr.f32.mxu0 0.0
      %1226 = vmatmul.mubr.f32.gmra.mxu0 %v1032
      %v1227 = vpop.f32.mrf.mxu0
      %v1228 = vadd.f32 0.0, %v1227
      %v1229 = vpop.f32.mrf.mxu0
      %1230 = vmatprep.mubr.f32.mxu0 0.0
      %1231 = vmatmul.mubr.f32.gmra.mxu0 %v1033
      %v1232 = vpop.f32.mrf.mxu0
      %v1233 = vadd.f32 0.0, %v1232
      %v1234 = vpop.f32.mrf.mxu0
      %1235 = vmatprep.mubr.f32.mxu0 0.0
      %1236 = vmatmul.mubr.f32.gmra.mxu0 %v1034
      %v1237 = vpop.f32.mrf.mxu0
      %v1238 = vadd.f32 0.0, %v1237
      %v1239 = vpop.f32.mrf.mxu0
      %1240 = vmatprep.mubr.f32.mxu0 0.0
      %1241 = vmatmul.mubr.f32.gmra.mxu0 %v1035
      %v1242 = vpop.f32.mrf.mxu0
      %v1243 = vadd.f32 0.0, %v1242
      %v1244 = vpop.f32.mrf.mxu0
      %1245 = vmatprep.mubr.f32.mxu0 0.0
      %1246 = vmatmul.mubr.f32.gmra.mxu0 %v1036
      %v1247 = vpop.f32.mrf.mxu0
      %v1248 = vadd.f32 0.0, %v1247
      %v1249 = vpop.f32.mrf.mxu0
      %1250 = vmatprep.mubr.f32.mxu0 0.0
      %1251 = vmatmul.mubr.f32.gmra.mxu0 %v1037
      %v1252 = vpop.f32.mrf.mxu0
      %v1253 = vadd.f32 0.0, %v1252
      %v1254 = vpop.f32.mrf.mxu0
      %1255 = vmatprep.mubr.f32.mxu0 0.0
      %1256 = vmatmul.mubr.f32.gmra.mxu0 %v1038
      %v1257 = vpop.f32.mrf.mxu0
      %v1258 = vadd.f32 0.0, %v1257
      %v1259 = vpop.f32.mrf.mxu0
      %1260 = vmatprep.mubr.f32.mxu0 0.0
      %1261 = vmatmul.mubr.f32.gmra.mxu0 %v1039
      %v1262 = vpop.f32.mrf.mxu0
      %v1263 = vadd.f32 0.0, %v1262
      %v1264 = vpop.f32.mrf.mxu0
      %1265 = vmatprep.mubr.f32.mxu0 0.0
      %1266 = vmatmul.mubr.f32.gmra.mxu0 %v1040
      %v1267 = vpop.f32.mrf.mxu0
      %v1268 = vadd.f32 0.0, %v1267
      %v1269 = vpop.f32.mrf.mxu0
      %1270 = vmatprep.mubr.f32.mxu0 0.0
      %1271 = vmatmul.mubr.f32.gmra.mxu0 %v1041
      %v1272 = vpop.f32.mrf.mxu0
      %v1273 = vadd.f32 0.0, %v1272
      %v1274 = vpop.f32.mrf.mxu0
      %1275 = vmatprep.mubr.f32.mxu0 0.0
      %1276 = vmatmul.mubr.f32.gmra.mxu0 %v1042
      %v1277 = vpop.f32.mrf.mxu0
      %v1278 = vadd.f32 0.0, %v1277
      %v1279 = vpop.f32.mrf.mxu0
      %1280 = vmatprep.mubr.f32.mxu0 0.0
      %1281 = vmatmul.mubr.f32.gmra.mxu0 %v1043
      %v1282 = vpop.f32.mrf.mxu0
      %v1283 = vadd.f32 0.0, %v1282
      %v1284 = vpop.f32.mrf.mxu0
      %1285 = vdwg.mxu0
      %v1286 = vadd.f32 %v854, %v1128
      %v1287 = vadd.f32 %v859, %v1133
      %v1288 = vadd.f32 %v864, %v1138
      %v1289 = vadd.f32 %v869, %v1143
      %v1290 = vadd.f32 %v874, %v1148
      %v1291 = vadd.f32 %v879, %v1153
      %v1292 = vadd.f32 %v884, %v1158
      %v1293 = vadd.f32 %v889, %v1163
      %v1294 = vadd.f32 %v894, %v1168
      %v1295 = vadd.f32 %v899, %v1173
      %v1296 = vadd.f32 %v904, %v1178
      %v1297 = vadd.f32 %v909, %v1183
      %v1298 = vadd.f32 %v914, %v1188
      %v1299 = vadd.f32 %v919, %v1193
      %v1300 = vadd.f32 %v924, %v1198
      %v1301 = vadd.f32 %v929, %v1203
      %v1302 = vadd.f32 %v934, %v1208
      %v1303 = vadd.f32 %v939, %v1213
      %v1304 = vadd.f32 %v944, %v1218
      %v1305 = vadd.f32 %v949, %v1223
      %v1306 = vadd.f32 %v954, %v1228
      %v1307 = vadd.f32 %v959, %v1233
      %v1308 = vadd.f32 %v964, %v1238
      %v1309 = vadd.f32 %v969, %v1243
      %v1310 = vadd.f32 %v974, %v1248
      %v1311 = vadd.f32 %v979, %v1253
      %v1312 = vadd.f32 %v984, %v1258
      %v1313 = vadd.f32 %v989, %v1263
      %v1314 = vadd.f32 %v994, %v1268
      %v1315 = vadd.f32 %v999, %v1273
      %v1316 = vadd.f32 %v1004, %v1278
      %v1317 = vadd.f32 %v1009, %v1283
      %v1318 = vld [vmem:[%s432] sm:$0xff]
      %v1319 = vld [vmem:[%s432 + $0x8] sm:$0xff]
      %v1320 = vld [vmem:[%s432 + $0x18] sm:$0xff]
      %v1321 = vld [vmem:[%s432 + $0x20] sm:$0xff]
      %v1322 = vld [vmem:[%s432 + $0x30] sm:$0xff]
      %v1323 = vld [vmem:[%s432 + $0x38] sm:$0xff]
      %v1324 = vld [vmem:[%s432 + $0x48] sm:$0xff]
      %v1325 = vld [vmem:[%s432 + $0x50] sm:$0xff]
      %v1326 = vld [vmem:[%s432 + $0x60] sm:$0xff]
      %v1327 = vld [vmem:[%s432 + $0x68] sm:$0xff]
      %v1328 = vld [vmem:[%s432 + $0x78] sm:$0xff]
      %v1329 = vld [vmem:[%s432 + $0x80] sm:$0xff]
      %v1330 = vld [vmem:[%s432 + $0x90] sm:$0xff]
      %v1331 = vld [vmem:[%s432 + $0x98] sm:$0xff]
      %v1332 = vld [vmem:[%s432 + $0xa8] sm:$0xff]
      %v1333 = vld [vmem:[%s432 + $0xb0] sm:$0xff]
      %v1334 = vld [vmem:[%s432 + $0xc0] sm:$0xff]
      %v1335 = vld [vmem:[%s432 + $0xc8] sm:$0xff]
      %v1336 = vld [vmem:[%s432 + $0xd8] sm:$0xff]
      %v1337 = vld [vmem:[%s432 + $0xe0] sm:$0xff]
      %v1338 = vld [vmem:[%s432 + $0xf0] sm:$0xff]
      %v1339 = vld [vmem:[%s432 + $0xf8] sm:$0xff]
      %v1340 = vld [vmem:[%s432 + $0x108] sm:$0xff]
      %v1341 = vld [vmem:[%s432 + $0x110] sm:$0xff]
      %v1342 = vld [vmem:[%s432 + $0x120] sm:$0xff]
      %v1343 = vld [vmem:[%s432 + $0x128] sm:$0xff]
      %v1344 = vld [vmem:[%s432 + $0x138] sm:$0xff]
      %v1345 = vld [vmem:[%s432 + $0x140] sm:$0xff]
      %v1346 = vld [vmem:[%s432 + $0x150] sm:$0xff]
      %v1347 = vld [vmem:[%s432 + $0x158] sm:$0xff]
      %v1348 = vld [vmem:[%s432 + $0x168] sm:$0xff]
      %v1349 = vld [vmem:[%s432 + $0x170] sm:$0xff]
      %s1350 = scalar_lea.vmem %s3, 384
      %v1351 = vld [vmem:[%s1350] sm:$0xff]
      %v1352 = vld [vmem:[%s1350 + $0x8] sm:$0xff]
      %v1353 = vld [vmem:[%s1350 + $0x10] sm:$0xff]
      %v1354 = vld [vmem:[%s1350 + $0x18] sm:$0xff]
      %v1355 = vld [vmem:[%s1350 + $0x20] sm:$0xff]
      %v1356 = vld [vmem:[%s1350 + $0x28] sm:$0xff]
      %v1357 = vld [vmem:[%s1350 + $0x30] sm:$0xff]
      %v1358 = vld [vmem:[%s1350 + $0x38] sm:$0xff]
      %v1359 = vld [vmem:[%s1350 + $0x40] sm:$0xff]
      %v1360 = vld [vmem:[%s1350 + $0x48] sm:$0xff]
      %v1361 = vld [vmem:[%s1350 + $0x50] sm:$0xff]
      %v1362 = vld [vmem:[%s1350 + $0x58] sm:$0xff]
      %v1363 = vld [vmem:[%s1350 + $0x60] sm:$0xff]
      %v1364 = vld [vmem:[%s1350 + $0x68] sm:$0xff]
      %v1365 = vld [vmem:[%s1350 + $0x70] sm:$0xff]
      %v1366 = vld [vmem:[%s1350 + $0x78] sm:$0xff]
      %1367 = vmatprep.subr.mxu0 0.0
      %1368 = vmatpush1.msra.mxu0 %v1366
      %1369 = vmatprep.subr.mxu0 0.0
      %1370 = vmatpush1.msra.mxu0 %v1365
      %1371 = vmatprep.subr.mxu0 0.0
      %1372 = vmatpush1.msra.mxu0 %v1364
      %1373 = vmatprep.subr.mxu0 0.0
      %1374 = vmatpush1.msra.mxu0 %v1363
      %1375 = vmatprep.subr.mxu0 0.0
      %1376 = vmatpush1.msra.mxu0 %v1362
      %1377 = vmatprep.subr.mxu0 0.0
      %1378 = vmatpush1.msra.mxu0 %v1361
      %1379 = vmatprep.subr.mxu0 0.0
      %1380 = vmatpush1.msra.mxu0 %v1360
      %1381 = vmatprep.subr.mxu0 0.0
      %1382 = vmatpush1.msra.mxu0 %v1359
      %1383 = vmatprep.subr.mxu0 0.0
      %1384 = vmatpush1.msra.mxu0 %v1358
      %1385 = vmatprep.subr.mxu0 0.0
      %1386 = vmatpush1.msra.mxu0 %v1357
      %1387 = vmatprep.subr.mxu0 0.0
      %1388 = vmatpush1.msra.mxu0 %v1356
      %1389 = vmatprep.subr.mxu0 0.0
      %1390 = vmatpush1.msra.mxu0 %v1355
      %1391 = vmatprep.subr.mxu0 0.0
      %1392 = vmatpush1.msra.mxu0 %v1354
      %1393 = vmatprep.subr.mxu0 0.0
      %1394 = vmatpush1.msra.mxu0 %v1353
      %1395 = vmatprep.subr.mxu0 0.0
      %1396 = vmatpush1.msra.mxu0 %v1352
      %1397 = vmatprep.subr.mxu0 0.0
      %1398 = vmatpush1.msra.mxu0 %v1351
      %1399 = vmatprep.subr.mxu0 0.0
      %1400 = vmatpush2.msra.mxu0 0.0
      %1401 = vmatprep.subr.mxu0 0.0
      %1402 = vmatpush2.msra.mxu0 0.0
      %1403 = vmatprep.subr.mxu0 0.0
      %1404 = vmatpush2.msra.mxu0 0.0
      %1405 = vmatprep.subr.mxu0 0.0
      %1406 = vmatpush2.msra.mxu0 0.0
      %1407 = vmatprep.subr.mxu0 0.0
      %1408 = vmatpush2.msra.mxu0 0.0
      %1409 = vmatprep.subr.mxu0 0.0
      %1410 = vmatpush2.msra.mxu0 0.0
      %1411 = vmatprep.subr.mxu0 0.0
      %1412 = vmatpush2.msra.mxu0 0.0
      %1413 = vmatprep.subr.mxu0 0.0
      %1414 = vmatpush2.msra.mxu0 0.0
      %1415 = vmatprep.subr.mxu0 0.0
      %1416 = vmatpush2.msra.mxu0 0.0
      %1417 = vmatprep.subr.mxu0 0.0
      %1418 = vmatpush2.msra.mxu0 0.0
      %1419 = vmatprep.subr.mxu0 0.0
      %1420 = vmatpush2.msra.mxu0 0.0
      %1421 = vmatprep.subr.mxu0 0.0
      %1422 = vmatpush2.msra.mxu0 0.0
      %1423 = vmatprep.subr.mxu0 0.0
      %1424 = vmatpush2.msra.mxu0 0.0
      %1425 = vmatprep.subr.mxu0 0.0
      %1426 = vmatpush2.msra.mxu0 0.0
      %1427 = vmatprep.subr.mxu0 0.0
      %1428 = vmatpush2.msra.mxu0 0.0
      %1429 = vmatprep.subr.mxu0 0.0
      %1430 = vmatpush2.msra.mxu0 0.0
      %1431 = vmatprep.mubr.f32.mxu0 0.0
      %1432 = vmatmul.mubr.f32.gmra.mxu0 %v1318
      %v1433 = vpop.f32.mrf.mxu0
      %v1434 = vadd.f32 0.0, %v1433
      %v1435 = vpop.f32.mrf.mxu0
      %1436 = vmatprep.mubr.f32.mxu0 0.0
      %1437 = vmatmul.mubr.f32.gmra.mxu0 %v1319
      %v1438 = vpop.f32.mrf.mxu0
      %v1439 = vadd.f32 0.0, %v1438
      %v1440 = vpop.f32.mrf.mxu0
      %1441 = vmatprep.mubr.f32.mxu0 0.0
      %1442 = vmatmul.mubr.f32.gmra.mxu0 %v1320
      %v1443 = vpop.f32.mrf.mxu0
      %v1444 = vadd.f32 0.0, %v1443
      %v1445 = vpop.f32.mrf.mxu0
      %1446 = vmatprep.mubr.f32.mxu0 0.0
      %1447 = vmatmul.mubr.f32.gmra.mxu0 %v1321
      %v1448 = vpop.f32.mrf.mxu0
      %v1449 = vadd.f32 0.0, %v1448
      %v1450 = vpop.f32.mrf.mxu0
      %1451 = vmatprep.mubr.f32.mxu0 0.0
      %1452 = vmatmul.mubr.f32.gmra.mxu0 %v1322
      %v1453 = vpop.f32.mrf.mxu0
      %v1454 = vadd.f32 0.0, %v1453
      %v1455 = vpop.f32.mrf.mxu0
      %1456 = vmatprep.mubr.f32.mxu0 0.0
      %1457 = vmatmul.mubr.f32.gmra.mxu0 %v1323
      %v1458 = vpop.f32.mrf.mxu0
      %v1459 = vadd.f32 0.0, %v1458
      %v1460 = vpop.f32.mrf.mxu0
      %1461 = vmatprep.mubr.f32.mxu0 0.0
      %1462 = vmatmul.mubr.f32.gmra.mxu0 %v1324
      %v1463 = vpop.f32.mrf.mxu0
      %v1464 = vadd.f32 0.0, %v1463
      %v1465 = vpop.f32.mrf.mxu0
      %1466 = vmatprep.mubr.f32.mxu0 0.0
      %1467 = vmatmul.mubr.f32.gmra.mxu0 %v1325
      %v1468 = vpop.f32.mrf.mxu0
      %v1469 = vadd.f32 0.0, %v1468
      %v1470 = vpop.f32.mrf.mxu0
      %1471 = vmatprep.mubr.f32.mxu0 0.0
      %1472 = vmatmul.mubr.f32.gmra.mxu0 %v1326
      %v1473 = vpop.f32.mrf.mxu0
      %v1474 = vadd.f32 0.0, %v1473
      %v1475 = vpop.f32.mrf.mxu0
      %1476 = vmatprep.mubr.f32.mxu0 0.0
      %1477 = vmatmul.mubr.f32.gmra.mxu0 %v1327
      %v1478 = vpop.f32.mrf.mxu0
      %v1479 = vadd.f32 0.0, %v1478
      %v1480 = vpop.f32.mrf.mxu0
      %1481 = vmatprep.mubr.f32.mxu0 0.0
      %1482 = vmatmul.mubr.f32.gmra.mxu0 %v1328
      %v1483 = vpop.f32.mrf.mxu0
      %v1484 = vadd.f32 0.0, %v1483
      %v1485 = vpop.f32.mrf.mxu0
      %1486 = vmatprep.mubr.f32.mxu0 0.0
      %1487 = vmatmul.mubr.f32.gmra.mxu0 %v1329
      %v1488 = vpop.f32.mrf.mxu0
      %v1489 = vadd.f32 0.0, %v1488
      %v1490 = vpop.f32.mrf.mxu0
      %1491 = vmatprep.mubr.f32.mxu0 0.0
      %1492 = vmatmul.mubr.f32.gmra.mxu0 %v1330
      %v1493 = vpop.f32.mrf.mxu0
      %v1494 = vadd.f32 0.0, %v1493
      %v1495 = vpop.f32.mrf.mxu0
      %1496 = vmatprep.mubr.f32.mxu0 0.0
      %1497 = vmatmul.mubr.f32.gmra.mxu0 %v1331
      %v1498 = vpop.f32.mrf.mxu0
      %v1499 = vadd.f32 0.0, %v1498
      %v1500 = vpop.f32.mrf.mxu0
      %1501 = vmatprep.mubr.f32.mxu0 0.0
      %1502 = vmatmul.mubr.f32.gmra.mxu0 %v1332
      %v1503 = vpop.f32.mrf.mxu0
      %v1504 = vadd.f32 0.0, %v1503
      %v1505 = vpop.f32.mrf.mxu0
      %1506 = vmatprep.mubr.f32.mxu0 0.0
      %1507 = vmatmul.mubr.f32.gmra.mxu0 %v1333
      %v1508 = vpop.f32.mrf.mxu0
      %v1509 = vadd.f32 0.0, %v1508
      %v1510 = vpop.f32.mrf.mxu0
      %1511 = vmatprep.mubr.f32.mxu0 0.0
      %1512 = vmatmul.mubr.f32.gmra.mxu0 %v1334
      %v1513 = vpop.f32.mrf.mxu0
      %v1514 = vadd.f32 0.0, %v1513
      %v1515 = vpop.f32.mrf.mxu0
      %1516 = vmatprep.mubr.f32.mxu0 0.0
      %1517 = vmatmul.mubr.f32.gmra.mxu0 %v1335
      %v1518 = vpop.f32.mrf.mxu0
      %v1519 = vadd.f32 0.0, %v1518
      %v1520 = vpop.f32.mrf.mxu0
      %1521 = vmatprep.mubr.f32.mxu0 0.0
      %1522 = vmatmul.mubr.f32.gmra.mxu0 %v1336
      %v1523 = vpop.f32.mrf.mxu0
      %v1524 = vadd.f32 0.0, %v1523
      %v1525 = vpop.f32.mrf.mxu0
      %1526 = vmatprep.mubr.f32.mxu0 0.0
      %1527 = vmatmul.mubr.f32.gmra.mxu0 %v1337
      %v1528 = vpop.f32.mrf.mxu0
      %v1529 = vadd.f32 0.0, %v1528
      %v1530 = vpop.f32.mrf.mxu0
      %1531 = vmatprep.mubr.f32.mxu0 0.0
      %1532 = vmatmul.mubr.f32.gmra.mxu0 %v1338
      %v1533 = vpop.f32.mrf.mxu0
      %v1534 = vadd.f32 0.0, %v1533
      %v1535 = vpop.f32.mrf.mxu0
      %1536 = vmatprep.mubr.f32.mxu0 0.0
      %1537 = vmatmul.mubr.f32.gmra.mxu0 %v1339
      %v1538 = vpop.f32.mrf.mxu0
      %v1539 = vadd.f32 0.0, %v1538
      %v1540 = vpop.f32.mrf.mxu0
      %1541 = vmatprep.mubr.f32.mxu0 0.0
      %1542 = vmatmul.mubr.f32.gmra.mxu0 %v1340
      %v1543 = vpop.f32.mrf.mxu0
      %v1544 = vadd.f32 0.0, %v1543
      %v1545 = vpop.f32.mrf.mxu0
      %1546 = vmatprep.mubr.f32.mxu0 0.0
      %1547 = vmatmul.mubr.f32.gmra.mxu0 %v1341
      %v1548 = vpop.f32.mrf.mxu0
      %v1549 = vadd.f32 0.0, %v1548
      %v1550 = vpop.f32.mrf.mxu0
      %1551 = vmatprep.mubr.f32.mxu0 0.0
      %1552 = vmatmul.mubr.f32.gmra.mxu0 %v1342
      %v1553 = vpop.f32.mrf.mxu0
      %v1554 = vadd.f32 0.0, %v1553
      %v1555 = vpop.f32.mrf.mxu0
      %1556 = vmatprep.mubr.f32.mxu0 0.0
      %1557 = vmatmul.mubr.f32.gmra.mxu0 %v1343
      %v1558 = vpop.f32.mrf.mxu0
      %v1559 = vadd.f32 0.0, %v1558
      %v1560 = vpop.f32.mrf.mxu0
      %1561 = vmatprep.mubr.f32.mxu0 0.0
      %1562 = vmatmul.mubr.f32.gmra.mxu0 %v1344
      %v1563 = vpop.f32.mrf.mxu0
      %v1564 = vadd.f32 0.0, %v1563
      %v1565 = vpop.f32.mrf.mxu0
      %1566 = vmatprep.mubr.f32.mxu0 0.0
      %1567 = vmatmul.mubr.f32.gmra.mxu0 %v1345
      %v1568 = vpop.f32.mrf.mxu0
      %v1569 = vadd.f32 0.0, %v1568
      %v1570 = vpop.f32.mrf.mxu0
      %1571 = vmatprep.mubr.f32.mxu0 0.0
      %1572 = vmatmul.mubr.f32.gmra.mxu0 %v1346
      %v1573 = vpop.f32.mrf.mxu0
      %v1574 = vadd.f32 0.0, %v1573
      %v1575 = vpop.f32.mrf.mxu0
      %1576 = vmatprep.mubr.f32.mxu0 0.0
      %1577 = vmatmul.mubr.f32.gmra.mxu0 %v1347
      %v1578 = vpop.f32.mrf.mxu0
      %v1579 = vadd.f32 0.0, %v1578
      %v1580 = vpop.f32.mrf.mxu0
      %1581 = vmatprep.mubr.f32.mxu0 0.0
      %1582 = vmatmul.mubr.f32.gmra.mxu0 %v1348
      %v1583 = vpop.f32.mrf.mxu0
      %v1584 = vadd.f32 0.0, %v1583
      %v1585 = vpop.f32.mrf.mxu0
      %1586 = vmatprep.mubr.f32.mxu0 0.0
      %1587 = vmatmul.mubr.f32.gmra.mxu0 %v1349
      %v1588 = vpop.f32.mrf.mxu0
      %v1589 = vadd.f32 0.0, %v1588
      %v1590 = vpop.f32.mrf.mxu0
      %1591 = vdwg.mxu0
      %v1592 = vadd.f32 %v1286, %v1434
      %v1593 = vadd.f32 %v1287, %v1439
      %v1594 = vadd.f32 %v1288, %v1444
      %v1595 = vadd.f32 %v1289, %v1449
      %v1596 = vadd.f32 %v1290, %v1454
      %v1597 = vadd.f32 %v1291, %v1459
      %v1598 = vadd.f32 %v1292, %v1464
      %v1599 = vadd.f32 %v1293, %v1469
      %v1600 = vadd.f32 %v1294, %v1474
      %v1601 = vadd.f32 %v1295, %v1479
      %v1602 = vadd.f32 %v1296, %v1484
      %v1603 = vadd.f32 %v1297, %v1489
      %v1604 = vadd.f32 %v1298, %v1494
      %v1605 = vadd.f32 %v1299, %v1499
      %v1606 = vadd.f32 %v1300, %v1504
      %v1607 = vadd.f32 %v1301, %v1509
      %v1608 = vadd.f32 %v1302, %v1514
      %v1609 = vadd.f32 %v1303, %v1519
      %v1610 = vadd.f32 %v1304, %v1524
      %v1611 = vadd.f32 %v1305, %v1529
      %v1612 = vadd.f32 %v1306, %v1534
      %v1613 = vadd.f32 %v1307, %v1539
      %v1614 = vadd.f32 %v1308, %v1544
      %v1615 = vadd.f32 %v1309, %v1549
      %v1616 = vadd.f32 %v1310, %v1554
      %v1617 = vadd.f32 %v1311, %v1559
      %v1618 = vadd.f32 %v1312, %v1564
      %v1619 = vadd.f32 %v1313, %v1569
      %v1620 = vadd.f32 %v1314, %v1574
      %v1621 = vadd.f32 %v1315, %v1579
      %v1622 = vadd.f32 %v1316, %v1584
      %v1623 = vadd.f32 %v1317, %v1589
      %v1624 = vld [vmem:[%s432 + $0x1] sm:$0xff]
      %v1625 = vld [vmem:[%s432 + $0x9] sm:$0xff]
      %v1626 = vld [vmem:[%s432 + $0x19] sm:$0xff]
      %v1627 = vld [vmem:[%s432 + $0x21] sm:$0xff]
      %v1628 = vld [vmem:[%s432 + $0x31] sm:$0xff]
      %v1629 = vld [vmem:[%s432 + $0x39] sm:$0xff]
      %v1630 = vld [vmem:[%s432 + $0x49] sm:$0xff]
      %v1631 = vld [vmem:[%s432 + $0x51] sm:$0xff]
      %v1632 = vld [vmem:[%s432 + $0x61] sm:$0xff]
      %v1633 = vld [vmem:[%s432 + $0x69] sm:$0xff]
      %v1634 = vld [vmem:[%s432 + $0x79] sm:$0xff]
      %v1635 = vld [vmem:[%s432 + $0x81] sm:$0xff]
      %v1636 = vld [vmem:[%s432 + $0x91] sm:$0xff]
      %v1637 = vld [vmem:[%s432 + $0x99] sm:$0xff]
      %v1638 = vld [vmem:[%s432 + $0xa9] sm:$0xff]
      %v1639 = vld [vmem:[%s432 + $0xb1] sm:$0xff]
      %v1640 = vld [vmem:[%s432 + $0xc1] sm:$0xff]
      %v1641 = vld [vmem:[%s432 + $0xc9] sm:$0xff]
      %v1642 = vld [vmem:[%s432 + $0xd9] sm:$0xff]
      %v1643 = vld [vmem:[%s432 + $0xe1] sm:$0xff]
      %v1644 = vld [vmem:[%s432 + $0xf1] sm:$0xff]
      %v1645 = vld [vmem:[%s432 + $0xf9] sm:$0xff]
      %v1646 = vld [vmem:[%s432 + $0x109] sm:$0xff]
      %v1647 = vld [vmem:[%s432 + $0x111] sm:$0xff]
      %v1648 = vld [vmem:[%s432 + $0x121] sm:$0xff]
      %v1649 = vld [vmem:[%s432 + $0x129] sm:$0xff]
      %v1650 = vld [vmem:[%s432 + $0x139] sm:$0xff]
      %v1651 = vld [vmem:[%s432 + $0x141] sm:$0xff]
      %v1652 = vld [vmem:[%s432 + $0x151] sm:$0xff]
      %v1653 = vld [vmem:[%s432 + $0x159] sm:$0xff]
      %v1654 = vld [vmem:[%s432 + $0x169] sm:$0xff]
      %v1655 = vld [vmem:[%s432 + $0x171] sm:$0xff]
      %s1656 = scalar_lea.vmem %s3, 512
      %v1657 = vld [vmem:[%s1656] sm:$0xff]
      %v1658 = vld [vmem:[%s1656 + $0x8] sm:$0xff]
      %v1659 = vld [vmem:[%s1656 + $0x10] sm:$0xff]
      %v1660 = vld [vmem:[%s1656 + $0x18] sm:$0xff]
      %v1661 = vld [vmem:[%s1656 + $0x20] sm:$0xff]
      %v1662 = vld [vmem:[%s1656 + $0x28] sm:$0xff]
      %v1663 = vld [vmem:[%s1656 + $0x30] sm:$0xff]
      %v1664 = vld [vmem:[%s1656 + $0x38] sm:$0xff]
      %v1665 = vld [vmem:[%s1656 + $0x40] sm:$0xff]
      %v1666 = vld [vmem:[%s1656 + $0x48] sm:$0xff]
      %v1667 = vld [vmem:[%s1656 + $0x50] sm:$0xff]
      %v1668 = vld [vmem:[%s1656 + $0x58] sm:$0xff]
      %v1669 = vld [vmem:[%s1656 + $0x60] sm:$0xff]
      %v1670 = vld [vmem:[%s1656 + $0x68] sm:$0xff]
      %v1671 = vld [vmem:[%s1656 + $0x70] sm:$0xff]
      %v1672 = vld [vmem:[%s1656 + $0x78] sm:$0xff]
      %1673 = vmatprep.subr.mxu0 0.0
      %1674 = vmatpush1.msra.mxu0 %v1672
      %1675 = vmatprep.subr.mxu0 0.0
      %1676 = vmatpush1.msra.mxu0 %v1671
      %1677 = vmatprep.subr.mxu0 0.0
      %1678 = vmatpush1.msra.mxu0 %v1670
      %1679 = vmatprep.subr.mxu0 0.0
      %1680 = vmatpush1.msra.mxu0 %v1669
      %1681 = vmatprep.subr.mxu0 0.0
      %1682 = vmatpush1.msra.mxu0 %v1668
      %1683 = vmatprep.subr.mxu0 0.0
      %1684 = vmatpush1.msra.mxu0 %v1667
      %1685 = vmatprep.subr.mxu0 0.0
      %1686 = vmatpush1.msra.mxu0 %v1666
      %1687 = vmatprep.subr.mxu0 0.0
      %1688 = vmatpush1.msra.mxu0 %v1665
      %1689 = vmatprep.subr.mxu0 0.0
      %1690 = vmatpush1.msra.mxu0 %v1664
      %1691 = vmatprep.subr.mxu0 0.0
      %1692 = vmatpush1.msra.mxu0 %v1663
      %1693 = vmatprep.subr.mxu0 0.0
      %1694 = vmatpush1.msra.mxu0 %v1662
      %1695 = vmatprep.subr.mxu0 0.0
      %1696 = vmatpush1.msra.mxu0 %v1661
      %1697 = vmatprep.subr.mxu0 0.0
      %1698 = vmatpush1.msra.mxu0 %v1660
      %1699 = vmatprep.subr.mxu0 0.0
      %1700 = vmatpush1.msra.mxu0 %v1659
      %1701 = vmatprep.subr.mxu0 0.0
      %1702 = vmatpush1.msra.mxu0 %v1658
      %1703 = vmatprep.subr.mxu0 0.0
      %1704 = vmatpush1.msra.mxu0 %v1657
      %1705 = vmatprep.subr.mxu0 0.0
      %1706 = vmatpush2.msra.mxu0 0.0
      %1707 = vmatprep.subr.mxu0 0.0
      %1708 = vmatpush2.msra.mxu0 0.0
      %1709 = vmatprep.subr.mxu0 0.0
      %1710 = vmatpush2.msra.mxu0 0.0
      %1711 = vmatprep.subr.mxu0 0.0
      %1712 = vmatpush2.msra.mxu0 0.0
      %1713 = vmatprep.subr.mxu0 0.0
      %1714 = vmatpush2.msra.mxu0 0.0
      %1715 = vmatprep.subr.mxu0 0.0
      %1716 = vmatpush2.msra.mxu0 0.0
      %1717 = vmatprep.subr.mxu0 0.0
      %1718 = vmatpush2.msra.mxu0 0.0
      %1719 = vmatprep.subr.mxu0 0.0
      %1720 = vmatpush2.msra.mxu0 0.0
      %1721 = vmatprep.subr.mxu0 0.0
      %1722 = vmatpush2.msra.mxu0 0.0
      %1723 = vmatprep.subr.mxu0 0.0
      %1724 = vmatpush2.msra.mxu0 0.0
      %1725 = vmatprep.subr.mxu0 0.0
      %1726 = vmatpush2.msra.mxu0 0.0
      %1727 = vmatprep.subr.mxu0 0.0
      %1728 = vmatpush2.msra.mxu0 0.0
      %1729 = vmatprep.subr.mxu0 0.0
      %1730 = vmatpush2.msra.mxu0 0.0
      %1731 = vmatprep.subr.mxu0 0.0
      %1732 = vmatpush2.msra.mxu0 0.0
      %1733 = vmatprep.subr.mxu0 0.0
      %1734 = vmatpush2.msra.mxu0 0.0
      %1735 = vmatprep.subr.mxu0 0.0
      %1736 = vmatpush2.msra.mxu0 0.0
      %1737 = vmatprep.mubr.f32.mxu0 0.0
      %1738 = vmatmul.mubr.f32.gmra.mxu0 %v1624
      %v1739 = vpop.f32.mrf.mxu0
      %v1740 = vadd.f32 0.0, %v1739
      %v1741 = vpop.f32.mrf.mxu0
      %1742 = vmatprep.mubr.f32.mxu0 0.0
      %1743 = vmatmul.mubr.f32.gmra.mxu0 %v1625
      %v1744 = vpop.f32.mrf.mxu0
      %v1745 = vadd.f32 0.0, %v1744
      %v1746 = vpop.f32.mrf.mxu0
      %1747 = vmatprep.mubr.f32.mxu0 0.0
      %1748 = vmatmul.mubr.f32.gmra.mxu0 %v1626
      %v1749 = vpop.f32.mrf.mxu0
      %v1750 = vadd.f32 0.0, %v1749
      %v1751 = vpop.f32.mrf.mxu0
      %1752 = vmatprep.mubr.f32.mxu0 0.0
      %1753 = vmatmul.mubr.f32.gmra.mxu0 %v1627
      %v1754 = vpop.f32.mrf.mxu0
      %v1755 = vadd.f32 0.0, %v1754
      %v1756 = vpop.f32.mrf.mxu0
      %1757 = vmatprep.mubr.f32.mxu0 0.0
      %1758 = vmatmul.mubr.f32.gmra.mxu0 %v1628
      %v1759 = vpop.f32.mrf.mxu0
      %v1760 = vadd.f32 0.0, %v1759
      %v1761 = vpop.f32.mrf.mxu0
      %1762 = vmatprep.mubr.f32.mxu0 0.0
      %1763 = vmatmul.mubr.f32.gmra.mxu0 %v1629
      %v1764 = vpop.f32.mrf.mxu0
      %v1765 = vadd.f32 0.0, %v1764
      %v1766 = vpop.f32.mrf.mxu0
      %1767 = vmatprep.mubr.f32.mxu0 0.0
      %1768 = vmatmul.mubr.f32.gmra.mxu0 %v1630
      %v1769 = vpop.f32.mrf.mxu0
      %v1770 = vadd.f32 0.0, %v1769
      %v1771 = vpop.f32.mrf.mxu0
      %1772 = vmatprep.mubr.f32.mxu0 0.0
      %1773 = vmatmul.mubr.f32.gmra.mxu0 %v1631
      %v1774 = vpop.f32.mrf.mxu0
      %v1775 = vadd.f32 0.0, %v1774
      %v1776 = vpop.f32.mrf.mxu0
      %1777 = vmatprep.mubr.f32.mxu0 0.0
      %1778 = vmatmul.mubr.f32.gmra.mxu0 %v1632
      %v1779 = vpop.f32.mrf.mxu0
      %v1780 = vadd.f32 0.0, %v1779
      %v1781 = vpop.f32.mrf.mxu0
      %1782 = vmatprep.mubr.f32.mxu0 0.0
      %1783 = vmatmul.mubr.f32.gmra.mxu0 %v1633
      %v1784 = vpop.f32.mrf.mxu0
      %v1785 = vadd.f32 0.0, %v1784
      %v1786 = vpop.f32.mrf.mxu0
      %1787 = vmatprep.mubr.f32.mxu0 0.0
      %1788 = vmatmul.mubr.f32.gmra.mxu0 %v1634
      %v1789 = vpop.f32.mrf.mxu0
      %v1790 = vadd.f32 0.0, %v1789
      %v1791 = vpop.f32.mrf.mxu0
      %1792 = vmatprep.mubr.f32.mxu0 0.0
      %1793 = vmatmul.mubr.f32.gmra.mxu0 %v1635
      %v1794 = vpop.f32.mrf.mxu0
      %v1795 = vadd.f32 0.0, %v1794
      %v1796 = vpop.f32.mrf.mxu0
      %1797 = vmatprep.mubr.f32.mxu0 0.0
      %1798 = vmatmul.mubr.f32.gmra.mxu0 %v1636
      %v1799 = vpop.f32.mrf.mxu0
      %v1800 = vadd.f32 0.0, %v1799
      %v1801 = vpop.f32.mrf.mxu0
      %1802 = vmatprep.mubr.f32.mxu0 0.0
      %1803 = vmatmul.mubr.f32.gmra.mxu0 %v1637
      %v1804 = vpop.f32.mrf.mxu0
      %v1805 = vadd.f32 0.0, %v1804
      %v1806 = vpop.f32.mrf.mxu0
      %1807 = vmatprep.mubr.f32.mxu0 0.0
      %1808 = vmatmul.mubr.f32.gmra.mxu0 %v1638
      %v1809 = vpop.f32.mrf.mxu0
      %v1810 = vadd.f32 0.0, %v1809
      %v1811 = vpop.f32.mrf.mxu0
      %1812 = vmatprep.mubr.f32.mxu0 0.0
      %1813 = vmatmul.mubr.f32.gmra.mxu0 %v1639
      %v1814 = vpop.f32.mrf.mxu0
      %v1815 = vadd.f32 0.0, %v1814
      %v1816 = vpop.f32.mrf.mxu0
      %1817 = vmatprep.mubr.f32.mxu0 0.0
      %1818 = vmatmul.mubr.f32.gmra.mxu0 %v1640
      %v1819 = vpop.f32.mrf.mxu0
      %v1820 = vadd.f32 0.0, %v1819
      %v1821 = vpop.f32.mrf.mxu0
      %1822 = vmatprep.mubr.f32.mxu0 0.0
      %1823 = vmatmul.mubr.f32.gmra.mxu0 %v1641
      %v1824 = vpop.f32.mrf.mxu0
      %v1825 = vadd.f32 0.0, %v1824
      %v1826 = vpop.f32.mrf.mxu0
      %1827 = vmatprep.mubr.f32.mxu0 0.0
      %1828 = vmatmul.mubr.f32.gmra.mxu0 %v1642
      %v1829 = vpop.f32.mrf.mxu0
      %v1830 = vadd.f32 0.0, %v1829
      %v1831 = vpop.f32.mrf.mxu0
      %1832 = vmatprep.mubr.f32.mxu0 0.0
      %1833 = vmatmul.mubr.f32.gmra.mxu0 %v1643
      %v1834 = vpop.f32.mrf.mxu0
      %v1835 = vadd.f32 0.0, %v1834
      %v1836 = vpop.f32.mrf.mxu0
      %1837 = vmatprep.mubr.f32.mxu0 0.0
      %1838 = vmatmul.mubr.f32.gmra.mxu0 %v1644
      %v1839 = vpop.f32.mrf.mxu0
      %v1840 = vadd.f32 0.0, %v1839
      %v1841 = vpop.f32.mrf.mxu0
      %1842 = vmatprep.mubr.f32.mxu0 0.0
      %1843 = vmatmul.mubr.f32.gmra.mxu0 %v1645
      %v1844 = vpop.f32.mrf.mxu0
      %v1845 = vadd.f32 0.0, %v1844
      %v1846 = vpop.f32.mrf.mxu0
      %1847 = vmatprep.mubr.f32.mxu0 0.0
      %1848 = vmatmul.mubr.f32.gmra.mxu0 %v1646
      %v1849 = vpop.f32.mrf.mxu0
      %v1850 = vadd.f32 0.0, %v1849
      %v1851 = vpop.f32.mrf.mxu0
      %1852 = vmatprep.mubr.f32.mxu0 0.0
      %1853 = vmatmul.mubr.f32.gmra.mxu0 %v1647
      %v1854 = vpop.f32.mrf.mxu0
      %v1855 = vadd.f32 0.0, %v1854
      %v1856 = vpop.f32.mrf.mxu0
      %1857 = vmatprep.mubr.f32.mxu0 0.0
      %1858 = vmatmul.mubr.f32.gmra.mxu0 %v1648
      %v1859 = vpop.f32.mrf.mxu0
      %v1860 = vadd.f32 0.0, %v1859
      %v1861 = vpop.f32.mrf.mxu0
      %1862 = vmatprep.mubr.f32.mxu0 0.0
      %1863 = vmatmul.mubr.f32.gmra.mxu0 %v1649
      %v1864 = vpop.f32.mrf.mxu0
      %v1865 = vadd.f32 0.0, %v1864
      %v1866 = vpop.f32.mrf.mxu0
      %1867 = vmatprep.mubr.f32.mxu0 0.0
      %1868 = vmatmul.mubr.f32.gmra.mxu0 %v1650
      %v1869 = vpop.f32.mrf.mxu0
      %v1870 = vadd.f32 0.0, %v1869
      %v1871 = vpop.f32.mrf.mxu0
      %1872 = vmatprep.mubr.f32.mxu0 0.0
      %1873 = vmatmul.mubr.f32.gmra.mxu0 %v1651
      %v1874 = vpop.f32.mrf.mxu0
      %v1875 = vadd.f32 0.0, %v1874
      %v1876 = vpop.f32.mrf.mxu0
      %1877 = vmatprep.mubr.f32.mxu0 0.0
      %1878 = vmatmul.mubr.f32.gmra.mxu0 %v1652
      %v1879 = vpop.f32.mrf.mxu0
      %v1880 = vadd.f32 0.0, %v1879
      %v1881 = vpop.f32.mrf.mxu0
      %1882 = vmatprep.mubr.f32.mxu0 0.0
      %1883 = vmatmul.mubr.f32.gmra.mxu0 %v1653
      %v1884 = vpop.f32.mrf.mxu0
      %v1885 = vadd.f32 0.0, %v1884
      %v1886 = vpop.f32.mrf.mxu0
      %1887 = vmatprep.mubr.f32.mxu0 0.0
      %1888 = vmatmul.mubr.f32.gmra.mxu0 %v1654
      %v1889 = vpop.f32.mrf.mxu0
      %v1890 = vadd.f32 0.0, %v1889
      %v1891 = vpop.f32.mrf.mxu0
      %1892 = vmatprep.mubr.f32.mxu0 0.0
      %1893 = vmatmul.mubr.f32.gmra.mxu0 %v1655
      %v1894 = vpop.f32.mrf.mxu0
      %v1895 = vadd.f32 0.0, %v1894
      %v1896 = vpop.f32.mrf.mxu0
      %1897 = vdwg.mxu0
      %v1898 = vadd.f32 %v1592, %v1740
      %v1899 = vadd.f32 %v1593, %v1745
      %v1900 = vadd.f32 %v1594, %v1750
      %v1901 = vadd.f32 %v1595, %v1755
      %v1902 = vadd.f32 %v1596, %v1760
      %v1903 = vadd.f32 %v1597, %v1765
      %v1904 = vadd.f32 %v1598, %v1770
      %v1905 = vadd.f32 %v1599, %v1775
      %v1906 = vadd.f32 %v1600, %v1780
      %v1907 = vadd.f32 %v1601, %v1785
      %v1908 = vadd.f32 %v1602, %v1790
      %v1909 = vadd.f32 %v1603, %v1795
      %v1910 = vadd.f32 %v1604, %v1800
      %v1911 = vadd.f32 %v1605, %v1805
      %v1912 = vadd.f32 %v1606, %v1810
      %v1913 = vadd.f32 %v1607, %v1815
      %v1914 = vadd.f32 %v1608, %v1820
      %v1915 = vadd.f32 %v1609, %v1825
      %v1916 = vadd.f32 %v1610, %v1830
      %v1917 = vadd.f32 %v1611, %v1835
      %v1918 = vadd.f32 %v1612, %v1840
      %v1919 = vadd.f32 %v1613, %v1845
      %v1920 = vadd.f32 %v1614, %v1850
      %v1921 = vadd.f32 %v1615, %v1855
      %v1922 = vadd.f32 %v1616, %v1860
      %v1923 = vadd.f32 %v1617, %v1865
      %v1924 = vadd.f32 %v1618, %v1870
      %v1925 = vadd.f32 %v1619, %v1875
      %v1926 = vadd.f32 %v1620, %v1880
      %v1927 = vadd.f32 %v1621, %v1885
      %v1928 = vadd.f32 %v1622, %v1890
      %v1929 = vadd.f32 %v1623, %v1895
      %v1930 = vld [vmem:[%s432 + $0x2] sm:$0xff]
      %v1931 = vld [vmem:[%s432 + $0xa] sm:$0xff]
      %v1932 = vld [vmem:[%s432 + $0x1a] sm:$0xff]
      %v1933 = vld [vmem:[%s432 + $0x22] sm:$0xff]
      %v1934 = vld [vmem:[%s432 + $0x32] sm:$0xff]
      %v1935 = vld [vmem:[%s432 + $0x3a] sm:$0xff]
      %v1936 = vld [vmem:[%s432 + $0x4a] sm:$0xff]
      %v1937 = vld [vmem:[%s432 + $0x52] sm:$0xff]
      %v1938 = vld [vmem:[%s432 + $0x62] sm:$0xff]
      %v1939 = vld [vmem:[%s432 + $0x6a] sm:$0xff]
      %v1940 = vld [vmem:[%s432 + $0x7a] sm:$0xff]
      %v1941 = vld [vmem:[%s432 + $0x82] sm:$0xff]
      %v1942 = vld [vmem:[%s432 + $0x92] sm:$0xff]
      %v1943 = vld [vmem:[%s432 + $0x9a] sm:$0xff]
      %v1944 = vld [vmem:[%s432 + $0xaa] sm:$0xff]
      %v1945 = vld [vmem:[%s432 + $0xb2] sm:$0xff]
      %v1946 = vld [vmem:[%s432 + $0xc2] sm:$0xff]
      %v1947 = vld [vmem:[%s432 + $0xca] sm:$0xff]
      %v1948 = vld [vmem:[%s432 + $0xda] sm:$0xff]
      %v1949 = vld [vmem:[%s432 + $0xe2] sm:$0xff]
      %v1950 = vld [vmem:[%s432 + $0xf2] sm:$0xff]
      %v1951 = vld [vmem:[%s432 + $0xfa] sm:$0xff]
      %v1952 = vld [vmem:[%s432 + $0x10a] sm:$0xff]
      %v1953 = vld [vmem:[%s432 + $0x112] sm:$0xff]
      %v1954 = vld [vmem:[%s432 + $0x122] sm:$0xff]
      %v1955 = vld [vmem:[%s432 + $0x12a] sm:$0xff]
      %v1956 = vld [vmem:[%s432 + $0x13a] sm:$0xff]
      %v1957 = vld [vmem:[%s432 + $0x142] sm:$0xff]
      %v1958 = vld [vmem:[%s432 + $0x152] sm:$0xff]
      %v1959 = vld [vmem:[%s432 + $0x15a] sm:$0xff]
      %v1960 = vld [vmem:[%s432 + $0x16a] sm:$0xff]
      %v1961 = vld [vmem:[%s432 + $0x172] sm:$0xff]
      %s1962 = scalar_lea.vmem %s3, 640
      %v1963 = vld [vmem:[%s1962] sm:$0xff]
      %v1964 = vld [vmem:[%s1962 + $0x8] sm:$0xff]
      %v1965 = vld [vmem:[%s1962 + $0x10] sm:$0xff]
      %v1966 = vld [vmem:[%s1962 + $0x18] sm:$0xff]
      %v1967 = vld [vmem:[%s1962 + $0x20] sm:$0xff]
      %v1968 = vld [vmem:[%s1962 + $0x28] sm:$0xff]
      %v1969 = vld [vmem:[%s1962 + $0x30] sm:$0xff]
      %v1970 = vld [vmem:[%s1962 + $0x38] sm:$0xff]
      %v1971 = vld [vmem:[%s1962 + $0x40] sm:$0xff]
      %v1972 = vld [vmem:[%s1962 + $0x48] sm:$0xff]
      %v1973 = vld [vmem:[%s1962 + $0x50] sm:$0xff]
      %v1974 = vld [vmem:[%s1962 + $0x58] sm:$0xff]
      %v1975 = vld [vmem:[%s1962 + $0x60] sm:$0xff]
      %v1976 = vld [vmem:[%s1962 + $0x68] sm:$0xff]
      %v1977 = vld [vmem:[%s1962 + $0x70] sm:$0xff]
      %v1978 = vld [vmem:[%s1962 + $0x78] sm:$0xff]
      %1979 = vmatprep.subr.mxu0 0.0
      %1980 = vmatpush1.msra.mxu0 %v1978
      %1981 = vmatprep.subr.mxu0 0.0
      %1982 = vmatpush1.msra.mxu0 %v1977
      %1983 = vmatprep.subr.mxu0 0.0
      %1984 = vmatpush1.msra.mxu0 %v1976
      %1985 = vmatprep.subr.mxu0 0.0
      %1986 = vmatpush1.msra.mxu0 %v1975
      %1987 = vmatprep.subr.mxu0 0.0
      %1988 = vmatpush1.msra.mxu0 %v1974
      %1989 = vmatprep.subr.mxu0 0.0
      %1990 = vmatpush1.msra.mxu0 %v1973
      %1991 = vmatprep.subr.mxu0 0.0
      %1992 = vmatpush1.msra.mxu0 %v1972
      %1993 = vmatprep.subr.mxu0 0.0
      %1994 = vmatpush1.msra.mxu0 %v1971
      %1995 = vmatprep.subr.mxu0 0.0
      %1996 = vmatpush1.msra.mxu0 %v1970
      %1997 = vmatprep.subr.mxu0 0.0
      %1998 = vmatpush1.msra.mxu0 %v1969
      %1999 = vmatprep.subr.mxu0 0.0
      %2000 = vmatpush1.msra.mxu0 %v1968
      %2001 = vmatprep.subr.mxu0 0.0
      %2002 = vmatpush1.msra.mxu0 %v1967
      %2003 = vmatprep.subr.mxu0 0.0
      %2004 = vmatpush1.msra.mxu0 %v1966
      %2005 = vmatprep.subr.mxu0 0.0
      %2006 = vmatpush1.msra.mxu0 %v1965
      %2007 = vmatprep.subr.mxu0 0.0
      %2008 = vmatpush1.msra.mxu0 %v1964
      %2009 = vmatprep.subr.mxu0 0.0
      %2010 = vmatpush1.msra.mxu0 %v1963
      %2011 = vmatprep.subr.mxu0 0.0
      %2012 = vmatpush2.msra.mxu0 0.0
      %2013 = vmatprep.subr.mxu0 0.0
      %2014 = vmatpush2.msra.mxu0 0.0
      %2015 = vmatprep.subr.mxu0 0.0
      %2016 = vmatpush2.msra.mxu0 0.0
      %2017 = vmatprep.subr.mxu0 0.0
      %2018 = vmatpush2.msra.mxu0 0.0
      %2019 = vmatprep.subr.mxu0 0.0
      %2020 = vmatpush2.msra.mxu0 0.0
      %2021 = vmatprep.subr.mxu0 0.0
      %2022 = vmatpush2.msra.mxu0 0.0
      %2023 = vmatprep.subr.mxu0 0.0
      %2024 = vmatpush2.msra.mxu0 0.0
      %2025 = vmatprep.subr.mxu0 0.0
      %2026 = vmatpush2.msra.mxu0 0.0
      %2027 = vmatprep.subr.mxu0 0.0
      %2028 = vmatpush2.msra.mxu0 0.0
      %2029 = vmatprep.subr.mxu0 0.0
      %2030 = vmatpush2.msra.mxu0 0.0
      %2031 = vmatprep.subr.mxu0 0.0
      %2032 = vmatpush2.msra.mxu0 0.0
      %2033 = vmatprep.subr.mxu0 0.0
      %2034 = vmatpush2.msra.mxu0 0.0
      %2035 = vmatprep.subr.mxu0 0.0
      %2036 = vmatpush2.msra.mxu0 0.0
      %2037 = vmatprep.subr.mxu0 0.0
      %2038 = vmatpush2.msra.mxu0 0.0
      %2039 = vmatprep.subr.mxu0 0.0
      %2040 = vmatpush2.msra.mxu0 0.0
      %2041 = vmatprep.subr.mxu0 0.0
      %2042 = vmatpush2.msra.mxu0 0.0
      %2043 = vmatprep.mubr.f32.mxu0 0.0
      %2044 = vmatmul.mubr.f32.gmra.mxu0 %v1930
      %v2045 = vpop.f32.mrf.mxu0
      %v2046 = vadd.f32 0.0, %v2045
      %v2047 = vpop.f32.mrf.mxu0
      %2048 = vmatprep.mubr.f32.mxu0 0.0
      %2049 = vmatmul.mubr.f32.gmra.mxu0 %v1931
      %v2050 = vpop.f32.mrf.mxu0
      %v2051 = vadd.f32 0.0, %v2050
      %v2052 = vpop.f32.mrf.mxu0
      %2053 = vmatprep.mubr.f32.mxu0 0.0
      %2054 = vmatmul.mubr.f32.gmra.mxu0 %v1932
      %v2055 = vpop.f32.mrf.mxu0
      %v2056 = vadd.f32 0.0, %v2055
      %v2057 = vpop.f32.mrf.mxu0
      %2058 = vmatprep.mubr.f32.mxu0 0.0
      %2059 = vmatmul.mubr.f32.gmra.mxu0 %v1933
      %v2060 = vpop.f32.mrf.mxu0
      %v2061 = vadd.f32 0.0, %v2060
      %v2062 = vpop.f32.mrf.mxu0
      %2063 = vmatprep.mubr.f32.mxu0 0.0
      %2064 = vmatmul.mubr.f32.gmra.mxu0 %v1934
      %v2065 = vpop.f32.mrf.mxu0
      %v2066 = vadd.f32 0.0, %v2065
      %v2067 = vpop.f32.mrf.mxu0
      %2068 = vmatprep.mubr.f32.mxu0 0.0
      %2069 = vmatmul.mubr.f32.gmra.mxu0 %v1935
      %v2070 = vpop.f32.mrf.mxu0
      %v2071 = vadd.f32 0.0, %v2070
      %v2072 = vpop.f32.mrf.mxu0
      %2073 = vmatprep.mubr.f32.mxu0 0.0
      %2074 = vmatmul.mubr.f32.gmra.mxu0 %v1936
      %v2075 = vpop.f32.mrf.mxu0
      %v2076 = vadd.f32 0.0, %v2075
      %v2077 = vpop.f32.mrf.mxu0
      %2078 = vmatprep.mubr.f32.mxu0 0.0
      %2079 = vmatmul.mubr.f32.gmra.mxu0 %v1937
      %v2080 = vpop.f32.mrf.mxu0
      %v2081 = vadd.f32 0.0, %v2080
      %v2082 = vpop.f32.mrf.mxu0
      %2083 = vmatprep.mubr.f32.mxu0 0.0
      %2084 = vmatmul.mubr.f32.gmra.mxu0 %v1938
      %v2085 = vpop.f32.mrf.mxu0
      %v2086 = vadd.f32 0.0, %v2085
      %v2087 = vpop.f32.mrf.mxu0
      %2088 = vmatprep.mubr.f32.mxu0 0.0
      %2089 = vmatmul.mubr.f32.gmra.mxu0 %v1939
      %v2090 = vpop.f32.mrf.mxu0
      %v2091 = vadd.f32 0.0, %v2090
      %v2092 = vpop.f32.mrf.mxu0
      %2093 = vmatprep.mubr.f32.mxu0 0.0
      %2094 = vmatmul.mubr.f32.gmra.mxu0 %v1940
      %v2095 = vpop.f32.mrf.mxu0
      %v2096 = vadd.f32 0.0, %v2095
      %v2097 = vpop.f32.mrf.mxu0
      %2098 = vmatprep.mubr.f32.mxu0 0.0
      %2099 = vmatmul.mubr.f32.gmra.mxu0 %v1941
      %v2100 = vpop.f32.mrf.mxu0
      %v2101 = vadd.f32 0.0, %v2100
      %v2102 = vpop.f32.mrf.mxu0
      %2103 = vmatprep.mubr.f32.mxu0 0.0
      %2104 = vmatmul.mubr.f32.gmra.mxu0 %v1942
      %v2105 = vpop.f32.mrf.mxu0
      %v2106 = vadd.f32 0.0, %v2105
      %v2107 = vpop.f32.mrf.mxu0
      %2108 = vmatprep.mubr.f32.mxu0 0.0
      %2109 = vmatmul.mubr.f32.gmra.mxu0 %v1943
      %v2110 = vpop.f32.mrf.mxu0
      %v2111 = vadd.f32 0.0, %v2110
      %v2112 = vpop.f32.mrf.mxu0
      %2113 = vmatprep.mubr.f32.mxu0 0.0
      %2114 = vmatmul.mubr.f32.gmra.mxu0 %v1944
      %v2115 = vpop.f32.mrf.mxu0
      %v2116 = vadd.f32 0.0, %v2115
      %v2117 = vpop.f32.mrf.mxu0
      %2118 = vmatprep.mubr.f32.mxu0 0.0
      %2119 = vmatmul.mubr.f32.gmra.mxu0 %v1945
      %v2120 = vpop.f32.mrf.mxu0
      %v2121 = vadd.f32 0.0, %v2120
      %v2122 = vpop.f32.mrf.mxu0
      %2123 = vmatprep.mubr.f32.mxu0 0.0
      %2124 = vmatmul.mubr.f32.gmra.mxu0 %v1946
      %v2125 = vpop.f32.mrf.mxu0
      %v2126 = vadd.f32 0.0, %v2125
      %v2127 = vpop.f32.mrf.mxu0
      %2128 = vmatprep.mubr.f32.mxu0 0.0
      %2129 = vmatmul.mubr.f32.gmra.mxu0 %v1947
      %v2130 = vpop.f32.mrf.mxu0
      %v2131 = vadd.f32 0.0, %v2130
      %v2132 = vpop.f32.mrf.mxu0
      %2133 = vmatprep.mubr.f32.mxu0 0.0
      %2134 = vmatmul.mubr.f32.gmra.mxu0 %v1948
      %v2135 = vpop.f32.mrf.mxu0
      %v2136 = vadd.f32 0.0, %v2135
      %v2137 = vpop.f32.mrf.mxu0
      %2138 = vmatprep.mubr.f32.mxu0 0.0
      %2139 = vmatmul.mubr.f32.gmra.mxu0 %v1949
      %v2140 = vpop.f32.mrf.mxu0
      %v2141 = vadd.f32 0.0, %v2140
      %v2142 = vpop.f32.mrf.mxu0
      %2143 = vmatprep.mubr.f32.mxu0 0.0
      %2144 = vmatmul.mubr.f32.gmra.mxu0 %v1950
      %v2145 = vpop.f32.mrf.mxu0
      %v2146 = vadd.f32 0.0, %v2145
      %v2147 = vpop.f32.mrf.mxu0
      %2148 = vmatprep.mubr.f32.mxu0 0.0
      %2149 = vmatmul.mubr.f32.gmra.mxu0 %v1951
      %v2150 = vpop.f32.mrf.mxu0
      %v2151 = vadd.f32 0.0, %v2150
      %v2152 = vpop.f32.mrf.mxu0
      %2153 = vmatprep.mubr.f32.mxu0 0.0
      %2154 = vmatmul.mubr.f32.gmra.mxu0 %v1952
      %v2155 = vpop.f32.mrf.mxu0
      %v2156 = vadd.f32 0.0, %v2155
      %v2157 = vpop.f32.mrf.mxu0
      %2158 = vmatprep.mubr.f32.mxu0 0.0
      %2159 = vmatmul.mubr.f32.gmra.mxu0 %v1953
      %v2160 = vpop.f32.mrf.mxu0
      %v2161 = vadd.f32 0.0, %v2160
      %v2162 = vpop.f32.mrf.mxu0
      %2163 = vmatprep.mubr.f32.mxu0 0.0
      %2164 = vmatmul.mubr.f32.gmra.mxu0 %v1954
      %v2165 = vpop.f32.mrf.mxu0
      %v2166 = vadd.f32 0.0, %v2165
      %v2167 = vpop.f32.mrf.mxu0
      %2168 = vmatprep.mubr.f32.mxu0 0.0
      %2169 = vmatmul.mubr.f32.gmra.mxu0 %v1955
      %v2170 = vpop.f32.mrf.mxu0
      %v2171 = vadd.f32 0.0, %v2170
      %v2172 = vpop.f32.mrf.mxu0
      %2173 = vmatprep.mubr.f32.mxu0 0.0
      %2174 = vmatmul.mubr.f32.gmra.mxu0 %v1956
      %v2175 = vpop.f32.mrf.mxu0
      %v2176 = vadd.f32 0.0, %v2175
      %v2177 = vpop.f32.mrf.mxu0
      %2178 = vmatprep.mubr.f32.mxu0 0.0
      %2179 = vmatmul.mubr.f32.gmra.mxu0 %v1957
      %v2180 = vpop.f32.mrf.mxu0
      %v2181 = vadd.f32 0.0, %v2180
      %v2182 = vpop.f32.mrf.mxu0
      %2183 = vmatprep.mubr.f32.mxu0 0.0
      %2184 = vmatmul.mubr.f32.gmra.mxu0 %v1958
      %v2185 = vpop.f32.mrf.mxu0
      %v2186 = vadd.f32 0.0, %v2185
      %v2187 = vpop.f32.mrf.mxu0
      %2188 = vmatprep.mubr.f32.mxu0 0.0
      %2189 = vmatmul.mubr.f32.gmra.mxu0 %v1959
      %v2190 = vpop.f32.mrf.mxu0
      %v2191 = vadd.f32 0.0, %v2190
      %v2192 = vpop.f32.mrf.mxu0
      %2193 = vmatprep.mubr.f32.mxu0 0.0
      %2194 = vmatmul.mubr.f32.gmra.mxu0 %v1960
      %v2195 = vpop.f32.mrf.mxu0
      %v2196 = vadd.f32 0.0, %v2195
      %v2197 = vpop.f32.mrf.mxu0
      %2198 = vmatprep.mubr.f32.mxu0 0.0
      %2199 = vmatmul.mubr.f32.gmra.mxu0 %v1961
      %v2200 = vpop.f32.mrf.mxu0
      %v2201 = vadd.f32 0.0, %v2200
      %v2202 = vpop.f32.mrf.mxu0
      %2203 = vdwg.mxu0
      %v2204 = vadd.f32 %v1898, %v2046
      %v2205 = vadd.f32 %v1899, %v2051
      %v2206 = vadd.f32 %v1900, %v2056
      %v2207 = vadd.f32 %v1901, %v2061
      %v2208 = vadd.f32 %v1902, %v2066
      %v2209 = vadd.f32 %v1903, %v2071
      %v2210 = vadd.f32 %v1904, %v2076
      %v2211 = vadd.f32 %v1905, %v2081
      %v2212 = vadd.f32 %v1906, %v2086
      %v2213 = vadd.f32 %v1907, %v2091
      %v2214 = vadd.f32 %v1908, %v2096
      %v2215 = vadd.f32 %v1909, %v2101
      %v2216 = vadd.f32 %v1910, %v2106
      %v2217 = vadd.f32 %v1911, %v2111
      %v2218 = vadd.f32 %v1912, %v2116
      %v2219 = vadd.f32 %v1913, %v2121
      %v2220 = vadd.f32 %v1914, %v2126
      %v2221 = vadd.f32 %v1915, %v2131
      %v2222 = vadd.f32 %v1916, %v2136
      %v2223 = vadd.f32 %v1917, %v2141
      %v2224 = vadd.f32 %v1918, %v2146
      %v2225 = vadd.f32 %v1919, %v2151
      %v2226 = vadd.f32 %v1920, %v2156
      %v2227 = vadd.f32 %v1921, %v2161
      %v2228 = vadd.f32 %v1922, %v2166
      %v2229 = vadd.f32 %v1923, %v2171
      %v2230 = vadd.f32 %v1924, %v2176
      %v2231 = vadd.f32 %v1925, %v2181
      %v2232 = vadd.f32 %v1926, %v2186
      %v2233 = vadd.f32 %v1927, %v2191
      %v2234 = vadd.f32 %v1928, %v2196
      %v2235 = vadd.f32 %v1929, %v2201
      %s2236 = scalar_lea.vmem [#allocation2], 48
      %v2237 = vld [vmem:[%s2236] sm:$0xff]
      %v2238 = vld [vmem:[%s2236 + $0x8] sm:$0xff]
      %v2239 = vld [vmem:[%s2236 + $0x18] sm:$0xff]
      %v2240 = vld [vmem:[%s2236 + $0x20] sm:$0xff]
      %v2241 = vld [vmem:[%s2236 + $0x30] sm:$0xff]
      %v2242 = vld [vmem:[%s2236 + $0x38] sm:$0xff]
      %v2243 = vld [vmem:[%s2236 + $0x48] sm:$0xff]
      %v2244 = vld [vmem:[%s2236 + $0x50] sm:$0xff]
      %v2245 = vld [vmem:[%s2236 + $0x60] sm:$0xff]
      %v2246 = vld [vmem:[%s2236 + $0x68] sm:$0xff]
      %v2247 = vld [vmem:[%s2236 + $0x78] sm:$0xff]
      %v2248 = vld [vmem:[%s2236 + $0x80] sm:$0xff]
      %v2249 = vld [vmem:[%s2236 + $0x90] sm:$0xff]
      %v2250 = vld [vmem:[%s2236 + $0x98] sm:$0xff]
      %v2251 = vld [vmem:[%s2236 + $0xa8] sm:$0xff]
      %v2252 = vld [vmem:[%s2236 + $0xb0] sm:$0xff]
      %v2253 = vld [vmem:[%s2236 + $0xc0] sm:$0xff]
      %v2254 = vld [vmem:[%s2236 + $0xc8] sm:$0xff]
      %v2255 = vld [vmem:[%s2236 + $0xd8] sm:$0xff]
      %v2256 = vld [vmem:[%s2236 + $0xe0] sm:$0xff]
      %v2257 = vld [vmem:[%s2236 + $0xf0] sm:$0xff]
      %v2258 = vld [vmem:[%s2236 + $0xf8] sm:$0xff]
      %v2259 = vld [vmem:[%s2236 + $0x108] sm:$0xff]
      %v2260 = vld [vmem:[%s2236 + $0x110] sm:$0xff]
      %v2261 = vld [vmem:[%s2236 + $0x120] sm:$0xff]
      %v2262 = vld [vmem:[%s2236 + $0x128] sm:$0xff]
      %v2263 = vld [vmem:[%s2236 + $0x138] sm:$0xff]
      %v2264 = vld [vmem:[%s2236 + $0x140] sm:$0xff]
      %v2265 = vld [vmem:[%s2236 + $0x150] sm:$0xff]
      %v2266 = vld [vmem:[%s2236 + $0x158] sm:$0xff]
      %v2267 = vld [vmem:[%s2236 + $0x168] sm:$0xff]
      %v2268 = vld [vmem:[%s2236 + $0x170] sm:$0xff]
      %s2269 = scalar_lea.vmem %s3, 768
      %v2270 = vld [vmem:[%s2269] sm:$0xff]
      %v2271 = vld [vmem:[%s2269 + $0x8] sm:$0xff]
      %v2272 = vld [vmem:[%s2269 + $0x10] sm:$0xff]
      %v2273 = vld [vmem:[%s2269 + $0x18] sm:$0xff]
      %v2274 = vld [vmem:[%s2269 + $0x20] sm:$0xff]
      %v2275 = vld [vmem:[%s2269 + $0x28] sm:$0xff]
      %v2276 = vld [vmem:[%s2269 + $0x30] sm:$0xff]
      %v2277 = vld [vmem:[%s2269 + $0x38] sm:$0xff]
      %v2278 = vld [vmem:[%s2269 + $0x40] sm:$0xff]
      %v2279 = vld [vmem:[%s2269 + $0x48] sm:$0xff]
      %v2280 = vld [vmem:[%s2269 + $0x50] sm:$0xff]
      %v2281 = vld [vmem:[%s2269 + $0x58] sm:$0xff]
      %v2282 = vld [vmem:[%s2269 + $0x60] sm:$0xff]
      %v2283 = vld [vmem:[%s2269 + $0x68] sm:$0xff]
      %v2284 = vld [vmem:[%s2269 + $0x70] sm:$0xff]
      %v2285 = vld [vmem:[%s2269 + $0x78] sm:$0xff]
      %2286 = vmatprep.subr.mxu0 0.0
      %2287 = vmatpush1.msra.mxu0 %v2285
      %2288 = vmatprep.subr.mxu0 0.0
      %2289 = vmatpush1.msra.mxu0 %v2284
      %2290 = vmatprep.subr.mxu0 0.0
      %2291 = vmatpush1.msra.mxu0 %v2283
      %2292 = vmatprep.subr.mxu0 0.0
      %2293 = vmatpush1.msra.mxu0 %v2282
      %2294 = vmatprep.subr.mxu0 0.0
      %2295 = vmatpush1.msra.mxu0 %v2281
      %2296 = vmatprep.subr.mxu0 0.0
      %2297 = vmatpush1.msra.mxu0 %v2280
      %2298 = vmatprep.subr.mxu0 0.0
      %2299 = vmatpush1.msra.mxu0 %v2279
      %2300 = vmatprep.subr.mxu0 0.0
      %2301 = vmatpush1.msra.mxu0 %v2278
      %2302 = vmatprep.subr.mxu0 0.0
      %2303 = vmatpush1.msra.mxu0 %v2277
      %2304 = vmatprep.subr.mxu0 0.0
      %2305 = vmatpush1.msra.mxu0 %v2276
      %2306 = vmatprep.subr.mxu0 0.0
      %2307 = vmatpush1.msra.mxu0 %v2275
      %2308 = vmatprep.subr.mxu0 0.0
      %2309 = vmatpush1.msra.mxu0 %v2274
      %2310 = vmatprep.subr.mxu0 0.0
      %2311 = vmatpush1.msra.mxu0 %v2273
      %2312 = vmatprep.subr.mxu0 0.0
      %2313 = vmatpush1.msra.mxu0 %v2272
      %2314 = vmatprep.subr.mxu0 0.0
      %2315 = vmatpush1.msra.mxu0 %v2271
      %2316 = vmatprep.subr.mxu0 0.0
      %2317 = vmatpush1.msra.mxu0 %v2270
      %2318 = vmatprep.subr.mxu0 0.0
      %2319 = vmatpush2.msra.mxu0 0.0
      %2320 = vmatprep.subr.mxu0 0.0
      %2321 = vmatpush2.msra.mxu0 0.0
      %2322 = vmatprep.subr.mxu0 0.0
      %2323 = vmatpush2.msra.mxu0 0.0
      %2324 = vmatprep.subr.mxu0 0.0
      %2325 = vmatpush2.msra.mxu0 0.0
      %2326 = vmatprep.subr.mxu0 0.0
      %2327 = vmatpush2.msra.mxu0 0.0
      %2328 = vmatprep.subr.mxu0 0.0
      %2329 = vmatpush2.msra.mxu0 0.0
      %2330 = vmatprep.subr.mxu0 0.0
      %2331 = vmatpush2.msra.mxu0 0.0
      %2332 = vmatprep.subr.mxu0 0.0
      %2333 = vmatpush2.msra.mxu0 0.0
      %2334 = vmatprep.subr.mxu0 0.0
      %2335 = vmatpush2.msra.mxu0 0.0
      %2336 = vmatprep.subr.mxu0 0.0
      %2337 = vmatpush2.msra.mxu0 0.0
      %2338 = vmatprep.subr.mxu0 0.0
      %2339 = vmatpush2.msra.mxu0 0.0
      %2340 = vmatprep.subr.mxu0 0.0
      %2341 = vmatpush2.msra.mxu0 0.0
      %2342 = vmatprep.subr.mxu0 0.0
      %2343 = vmatpush2.msra.mxu0 0.0
      %2344 = vmatprep.subr.mxu0 0.0
      %2345 = vmatpush2.msra.mxu0 0.0
      %2346 = vmatprep.subr.mxu0 0.0
      %2347 = vmatpush2.msra.mxu0 0.0
      %2348 = vmatprep.subr.mxu0 0.0
      %2349 = vmatpush2.msra.mxu0 0.0
      %2350 = vmatprep.mubr.f32.mxu0 0.0
      %2351 = vmatmul.mubr.f32.gmra.mxu0 %v2237
      %v2352 = vpop.f32.mrf.mxu0
      %v2353 = vadd.f32 0.0, %v2352
      %v2354 = vpop.f32.mrf.mxu0
      %2355 = vmatprep.mubr.f32.mxu0 0.0
      %2356 = vmatmul.mubr.f32.gmra.mxu0 %v2238
      %v2357 = vpop.f32.mrf.mxu0
      %v2358 = vadd.f32 0.0, %v2357
      %v2359 = vpop.f32.mrf.mxu0
      %2360 = vmatprep.mubr.f32.mxu0 0.0
      %2361 = vmatmul.mubr.f32.gmra.mxu0 %v2239
      %v2362 = vpop.f32.mrf.mxu0
      %v2363 = vadd.f32 0.0, %v2362
      %v2364 = vpop.f32.mrf.mxu0
      %2365 = vmatprep.mubr.f32.mxu0 0.0
      %2366 = vmatmul.mubr.f32.gmra.mxu0 %v2240
      %v2367 = vpop.f32.mrf.mxu0
      %v2368 = vadd.f32 0.0, %v2367
      %v2369 = vpop.f32.mrf.mxu0
      %2370 = vmatprep.mubr.f32.mxu0 0.0
      %2371 = vmatmul.mubr.f32.gmra.mxu0 %v2241
      %v2372 = vpop.f32.mrf.mxu0
      %v2373 = vadd.f32 0.0, %v2372
      %v2374 = vpop.f32.mrf.mxu0
      %2375 = vmatprep.mubr.f32.mxu0 0.0
      %2376 = vmatmul.mubr.f32.gmra.mxu0 %v2242
      %v2377 = vpop.f32.mrf.mxu0
      %v2378 = vadd.f32 0.0, %v2377
      %v2379 = vpop.f32.mrf.mxu0
      %2380 = vmatprep.mubr.f32.mxu0 0.0
      %2381 = vmatmul.mubr.f32.gmra.mxu0 %v2243
      %v2382 = vpop.f32.mrf.mxu0
      %v2383 = vadd.f32 0.0, %v2382
      %v2384 = vpop.f32.mrf.mxu0
      %2385 = vmatprep.mubr.f32.mxu0 0.0
      %2386 = vmatmul.mubr.f32.gmra.mxu0 %v2244
      %v2387 = vpop.f32.mrf.mxu0
      %v2388 = vadd.f32 0.0, %v2387
      %v2389 = vpop.f32.mrf.mxu0
      %2390 = vmatprep.mubr.f32.mxu0 0.0
      %2391 = vmatmul.mubr.f32.gmra.mxu0 %v2245
      %v2392 = vpop.f32.mrf.mxu0
      %v2393 = vadd.f32 0.0, %v2392
      %v2394 = vpop.f32.mrf.mxu0
      %2395 = vmatprep.mubr.f32.mxu0 0.0
      %2396 = vmatmul.mubr.f32.gmra.mxu0 %v2246
      %v2397 = vpop.f32.mrf.mxu0
      %v2398 = vadd.f32 0.0, %v2397
      %v2399 = vpop.f32.mrf.mxu0
      %2400 = vmatprep.mubr.f32.mxu0 0.0
      %2401 = vmatmul.mubr.f32.gmra.mxu0 %v2247
      %v2402 = vpop.f32.mrf.mxu0
      %v2403 = vadd.f32 0.0, %v2402
      %v2404 = vpop.f32.mrf.mxu0
      %2405 = vmatprep.mubr.f32.mxu0 0.0
      %2406 = vmatmul.mubr.f32.gmra.mxu0 %v2248
      %v2407 = vpop.f32.mrf.mxu0
      %v2408 = vadd.f32 0.0, %v2407
      %v2409 = vpop.f32.mrf.mxu0
      %2410 = vmatprep.mubr.f32.mxu0 0.0
      %2411 = vmatmul.mubr.f32.gmra.mxu0 %v2249
      %v2412 = vpop.f32.mrf.mxu0
      %v2413 = vadd.f32 0.0, %v2412
      %v2414 = vpop.f32.mrf.mxu0
      %2415 = vmatprep.mubr.f32.mxu0 0.0
      %2416 = vmatmul.mubr.f32.gmra.mxu0 %v2250
      %v2417 = vpop.f32.mrf.mxu0
      %v2418 = vadd.f32 0.0, %v2417
      %v2419 = vpop.f32.mrf.mxu0
      %2420 = vmatprep.mubr.f32.mxu0 0.0
      %2421 = vmatmul.mubr.f32.gmra.mxu0 %v2251
      %v2422 = vpop.f32.mrf.mxu0
      %v2423 = vadd.f32 0.0, %v2422
      %v2424 = vpop.f32.mrf.mxu0
      %2425 = vmatprep.mubr.f32.mxu0 0.0
      %2426 = vmatmul.mubr.f32.gmra.mxu0 %v2252
      %v2427 = vpop.f32.mrf.mxu0
      %v2428 = vadd.f32 0.0, %v2427
      %v2429 = vpop.f32.mrf.mxu0
      %2430 = vmatprep.mubr.f32.mxu0 0.0
      %2431 = vmatmul.mubr.f32.gmra.mxu0 %v2253
      %v2432 = vpop.f32.mrf.mxu0
      %v2433 = vadd.f32 0.0, %v2432
      %v2434 = vpop.f32.mrf.mxu0
      %2435 = vmatprep.mubr.f32.mxu0 0.0
      %2436 = vmatmul.mubr.f32.gmra.mxu0 %v2254
      %v2437 = vpop.f32.mrf.mxu0
      %v2438 = vadd.f32 0.0, %v2437
      %v2439 = vpop.f32.mrf.mxu0
      %2440 = vmatprep.mubr.f32.mxu0 0.0
      %2441 = vmatmul.mubr.f32.gmra.mxu0 %v2255
      %v2442 = vpop.f32.mrf.mxu0
      %v2443 = vadd.f32 0.0, %v2442
      %v2444 = vpop.f32.mrf.mxu0
      %2445 = vmatprep.mubr.f32.mxu0 0.0
      %2446 = vmatmul.mubr.f32.gmra.mxu0 %v2256
      %v2447 = vpop.f32.mrf.mxu0
      %v2448 = vadd.f32 0.0, %v2447
      %v2449 = vpop.f32.mrf.mxu0
      %2450 = vmatprep.mubr.f32.mxu0 0.0
      %2451 = vmatmul.mubr.f32.gmra.mxu0 %v2257
      %v2452 = vpop.f32.mrf.mxu0
      %v2453 = vadd.f32 0.0, %v2452
      %v2454 = vpop.f32.mrf.mxu0
      %2455 = vmatprep.mubr.f32.mxu0 0.0
      %2456 = vmatmul.mubr.f32.gmra.mxu0 %v2258
      %v2457 = vpop.f32.mrf.mxu0
      %v2458 = vadd.f32 0.0, %v2457
      %v2459 = vpop.f32.mrf.mxu0
      %2460 = vmatprep.mubr.f32.mxu0 0.0
      %2461 = vmatmul.mubr.f32.gmra.mxu0 %v2259
      %v2462 = vpop.f32.mrf.mxu0
      %v2463 = vadd.f32 0.0, %v2462
      %v2464 = vpop.f32.mrf.mxu0
      %2465 = vmatprep.mubr.f32.mxu0 0.0
      %2466 = vmatmul.mubr.f32.gmra.mxu0 %v2260
      %v2467 = vpop.f32.mrf.mxu0
      %v2468 = vadd.f32 0.0, %v2467
      %v2469 = vpop.f32.mrf.mxu0
      %2470 = vmatprep.mubr.f32.mxu0 0.0
      %2471 = vmatmul.mubr.f32.gmra.mxu0 %v2261
      %v2472 = vpop.f32.mrf.mxu0
      %v2473 = vadd.f32 0.0, %v2472
      %v2474 = vpop.f32.mrf.mxu0
      %2475 = vmatprep.mubr.f32.mxu0 0.0
      %2476 = vmatmul.mubr.f32.gmra.mxu0 %v2262
      %v2477 = vpop.f32.mrf.mxu0
      %v2478 = vadd.f32 0.0, %v2477
      %v2479 = vpop.f32.mrf.mxu0
      %2480 = vmatprep.mubr.f32.mxu0 0.0
      %2481 = vmatmul.mubr.f32.gmra.mxu0 %v2263
      %v2482 = vpop.f32.mrf.mxu0
      %v2483 = vadd.f32 0.0, %v2482
      %v2484 = vpop.f32.mrf.mxu0
      %2485 = vmatprep.mubr.f32.mxu0 0.0
      %2486 = vmatmul.mubr.f32.gmra.mxu0 %v2264
      %v2487 = vpop.f32.mrf.mxu0
      %v2488 = vadd.f32 0.0, %v2487
      %v2489 = vpop.f32.mrf.mxu0
      %2490 = vmatprep.mubr.f32.mxu0 0.0
      %2491 = vmatmul.mubr.f32.gmra.mxu0 %v2265
      %v2492 = vpop.f32.mrf.mxu0
      %v2493 = vadd.f32 0.0, %v2492
      %v2494 = vpop.f32.mrf.mxu0
      %2495 = vmatprep.mubr.f32.mxu0 0.0
      %2496 = vmatmul.mubr.f32.gmra.mxu0 %v2266
      %v2497 = vpop.f32.mrf.mxu0
      %v2498 = vadd.f32 0.0, %v2497
      %v2499 = vpop.f32.mrf.mxu0
      %2500 = vmatprep.mubr.f32.mxu0 0.0
      %2501 = vmatmul.mubr.f32.gmra.mxu0 %v2267
      %v2502 = vpop.f32.mrf.mxu0
      %v2503 = vadd.f32 0.0, %v2502
      %v2504 = vpop.f32.mrf.mxu0
      %2505 = vmatprep.mubr.f32.mxu0 0.0
      %2506 = vmatmul.mubr.f32.gmra.mxu0 %v2268
      %v2507 = vpop.f32.mrf.mxu0
      %v2508 = vadd.f32 0.0, %v2507
      %v2509 = vpop.f32.mrf.mxu0
      %2510 = vdwg.mxu0
      %v2511 = vadd.f32 %v2204, %v2353
      %v2512 = vadd.f32 %v2205, %v2358
      %v2513 = vadd.f32 %v2206, %v2363
      %v2514 = vadd.f32 %v2207, %v2368
      %v2515 = vadd.f32 %v2208, %v2373
      %v2516 = vadd.f32 %v2209, %v2378
      %v2517 = vadd.f32 %v2210, %v2383
      %v2518 = vadd.f32 %v2211, %v2388
      %v2519 = vadd.f32 %v2212, %v2393
      %v2520 = vadd.f32 %v2213, %v2398
      %v2521 = vadd.f32 %v2214, %v2403
      %v2522 = vadd.f32 %v2215, %v2408
      %v2523 = vadd.f32 %v2216, %v2413
      %v2524 = vadd.f32 %v2217, %v2418
      %v2525 = vadd.f32 %v2218, %v2423
      %v2526 = vadd.f32 %v2219, %v2428
      %v2527 = vadd.f32 %v2220, %v2433
      %v2528 = vadd.f32 %v2221, %v2438
      %v2529 = vadd.f32 %v2222, %v2443
      %v2530 = vadd.f32 %v2223, %v2448
      %v2531 = vadd.f32 %v2224, %v2453
      %v2532 = vadd.f32 %v2225, %v2458
      %v2533 = vadd.f32 %v2226, %v2463
      %v2534 = vadd.f32 %v2227, %v2468
      %v2535 = vadd.f32 %v2228, %v2473
      %v2536 = vadd.f32 %v2229, %v2478
      %v2537 = vadd.f32 %v2230, %v2483
      %v2538 = vadd.f32 %v2231, %v2488
      %v2539 = vadd.f32 %v2232, %v2493
      %v2540 = vadd.f32 %v2233, %v2498
      %v2541 = vadd.f32 %v2234, %v2503
      %v2542 = vadd.f32 %v2235, %v2508
      %v2543 = vld [vmem:[%s2236 + $0x1] sm:$0xff]
      %v2544 = vld [vmem:[%s2236 + $0x9] sm:$0xff]
      %v2545 = vld [vmem:[%s2236 + $0x19] sm:$0xff]
      %v2546 = vld [vmem:[%s2236 + $0x21] sm:$0xff]
      %v2547 = vld [vmem:[%s2236 + $0x31] sm:$0xff]
      %v2548 = vld [vmem:[%s2236 + $0x39] sm:$0xff]
      %v2549 = vld [vmem:[%s2236 + $0x49] sm:$0xff]
      %v2550 = vld [vmem:[%s2236 + $0x51] sm:$0xff]
      %v2551 = vld [vmem:[%s2236 + $0x61] sm:$0xff]
      %v2552 = vld [vmem:[%s2236 + $0x69] sm:$0xff]
      %v2553 = vld [vmem:[%s2236 + $0x79] sm:$0xff]
      %v2554 = vld [vmem:[%s2236 + $0x81] sm:$0xff]
      %v2555 = vld [vmem:[%s2236 + $0x91] sm:$0xff]
      %v2556 = vld [vmem:[%s2236 + $0x99] sm:$0xff]
      %v2557 = vld [vmem:[%s2236 + $0xa9] sm:$0xff]
      %v2558 = vld [vmem:[%s2236 + $0xb1] sm:$0xff]
      %v2559 = vld [vmem:[%s2236 + $0xc1] sm:$0xff]
      %v2560 = vld [vmem:[%s2236 + $0xc9] sm:$0xff]
      %v2561 = vld [vmem:[%s2236 + $0xd9] sm:$0xff]
      %v2562 = vld [vmem:[%s2236 + $0xe1] sm:$0xff]
      %v2563 = vld [vmem:[%s2236 + $0xf1] sm:$0xff]
      %v2564 = vld [vmem:[%s2236 + $0xf9] sm:$0xff]
      %v2565 = vld [vmem:[%s2236 + $0x109] sm:$0xff]
      %v2566 = vld [vmem:[%s2236 + $0x111] sm:$0xff]
      %v2567 = vld [vmem:[%s2236 + $0x121] sm:$0xff]
      %v2568 = vld [vmem:[%s2236 + $0x129] sm:$0xff]
      %v2569 = vld [vmem:[%s2236 + $0x139] sm:$0xff]
      %v2570 = vld [vmem:[%s2236 + $0x141] sm:$0xff]
      %v2571 = vld [vmem:[%s2236 + $0x151] sm:$0xff]
      %v2572 = vld [vmem:[%s2236 + $0x159] sm:$0xff]
      %v2573 = vld [vmem:[%s2236 + $0x169] sm:$0xff]
      %v2574 = vld [vmem:[%s2236 + $0x171] sm:$0xff]
      %s2575 = scalar_lea.vmem %s3, 896
      %v2576 = vld [vmem:[%s2575] sm:$0xff]
      %v2577 = vld [vmem:[%s2575 + $0x8] sm:$0xff]
      %v2578 = vld [vmem:[%s2575 + $0x10] sm:$0xff]
      %v2579 = vld [vmem:[%s2575 + $0x18] sm:$0xff]
      %v2580 = vld [vmem:[%s2575 + $0x20] sm:$0xff]
      %v2581 = vld [vmem:[%s2575 + $0x28] sm:$0xff]
      %v2582 = vld [vmem:[%s2575 + $0x30] sm:$0xff]
      %v2583 = vld [vmem:[%s2575 + $0x38] sm:$0xff]
      %v2584 = vld [vmem:[%s2575 + $0x40] sm:$0xff]
      %v2585 = vld [vmem:[%s2575 + $0x48] sm:$0xff]
      %v2586 = vld [vmem:[%s2575 + $0x50] sm:$0xff]
      %v2587 = vld [vmem:[%s2575 + $0x58] sm:$0xff]
      %v2588 = vld [vmem:[%s2575 + $0x60] sm:$0xff]
      %v2589 = vld [vmem:[%s2575 + $0x68] sm:$0xff]
      %v2590 = vld [vmem:[%s2575 + $0x70] sm:$0xff]
      %v2591 = vld [vmem:[%s2575 + $0x78] sm:$0xff]
      %2592 = vmatprep.subr.mxu0 0.0
      %2593 = vmatpush1.msra.mxu0 %v2591
      %2594 = vmatprep.subr.mxu0 0.0
      %2595 = vmatpush1.msra.mxu0 %v2590
      %2596 = vmatprep.subr.mxu0 0.0
      %2597 = vmatpush1.msra.mxu0 %v2589
      %2598 = vmatprep.subr.mxu0 0.0
      %2599 = vmatpush1.msra.mxu0 %v2588
      %2600 = vmatprep.subr.mxu0 0.0
      %2601 = vmatpush1.msra.mxu0 %v2587
      %2602 = vmatprep.subr.mxu0 0.0
      %2603 = vmatpush1.msra.mxu0 %v2586
      %2604 = vmatprep.subr.mxu0 0.0
      %2605 = vmatpush1.msra.mxu0 %v2585
      %2606 = vmatprep.subr.mxu0 0.0
      %2607 = vmatpush1.msra.mxu0 %v2584
      %2608 = vmatprep.subr.mxu0 0.0
      %2609 = vmatpush1.msra.mxu0 %v2583
      %2610 = vmatprep.subr.mxu0 0.0
      %2611 = vmatpush1.msra.mxu0 %v2582
      %2612 = vmatprep.subr.mxu0 0.0
      %2613 = vmatpush1.msra.mxu0 %v2581
      %2614 = vmatprep.subr.mxu0 0.0
      %2615 = vmatpush1.msra.mxu0 %v2580
      %2616 = vmatprep.subr.mxu0 0.0
      %2617 = vmatpush1.msra.mxu0 %v2579
      %2618 = vmatprep.subr.mxu0 0.0
      %2619 = vmatpush1.msra.mxu0 %v2578
      %2620 = vmatprep.subr.mxu0 0.0
      %2621 = vmatpush1.msra.mxu0 %v2577
      %2622 = vmatprep.subr.mxu0 0.0
      %2623 = vmatpush1.msra.mxu0 %v2576
      %2624 = vmatprep.subr.mxu0 0.0
      %2625 = vmatpush2.msra.mxu0 0.0
      %2626 = vmatprep.subr.mxu0 0.0
      %2627 = vmatpush2.msra.mxu0 0.0
      %2628 = vmatprep.subr.mxu0 0.0
      %2629 = vmatpush2.msra.mxu0 0.0
      %2630 = vmatprep.subr.mxu0 0.0
      %2631 = vmatpush2.msra.mxu0 0.0
      %2632 = vmatprep.subr.mxu0 0.0
      %2633 = vmatpush2.msra.mxu0 0.0
      %2634 = vmatprep.subr.mxu0 0.0
      %2635 = vmatpush2.msra.mxu0 0.0
      %2636 = vmatprep.subr.mxu0 0.0
      %2637 = vmatpush2.msra.mxu0 0.0
      %2638 = vmatprep.subr.mxu0 0.0
      %2639 = vmatpush2.msra.mxu0 0.0
      %2640 = vmatprep.subr.mxu0 0.0
      %2641 = vmatpush2.msra.mxu0 0.0
      %2642 = vmatprep.subr.mxu0 0.0
      %2643 = vmatpush2.msra.mxu0 0.0
      %2644 = vmatprep.subr.mxu0 0.0
      %2645 = vmatpush2.msra.mxu0 0.0
      %2646 = vmatprep.subr.mxu0 0.0
      %2647 = vmatpush2.msra.mxu0 0.0
      %2648 = vmatprep.subr.mxu0 0.0
      %2649 = vmatpush2.msra.mxu0 0.0
      %2650 = vmatprep.subr.mxu0 0.0
      %2651 = vmatpush2.msra.mxu0 0.0
      %2652 = vmatprep.subr.mxu0 0.0
      %2653 = vmatpush2.msra.mxu0 0.0
      %2654 = vmatprep.subr.mxu0 0.0
      %2655 = vmatpush2.msra.mxu0 0.0
      %2656 = vmatprep.mubr.f32.mxu0 0.0
      %2657 = vmatmul.mubr.f32.gmra.mxu0 %v2543
      %v2658 = vpop.f32.mrf.mxu0
      %v2659 = vadd.f32 0.0, %v2658
      %v2660 = vpop.f32.mrf.mxu0
      %2661 = vmatprep.mubr.f32.mxu0 0.0
      %2662 = vmatmul.mubr.f32.gmra.mxu0 %v2544
      %v2663 = vpop.f32.mrf.mxu0
      %v2664 = vadd.f32 0.0, %v2663
      %v2665 = vpop.f32.mrf.mxu0
      %2666 = vmatprep.mubr.f32.mxu0 0.0
      %2667 = vmatmul.mubr.f32.gmra.mxu0 %v2545
      %v2668 = vpop.f32.mrf.mxu0
      %v2669 = vadd.f32 0.0, %v2668
      %v2670 = vpop.f32.mrf.mxu0
      %2671 = vmatprep.mubr.f32.mxu0 0.0
      %2672 = vmatmul.mubr.f32.gmra.mxu0 %v2546
      %v2673 = vpop.f32.mrf.mxu0
      %v2674 = vadd.f32 0.0, %v2673
      %v2675 = vpop.f32.mrf.mxu0
      %2676 = vmatprep.mubr.f32.mxu0 0.0
      %2677 = vmatmul.mubr.f32.gmra.mxu0 %v2547
      %v2678 = vpop.f32.mrf.mxu0
      %v2679 = vadd.f32 0.0, %v2678
      %v2680 = vpop.f32.mrf.mxu0
      %2681 = vmatprep.mubr.f32.mxu0 0.0
      %2682 = vmatmul.mubr.f32.gmra.mxu0 %v2548
      %v2683 = vpop.f32.mrf.mxu0
      %v2684 = vadd.f32 0.0, %v2683
      %v2685 = vpop.f32.mrf.mxu0
      %2686 = vmatprep.mubr.f32.mxu0 0.0
      %2687 = vmatmul.mubr.f32.gmra.mxu0 %v2549
      %v2688 = vpop.f32.mrf.mxu0
      %v2689 = vadd.f32 0.0, %v2688
      %v2690 = vpop.f32.mrf.mxu0
      %2691 = vmatprep.mubr.f32.mxu0 0.0
      %2692 = vmatmul.mubr.f32.gmra.mxu0 %v2550
      %v2693 = vpop.f32.mrf.mxu0
      %v2694 = vadd.f32 0.0, %v2693
      %v2695 = vpop.f32.mrf.mxu0
      %2696 = vmatprep.mubr.f32.mxu0 0.0
      %2697 = vmatmul.mubr.f32.gmra.mxu0 %v2551
      %v2698 = vpop.f32.mrf.mxu0
      %v2699 = vadd.f32 0.0, %v2698
      %v2700 = vpop.f32.mrf.mxu0
      %2701 = vmatprep.mubr.f32.mxu0 0.0
      %2702 = vmatmul.mubr.f32.gmra.mxu0 %v2552
      %v2703 = vpop.f32.mrf.mxu0
      %v2704 = vadd.f32 0.0, %v2703
      %v2705 = vpop.f32.mrf.mxu0
      %2706 = vmatprep.mubr.f32.mxu0 0.0
      %2707 = vmatmul.mubr.f32.gmra.mxu0 %v2553
      %v2708 = vpop.f32.mrf.mxu0
      %v2709 = vadd.f32 0.0, %v2708
      %v2710 = vpop.f32.mrf.mxu0
      %2711 = vmatprep.mubr.f32.mxu0 0.0
      %2712 = vmatmul.mubr.f32.gmra.mxu0 %v2554
      %v2713 = vpop.f32.mrf.mxu0
      %v2714 = vadd.f32 0.0, %v2713
      %v2715 = vpop.f32.mrf.mxu0
      %2716 = vmatprep.mubr.f32.mxu0 0.0
      %2717 = vmatmul.mubr.f32.gmra.mxu0 %v2555
      %v2718 = vpop.f32.mrf.mxu0
      %v2719 = vadd.f32 0.0, %v2718
      %v2720 = vpop.f32.mrf.mxu0
      %2721 = vmatprep.mubr.f32.mxu0 0.0
      %2722 = vmatmul.mubr.f32.gmra.mxu0 %v2556
      %v2723 = vpop.f32.mrf.mxu0
      %v2724 = vadd.f32 0.0, %v2723
      %v2725 = vpop.f32.mrf.mxu0
      %2726 = vmatprep.mubr.f32.mxu0 0.0
      %2727 = vmatmul.mubr.f32.gmra.mxu0 %v2557
      %v2728 = vpop.f32.mrf.mxu0
      %v2729 = vadd.f32 0.0, %v2728
      %v2730 = vpop.f32.mrf.mxu0
      %2731 = vmatprep.mubr.f32.mxu0 0.0
      %2732 = vmatmul.mubr.f32.gmra.mxu0 %v2558
      %v2733 = vpop.f32.mrf.mxu0
      %v2734 = vadd.f32 0.0, %v2733
      %v2735 = vpop.f32.mrf.mxu0
      %2736 = vmatprep.mubr.f32.mxu0 0.0
      %2737 = vmatmul.mubr.f32.gmra.mxu0 %v2559
      %v2738 = vpop.f32.mrf.mxu0
      %v2739 = vadd.f32 0.0, %v2738
      %v2740 = vpop.f32.mrf.mxu0
      %2741 = vmatprep.mubr.f32.mxu0 0.0
      %2742 = vmatmul.mubr.f32.gmra.mxu0 %v2560
      %v2743 = vpop.f32.mrf.mxu0
      %v2744 = vadd.f32 0.0, %v2743
      %v2745 = vpop.f32.mrf.mxu0
      %2746 = vmatprep.mubr.f32.mxu0 0.0
      %2747 = vmatmul.mubr.f32.gmra.mxu0 %v2561
      %v2748 = vpop.f32.mrf.mxu0
      %v2749 = vadd.f32 0.0, %v2748
      %v2750 = vpop.f32.mrf.mxu0
      %2751 = vmatprep.mubr.f32.mxu0 0.0
      %2752 = vmatmul.mubr.f32.gmra.mxu0 %v2562
      %v2753 = vpop.f32.mrf.mxu0
      %v2754 = vadd.f32 0.0, %v2753
      %v2755 = vpop.f32.mrf.mxu0
      %2756 = vmatprep.mubr.f32.mxu0 0.0
      %2757 = vmatmul.mubr.f32.gmra.mxu0 %v2563
      %v2758 = vpop.f32.mrf.mxu0
      %v2759 = vadd.f32 0.0, %v2758
      %v2760 = vpop.f32.mrf.mxu0
      %2761 = vmatprep.mubr.f32.mxu0 0.0
      %2762 = vmatmul.mubr.f32.gmra.mxu0 %v2564
      %v2763 = vpop.f32.mrf.mxu0
      %v2764 = vadd.f32 0.0, %v2763
      %v2765 = vpop.f32.mrf.mxu0
      %2766 = vmatprep.mubr.f32.mxu0 0.0
      %2767 = vmatmul.mubr.f32.gmra.mxu0 %v2565
      %v2768 = vpop.f32.mrf.mxu0
      %v2769 = vadd.f32 0.0, %v2768
      %v2770 = vpop.f32.mrf.mxu0
      %2771 = vmatprep.mubr.f32.mxu0 0.0
      %2772 = vmatmul.mubr.f32.gmra.mxu0 %v2566
      %v2773 = vpop.f32.mrf.mxu0
      %v2774 = vadd.f32 0.0, %v2773
      %v2775 = vpop.f32.mrf.mxu0
      %2776 = vmatprep.mubr.f32.mxu0 0.0
      %2777 = vmatmul.mubr.f32.gmra.mxu0 %v2567
      %v2778 = vpop.f32.mrf.mxu0
      %v2779 = vadd.f32 0.0, %v2778
      %v2780 = vpop.f32.mrf.mxu0
      %2781 = vmatprep.mubr.f32.mxu0 0.0
      %2782 = vmatmul.mubr.f32.gmra.mxu0 %v2568
      %v2783 = vpop.f32.mrf.mxu0
      %v2784 = vadd.f32 0.0, %v2783
      %v2785 = vpop.f32.mrf.mxu0
      %2786 = vmatprep.mubr.f32.mxu0 0.0
      %2787 = vmatmul.mubr.f32.gmra.mxu0 %v2569
      %v2788 = vpop.f32.mrf.mxu0
      %v2789 = vadd.f32 0.0, %v2788
      %v2790 = vpop.f32.mrf.mxu0
      %2791 = vmatprep.mubr.f32.mxu0 0.0
      %2792 = vmatmul.mubr.f32.gmra.mxu0 %v2570
      %v2793 = vpop.f32.mrf.mxu0
      %v2794 = vadd.f32 0.0, %v2793
      %v2795 = vpop.f32.mrf.mxu0
      %2796 = vmatprep.mubr.f32.mxu0 0.0
      %2797 = vmatmul.mubr.f32.gmra.mxu0 %v2571
      %v2798 = vpop.f32.mrf.mxu0
      %v2799 = vadd.f32 0.0, %v2798
      %v2800 = vpop.f32.mrf.mxu0
      %2801 = vmatprep.mubr.f32.mxu0 0.0
      %2802 = vmatmul.mubr.f32.gmra.mxu0 %v2572
      %v2803 = vpop.f32.mrf.mxu0
      %v2804 = vadd.f32 0.0, %v2803
      %v2805 = vpop.f32.mrf.mxu0
      %2806 = vmatprep.mubr.f32.mxu0 0.0
      %2807 = vmatmul.mubr.f32.gmra.mxu0 %v2573
      %v2808 = vpop.f32.mrf.mxu0
      %v2809 = vadd.f32 0.0, %v2808
      %v2810 = vpop.f32.mrf.mxu0
      %2811 = vmatprep.mubr.f32.mxu0 0.0
      %2812 = vmatmul.mubr.f32.gmra.mxu0 %v2574
      %v2813 = vpop.f32.mrf.mxu0
      %v2814 = vadd.f32 0.0, %v2813
      %v2815 = vpop.f32.mrf.mxu0
      %2816 = vdwg.mxu0
      %v2817 = vadd.f32 %v2511, %v2659
      %v2818 = vadd.f32 %v2512, %v2664
      %v2819 = vadd.f32 %v2513, %v2669
      %v2820 = vadd.f32 %v2514, %v2674
      %v2821 = vadd.f32 %v2515, %v2679
      %v2822 = vadd.f32 %v2516, %v2684
      %v2823 = vadd.f32 %v2517, %v2689
      %v2824 = vadd.f32 %v2518, %v2694
      %v2825 = vadd.f32 %v2519, %v2699
      %v2826 = vadd.f32 %v2520, %v2704
      %v2827 = vadd.f32 %v2521, %v2709
      %v2828 = vadd.f32 %v2522, %v2714
      %v2829 = vadd.f32 %v2523, %v2719
      %v2830 = vadd.f32 %v2524, %v2724
      %v2831 = vadd.f32 %v2525, %v2729
      %v2832 = vadd.f32 %v2526, %v2734
      %v2833 = vadd.f32 %v2527, %v2739
      %v2834 = vadd.f32 %v2528, %v2744
      %v2835 = vadd.f32 %v2529, %v2749
      %v2836 = vadd.f32 %v2530, %v2754
      %v2837 = vadd.f32 %v2531, %v2759
      %v2838 = vadd.f32 %v2532, %v2764
      %v2839 = vadd.f32 %v2533, %v2769
      %v2840 = vadd.f32 %v2534, %v2774
      %v2841 = vadd.f32 %v2535, %v2779
      %v2842 = vadd.f32 %v2536, %v2784
      %v2843 = vadd.f32 %v2537, %v2789
      %v2844 = vadd.f32 %v2538, %v2794
      %v2845 = vadd.f32 %v2539, %v2799
      %v2846 = vadd.f32 %v2540, %v2804
      %v2847 = vadd.f32 %v2541, %v2809
      %v2848 = vadd.f32 %v2542, %v2814
      %v2849 = vld [vmem:[%s2236 + $0x2] sm:$0xff]
      %v2850 = vld [vmem:[%s2236 + $0xa] sm:$0xff]
      %v2851 = vld [vmem:[%s2236 + $0x1a] sm:$0xff]
      %v2852 = vld [vmem:[%s2236 + $0x22] sm:$0xff]
      %v2853 = vld [vmem:[%s2236 + $0x32] sm:$0xff]
      %v2854 = vld [vmem:[%s2236 + $0x3a] sm:$0xff]
      %v2855 = vld [vmem:[%s2236 + $0x4a] sm:$0xff]
      %v2856 = vld [vmem:[%s2236 + $0x52] sm:$0xff]
      %v2857 = vld [vmem:[%s2236 + $0x62] sm:$0xff]
      %v2858 = vld [vmem:[%s2236 + $0x6a] sm:$0xff]
      %v2859 = vld [vmem:[%s2236 + $0x7a] sm:$0xff]
      %v2860 = vld [vmem:[%s2236 + $0x82] sm:$0xff]
      %v2861 = vld [vmem:[%s2236 + $0x92] sm:$0xff]
      %v2862 = vld [vmem:[%s2236 + $0x9a] sm:$0xff]
      %v2863 = vld [vmem:[%s2236 + $0xaa] sm:$0xff]
      %v2864 = vld [vmem:[%s2236 + $0xb2] sm:$0xff]
      %v2865 = vld [vmem:[%s2236 + $0xc2] sm:$0xff]
      %v2866 = vld [vmem:[%s2236 + $0xca] sm:$0xff]
      %v2867 = vld [vmem:[%s2236 + $0xda] sm:$0xff]
      %v2868 = vld [vmem:[%s2236 + $0xe2] sm:$0xff]
      %v2869 = vld [vmem:[%s2236 + $0xf2] sm:$0xff]
      %v2870 = vld [vmem:[%s2236 + $0xfa] sm:$0xff]
      %v2871 = vld [vmem:[%s2236 + $0x10a] sm:$0xff]
      %v2872 = vld [vmem:[%s2236 + $0x112] sm:$0xff]
      %v2873 = vld [vmem:[%s2236 + $0x122] sm:$0xff]
      %v2874 = vld [vmem:[%s2236 + $0x12a] sm:$0xff]
      %v2875 = vld [vmem:[%s2236 + $0x13a] sm:$0xff]
      %v2876 = vld [vmem:[%s2236 + $0x142] sm:$0xff]
      %v2877 = vld [vmem:[%s2236 + $0x152] sm:$0xff]
      %v2878 = vld [vmem:[%s2236 + $0x15a] sm:$0xff]
      %v2879 = vld [vmem:[%s2236 + $0x16a] sm:$0xff]
      %v2880 = vld [vmem:[%s2236 + $0x172] sm:$0xff]
      %s2881 = scalar_lea.vmem %s3, 1024
      %v2882 = vld [vmem:[%s2881] sm:$0xff]
      %v2883 = vld [vmem:[%s2881 + $0x8] sm:$0xff]
      %v2884 = vld [vmem:[%s2881 + $0x10] sm:$0xff]
      %v2885 = vld [vmem:[%s2881 + $0x18] sm:$0xff]
      %v2886 = vld [vmem:[%s2881 + $0x20] sm:$0xff]
      %v2887 = vld [vmem:[%s2881 + $0x28] sm:$0xff]
      %v2888 = vld [vmem:[%s2881 + $0x30] sm:$0xff]
      %v2889 = vld [vmem:[%s2881 + $0x38] sm:$0xff]
      %v2890 = vld [vmem:[%s2881 + $0x40] sm:$0xff]
      %v2891 = vld [vmem:[%s2881 + $0x48] sm:$0xff]
      %v2892 = vld [vmem:[%s2881 + $0x50] sm:$0xff]
      %v2893 = vld [vmem:[%s2881 + $0x58] sm:$0xff]
      %v2894 = vld [vmem:[%s2881 + $0x60] sm:$0xff]
      %v2895 = vld [vmem:[%s2881 + $0x68] sm:$0xff]
      %v2896 = vld [vmem:[%s2881 + $0x70] sm:$0xff]
      %v2897 = vld [vmem:[%s2881 + $0x78] sm:$0xff]
      %2898 = vmatprep.subr.mxu0 0.0
      %2899 = vmatpush1.msra.mxu0 %v2897
      %2900 = vmatprep.subr.mxu0 0.0
      %2901 = vmatpush1.msra.mxu0 %v2896
      %2902 = vmatprep.subr.mxu0 0.0
      %2903 = vmatpush1.msra.mxu0 %v2895
      %2904 = vmatprep.subr.mxu0 0.0
      %2905 = vmatpush1.msra.mxu0 %v2894
      %2906 = vmatprep.subr.mxu0 0.0
      %2907 = vmatpush1.msra.mxu0 %v2893
      %2908 = vmatprep.subr.mxu0 0.0
      %2909 = vmatpush1.msra.mxu0 %v2892
      %2910 = vmatprep.subr.mxu0 0.0
      %2911 = vmatpush1.msra.mxu0 %v2891
      %2912 = vmatprep.subr.mxu0 0.0
      %2913 = vmatpush1.msra.mxu0 %v2890
      %2914 = vmatprep.subr.mxu0 0.0
      %2915 = vmatpush1.msra.mxu0 %v2889
      %2916 = vmatprep.subr.mxu0 0.0
      %2917 = vmatpush1.msra.mxu0 %v2888
      %2918 = vmatprep.subr.mxu0 0.0
      %2919 = vmatpush1.msra.mxu0 %v2887
      %2920 = vmatprep.subr.mxu0 0.0
      %2921 = vmatpush1.msra.mxu0 %v2886
      %2922 = vmatprep.subr.mxu0 0.0
      %2923 = vmatpush1.msra.mxu0 %v2885
      %2924 = vmatprep.subr.mxu0 0.0
      %2925 = vmatpush1.msra.mxu0 %v2884
      %2926 = vmatprep.subr.mxu0 0.0
      %2927 = vmatpush1.msra.mxu0 %v2883
      %2928 = vmatprep.subr.mxu0 0.0
      %2929 = vmatpush1.msra.mxu0 %v2882
      %2930 = vmatprep.subr.mxu0 0.0
      %2931 = vmatpush2.msra.mxu0 0.0
      %2932 = vmatprep.subr.mxu0 0.0
      %2933 = vmatpush2.msra.mxu0 0.0
      %2934 = vmatprep.subr.mxu0 0.0
      %2935 = vmatpush2.msra.mxu0 0.0
      %2936 = vmatprep.subr.mxu0 0.0
      %2937 = vmatpush2.msra.mxu0 0.0
      %2938 = vmatprep.subr.mxu0 0.0
      %2939 = vmatpush2.msra.mxu0 0.0
      %2940 = vmatprep.subr.mxu0 0.0
      %2941 = vmatpush2.msra.mxu0 0.0
      %2942 = vmatprep.subr.mxu0 0.0
      %2943 = vmatpush2.msra.mxu0 0.0
      %2944 = vmatprep.subr.mxu0 0.0
      %2945 = vmatpush2.msra.mxu0 0.0
      %2946 = vmatprep.subr.mxu0 0.0
      %2947 = vmatpush2.msra.mxu0 0.0
      %2948 = vmatprep.subr.mxu0 0.0
      %2949 = vmatpush2.msra.mxu0 0.0
      %2950 = vmatprep.subr.mxu0 0.0
      %2951 = vmatpush2.msra.mxu0 0.0
      %2952 = vmatprep.subr.mxu0 0.0
      %2953 = vmatpush2.msra.mxu0 0.0
      %2954 = vmatprep.subr.mxu0 0.0
      %2955 = vmatpush2.msra.mxu0 0.0
      %2956 = vmatprep.subr.mxu0 0.0
      %2957 = vmatpush2.msra.mxu0 0.0
      %2958 = vmatprep.subr.mxu0 0.0
      %2959 = vmatpush2.msra.mxu0 0.0
      %2960 = vmatprep.subr.mxu0 0.0
      %2961 = vmatpush2.msra.mxu0 0.0
      %2962 = vmatprep.mubr.f32.mxu0 0.0
      %2963 = vmatmul.mubr.f32.gmra.mxu0 %v2849
      %v2964 = vpop.f32.mrf.mxu0
      %v2965 = vadd.f32 0.0, %v2964
      %v2966 = vpop.f32.mrf.mxu0
      %2967 = vmatprep.mubr.f32.mxu0 0.0
      %2968 = vmatmul.mubr.f32.gmra.mxu0 %v2850
      %v2969 = vpop.f32.mrf.mxu0
      %v2970 = vadd.f32 0.0, %v2969
      %v2971 = vpop.f32.mrf.mxu0
      %2972 = vmatprep.mubr.f32.mxu0 0.0
      %2973 = vmatmul.mubr.f32.gmra.mxu0 %v2851
      %v2974 = vpop.f32.mrf.mxu0
      %v2975 = vadd.f32 0.0, %v2974
      %v2976 = vpop.f32.mrf.mxu0
      %2977 = vmatprep.mubr.f32.mxu0 0.0
      %2978 = vmatmul.mubr.f32.gmra.mxu0 %v2852
      %v2979 = vpop.f32.mrf.mxu0
      %v2980 = vadd.f32 0.0, %v2979
      %v2981 = vpop.f32.mrf.mxu0
      %2982 = vmatprep.mubr.f32.mxu0 0.0
      %2983 = vmatmul.mubr.f32.gmra.mxu0 %v2853
      %v2984 = vpop.f32.mrf.mxu0
      %v2985 = vadd.f32 0.0, %v2984
      %v2986 = vpop.f32.mrf.mxu0
      %2987 = vmatprep.mubr.f32.mxu0 0.0
      %2988 = vmatmul.mubr.f32.gmra.mxu0 %v2854
      %v2989 = vpop.f32.mrf.mxu0
      %v2990 = vadd.f32 0.0, %v2989
      %v2991 = vpop.f32.mrf.mxu0
      %2992 = vmatprep.mubr.f32.mxu0 0.0
      %2993 = vmatmul.mubr.f32.gmra.mxu0 %v2855
      %v2994 = vpop.f32.mrf.mxu0
      %v2995 = vadd.f32 0.0, %v2994
      %v2996 = vpop.f32.mrf.mxu0
      %2997 = vmatprep.mubr.f32.mxu0 0.0
      %2998 = vmatmul.mubr.f32.gmra.mxu0 %v2856
      %v2999 = vpop.f32.mrf.mxu0
      %v3000 = vadd.f32 0.0, %v2999
      %v3001 = vpop.f32.mrf.mxu0
      %3002 = vmatprep.mubr.f32.mxu0 0.0
      %3003 = vmatmul.mubr.f32.gmra.mxu0 %v2857
      %v3004 = vpop.f32.mrf.mxu0
      %v3005 = vadd.f32 0.0, %v3004
      %v3006 = vpop.f32.mrf.mxu0
      %3007 = vmatprep.mubr.f32.mxu0 0.0
      %3008 = vmatmul.mubr.f32.gmra.mxu0 %v2858
      %v3009 = vpop.f32.mrf.mxu0
      %v3010 = vadd.f32 0.0, %v3009
      %v3011 = vpop.f32.mrf.mxu0
      %3012 = vmatprep.mubr.f32.mxu0 0.0
      %3013 = vmatmul.mubr.f32.gmra.mxu0 %v2859
      %v3014 = vpop.f32.mrf.mxu0
      %v3015 = vadd.f32 0.0, %v3014
      %v3016 = vpop.f32.mrf.mxu0
      %3017 = vmatprep.mubr.f32.mxu0 0.0
      %3018 = vmatmul.mubr.f32.gmra.mxu0 %v2860
      %v3019 = vpop.f32.mrf.mxu0
      %v3020 = vadd.f32 0.0, %v3019
      %v3021 = vpop.f32.mrf.mxu0
      %3022 = vmatprep.mubr.f32.mxu0 0.0
      %3023 = vmatmul.mubr.f32.gmra.mxu0 %v2861
      %v3024 = vpop.f32.mrf.mxu0
      %v3025 = vadd.f32 0.0, %v3024
      %v3026 = vpop.f32.mrf.mxu0
      %3027 = vmatprep.mubr.f32.mxu0 0.0
      %3028 = vmatmul.mubr.f32.gmra.mxu0 %v2862
      %v3029 = vpop.f32.mrf.mxu0
      %v3030 = vadd.f32 0.0, %v3029
      %v3031 = vpop.f32.mrf.mxu0
      %3032 = vmatprep.mubr.f32.mxu0 0.0
      %3033 = vmatmul.mubr.f32.gmra.mxu0 %v2863
      %v3034 = vpop.f32.mrf.mxu0
      %v3035 = vadd.f32 0.0, %v3034
      %v3036 = vpop.f32.mrf.mxu0
      %3037 = vmatprep.mubr.f32.mxu0 0.0
      %3038 = vmatmul.mubr.f32.gmra.mxu0 %v2864
      %v3039 = vpop.f32.mrf.mxu0
      %v3040 = vadd.f32 0.0, %v3039
      %v3041 = vpop.f32.mrf.mxu0
      %3042 = vmatprep.mubr.f32.mxu0 0.0
      %3043 = vmatmul.mubr.f32.gmra.mxu0 %v2865
      %v3044 = vpop.f32.mrf.mxu0
      %v3045 = vadd.f32 0.0, %v3044
      %v3046 = vpop.f32.mrf.mxu0
      %3047 = vmatprep.mubr.f32.mxu0 0.0
      %3048 = vmatmul.mubr.f32.gmra.mxu0 %v2866
      %v3049 = vpop.f32.mrf.mxu0
      %v3050 = vadd.f32 0.0, %v3049
      %v3051 = vpop.f32.mrf.mxu0
      %3052 = vmatprep.mubr.f32.mxu0 0.0
      %3053 = vmatmul.mubr.f32.gmra.mxu0 %v2867
      %v3054 = vpop.f32.mrf.mxu0
      %v3055 = vadd.f32 0.0, %v3054
      %v3056 = vpop.f32.mrf.mxu0
      %3057 = vmatprep.mubr.f32.mxu0 0.0
      %3058 = vmatmul.mubr.f32.gmra.mxu0 %v2868
      %v3059 = vpop.f32.mrf.mxu0
      %v3060 = vadd.f32 0.0, %v3059
      %v3061 = vpop.f32.mrf.mxu0
      %3062 = vmatprep.mubr.f32.mxu0 0.0
      %3063 = vmatmul.mubr.f32.gmra.mxu0 %v2869
      %v3064 = vpop.f32.mrf.mxu0
      %v3065 = vadd.f32 0.0, %v3064
      %v3066 = vpop.f32.mrf.mxu0
      %3067 = vmatprep.mubr.f32.mxu0 0.0
      %3068 = vmatmul.mubr.f32.gmra.mxu0 %v2870
      %v3069 = vpop.f32.mrf.mxu0
      %v3070 = vadd.f32 0.0, %v3069
      %v3071 = vpop.f32.mrf.mxu0
      %3072 = vmatprep.mubr.f32.mxu0 0.0
      %3073 = vmatmul.mubr.f32.gmra.mxu0 %v2871
      %v3074 = vpop.f32.mrf.mxu0
      %v3075 = vadd.f32 0.0, %v3074
      %v3076 = vpop.f32.mrf.mxu0
      %3077 = vmatprep.mubr.f32.mxu0 0.0
      %3078 = vmatmul.mubr.f32.gmra.mxu0 %v2872
      %v3079 = vpop.f32.mrf.mxu0
      %v3080 = vadd.f32 0.0, %v3079
      %v3081 = vpop.f32.mrf.mxu0
      %3082 = vmatprep.mubr.f32.mxu0 0.0
      %3083 = vmatmul.mubr.f32.gmra.mxu0 %v2873
      %v3084 = vpop.f32.mrf.mxu0
      %v3085 = vadd.f32 0.0, %v3084
      %v3086 = vpop.f32.mrf.mxu0
      %3087 = vmatprep.mubr.f32.mxu0 0.0
      %3088 = vmatmul.mubr.f32.gmra.mxu0 %v2874
      %v3089 = vpop.f32.mrf.mxu0
      %v3090 = vadd.f32 0.0, %v3089
      %v3091 = vpop.f32.mrf.mxu0
      %3092 = vmatprep.mubr.f32.mxu0 0.0
      %3093 = vmatmul.mubr.f32.gmra.mxu0 %v2875
      %v3094 = vpop.f32.mrf.mxu0
      %v3095 = vadd.f32 0.0, %v3094
      %v3096 = vpop.f32.mrf.mxu0
      %3097 = vmatprep.mubr.f32.mxu0 0.0
      %3098 = vmatmul.mubr.f32.gmra.mxu0 %v2876
      %v3099 = vpop.f32.mrf.mxu0
      %v3100 = vadd.f32 0.0, %v3099
      %v3101 = vpop.f32.mrf.mxu0
      %3102 = vmatprep.mubr.f32.mxu0 0.0
      %3103 = vmatmul.mubr.f32.gmra.mxu0 %v2877
      %v3104 = vpop.f32.mrf.mxu0
      %v3105 = vadd.f32 0.0, %v3104
      %v3106 = vpop.f32.mrf.mxu0
      %3107 = vmatprep.mubr.f32.mxu0 0.0
      %3108 = vmatmul.mubr.f32.gmra.mxu0 %v2878
      %v3109 = vpop.f32.mrf.mxu0
      %v3110 = vadd.f32 0.0, %v3109
      %v3111 = vpop.f32.mrf.mxu0
      %3112 = vmatprep.mubr.f32.mxu0 0.0
      %3113 = vmatmul.mubr.f32.gmra.mxu0 %v2879
      %v3114 = vpop.f32.mrf.mxu0
      %v3115 = vadd.f32 0.0, %v3114
      %v3116 = vpop.f32.mrf.mxu0
      %3117 = vmatprep.mubr.f32.mxu0 0.0
      %3118 = vmatmul.mubr.f32.gmra.mxu0 %v2880
      %v3119 = vpop.f32.mrf.mxu0
      %v3120 = vadd.f32 0.0, %v3119
      %v3121 = vpop.f32.mrf.mxu0
      %3122 = vdwg.mxu0
      %v3123 = vadd.f32 %v2817, %v2965
      %v3124 = vadd.f32 %v2818, %v2970
      %v3125 = vadd.f32 %v2819, %v2975
      %v3126 = vadd.f32 %v2820, %v2980
      %v3127 = vadd.f32 %v2821, %v2985
      %v3128 = vadd.f32 %v2822, %v2990
      %v3129 = vadd.f32 %v2823, %v2995
      %v3130 = vadd.f32 %v2824, %v3000
      %v3131 = vadd.f32 %v2825, %v3005
      %v3132 = vadd.f32 %v2826, %v3010
      %v3133 = vadd.f32 %v2827, %v3015
      %v3134 = vadd.f32 %v2828, %v3020
      %v3135 = vadd.f32 %v2829, %v3025
      %v3136 = vadd.f32 %v2830, %v3030
      %v3137 = vadd.f32 %v2831, %v3035
      %v3138 = vadd.f32 %v2832, %v3040
      %v3139 = vadd.f32 %v2833, %v3045
      %v3140 = vadd.f32 %v2834, %v3050
      %v3141 = vadd.f32 %v2835, %v3055
      %v3142 = vadd.f32 %v2836, %v3060
      %v3143 = vadd.f32 %v2837, %v3065
      %v3144 = vadd.f32 %v2838, %v3070
      %v3145 = vadd.f32 %v2839, %v3075
      %v3146 = vadd.f32 %v2840, %v3080
      %v3147 = vadd.f32 %v2841, %v3085
      %v3148 = vadd.f32 %v2842, %v3090
      %v3149 = vadd.f32 %v2843, %v3095
      %v3150 = vadd.f32 %v2844, %v3100
      %v3151 = vadd.f32 %v2845, %v3105
      %v3152 = vadd.f32 %v2846, %v3110
      %v3153 = vadd.f32 %v2847, %v3115
      %v3154 = vadd.f32 %v2848, %v3120
      %3155 = vst [vmem:[%s231] sm:$0xff] %v3123
      %3156 = vst [vmem:[%s231 + $0x8] sm:$0xff] %v3124
      %3157 = vst [vmem:[%s231 + $0x10] sm:$0xff] %v3125
      %3158 = vst [vmem:[%s231 + $0x18] sm:$0xff] %v3126
      %3159 = vst [vmem:[%s231 + $0x20] sm:$0xff] %v3127
      %3160 = vst [vmem:[%s231 + $0x28] sm:$0xff] %v3128
      %3161 = vst [vmem:[%s231 + $0x30] sm:$0xff] %v3129
      %3162 = vst [vmem:[%s231 + $0x38] sm:$0xff] %v3130
      %3163 = vst [vmem:[%s231 + $0x40] sm:$0xff] %v3131
      %3164 = vst [vmem:[%s231 + $0x48] sm:$0xff] %v3132
      %3165 = vst [vmem:[%s231 + $0x50] sm:$0xff] %v3133
      %3166 = vst [vmem:[%s231 + $0x58] sm:$0xff] %v3134
      %3167 = vst [vmem:[%s231 + $0x60] sm:$0xff] %v3135
      %3168 = vst [vmem:[%s231 + $0x68] sm:$0xff] %v3136
      %3169 = vst [vmem:[%s231 + $0x70] sm:$0xff] %v3137
      %3170 = vst [vmem:[%s231 + $0x78] sm:$0xff] %v3138
      %3171 = vst [vmem:[%s231 + $0x80] sm:$0xff] %v3139
      %3172 = vst [vmem:[%s231 + $0x88] sm:$0xff] %v3140
      %3173 = vst [vmem:[%s231 + $0x90] sm:$0xff] %v3141
      %3174 = vst [vmem:[%s231 + $0x98] sm:$0xff] %v3142
      %3175 = vst [vmem:[%s231 + $0xa0] sm:$0xff] %v3143
      %3176 = vst [vmem:[%s231 + $0xa8] sm:$0xff] %v3144
      %3177 = vst [vmem:[%s231 + $0xb0] sm:$0xff] %v3145
      %3178 = vst [vmem:[%s231 + $0xb8] sm:$0xff] %v3146
      %3179 = vst [vmem:[%s231 + $0xc0] sm:$0xff] %v3147
      %3180 = vst [vmem:[%s231 + $0xc8] sm:$0xff] %v3148
      %3181 = vst [vmem:[%s231 + $0xd0] sm:$0xff] %v3149
      %3182 = vst [vmem:[%s231 + $0xd8] sm:$0xff] %v3150
      %3183 = vst [vmem:[%s231 + $0xe0] sm:$0xff] %v3151
      %3184 = vst [vmem:[%s231 + $0xe8] sm:$0xff] %v3152
      %3185 = vst [vmem:[%s231 + $0xf0] sm:$0xff] %v3153
      %3186 = vst [vmem:[%s231 + $0xf8] sm:$0xff] %v3154
      %v3187 = vadd.f32 %v3123, %v3124
      %v3188 = vadd.f32 %v3187, %v3125
      %v3189 = vadd.f32 %v3188, %v3126
      %v3190 = vadd.f32 %v3189, %v3127
      %v3191 = vadd.f32 %v3190, %v3128
      %v3192 = vadd.f32 %v3191, %v3129
      %v3193 = vadd.f32 %v3192, %v3130
      %v3194 = vadd.f32 %v3193, %v3131
      %v3195 = vadd.f32 %v3194, %v3132
      %v3196 = vadd.f32 %v3195, %v3133
      %v3197 = vadd.f32 %v3196, %v3134
      %v3198 = vadd.f32 %v3197, %v3135
      %v3199 = vadd.f32 %v3198, %v3136
      %v3200 = vadd.f32 %v3199, %v3137
      %v3201 = vadd.f32 %v3200, %v3138
      %v3202 = vadd.f32 %v3201, %v3139
      %v3203 = vadd.f32 %v3202, %v3140
      %v3204 = vadd.f32 %v3203, %v3141
      %v3205 = vadd.f32 %v3204, %v3142
      %v3206 = vadd.f32 %v3205, %v3143
      %v3207 = vadd.f32 %v3206, %v3144
      %v3208 = vadd.f32 %v3207, %v3145
      %v3209 = vadd.f32 %v3208, %v3146
      %v3210 = vadd.f32 %v3209, %v3147
      %v3211 = vadd.f32 %v3210, %v3148
      %v3212 = vadd.f32 %v3211, %v3149
      %v3213 = vadd.f32 %v3212, %v3150
      %v3214 = vadd.f32 %v3213, %v3151
      %v3215 = vadd.f32 %v3214, %v3152
      %v3216 = vadd.f32 %v3215, %v3153
      %v3217 = vadd.f32 %v3216, %v3154
      %v3218 = vrot.slane %v3217, 4
      %v3219 = vadd.f32 %v3217, %v3218
      %v3220 = vrot.slane %v3219, 2
      %v3221 = vadd.f32 %v3219, %v3220
      %v3222 = vrot.slane %v3221, 1
      %v3223 = vadd.f32 %v3221, %v3222
      %v3224 = vmul.f32 %v3123, %v3123
      %v3225 = vmul.f32 %v3124, %v3124
      %v3226 = vmul.f32 %v3125, %v3125
      %v3227 = vmul.f32 %v3126, %v3126
      %v3228 = vmul.f32 %v3127, %v3127
      %v3229 = vmul.f32 %v3128, %v3128
      %v3230 = vmul.f32 %v3129, %v3129
      %v3231 = vmul.f32 %v3130, %v3130
      %v3232 = vmul.f32 %v3131, %v3131
      %v3233 = vmul.f32 %v3132, %v3132
      %v3234 = vmul.f32 %v3133, %v3133
      %v3235 = vmul.f32 %v3134, %v3134
      %v3236 = vmul.f32 %v3135, %v3135
      %v3237 = vmul.f32 %v3136, %v3136
      %v3238 = vmul.f32 %v3137, %v3137
      %v3239 = vmul.f32 %v3138, %v3138
      %v3240 = vmul.f32 %v3139, %v3139
      %v3241 = vmul.f32 %v3140, %v3140
      %v3242 = vmul.f32 %v3141, %v3141
      %v3243 = vmul.f32 %v3142, %v3142
      %v3244 = vmul.f32 %v3143, %v3143
      %v3245 = vmul.f32 %v3144, %v3144
      %v3246 = vmul.f32 %v3145, %v3145
      %v3247 = vmul.f32 %v3146, %v3146
      %v3248 = vmul.f32 %v3147, %v3147
      %v3249 = vmul.f32 %v3148, %v3148
      %v3250 = vmul.f32 %v3149, %v3149
      %v3251 = vmul.f32 %v3150, %v3150
      %v3252 = vmul.f32 %v3151, %v3151
      %v3253 = vmul.f32 %v3152, %v3152
      %v3254 = vmul.f32 %v3153, %v3153
      %v3255 = vmul.f32 %v3154, %v3154
      %v3256 = vadd.f32 %v3224, %v3225
      %v3257 = vadd.f32 %v3256, %v3226
      %v3258 = vadd.f32 %v3257, %v3227
      %v3259 = vadd.f32 %v3258, %v3228
      %v3260 = vadd.f32 %v3259, %v3229
      %v3261 = vadd.f32 %v3260, %v3230
      %v3262 = vadd.f32 %v3261, %v3231
      %v3263 = vadd.f32 %v3262, %v3232
      %v3264 = vadd.f32 %v3263, %v3233
      %v3265 = vadd.f32 %v3264, %v3234
      %v3266 = vadd.f32 %v3265, %v3235
      %v3267 = vadd.f32 %v3266, %v3236
      %v3268 = vadd.f32 %v3267, %v3237
      %v3269 = vadd.f32 %v3268, %v3238
      %v3270 = vadd.f32 %v3269, %v3239
      %v3271 = vadd.f32 %v3270, %v3240
      %v3272 = vadd.f32 %v3271, %v3241
      %v3273 = vadd.f32 %v3272, %v3242
      %v3274 = vadd.f32 %v3273, %v3243
      %v3275 = vadd.f32 %v3274, %v3244
      %v3276 = vadd.f32 %v3275, %v3245
      %v3277 = vadd.f32 %v3276, %v3246
      %v3278 = vadd.f32 %v3277, %v3247
      %v3279 = vadd.f32 %v3278, %v3248
      %v3280 = vadd.f32 %v3279, %v3249
      %v3281 = vadd.f32 %v3280, %v3250
      %v3282 = vadd.f32 %v3281, %v3251
      %v3283 = vadd.f32 %v3282, %v3252
      %v3284 = vadd.f32 %v3283, %v3253
      %v3285 = vadd.f32 %v3284, %v3254
      %v3286 = vadd.f32 %v3285, %v3255
      %v3287 = vrot.slane %v3286, 4
      %v3288 = vadd.f32 %v3286, %v3287
      %v3289 = vrot.slane %v3288, 2
      %v3290 = vadd.f32 %v3288, %v3289
      %v3291 = vrot.slane %v3290, 1
      %v3292 = vadd.f32 %v3290, %v3291
      %vm3293 = vcmask 1040384
      %v3294 = vsel %vm3293, %v3223, %v3292
      %vm3295 = vcmask 1041408
      %v3296 = vsel %vm3295, %v3294, 0.0
      %3297 = vst [vmem:[%s235] sm:$0xff] %v3296
      %p3298 = scmp.lt.s32.totalorder %s17, 1
      %s3299 = scalar_select %p3298, %s17, 1
      %s3300 = smul.addr %s3299, 32
      %s3301 = smul.addr %s3300, 8
      %s3302 = scalar_lea.vmem %s4, %s3301
      %p3303 = scmp.lt.s32.totalorder %s17, 1
      %s3304 = scalar_select %p3303, %s17, 1
      %s3305 = smul.addr %s3304, 8
      %s3306 = scalar_lea.vmem %s5, %s3305
      // Predicated region
      $region37: #{bottleneck_forward.5} parent=35 // pred_check
        %p3307 = pneg %p124
      $region38: #{bottleneck_forward.5} parent=35 // pred_check_branch
        %3309 = sbr.rel (%p3307) target = $region40
      $region39: #{bottleneck_forward.5} parent=35 // pred_region
        _
      $region40: #{bottleneck_forward.5} parent=35 // pred_fallthru
        _
      // Predicated region
      $region41: #{bottleneck_forward.5} parent=35 // pred_check
        %p3310 = pneg %p150
      $region42: #{bottleneck_forward.5} parent=35 // pred_check_branch
        %3312 = sbr.rel (%p3310) target = $region44
      $region43: #{bottleneck_forward.5} parent=35 // pred_region
        _
      $region44: #{bottleneck_forward.5} parent=35 // pred_fallthru
        _
    $region36: #{bottleneck_forward.5} parent=5 // pred_fallthru
      _
    %p3313 = scmp.le.s32.totalorder 2, %s12
    // Predicated region
    $region45: #{bottleneck_forward.5} parent=5 // pred_check
      %p3314 = pneg %p3313
    $region46: #{bottleneck_forward.5} parent=5 // pred_check_branch
      %3316 = sbr.rel (%p3314) target = $region48
    $region47: #{bottleneck_forward.5} parent=5 // pred_region
      %s3317 = ssub.s32 %s12, 2
      // Predicated region
      $region49: #{bottleneck_forward.5} parent=47 // pred_check
        %p3318 = pneg %p130
      $region50: #{bottleneck_forward.5} parent=47 // pred_check_branch
        %3320 = sbr.rel (%p3318) target = $region52
      $region51: #{bottleneck_forward.5} parent=47 // pred_region
        %p3321 = scmp.lt.s32.totalorder %s18, 1
        %s3322 = scalar_select %p3321, %s18, 1
        %s3323 = smul.addr %s3322, 32
        %s3324 = smul.addr %s3323, 8
        %s3325 = scalar_lea.vmem %s4, %s3324
      $region52: #{bottleneck_forward.5} parent=47 // pred_fallthru
        _
      // Predicated region
      $region53: #{bottleneck_forward.5} parent=47 // pred_check
        %p3326 = pneg %p156
      $region54: #{bottleneck_forward.5} parent=47 // pred_check_branch
        %3328 = sbr.rel (%p3326) target = $region56
      $region55: #{bottleneck_forward.5} parent=47 // pred_region
        %p3329 = scmp.lt.s32.totalorder %s18, 1
        %s3330 = scalar_select %p3329, %s18, 1
        %s3331 = smul.addr %s3330, 8
        %s3332 = scalar_lea.vmem %s5, %s3331
      $region56: #{bottleneck_forward.5} parent=47 // pred_fallthru
        _
    $region48: #{bottleneck_forward.5} parent=5 // pred_fallthru
      _
  $region6: #{bottleneck_forward.5} parent=0 // loop_footer
    %s16 = sadd.s32 1, %s12
  $region7: #{bottleneck_forward.5} parent=0 // loop_footer_branch
    %11 = sbr.rel target = $region3
  $region8: #{bottleneck_forward.5} parent=0 // loop_exit
    _

</llo_original>
